<compile_context>
chip_gen: v5e
topology: v5e:2x2
jax: 0.10.0
libtpu: 0.0.40
codegen_flags: <defaults>
</compile_context>

<pallas_src>
import functools

import jax
import jax.numpy as jnp
from jax import lax
from jax.experimental import pallas as pl
from jax.experimental.pallas import tpu as pltpu


def _leaky_relu(v, neg_slope=0.05):
    return jnp.where(v >= 0, v, neg_slope * v)


def _sesf_kernel(x_ref, halo_ref, xs_ref, cml_ref, cmr_ref,
                 w1_ref, b1_ref, w21_ref, b21_ref, w22_ref, b22_ref,
                 w3_ref, b3_ref, out_ref,
                 *, nf, squeeze, distilled, w, tap_stride, compute_dtype):
    """One (batch, row-tile) step of the fused SESF forward.

    Layout: channels on sublanes, flattened spatial (rows*W) on lanes.
      x_ref    : (1, nf, tile_p)        centre rows of x (tile_p = th*W, lane-dense)
      halo_ref : (1, 1, nf, 2*W)        [row above tile | row below tile] (zeros at edges)
      xs_ref   : (1, sobel_c, tile_p)   x_xobel for the centre rows
      cml/cmr  : (1, tile_p)            "not first column" / "not last column" masks
      out_ref  : (1, nf, tile_p)
    """
    i = pl.program_id(1)
    n_tiles = pl.num_programs(1)
    tile_p = out_ref.shape[-1]
    f32 = jnp.float32

    xc = x_ref[0].astype(compute_dtype)               # (nf, P)
    xh = halo_ref[0, 0].astype(compute_dtype)         # (nf, 2W)
    w1 = w1_ref[...]                                  # (expand, nf), compute dtype
    b1 = b1_ref[...]                                  # (expand, 1), f32

    # ---- c1 (1x1) + LeakyReLU: one M=expand dot on the centre tile -------------------
    oc1 = _leaky_relu(jnp.dot(w1, xc, preferred_element_type=f32) + b1)   # (expand, P) f32
    d_c = oc1[:distilled]                              # (2nf, P)   aligned sublane view
    remain = oc1[distilled:]                           # (rem, P)   aligned sublane view

    # Distilled channels on the two halo rows (tiny: (2nf,nf) @ (nf,2W)).
    d_h = _leaky_relu(jnp.dot(w1[:distilled], xh, preferred_element_type=f32)
                      + b1[:distilled])                # (2nf, 2W) f32
    # Halo rows outside the image are the 3x3 conv's zero padding of d -> force to 0.
    col2 = lax.broadcasted_iota(jnp.int32, (1, 2 * w), 1)
    keep_top = (i > 0).astype(f32)
    keep_bot = (i < n_tiles - 1).astype(f32)
    d_h = d_h * jnp.where(col2 < w, keep_top, keep_bot)

    # ---- c2_1 (1x1, no activation) -----------------------------------------------------
    o21 = (jnp.dot(w21_ref[...], remain.astype(compute_dtype),
                   preferred_element_type=f32) + b21_ref[...])            # (squeeze, P)

    # ---- c2_2 (3x3, pad=1, no activation): all 9 taps in ONE output-stacked dot --------
    # d_ext rows: [zero pad, halo_top, centre rows, halo_bot, zero pad], flattened.
    # The outermost zero rows are only ever read at column-masked positions.
    zrow = jnp.zeros((distilled, w), compute_dtype)
    d_ext = jnp.concatenate(
        [zrow, d_h[:, :w].astype(compute_dtype), d_c.astype(compute_dtype),
         d_h[:, w:].astype(compute_dtype), zrow], axis=1)                 # (2nf, P+4W)
    taps = jnp.dot(w22_ref[...], d_ext, preferred_element_type=f32)      # (9*ts, P+4W)

    def tap(k):                       # k = (dh+1)*3 + (dw+1)
        dh, dw = k // 3 - 1, k % 3 - 1
        s = (2 + dh) * w + dw
        return taps[tap_stride * k:tap_stride * k + nf, s:s + tile_p]    # (nf, P)

    left = tap(0) + tap(3) + tap(6)    # dw = -1 taps
    mid = tap(1) + tap(4) + tap(7)     # dw =  0 taps
    right = tap(2) + tap(5) + tap(8)   # dw = +1 taps
    o22 = (mid + left * cml_ref[...] + right * cmr_ref[...]
           + b22_ref[...])                                                # (nf, P)

    # ---- c3 (1x1 over the implicit concat) + LeakyReLU ---------------------------------
    # The concat [x, o21, o22, x_xobel] is never materialised: c3 is evaluated as four
    # partial matmuls over the corresponding column blocks of its weight.
    xs = xs_ref[0].astype(compute_dtype)
    w3 = w3_ref[...]
    c0, c1_, c2_ = nf, nf + squeeze, nf + squeeze + nf
    y = (jnp.dot(w3[:, :c0], xc, preferred_element_type=f32)
         + jnp.dot(w3[:, c0:c1_], o21.astype(compute_dtype), preferred_element_type=f32)
         + jnp.dot(w3[:, c1_:c2_], o22.astype(compute_dtype), preferred_element_type=f32)
         + jnp.dot(w3[:, c2_:], xs, preferred_element_type=f32)
         + b3_ref[...])
    out_ref[0] = _leaky_relu(y).astype(out_ref.dtype)


def sesf_forward(x, x_xobel, params, *, nf=12, squeeze=9, expand=128,
                 row_tile=None, compute_dtype=jnp.bfloat16):
    """Fused SESF forward. x, x_xobel are NCHW; returns NCHW (B, nf, H, W).

    compute_dtype=jnp.bfloat16 uses bf16 MXU operands with f32 accumulation (TPU
    default-precision style); pass jnp.float32 for bit-faithful f32 matmuls.
    """
    B, C, H, W = x.shape
    assert C == nf, (C, nf)
    distilled = nf * 2
    remaining = expand - distilled
    sobel_c = 3 * nf - (nf + squeeze + nf)          # c3 consumes 3*nf channels total
    assert x_xobel.shape == (B, sobel_c, H, W), x_xobel.shape

    # ---- row-tile selection: big lane-dense tiles (~8K lanes/step), >=2 grid steps ----
    if row_tile is None:
        target_lanes, max_lanes = 8192, 16384
        aligned = [t for t in range(1, H + 1) if H % t == 0 and (t * W) % 128 == 0]
        if not aligned:
            row_tile = H            # full-extent lane dim is still legal; perf fallback
        else:
            fit = [t for t in aligned if t * W <= max_lanes] or \
                  [min(aligned, key=lambda t: t * W)]
            row_tile = min(fit, key=lambda t: abs(t * W - target_lanes))
            if B * (H // row_tile) < 2:             # keep both v7x TensorCores busy
                multi = [t for t in fit if H // t >= 2]
                if multi:
                    row_tile = min(multi, key=lambda t: abs(t * W - target_lanes))
    th = row_tile
    assert H % th == 0, (H, th)
    n_tiles = H // th
    tile_p = th * W
    cdt = compute_dtype

    # Kernel reads x / x_xobel directly (free NCHW reshape, lane-dense tiles).
    x_flat = x.reshape(B, nf, H * W)
    xs_flat = x_xobel.reshape(B, sobel_c, H * W)

    # Tiny per-tile halo rows (row above / below each tile; zeros at the image edges).
    # Extra HBM traffic is ~2/th of x, vs. the previous full pad/gather pre-pass.
    zero_row = jnp.zeros((B, nf, 1, W), x.dtype)
    tops = jnp.concatenate([zero_row, x[:, :, th - 1:H - 1:th, :]], axis=2)   # (B,nf,T,W)
    bots = jnp.concatenate([x[:, :, th::th, :], zero_row], axis=2)            # (B,nf,T,W)
    halo = jnp.stack([tops, bots], axis=3)                                    # (B,nf,T,2,W)
    halo = halo.transpose(0, 2, 1, 3, 4).reshape(B, n_tiles, nf, 2 * W)

    # Column masks standing in for the 3x3 conv's horizontal zero padding
    # (precomputed once; identical for every row tile since tile_p = th*W).
    col = jnp.arange(tile_p, dtype=jnp.int32) % W
    cmask_l = (col != 0).astype(jnp.float32)[None, :]        # (1, tile_p)
    cmask_r = (col != W - 1).astype(jnp.float32)[None, :]    # (1, tile_p)

    # c2_2 weights packed along the MXU M dimension: tap k occupies rows
    # [k*tap_stride, k*tap_stride+nf) so the per-tap result slices stay sublane-aligned.
    tap_stride = -(-nf // 8) * 8
    w22_big = jnp.pad(params["w22"], ((0, 0), (0, tap_stride - nf), (0, 0)))
    w22_big = w22_big.reshape(9 * tap_stride, distilled).astype(cdt)

    w1 = params["w1"].astype(cdt)
    w21 = params["w21"].astype(cdt)
    w3 = params["w3"].astype(cdt)
    b1, b21, b22, b3 = params["b1"], params["b21"], params["b22"], params["b3"]

    kernel = functools.partial(_sesf_kernel, nf=nf, squeeze=squeeze,
                               distilled=distilled, w=W, tap_stride=tap_stride,
                               compute_dtype=cdt)

    flops = int(2 * B * H * W * (nf * expand + remaining * squeeze
                                 + distilled * nf * 9 + 3 * nf * nf))
    bytes_accessed = int(
        x.size * x.dtype.itemsize + x_xobel.size * x_xobel.dtype.itemsize
        + B * nf * H * W * x.dtype.itemsize + halo.size * halo.dtype.itemsize
        + 2 * 4 * tile_p + sum(int(v.size) * 4 for v in params.values()))

    out_flat = pl.pallas_call(
        kernel,
        out_shape=jax.ShapeDtypeStruct((B, nf, H * W), x.dtype),
        grid=(B, n_tiles),
        in_specs=[
            pl.BlockSpec((1, nf, tile_p), lambda b, i: (b, 0, i)),
            pl.BlockSpec((1, 1, nf, 2 * W), lambda b, i: (b, i, 0, 0)),
            pl.BlockSpec((1, sobel_c, tile_p), lambda b, i: (b, 0, i)),
            pl.BlockSpec((1, tile_p), lambda b, i: (0, 0)),
            pl.BlockSpec((1, tile_p), lambda b, i: (0, 0)),
            pl.BlockSpec((expand, nf), lambda b, i: (0, 0)),
            pl.BlockSpec((expand, 1), lambda b, i: (0, 0)),
            pl.BlockSpec((squeeze, remaining), lambda b, i: (0, 0)),
            pl.BlockSpec((squeeze, 1), lambda b, i: (0, 0)),
            pl.BlockSpec((9 * tap_stride, distilled), lambda b, i: (0, 0)),
            pl.BlockSpec((nf, 1), lambda b, i: (0, 0)),
            pl.BlockSpec((nf, 3 * nf), lambda b, i: (0, 0)),
            pl.BlockSpec((nf, 1), lambda b, i: (0, 0)),
        ],
        out_specs=pl.BlockSpec((1, nf, tile_p), lambda b, i: (b, 0, i)),
        compiler_params=pltpu.CompilerParams(
            dimension_semantics=("parallel", "parallel"),
            vmem_limit_bytes=48 * 1024 * 1024),
        cost_estimate=pl.CostEstimate(flops=flops, transcendentals=0,
                                      bytes_accessed=bytes_accessed),
    )(x_flat, halo, xs_flat, cmask_l, cmask_r,
      w1, b1, w21, b21, w22_big, b22, w3, b3)

    return out_flat.reshape(B, nf, H, W)


def _sesf_reference(x, x_xobel, params, *, nf=12, squeeze=9, expand=128):
    """Pure-JAX (lax.conv) reference mirroring the PyTorch module."""
    def conv(v, w_oihw, b, pad):
        y = lax.conv_general_dilated(
            v, w_oihw, window_strides=(1, 1), padding=[(pad, pad), (pad, pad)],
            dimension_numbers=("NCHW", "OIHW", "NCHW"))
        return y + b.reshape(1, -1, 1, 1)

    lrelu = lambda v: jnp.where(v >= 0, v, 0.05 * v)
    distilled = nf * 2
    out_c1 = lrelu(conv(x, params["w1"][:, :, None, None], params["b1"][:, 0], 0))
    dist, remain = out_c1[:, :distilled], out_c1[:, distilled:]
    o21 = conv(remain, params["w21"][:, :, None, None], params["b21"][:, 0], 0)
    w22 = params["w22"].reshape(3, 3, nf, distilled).transpose(2, 3, 0, 1)
    o22 = conv(dist, w22, params["b22"][:, 0], 1)
    cat = jnp.concatenate([x, o21, o22, x_xobel], axis=1)
    return lrelu(conv(cat, params["w3"][:, :, None, None], params["b3"][:, 0], 0))


if __name__ == "__main__":
    jax.config.update("jax_default_matmul_precision", "float32")

    nf, squeeze, expand = 12, 9, 128            # SESF defaults
    distilled, remaining = nf * 2, expand - nf * 2

    key = jax.random.PRNGKey(0)
    ks = jax.random.split(key, 12)
    params = dict(
        w1=0.2 * jax.random.normal(ks[0], (expand, nf), jnp.float32),
        b1=0.1 * jax.random.normal(ks[1], (expand, 1), jnp.float32),
        w21=0.2 * jax.random.normal(ks[2], (squeeze, remaining), jnp.float32),
        b21=0.1 * jax.random.normal(ks[3], (squeeze, 1), jnp.float32),
        # c2_2 3x3 weight stored tap-major: (kh*3+kw, out=nf, in=2*nf)
        w22=0.2 * jax.random.normal(ks[4], (9, nf, distilled), jnp.float32),
        b22=0.1 * jax.random.normal(ks[5], (nf, 1), jnp.float32),
        w3=0.2 * jax.random.normal(ks[6], (nf, 3 * nf), jnp.float32),
        b3=0.1 * jax.random.normal(ks[7], (nf, 1), jnp.float32),
    )

    # --- small shape: exact (f32) path, single- and multi-tile, plus bf16 default ---
    B, H, W = 2, 16, 16
    x = jax.random.normal(ks[8], (B, nf, H, W), jnp.float32)
    x_xobel = jax.random.normal(ks[9], (B, 3, H, W), jnp.float32)
    ref = jax.block_until_ready(_sesf_reference(x, x_xobel, params))

    fwd_f32 = jax.jit(functools.partial(sesf_forward, compute_dtype=jnp.float32))
    fwd_f32_tiled = jax.jit(functools.partial(sesf_forward, compute_dtype=jnp.float32,
                                              row_tile=8))
    fwd_bf16 = jax.jit(sesf_forward)

    out_f32 = jax.block_until_ready(fwd_f32(x, x_xobel, params))
    out_f32_t = jax.block_until_ready(fwd_f32_tiled(x, x_xobel, params))
    out_bf16 = jax.block_until_ready(fwd_bf16(x, x_xobel, params))

    assert out_f32.shape == (B, nf, H, W), out_f32.shape
    e1 = float(jnp.max(jnp.abs(out_f32 - ref)))
    e2 = float(jnp.max(jnp.abs(out_f32_t - ref)))
    e3 = float(jnp.max(jnp.abs(out_bf16 - ref)))
    assert jnp.allclose(out_f32, ref, atol=2e-3, rtol=2e-3), f"f32 mismatch: {e1}"
    assert jnp.allclose(out_f32_t, ref, atol=2e-3, rtol=2e-3), f"f32 tiled mismatch: {e2}"
    assert jnp.allclose(out_bf16, ref, atol=1.5e-1, rtol=5e-2), f"bf16 mismatch: {e3}"

    # --- larger shape: exercises ~8K-lane tiles, 2 row tiles and the megacore split ---
    B2, H2, W2 = 1, 128, 128
    x2 = jax.random.normal(ks[10], (B2, nf, H2, W2), jnp.float32)
    xs2 = jax.random.normal(ks[11], (B2, 3, H2, W2), jnp.float32)
    ref2 = jax.block_until_ready(_sesf_reference(x2, xs2, params))
    out2 = jax.block_until_ready(fwd_bf16(x2, xs2, params))
    e4 = float(jnp.max(jnp.abs(out2 - ref2)))
    assert out2.shape == (B2, nf, H2, W2), out2.shape
    assert jnp.allclose(out2, ref2, atol=1.5e-1, rtol=5e-2), f"bf16 large mismatch: {e4}"

    print("KERNEL_OK")
</pallas_src>

<mosaic_0001>
module attributes {stable_mosaic.version = 11 : i64} {
  func.func @_sesf_kernel(%arg0: i32, %arg1: i32, %arg2: memref<1x12x256xf32, #tpu.memory_space<vmem>>, %arg3: memref<1x1x12x32xf32, #tpu.memory_space<vmem>>, %arg4: memref<1x3x256xf32, #tpu.memory_space<vmem>>, %arg5: memref<1x256xf32, #tpu.memory_space<vmem>>, %arg6: memref<1x256xf32, #tpu.memory_space<vmem>>, %arg7: memref<128x12xf32, #tpu.memory_space<vmem>>, %arg8: memref<128x1xf32, #tpu.memory_space<vmem>>, %arg9: memref<9x104xf32, #tpu.memory_space<vmem>>, %arg10: memref<9x1xf32, #tpu.memory_space<vmem>>, %arg11: memref<144x24xf32, #tpu.memory_space<vmem>>, %arg12: memref<12x1xf32, #tpu.memory_space<vmem>>, %arg13: memref<12x36xf32, #tpu.memory_space<vmem>>, %arg14: memref<12x1xf32, #tpu.memory_space<vmem>>, %arg15: memref<1x12x256xf32, #tpu.memory_space<vmem>>) attributes {dimension_semantics = [#tpu.dimension_semantics<parallel>, #tpu.dimension_semantics<parallel>], iteration_bounds = array<i64: 2, 1>, scalar_prefetch = 0 : i64, scratch_operands = 0 : i64, tpu.core_type = #tpu.core_type<tc>, window_params = [{transform_indices = @transform_0, window_bounds = array<i64: 1, 12, 256>}, {transform_indices = @transform_1, window_bounds = array<i64: 1, 1, 12, 32>}, {transform_indices = @transform_2, window_bounds = array<i64: 1, 3, 256>}, {pipeline_mode = #tpu.pipeline_mode<synchronous>, transform_indices = @transform_3, window_bounds = array<i64: 1, 256>}, {pipeline_mode = #tpu.pipeline_mode<synchronous>, transform_indices = @transform_4, window_bounds = array<i64: 1, 256>}, {pipeline_mode = #tpu.pipeline_mode<synchronous>, transform_indices = @transform_5, window_bounds = array<i64: 128, 12>}, {pipeline_mode = #tpu.pipeline_mode<synchronous>, transform_indices = @transform_6, window_bounds = array<i64: 128, 1>}, {pipeline_mode = #tpu.pipeline_mode<synchronous>, transform_indices = @transform_7, window_bounds = array<i64: 9, 104>}, {pipeline_mode = #tpu.pipeline_mode<synchronous>, transform_indices = @transform_8, window_bounds = array<i64: 9, 1>}, {pipeline_mode = #tpu.pipeline_mode<synchronous>, transform_indices = @transform_9, window_bounds = array<i64: 144, 24>}, {pipeline_mode = #tpu.pipeline_mode<synchronous>, transform_indices = @transform_10, window_bounds = array<i64: 12, 1>}, {pipeline_mode = #tpu.pipeline_mode<synchronous>, transform_indices = @transform_11, window_bounds = array<i64: 12, 36>}, {pipeline_mode = #tpu.pipeline_mode<synchronous>, transform_indices = @transform_12, window_bounds = array<i64: 12, 1>}, {transform_indices = @transform_13, window_bounds = array<i64: 1, 12, 256>}]} {
    %c0 = arith.constant 0 : index
    %c0_0 = arith.constant 0 : index
    %c0_1 = arith.constant 0 : index
    %0 = vector.load %arg2[%c0, %c0_0, %c0_1] : memref<1x12x256xf32, #tpu.memory_space<vmem>>, vector<1x12x256xf32>
    %1 = vector.shape_cast %0 : vector<1x12x256xf32> to vector<12x256xf32>
    %c0_2 = arith.constant 0 : index
    %c0_3 = arith.constant 0 : index
    %c0_4 = arith.constant 0 : index
    %c0_5 = arith.constant 0 : index
    %2 = vector.load %arg3[%c0_2, %c0_3, %c0_4, %c0_5] : memref<1x1x12x32xf32, #tpu.memory_space<vmem>>, vector<1x1x12x32xf32>
    %3 = vector.shape_cast %2 : vector<1x1x12x32xf32> to vector<12x32xf32>
    %c0_6 = arith.constant 0 : index
    %c0_7 = arith.constant 0 : index
    %4 = vector.load %arg7[%c0_6, %c0_7] : memref<128x12xf32, #tpu.memory_space<vmem>>, vector<128x12xf32>
    %c0_8 = arith.constant 0 : index
    %c0_9 = arith.constant 0 : index
    %5 = vector.load %arg8[%c0_8, %c0_9] : memref<128x1xf32, #tpu.memory_space<vmem>>, vector<128x1xf32>
    %cst = arith.constant dense<0.000000e+00> : vector<128x256xf32>
    %6 = tpu.matmul %4, %1, %cst {dimension_numbers = #tpu.dot_dimension_numbers<[1], [0], [0], [1], [0, 0, 1, 1], [], []>, precision = #tpu.contract_precision<fp32>} : vector<128x12xf32>, vector<12x256xf32>, vector<128x256xf32> -> vector<128x256xf32>
    %7 = vector.broadcast %5 : vector<128x1xf32> to vector<128x256xf32>
    %8 = arith.addf %6, %7 : vector<128x256xf32>
    %cst_10 = arith.constant 0.000000e+00 : f32
    %9 = vector.broadcast %cst_10 : f32 to vector<128x256xf32>
    %10 = arith.cmpf oge, %8, %9 : vector<128x256xf32>
    %cst_11 = arith.constant 5.000000e-02 : f32
    %11 = vector.broadcast %cst_11 : f32 to vector<128x256xf32>
    %12 = arith.mulf %11, %8 : vector<128x256xf32>
    %13 = arith.select %10, %8, %12 : vector<128x256xi1>, vector<128x256xf32>
    %14 = vector.extract_strided_slice %13 {offsets = [0, 0], sizes = [24, 256], strides = [1, 1]} : vector<128x256xf32> to vector<24x256xf32>
    %15 = vector.extract_strided_slice %13 {offsets = [24, 0], sizes = [104, 256], strides = [1, 1]} : vector<128x256xf32> to vector<104x256xf32>
    %16 = vector.extract_strided_slice %4 {offsets = [0, 0], sizes = [24, 12], strides = [1, 1]} : vector<128x12xf32> to vector<24x12xf32>
    %cst_12 = arith.constant dense<0.000000e+00> : vector<24x32xf32>
    %17 = tpu.matmul %16, %3, %cst_12 {dimension_numbers = #tpu.dot_dimension_numbers<[1], [0], [0], [1], [0, 0, 1, 1], [], []>, precision = #tpu.contract_precision<fp32>} : vector<24x12xf32>, vector<12x32xf32>, vector<24x32xf32> -> vector<24x32xf32>
    %18 = vector.extract_strided_slice %5 {offsets = [0, 0], sizes = [24, 1], strides = [1, 1]} : vector<128x1xf32> to vector<24x1xf32>
    %19 = vector.broadcast %18 : vector<24x1xf32> to vector<24x32xf32>
    %20 = arith.addf %17, %19 : vector<24x32xf32>
    %cst_13 = arith.constant 0.000000e+00 : f32
    %21 = vector.broadcast %cst_13 : f32 to vector<24x32xf32>
    %22 = arith.cmpf oge, %20, %21 : vector<24x32xf32>
    %cst_14 = arith.constant 5.000000e-02 : f32
    %23 = vector.broadcast %cst_14 : f32 to vector<24x32xf32>
    %24 = arith.mulf %23, %20 : vector<24x32xf32>
    %25 = arith.select %22, %20, %24 : vector<24x32xi1>, vector<24x32xf32>
    %26 = tpu.iota {dimensions = array<i32: 1>} : vector<1x32xi32>
    %c0_i32 = arith.constant 0 : i32
    %27 = arith.cmpi sgt, %arg1, %c0_i32 : i32
    %28 = arith.extui %27 : i1 to i32
    %29 = arith.sitofp %28 : i32 to f32
    %c0_i32_15 = arith.constant 0 : i32
    %30 = arith.cmpi slt, %arg1, %c0_i32_15 : i32
    %31 = arith.extui %30 : i1 to i32
    %32 = arith.sitofp %31 : i32 to f32
    %c16_i32 = arith.constant 16 : i32
    %33 = vector.broadcast %c16_i32 : i32 to vector<1x32xi32>
    %34 = arith.cmpi slt, %26, %33 : vector<1x32xi32>
    %35 = vector.broadcast %29 : f32 to vector<1x32xf32>
    %36 = vector.broadcast %32 : f32 to vector<1x32xf32>
    %37 = arith.select %34, %35, %36 : vector<1x32xi1>, vector<1x32xf32>
    %38 = vector.broadcast %37 : vector<1x32xf32> to vector<24x32xf32>
    %39 = arith.mulf %25, %38 : vector<24x32xf32>
    %c0_16 = arith.constant 0 : index
    %c0_17 = arith.constant 0 : index
    %40 = vector.load %arg9[%c0_16, %c0_17] : memref<9x104xf32, #tpu.memory_space<vmem>>, vector<9x104xf32>
    %cst_18 = arith.constant dense<0.000000e+00> : vector<9x256xf32>
    %41 = tpu.matmul %40, %15, %cst_18 {dimension_numbers = #tpu.dot_dimension_numbers<[1], [0], [0], [1], [0, 0, 1, 1], [], []>, precision = #tpu.contract_precision<fp32>} : vector<9x104xf32>, vector<104x256xf32>, vector<9x256xf32> -> vector<9x256xf32>
    %c0_19 = arith.constant 0 : index
    %c0_20 = arith.constant 0 : index
    %42 = vector.load %arg10[%c0_19, %c0_20] : memref<9x1xf32, #tpu.memory_space<vmem>>, vector<9x1xf32>
    %43 = vector.broadcast %42 : vector<9x1xf32> to vector<9x256xf32>
    %44 = arith.addf %41, %43 : vector<9x256xf32>
    %cst_21 = arith.constant 0.000000e+00 : f32
    %45 = vector.broadcast %cst_21 : f32 to vector<24x16xf32>
    %46 = vector.extract_strided_slice %39 {offsets = [0, 0], sizes = [24, 16], strides = [1, 1]} : vector<24x32xf32> to vector<24x16xf32>
    %47 = vector.extract_strided_slice %39 {offsets = [0, 16], sizes = [24, 16], strides = [1, 1]} : vector<24x32xf32> to vector<24x16xf32>
    %48 = tpu.concatenate %45, %46, %14, %47, %45 in 1 : vector<24x16xf32>, vector<24x16xf32>, vector<24x256xf32>, vector<24x16xf32>, vector<24x16xf32> -> vector<24x320xf32>
    %c0_22 = arith.constant 0 : index
    %c0_23 = arith.constant 0 : index
    %49 = vector.load %arg11[%c0_22, %c0_23] : memref<144x24xf32, #tpu.memory_space<vmem>>, vector<144x24xf32>
    %cst_24 = arith.constant dense<0.000000e+00> : vector<144x320xf32>
    %50 = tpu.matmul %49, %48, %cst_24 {dimension_numbers = #tpu.dot_dimension_numbers<[1], [0], [0], [1], [0, 0, 1, 1], [], []>, precision = #tpu.contract_precision<fp32>} : vector<144x24xf32>, vector<24x320xf32>, vector<144x320xf32> -> vector<144x320xf32>
    %51 = vector.extract_strided_slice %50 {offsets = [0, 15], sizes = [12, 256], strides = [1, 1]} : vector<144x320xf32> to vector<12x256xf32>
    %52 = vector.extract_strided_slice %50 {offsets = [48, 31], sizes = [12, 256], strides = [1, 1]} : vector<144x320xf32> to vector<12x256xf32>
    %53 = arith.addf %51, %52 : vector<12x256xf32>
    %54 = vector.extract_strided_slice %50 {offsets = [96, 47], sizes = [12, 256], strides = [1, 1]} : vector<144x320xf32> to vector<12x256xf32>
    %55 = arith.addf %53, %54 : vector<12x256xf32>
    %56 = vector.extract_strided_slice %50 {offsets = [16, 16], sizes = [12, 256], strides = [1, 1]} : vector<144x320xf32> to vector<12x256xf32>
    %57 = vector.extract_strided_slice %50 {offsets = [64, 32], sizes = [12, 256], strides = [1, 1]} : vector<144x320xf32> to vector<12x256xf32>
    %58 = arith.addf %56, %57 : vector<12x256xf32>
    %59 = vector.extract_strided_slice %50 {offsets = [112, 48], sizes = [12, 256], strides = [1, 1]} : vector<144x320xf32> to vector<12x256xf32>
    %60 = arith.addf %58, %59 : vector<12x256xf32>
    %61 = vector.extract_strided_slice %50 {offsets = [32, 17], sizes = [12, 256], strides = [1, 1]} : vector<144x320xf32> to vector<12x256xf32>
    %62 = vector.extract_strided_slice %50 {offsets = [80, 33], sizes = [12, 256], strides = [1, 1]} : vector<144x320xf32> to vector<12x256xf32>
    %63 = arith.addf %61, %62 : vector<12x256xf32>
    %64 = vector.extract_strided_slice %50 {offsets = [128, 49], sizes = [12, 256], strides = [1, 1]} : vector<144x320xf32> to vector<12x256xf32>
    %65 = arith.addf %63, %64 : vector<12x256xf32>
    %c0_25 = arith.constant 0 : index
    %c0_26 = arith.constant 0 : index
    %66 = vector.load %arg5[%c0_25, %c0_26] : memref<1x256xf32, #tpu.memory_space<vmem>>, vector<1x256xf32>
    %67 = vector.broadcast %66 : vector<1x256xf32> to vector<12x256xf32>
    %68 = arith.mulf %55, %67 : vector<12x256xf32>
    %69 = arith.addf %60, %68 : vector<12x256xf32>
    %c0_27 = arith.constant 0 : index
    %c0_28 = arith.constant 0 : index
    %70 = vector.load %arg6[%c0_27, %c0_28] : memref<1x256xf32, #tpu.memory_space<vmem>>, vector<1x256xf32>
    %71 = vector.broadcast %70 : vector<1x256xf32> to vector<12x256xf32>
    %72 = arith.mulf %65, %71 : vector<12x256xf32>
    %73 = arith.addf %69, %72 : vector<12x256xf32>
    %c0_29 = arith.constant 0 : index
    %c0_30 = arith.constant 0 : index
    %74 = vector.load %arg12[%c0_29, %c0_30] : memref<12x1xf32, #tpu.memory_space<vmem>>, vector<12x1xf32>
    %75 = vector.broadcast %74 : vector<12x1xf32> to vector<12x256xf32>
    %76 = arith.addf %73, %75 : vector<12x256xf32>
    %c0_31 = arith.constant 0 : index
    %c0_32 = arith.constant 0 : index
    %c0_33 = arith.constant 0 : index
    %77 = vector.load %arg4[%c0_31, %c0_32, %c0_33] : memref<1x3x256xf32, #tpu.memory_space<vmem>>, vector<1x3x256xf32>
    %78 = vector.shape_cast %77 : vector<1x3x256xf32> to vector<3x256xf32>
    %c0_34 = arith.constant 0 : index
    %c0_35 = arith.constant 0 : index
    %79 = vector.load %arg13[%c0_34, %c0_35] : memref<12x36xf32, #tpu.memory_space<vmem>>, vector<12x36xf32>
    %80 = vector.extract_strided_slice %79 {offsets = [0, 0], sizes = [12, 12], strides = [1, 1]} : vector<12x36xf32> to vector<12x12xf32>
    %cst_36 = arith.constant dense<0.000000e+00> : vector<12x256xf32>
    %81 = tpu.matmul %80, %1, %cst_36 {dimension_numbers = #tpu.dot_dimension_numbers<[1], [0], [0], [1], [0, 0, 1, 1], [], []>, precision = #tpu.contract_precision<fp32>} : vector<12x12xf32>, vector<12x256xf32>, vector<12x256xf32> -> vector<12x256xf32>
    %82 = vector.extract_strided_slice %79 {offsets = [0, 12], sizes = [12, 9], strides = [1, 1]} : vector<12x36xf32> to vector<12x9xf32>
    %cst_37 = arith.constant dense<0.000000e+00> : vector<12x256xf32>
    %83 = tpu.matmul %82, %44, %cst_37 {dimension_numbers = #tpu.dot_dimension_numbers<[1], [0], [0], [1], [0, 0, 1, 1], [], []>, precision = #tpu.contract_precision<fp32>} : vector<12x9xf32>, vector<9x256xf32>, vector<12x256xf32> -> vector<12x256xf32>
    %84 = arith.addf %81, %83 : vector<12x256xf32>
    %85 = vector.extract_strided_slice %79 {offsets = [0, 21], sizes = [12, 12], strides = [1, 1]} : vector<12x36xf32> to vector<12x12xf32>
    %cst_38 = arith.constant dense<0.000000e+00> : vector<12x256xf32>
    %86 = tpu.matmul %85, %76, %cst_38 {dimension_numbers = #tpu.dot_dimension_numbers<[1], [0], [0], [1], [0, 0, 1, 1], [], []>, precision = #tpu.contract_precision<fp32>} : vector<12x12xf32>, vector<12x256xf32>, vector<12x256xf32> -> vector<12x256xf32>
    %87 = arith.addf %84, %86 : vector<12x256xf32>
    %88 = vector.extract_strided_slice %79 {offsets = [0, 33], sizes = [12, 3], strides = [1, 1]} : vector<12x36xf32> to vector<12x3xf32>
    %cst_39 = arith.constant dense<0.000000e+00> : vector<12x256xf32>
    %89 = tpu.matmul %88, %78, %cst_39 {dimension_numbers = #tpu.dot_dimension_numbers<[1], [0], [0], [1], [0, 0, 1, 1], [], []>, precision = #tpu.contract_precision<fp32>} : vector<12x3xf32>, vector<3x256xf32>, vector<12x256xf32> -> vector<12x256xf32>
    %90 = arith.addf %87, %89 : vector<12x256xf32>
    %c0_40 = arith.constant 0 : index
    %c0_41 = arith.constant 0 : index
    %91 = vector.load %arg14[%c0_40, %c0_41] : memref<12x1xf32, #tpu.memory_space<vmem>>, vector<12x1xf32>
    %92 = vector.broadcast %91 : vector<12x1xf32> to vector<12x256xf32>
    %93 = arith.addf %90, %92 : vector<12x256xf32>
    %cst_42 = arith.constant 0.000000e+00 : f32
    %94 = vector.broadcast %cst_42 : f32 to vector<12x256xf32>
    %95 = arith.cmpf oge, %93, %94 : vector<12x256xf32>
    %cst_43 = arith.constant 5.000000e-02 : f32
    %96 = vector.broadcast %cst_43 : f32 to vector<12x256xf32>
    %97 = arith.mulf %96, %93 : vector<12x256xf32>
    %98 = arith.select %95, %93, %97 : vector<12x256xi1>, vector<12x256xf32>
    %c0_44 = arith.constant 0 : index
    %c0_45 = arith.constant 0 : index
    %c0_46 = arith.constant 0 : index
    %99 = vector.load %arg15[%c0_44, %c0_45, %c0_46] : memref<1x12x256xf32, #tpu.memory_space<vmem>>, vector<1x12x256xf32>
    %100 = vector.shape_cast %99 : vector<1x12x256xf32> to vector<12x256xf32>
    %101 = vector.shape_cast %98 : vector<12x256xf32> to vector<1x12x256xf32>
    tpu.vector_store %arg15[%c0_44, %c0_45, %c0_46], %101 {strides = array<i32>} : memref<1x12x256xf32, #tpu.memory_space<vmem>>, vector<1x12x256xf32>,
    return
  }
  func.func @transform_0(%arg0: i32, %arg1: i32) -> (i32, i32, i32) {
    %c0_i32 = arith.constant 0 : i32
    %c0_i32_0 = arith.constant 0 : i32
    return %arg0, %c0_i32, %arg1 : i32, i32, i32
  }
  func.func @transform_1(%arg0: i32, %arg1: i32) -> (i32, i32, i32, i32) {
    %c0_i32 = arith.constant 0 : i32
    %c0_i32_0 = arith.constant 0 : i32
    %c0_i32_1 = arith.constant 0 : i32
    return %arg0, %arg1, %c0_i32, %c0_i32_0 : i32, i32, i32, i32
  }
  func.func @transform_2(%arg0: i32, %arg1: i32) -> (i32, i32, i32) {
    %c0_i32 = arith.constant 0 : i32
    %c0_i32_0 = arith.constant 0 : i32
    return %arg0, %c0_i32, %arg1 : i32, i32, i32
  }
  func.func @transform_3(%arg0: i32, %arg1: i32) -> (i32, i32) {
    %c0_i32 = arith.constant 0 : i32
    %c0_i32_0 = arith.constant 0 : i32
    %c0_i32_1 = arith.constant 0 : i32
    return %c0_i32, %c0_i32_0 : i32, i32
  }
  func.func @transform_4(%arg0: i32, %arg1: i32) -> (i32, i32) {
    %c0_i32 = arith.constant 0 : i32
    %c0_i32_0 = arith.constant 0 : i32
    %c0_i32_1 = arith.constant 0 : i32
    return %c0_i32, %c0_i32_0 : i32, i32
  }
  func.func @transform_5(%arg0: i32, %arg1: i32) -> (i32, i32) {
    %c0_i32 = arith.constant 0 : i32
    %c0_i32_0 = arith.constant 0 : i32
    %c0_i32_1 = arith.constant 0 : i32
    return %c0_i32, %c0_i32_0 : i32, i32
  }
  func.func @transform_6(%arg0: i32, %arg1: i32) -> (i32, i32) {
    %c0_i32 = arith.constant 0 : i32
    %c0_i32_0 = arith.constant 0 : i32
    %c0_i32_1 = arith.constant 0 : i32
    return %c0_i32, %c0_i32_0 : i32, i32
  }
  func.func @transform_7(%arg0: i32, %arg1: i32) -> (i32, i32) {
    %c0_i32 = arith.constant 0 : i32
    %c0_i32_0 = arith.constant 0 : i32
    %c0_i32_1 = arith.constant 0 : i32
    return %c0_i32, %c0_i32_0 : i32, i32
  }
  func.func @transform_8(%arg0: i32, %arg1: i32) -> (i32, i32) {
    %c0_i32 = arith.constant 0 : i32
    %c0_i32_0 = arith.constant 0 : i32
    %c0_i32_1 = arith.constant 0 : i32
    return %c0_i32, %c0_i32_0 : i32, i32
  }
  func.func @transform_9(%arg0: i32, %arg1: i32) -> (i32, i32) {
    %c0_i32 = arith.constant 0 : i32
    %c0_i32_0 = arith.constant 0 : i32
    %c0_i32_1 = arith.constant 0 : i32
    return %c0_i32, %c0_i32_0 : i32, i32
  }
  func.func @transform_10(%arg0: i32, %arg1: i32) -> (i32, i32) {
    %c0_i32 = arith.constant 0 : i32
    %c0_i32_0 = arith.constant 0 : i32
    %c0_i32_1 = arith.constant 0 : i32
    return %c0_i32, %c0_i32_0 : i32, i32
  }
  func.func @transform_11(%arg0: i32, %arg1: i32) -> (i32, i32) {
    %c0_i32 = arith.constant 0 : i32
    %c0_i32_0 = arith.constant 0 : i32
    %c0_i32_1 = arith.constant 0 : i32
    return %c0_i32, %c0_i32_0 : i32, i32
  }
  func.func @transform_12(%arg0: i32, %arg1: i32) -> (i32, i32) {
    %c0_i32 = arith.constant 0 : i32
    %c0_i32_0 = arith.constant 0 : i32
    %c0_i32_1 = arith.constant 0 : i32
    return %c0_i32, %c0_i32_0 : i32, i32
  }
  func.func @transform_13(%arg0: i32, %arg1: i32) -> (i32, i32, i32) {
    %c0_i32 = arith.constant 0 : i32
    %c0_i32_0 = arith.constant 0 : i32
    return %arg0, %c0_i32, %arg1 : i32, i32, i32
  }
}

</mosaic_0001>

<llo_original>
// kernel: sesf_forward.1
$region0: #{sesf_forward.1}
  #allocation0 [shape = 'u32[]', space=smem, size = 0x4, offset = 0x4, fixed_abs, tag = 'smem constant byte address 0x4 - core index']
  #allocation1 [shape = 'u32[72,128]{1,0:T(1,128)}', space=vmem, size = 0x9000, scoped, tag = 'internal scratch']
  %s0 = inlined_call_operand.vmem [shape: f32[2,12,256], index: 0, kind: input, shape index: {}]
  %s1 = inlined_call_operand.vmem [shape: f32[2,1,12,32], index: 1, kind: input, shape index: {}]
  %s2 = inlined_call_operand.vmem [shape: f32[2,3,256], index: 2, kind: input, shape index: {}]
  %s3 = inlined_call_operand.vmem [shape: f32[1,256], index: 3, kind: input, shape index: {}]
  %s4 = inlined_call_operand.vmem [shape: f32[1,256], index: 4, kind: input, shape index: {}]
  %s5 = inlined_call_operand.vmem [shape: f32[128,12], index: 5, kind: input, shape index: {}]
  %s6 = inlined_call_operand.vmem [shape: f32[128,1], index: 6, kind: input, shape index: {}]
  %s7 = inlined_call_operand.vmem [shape: f32[9,104], index: 7, kind: input, shape index: {}]
  %s8 = inlined_call_operand.vmem [shape: f32[9,1], index: 8, kind: input, shape index: {}]
  %s9 = inlined_call_operand.vmem [shape: f32[144,24], index: 9, kind: input, shape index: {}]
  %s10 = inlined_call_operand.vmem [shape: f32[12,1], index: 10, kind: input, shape index: {}]
  %s11 = inlined_call_operand.vmem [shape: f32[12,36], index: 11, kind: input, shape index: {}]
  %s12 = inlined_call_operand.vmem [shape: f32[12,1], index: 12, kind: input, shape index: {}]
  %s13 = inlined_call_operand.vmem [shape: f32[2,12,256], index: 13, kind: output, shape index: {}]
  %s14 = sld [smem:[#allocation0]]
  $region85: #{sesf_forward.1} parent=0
    _
  %s16 = ssub.s32 1, %s14
  %s17 = scalar_select 0, %s16, %s14
  loop: start=0, step=1, limit=4
  $region2: #{sesf_forward.1} parent=0 // loop_pre_header
    _
  $region3: #{sesf_forward.1} parent=0 // loop_header
    %s19 = sphi 0, %s23
    %p20 = scmp.ge.s32.totalorder %s19, 4
    %s26 = sphi 0, %s38
    %s27 = sphi 0, %s34
    %s28 = sphi 0, %s26
    %s29 = sphi 0, %s27
    %s30 = sphi 0, %s28
    %s31 = sphi 0, %s29
    %s43 = sphi 0, %s45
    %s46 = sphi 0, %s43
    %s47 = sphi 0, %s46
    %s63 = sphi 0, %s47
    %s71 = sphi 0, %s73
    %s74 = sphi 0, %s71
    %s75 = sphi 0, %s74
    %s91 = sphi 0, %s75
    %s99 = sphi 0, %s101
    %s102 = sphi 0, %s99
    %s103 = sphi 0, %s102
    %s119 = sphi 0, %s103
    %s123 = sphi 0, %s123
    %s125 = sphi 0, %s123
    %s126 = sphi 0, %s125
    %s140 = sphi 0, %s126
    %s144 = sphi 0, %s144
    %s146 = sphi 0, %s144
    %s147 = sphi 0, %s146
    %s161 = sphi 0, %s147
    %s165 = sphi 0, %s165
    %s167 = sphi 0, %s165
    %s168 = sphi 0, %s167
    %s182 = sphi 0, %s168
    %s186 = sphi 0, %s186
    %s188 = sphi 0, %s186
    %s189 = sphi 0, %s188
    %s203 = sphi 0, %s189
    %s207 = sphi 0, %s207
    %s209 = sphi 0, %s207
    %s210 = sphi 0, %s209
    %s224 = sphi 0, %s210
    %s228 = sphi 0, %s228
    %s230 = sphi 0, %s228
    %s231 = sphi 0, %s230
    %s245 = sphi 0, %s231
    %s249 = sphi 0, %s249
    %s251 = sphi 0, %s249
    %s252 = sphi 0, %s251
    %s266 = sphi 0, %s252
    %s270 = sphi 0, %s270
    %s272 = sphi 0, %s270
    %s273 = sphi 0, %s272
    %s287 = sphi 0, %s273
    %s291 = sphi 0, %s291
    %s293 = sphi 0, %s291
    %s294 = sphi 0, %s293
    %s308 = sphi 0, %s294
    %s312 = sphi 0, %s312
    %s314 = sphi 0, %s312
    %s315 = sphi 0, %s314
    %s329 = sphi 0, %s315
    %s337 = sphi 0, %s339
    %s340 = sphi 0, %s337
    %s341 = sphi 0, %s340
    %s357 = sphi 0, %s341
  $region4: #{sesf_forward.1} parent=0 // loop_header_branch
    %22 = sbr.rel (%p20) target = $region8
  $region5: #{sesf_forward.1} parent=0 // loop_body
    %s24 = ssub.s32 %s19, 1
    %s25 = ssub.s32 %s19, 2
    %s32 = sadd.s32 1, %s27
    %p33 = scmp.ge.s32.totalorder %s32, 1
    %s34 = scalar_select %p33, 0, %s32
    %s35 = sadd.s32 1, %s26
    %s36 = scalar_select %p33, %s35, %s26
    %p37 = scmp.ge.s32.totalorder %s36, 2
    %s38 = scalar_select %p37, 0, %s36
    %s39 = ssub.s32 %s26, %s38
    %s40 = ssub.s32 %s27, %s34
    %s41 = sor.u32 %s39, %s40
    %p42 = scmp.eq.s32.totalorder %s41, 0
    %s44 = sadd.s32 %s43, 1
    %s45 = scalar_select %p42, %s43, %s44
    %p48 = pneg %p42
    %p49 = scmp.eq.s32.totalorder %s19, 1
    %p50 = por %p48, %p49
    %p51 = scmp.ne.s32.totalorder %s43, %s46
    %p52 = scmp.eq.s32.totalorder %s19, 0
    %p53 = por %p51, %p52
    %p54 = scmp.ne.s32.totalorder %s43, %s46
    %p55 = scmp.eq.s32.totalorder %s24, 1
    %p56 = por %p54, %p55
    %p57 = scmp.ne.s32.totalorder %s46, %s47
    %p58 = scmp.eq.s32.totalorder %s24, 0
    %p59 = por %p57, %p58
    %p60 = scmp.ne.s32.totalorder %s46, %s47
    %p61 = scmp.eq.s32.totalorder %s25, 1
    %p62 = por %p60, %p61
    %p64 = scmp.ne.s32.totalorder %s47, %s63
    %p65 = scmp.eq.s32.totalorder %s25, 0
    %p66 = por %p64, %p65
    %s67 = ssub.s32 %s26, %s38
    %s68 = ssub.s32 %s27, %s34
    %s69 = sor.u32 %s67, %s68
    %p70 = scmp.eq.s32.totalorder %s69, 0
    %s72 = sadd.s32 %s71, 1
    %s73 = scalar_select %p70, %s71, %s72
    %p76 = pneg %p70
    %p77 = scmp.eq.s32.totalorder %s19, 1
    %p78 = por %p76, %p77
    %p79 = scmp.ne.s32.totalorder %s71, %s74
    %p80 = scmp.eq.s32.totalorder %s19, 0
    %p81 = por %p79, %p80
    %p82 = scmp.ne.s32.totalorder %s71, %s74
    %p83 = scmp.eq.s32.totalorder %s24, 1
    %p84 = por %p82, %p83
    %p85 = scmp.ne.s32.totalorder %s74, %s75
    %p86 = scmp.eq.s32.totalorder %s24, 0
    %p87 = por %p85, %p86
    %p88 = scmp.ne.s32.totalorder %s74, %s75
    %p89 = scmp.eq.s32.totalorder %s25, 1
    %p90 = por %p88, %p89
    %p92 = scmp.ne.s32.totalorder %s75, %s91
    %p93 = scmp.eq.s32.totalorder %s25, 0
    %p94 = por %p92, %p93
    %s95 = ssub.s32 %s26, %s38
    %s96 = ssub.s32 %s27, %s34
    %s97 = sor.u32 %s95, %s96
    %p98 = scmp.eq.s32.totalorder %s97, 0
    %s100 = sadd.s32 %s99, 1
    %s101 = scalar_select %p98, %s99, %s100
    %p104 = pneg %p98
    %p105 = scmp.eq.s32.totalorder %s19, 1
    %p106 = por %p104, %p105
    %p107 = scmp.ne.s32.totalorder %s99, %s102
    %p108 = scmp.eq.s32.totalorder %s19, 0
    %p109 = por %p107, %p108
    %p110 = scmp.ne.s32.totalorder %s99, %s102
    %p111 = scmp.eq.s32.totalorder %s24, 1
    %p112 = por %p110, %p111
    %p113 = scmp.ne.s32.totalorder %s102, %s103
    %p114 = scmp.eq.s32.totalorder %s24, 0
    %p115 = por %p113, %p114
    %p116 = scmp.ne.s32.totalorder %s102, %s103
    %p117 = scmp.eq.s32.totalorder %s25, 1
    %p118 = por %p116, %p117
    %p120 = scmp.ne.s32.totalorder %s103, %s119
    %p121 = scmp.eq.s32.totalorder %s25, 0
    %p122 = por %p120, %p121
    %s124 = sadd.s32 %s123, 1
    %p127 = scmp.eq.s32.totalorder %s19, 1
    %p128 = scmp.ne.s32.totalorder %s123, %s125
    %p129 = scmp.eq.s32.totalorder %s19, 0
    %p130 = por %p128, %p129
    %p131 = scmp.ne.s32.totalorder %s123, %s125
    %p132 = scmp.eq.s32.totalorder %s24, 1
    %p133 = por %p131, %p132
    %p134 = scmp.ne.s32.totalorder %s125, %s126
    %p135 = scmp.eq.s32.totalorder %s24, 0
    %p136 = por %p134, %p135
    %p137 = scmp.ne.s32.totalorder %s125, %s126
    %p138 = scmp.eq.s32.totalorder %s25, 1
    %p139 = por %p137, %p138
    %p141 = scmp.ne.s32.totalorder %s126, %s140
    %p142 = scmp.eq.s32.totalorder %s25, 0
    %p143 = por %p141, %p142
    %s145 = sadd.s32 %s144, 1
    %p148 = scmp.eq.s32.totalorder %s19, 1
    %p149 = scmp.ne.s32.totalorder %s144, %s146
    %p150 = scmp.eq.s32.totalorder %s19, 0
    %p151 = por %p149, %p150
    %p152 = scmp.ne.s32.totalorder %s144, %s146
    %p153 = scmp.eq.s32.totalorder %s24, 1
    %p154 = por %p152, %p153
    %p155 = scmp.ne.s32.totalorder %s146, %s147
    %p156 = scmp.eq.s32.totalorder %s24, 0
    %p157 = por %p155, %p156
    %p158 = scmp.ne.s32.totalorder %s146, %s147
    %p159 = scmp.eq.s32.totalorder %s25, 1
    %p160 = por %p158, %p159
    %p162 = scmp.ne.s32.totalorder %s147, %s161
    %p163 = scmp.eq.s32.totalorder %s25, 0
    %p164 = por %p162, %p163
    %s166 = sadd.s32 %s165, 1
    %p169 = scmp.eq.s32.totalorder %s19, 1
    %p170 = scmp.ne.s32.totalorder %s165, %s167
    %p171 = scmp.eq.s32.totalorder %s19, 0
    %p172 = por %p170, %p171
    %p173 = scmp.ne.s32.totalorder %s165, %s167
    %p174 = scmp.eq.s32.totalorder %s24, 1
    %p175 = por %p173, %p174
    %p176 = scmp.ne.s32.totalorder %s167, %s168
    %p177 = scmp.eq.s32.totalorder %s24, 0
    %p178 = por %p176, %p177
    %p179 = scmp.ne.s32.totalorder %s167, %s168
    %p180 = scmp.eq.s32.totalorder %s25, 1
    %p181 = por %p179, %p180
    %p183 = scmp.ne.s32.totalorder %s168, %s182
    %p184 = scmp.eq.s32.totalorder %s25, 0
    %p185 = por %p183, %p184
    %s187 = sadd.s32 %s186, 1
    %p190 = scmp.eq.s32.totalorder %s19, 1
    %p191 = scmp.ne.s32.totalorder %s186, %s188
    %p192 = scmp.eq.s32.totalorder %s19, 0
    %p193 = por %p191, %p192
    %p194 = scmp.ne.s32.totalorder %s186, %s188
    %p195 = scmp.eq.s32.totalorder %s24, 1
    %p196 = por %p194, %p195
    %p197 = scmp.ne.s32.totalorder %s188, %s189
    %p198 = scmp.eq.s32.totalorder %s24, 0
    %p199 = por %p197, %p198
    %p200 = scmp.ne.s32.totalorder %s188, %s189
    %p201 = scmp.eq.s32.totalorder %s25, 1
    %p202 = por %p200, %p201
    %p204 = scmp.ne.s32.totalorder %s189, %s203
    %p205 = scmp.eq.s32.totalorder %s25, 0
    %p206 = por %p204, %p205
    %s208 = sadd.s32 %s207, 1
    %p211 = scmp.eq.s32.totalorder %s19, 1
    %p212 = scmp.ne.s32.totalorder %s207, %s209
    %p213 = scmp.eq.s32.totalorder %s19, 0
    %p214 = por %p212, %p213
    %p215 = scmp.ne.s32.totalorder %s207, %s209
    %p216 = scmp.eq.s32.totalorder %s24, 1
    %p217 = por %p215, %p216
    %p218 = scmp.ne.s32.totalorder %s209, %s210
    %p219 = scmp.eq.s32.totalorder %s24, 0
    %p220 = por %p218, %p219
    %p221 = scmp.ne.s32.totalorder %s209, %s210
    %p222 = scmp.eq.s32.totalorder %s25, 1
    %p223 = por %p221, %p222
    %p225 = scmp.ne.s32.totalorder %s210, %s224
    %p226 = scmp.eq.s32.totalorder %s25, 0
    %p227 = por %p225, %p226
    %s229 = sadd.s32 %s228, 1
    %p232 = scmp.eq.s32.totalorder %s19, 1
    %p233 = scmp.ne.s32.totalorder %s228, %s230
    %p234 = scmp.eq.s32.totalorder %s19, 0
    %p235 = por %p233, %p234
    %p236 = scmp.ne.s32.totalorder %s228, %s230
    %p237 = scmp.eq.s32.totalorder %s24, 1
    %p238 = por %p236, %p237
    %p239 = scmp.ne.s32.totalorder %s230, %s231
    %p240 = scmp.eq.s32.totalorder %s24, 0
    %p241 = por %p239, %p240
    %p242 = scmp.ne.s32.totalorder %s230, %s231
    %p243 = scmp.eq.s32.totalorder %s25, 1
    %p244 = por %p242, %p243
    %p246 = scmp.ne.s32.totalorder %s231, %s245
    %p247 = scmp.eq.s32.totalorder %s25, 0
    %p248 = por %p246, %p247
    %s250 = sadd.s32 %s249, 1
    %p253 = scmp.eq.s32.totalorder %s19, 1
    %p254 = scmp.ne.s32.totalorder %s249, %s251
    %p255 = scmp.eq.s32.totalorder %s19, 0
    %p256 = por %p254, %p255
    %p257 = scmp.ne.s32.totalorder %s249, %s251
    %p258 = scmp.eq.s32.totalorder %s24, 1
    %p259 = por %p257, %p258
    %p260 = scmp.ne.s32.totalorder %s251, %s252
    %p261 = scmp.eq.s32.totalorder %s24, 0
    %p262 = por %p260, %p261
    %p263 = scmp.ne.s32.totalorder %s251, %s252
    %p264 = scmp.eq.s32.totalorder %s25, 1
    %p265 = por %p263, %p264
    %p267 = scmp.ne.s32.totalorder %s252, %s266
    %p268 = scmp.eq.s32.totalorder %s25, 0
    %p269 = por %p267, %p268
    %s271 = sadd.s32 %s270, 1
    %p274 = scmp.eq.s32.totalorder %s19, 1
    %p275 = scmp.ne.s32.totalorder %s270, %s272
    %p276 = scmp.eq.s32.totalorder %s19, 0
    %p277 = por %p275, %p276
    %p278 = scmp.ne.s32.totalorder %s270, %s272
    %p279 = scmp.eq.s32.totalorder %s24, 1
    %p280 = por %p278, %p279
    %p281 = scmp.ne.s32.totalorder %s272, %s273
    %p282 = scmp.eq.s32.totalorder %s24, 0
    %p283 = por %p281, %p282
    %p284 = scmp.ne.s32.totalorder %s272, %s273
    %p285 = scmp.eq.s32.totalorder %s25, 1
    %p286 = por %p284, %p285
    %p288 = scmp.ne.s32.totalorder %s273, %s287
    %p289 = scmp.eq.s32.totalorder %s25, 0
    %p290 = por %p288, %p289
    %s292 = sadd.s32 %s291, 1
    %p295 = scmp.eq.s32.totalorder %s19, 1
    %p296 = scmp.ne.s32.totalorder %s291, %s293
    %p297 = scmp.eq.s32.totalorder %s19, 0
    %p298 = por %p296, %p297
    %p299 = scmp.ne.s32.totalorder %s291, %s293
    %p300 = scmp.eq.s32.totalorder %s24, 1
    %p301 = por %p299, %p300
    %p302 = scmp.ne.s32.totalorder %s293, %s294
    %p303 = scmp.eq.s32.totalorder %s24, 0
    %p304 = por %p302, %p303
    %p305 = scmp.ne.s32.totalorder %s293, %s294
    %p306 = scmp.eq.s32.totalorder %s25, 1
    %p307 = por %p305, %p306
    %p309 = scmp.ne.s32.totalorder %s294, %s308
    %p310 = scmp.eq.s32.totalorder %s25, 0
    %p311 = por %p309, %p310
    %s313 = sadd.s32 %s312, 1
    %p316 = scmp.eq.s32.totalorder %s19, 1
    %p317 = scmp.ne.s32.totalorder %s312, %s314
    %p318 = scmp.eq.s32.totalorder %s19, 0
    %p319 = por %p317, %p318
    %p320 = scmp.ne.s32.totalorder %s312, %s314
    %p321 = scmp.eq.s32.totalorder %s24, 1
    %p322 = por %p320, %p321
    %p323 = scmp.ne.s32.totalorder %s314, %s315
    %p324 = scmp.eq.s32.totalorder %s24, 0
    %p325 = por %p323, %p324
    %p326 = scmp.ne.s32.totalorder %s314, %s315
    %p327 = scmp.eq.s32.totalorder %s25, 1
    %p328 = por %p326, %p327
    %p330 = scmp.ne.s32.totalorder %s315, %s329
    %p331 = scmp.eq.s32.totalorder %s25, 0
    %p332 = por %p330, %p331
    %s333 = ssub.s32 %s26, %s38
    %s334 = ssub.s32 %s27, %s34
    %s335 = sor.u32 %s333, %s334
    %p336 = scmp.eq.s32.totalorder %s335, 0
    %s338 = sadd.s32 %s337, 1
    %s339 = scalar_select %p336, %s337, %s338
    %p342 = pneg %p336
    %p343 = scmp.eq.s32.totalorder %s19, 1
    %p344 = por %p342, %p343
    %p345 = scmp.ne.s32.totalorder %s337, %s340
    %p346 = scmp.eq.s32.totalorder %s19, 0
    %p347 = por %p345, %p346
    %p348 = scmp.ne.s32.totalorder %s337, %s340
    %p349 = scmp.eq.s32.totalorder %s24, 1
    %p350 = por %p348, %p349
    %p351 = scmp.ne.s32.totalorder %s340, %s341
    %p352 = scmp.eq.s32.totalorder %s24, 0
    %p353 = por %p351, %p352
    %p354 = scmp.ne.s32.totalorder %s340, %s341
    %p355 = scmp.eq.s32.totalorder %s25, 1
    %p356 = por %p354, %p355
    %p358 = scmp.ne.s32.totalorder %s341, %s357
    %p359 = scmp.eq.s32.totalorder %s25, 0
    %p360 = por %p358, %p359
    %p361 = scmp.le.s32.totalorder 1, %s19
    %p362 = scmp.lt.s32.totalorder %s19, 3
    %p363 = pnand %p361, %p362
    %p364 = pneg %p363
    // Predicated region
    $region9: #{sesf_forward.1} parent=5 // pred_check
      _
    $region10: #{sesf_forward.1} parent=5 // pred_check_branch
      %366 = sbr.rel (%p363) target = $region12
    $region11: #{sesf_forward.1} parent=5 // pred_region
      %s367 = ssub.s32 %s19, 1
      // Predicated region
      $region13: #{sesf_forward.1} parent=11 // pred_check
        %p368 = pneg %p136
      $region14: #{sesf_forward.1} parent=11 // pred_check_branch
        %370 = sbr.rel (%p368) target = $region16
      $region15: #{sesf_forward.1} parent=11 // pred_region
        _
      $region16: #{sesf_forward.1} parent=11 // pred_fallthru
        _
      // Predicated region
      $region17: #{sesf_forward.1} parent=11 // pred_check
        %p371 = pneg %p157
      $region18: #{sesf_forward.1} parent=11 // pred_check_branch
        %373 = sbr.rel (%p371) target = $region20
      $region19: #{sesf_forward.1} parent=11 // pred_region
        _
      $region20: #{sesf_forward.1} parent=11 // pred_fallthru
        _
      // Predicated region
      $region21: #{sesf_forward.1} parent=11 // pred_check
        %p374 = pneg %p178
      $region22: #{sesf_forward.1} parent=11 // pred_check_branch
        %376 = sbr.rel (%p374) target = $region24
      $region23: #{sesf_forward.1} parent=11 // pred_region
        _
      $region24: #{sesf_forward.1} parent=11 // pred_fallthru
        _
      // Predicated region
      $region25: #{sesf_forward.1} parent=11 // pred_check
        %p377 = pneg %p199
      $region26: #{sesf_forward.1} parent=11 // pred_check_branch
        %379 = sbr.rel (%p377) target = $region28
      $region27: #{sesf_forward.1} parent=11 // pred_region
        _
      $region28: #{sesf_forward.1} parent=11 // pred_fallthru
        _
      // Predicated region
      $region29: #{sesf_forward.1} parent=11 // pred_check
        %p380 = pneg %p220
      $region30: #{sesf_forward.1} parent=11 // pred_check_branch
        %382 = sbr.rel (%p380) target = $region32
      $region31: #{sesf_forward.1} parent=11 // pred_region
        _
      $region32: #{sesf_forward.1} parent=11 // pred_fallthru
        _
      // Predicated region
      $region33: #{sesf_forward.1} parent=11 // pred_check
        %p383 = pneg %p241
      $region34: #{sesf_forward.1} parent=11 // pred_check_branch
        %385 = sbr.rel (%p383) target = $region36
      $region35: #{sesf_forward.1} parent=11 // pred_region
        _
      $region36: #{sesf_forward.1} parent=11 // pred_fallthru
        _
      // Predicated region
      $region37: #{sesf_forward.1} parent=11 // pred_check
        %p386 = pneg %p262
      $region38: #{sesf_forward.1} parent=11 // pred_check_branch
        %388 = sbr.rel (%p386) target = $region40
      $region39: #{sesf_forward.1} parent=11 // pred_region
        _
      $region40: #{sesf_forward.1} parent=11 // pred_fallthru
        _
      // Predicated region
      $region41: #{sesf_forward.1} parent=11 // pred_check
        %p389 = pneg %p283
      $region42: #{sesf_forward.1} parent=11 // pred_check_branch
        %391 = sbr.rel (%p389) target = $region44
      $region43: #{sesf_forward.1} parent=11 // pred_region
        _
      $region44: #{sesf_forward.1} parent=11 // pred_fallthru
        _
      // Predicated region
      $region45: #{sesf_forward.1} parent=11 // pred_check
        %p392 = pneg %p304
      $region46: #{sesf_forward.1} parent=11 // pred_check_branch
        %394 = sbr.rel (%p392) target = $region48
      $region47: #{sesf_forward.1} parent=11 // pred_region
        _
      $region48: #{sesf_forward.1} parent=11 // pred_fallthru
        _
      // Predicated region
      $region49: #{sesf_forward.1} parent=11 // pred_check
        %p395 = pneg %p325
      $region50: #{sesf_forward.1} parent=11 // pred_check_branch
        %397 = sbr.rel (%p395) target = $region52
      $region51: #{sesf_forward.1} parent=11 // pred_region
        _
      $region52: #{sesf_forward.1} parent=11 // pred_fallthru
        _
    $region12: #{sesf_forward.1} parent=5 // pred_fallthru
      _
    %p398 = scmp.lt.s32.totalorder %s19, 2
    // Predicated region
    $region53: #{sesf_forward.1} parent=5 // pred_check
      %p399 = pneg %p398
    $region54: #{sesf_forward.1} parent=5 // pred_check_branch
      %401 = sbr.rel (%p399) target = $region56
    $region55: #{sesf_forward.1} parent=5 // pred_region
      // Predicated region
      $region57: #{sesf_forward.1} parent=55 // pred_check
        %p402 = pneg %p53
      $region58: #{sesf_forward.1} parent=55 // pred_check_branch
        %404 = sbr.rel (%p402) target = $region60
      $region59: #{sesf_forward.1} parent=55 // pred_region
        %s405 = smul.u32 2, %s27
        %p406 = scmp.lt.s32.totalorder %s26, 1
        %s407 = scalar_select %p406, %s26, 1
        %p408 = scmp.lt.s32.totalorder %s405, 1
        %s409 = scalar_select %p408, %s405, 1
        %s410 = smul.addr %s407, 4
        %s411 = sadd.s32 %s409, %s410
        %s412 = smul.addr %s411, 8
        %s413 = scalar_lea.vmem %s0, %s412
        %s414 = smul.u32 2, %s27
      $region60: #{sesf_forward.1} parent=55 // pred_fallthru
        _
      // Predicated region
      $region61: #{sesf_forward.1} parent=55 // pred_check
        %p415 = pneg %p81
      $region62: #{sesf_forward.1} parent=55 // pred_check_branch
        %417 = sbr.rel (%p415) target = $region64
      $region63: #{sesf_forward.1} parent=55 // pred_region
        %p418 = scmp.lt.s32.totalorder %s26, 1
        %s419 = scalar_select %p418, %s26, 1
        %p420 = scmp.lt.s32.totalorder %s27, 0
        %s421 = scalar_select %p420, %s27, 0
        %s422 = smul.addr %s421, 2
        %s423 = smul.addr %s419, 2
        %s424 = sadd.s32 %s422, %s423
        %s425 = smul.addr %s424, 8
        %s426 = scalar_lea.vmem %s1, %s425
      $region64: #{sesf_forward.1} parent=55 // pred_fallthru
        _
      // Predicated region
      $region65: #{sesf_forward.1} parent=55 // pred_check
        %p427 = pneg %p109
      $region66: #{sesf_forward.1} parent=55 // pred_check_branch
        %429 = sbr.rel (%p427) target = $region68
      $region67: #{sesf_forward.1} parent=55 // pred_region
        %s430 = smul.u32 2, %s27
        %p431 = scmp.lt.s32.totalorder %s26, 1
        %s432 = scalar_select %p431, %s26, 1
        %p433 = scmp.lt.s32.totalorder %s430, 1
        %s434 = scalar_select %p433, %s430, 1
        %s435 = smul.addr %s432, 2
        %s436 = sadd.s32 %s434, %s435
        %s437 = smul.addr %s436, 4
        %s438 = scalar_lea.vmem %s2, %s437
        %s439 = smul.u32 2, %s27
      $region68: #{sesf_forward.1} parent=55 // pred_fallthru
        _
    $region56: #{sesf_forward.1} parent=5 // pred_fallthru
      _
    %p440 = scmp.le.s32.totalorder 1, %s19
    %p441 = scmp.lt.s32.totalorder %s19, 3
    %p442 = pnand %p440, %p441
    %p443 = pneg %p442
    // Predicated region
    $region69: #{sesf_forward.1} parent=5 // pred_check
      _
    $region70: #{sesf_forward.1} parent=5 // pred_check_branch
      %445 = sbr.rel (%p442) target = $region72
    $region71: #{sesf_forward.1} parent=5 // pred_region
      %s446 = ssub.s32 %s19, 1
      %s447 = smul.u32 2, %s29
      %p448 = scmp.lt.s32.totalorder %s28, 1
      %s449 = scalar_select %p448, %s28, 1
      %p450 = scmp.lt.s32.totalorder %s447, 1
      %s451 = scalar_select %p450, %s447, 1
      %s452 = smul.addr %s449, 4
      %s453 = sadd.s32 %s451, %s452
      %s454 = smul.addr %s453, 8
      %s455 = scalar_lea.vmem %s0, %s454
      %p456 = pneg %p59
      %p457 = pneg %p56
      %p458 = scmp.lt.s32.totalorder %s28, 1
      %s459 = scalar_select %p458, %s28, 1
      %p460 = scmp.lt.s32.totalorder %s29, 0
      %s461 = scalar_select %p460, %s29, 0
      %s462 = smul.addr %s461, 2
      %s463 = smul.addr %s459, 2
      %s464 = sadd.s32 %s462, %s463
      %s465 = smul.addr %s464, 8
      %s466 = scalar_lea.vmem %s1, %s465
      %p467 = pneg %p87
      %p468 = pneg %p84
      %s469 = smul.u32 2, %s29
      %p470 = scmp.lt.s32.totalorder %s28, 1
      %s471 = scalar_select %p470, %s28, 1
      %p472 = scmp.lt.s32.totalorder %s469, 1
      %s473 = scalar_select %p472, %s469, 1
      %s474 = smul.addr %s471, 2
      %s475 = sadd.s32 %s473, %s474
      %s476 = smul.addr %s475, 4
      %s477 = scalar_lea.vmem %s2, %s476
      %p478 = pneg %p115
      %p479 = pneg %p112
      %p480 = pneg %p136
      %p481 = pneg %p133
      %p482 = pneg %p157
      %p483 = pneg %p154
      %p484 = pneg %p178
      %p485 = pneg %p175
      %p486 = pneg %p199
      %p487 = pneg %p196
      %p488 = pneg %p220
      %p489 = pneg %p217
      %p490 = pneg %p241
      %p491 = pneg %p238
      %p492 = pneg %p262
      %p493 = pneg %p259
      %p494 = pneg %p283
      %p495 = pneg %p280
      %p496 = pneg %p304
      %p497 = pneg %p301
      %p498 = pneg %p325
      %p499 = pneg %p322
      %p500 = pneg %p353
      %p501 = pneg %p350
      %s502 = smul.u32 2, %s29
      %p503 = scmp.lt.s32.totalorder %s28, 1
      %s504 = scalar_select %p503, %s28, 1
      %p505 = scmp.lt.s32.totalorder %s502, 1
      %s506 = scalar_select %p505, %s502, 1
      %s507 = smul.addr %s504, 4
      %s508 = sadd.s32 %s506, %s507
      %s509 = smul.addr %s508, 8
      %s510 = scalar_lea.vmem %s13, %s509
      %s511 = smul.u32 2, %s29
      %p512 = scmp.lt.s32.totalorder %s28, 1
      %s513 = scalar_select %p512, %s28, 1
      %p514 = scmp.lt.s32.totalorder %s511, 1
      %s515 = scalar_select %p514, %s511, 1
      %s516 = smul.addr %s513, 4
      %s517 = sadd.s32 %s515, %s516
      %s518 = smul.addr %s517, 8
      %s519 = scalar_lea.vmem %s0, %s518
      %s520 = smul.u32 2, %s29
      %p521 = scmp.lt.s32.totalorder %s28, 1
      %s522 = scalar_select %p521, %s28, 1
      %p523 = scmp.lt.s32.totalorder %s29, 0
      %s524 = scalar_select %p523, %s29, 0
      %s525 = smul.addr %s524, 2
      %s526 = smul.addr %s522, 2
      %s527 = sadd.s32 %s525, %s526
      %s528 = smul.addr %s527, 8
      %s529 = scalar_lea.vmem %s1, %s528
      %s530 = smul.u32 2, %s29
      %p531 = scmp.lt.s32.totalorder %s28, 1
      %s532 = scalar_select %p531, %s28, 1
      %p533 = scmp.lt.s32.totalorder %s530, 1
      %s534 = scalar_select %p533, %s530, 1
      %s535 = smul.addr %s532, 2
      %s536 = sadd.s32 %s534, %s535
      %s537 = smul.addr %s536, 4
      %s538 = scalar_lea.vmem %s2, %s537
      %s539 = smul.u32 2, %s29
      %s540 = smul.u32 2, %s29
      %p541 = scmp.lt.s32.totalorder %s28, 1
      %s542 = scalar_select %p541, %s28, 1
      %p543 = scmp.lt.s32.totalorder %s540, 1
      %s544 = scalar_select %p543, %s540, 1
      %s545 = smul.addr %s542, 4
      %s546 = sadd.s32 %s544, %s545
      %s547 = smul.addr %s546, 8
      %s548 = scalar_lea.vmem %s13, %s547
      %s549 = smul.u32 2, %s29
      %v550 = vld [vmem:[%s519] sm:$0xff]
      %v551 = vld [vmem:[%s519 + $0x8] sm:$0xff]
      %v552 = vld [vmem:[%s519 + $0x10] sm:$0xf]
      %v553 = vld [vmem:[%s519 + $0x18] sm:$0xf]
      %v554 = vld [vmem:[%s529] sm:$0xff]
      %v555 = vld [vmem:[%s529 + $0x8] sm:$0xf]
      %v556 = vld [vmem:[%s5] sm:$0xff]
      %v557 = vld [vmem:[%s5 + $0x8] sm:$0xff]
      %v558 = vld [vmem:[%s5 + $0x10] sm:$0xff]
      %v559 = vld [vmem:[%s5 + $0x18] sm:$0xff]
      %v560 = vld [vmem:[%s5 + $0x20] sm:$0xff]
      %v561 = vld [vmem:[%s5 + $0x28] sm:$0xff]
      %v562 = vld [vmem:[%s5 + $0x30] sm:$0xff]
      %v563 = vld [vmem:[%s5 + $0x38] sm:$0xff]
      %v564 = vld [vmem:[%s5 + $0x40] sm:$0xff]
      %v565 = vld [vmem:[%s5 + $0x48] sm:$0xff]
      %v566 = vld [vmem:[%s5 + $0x50] sm:$0xff]
      %v567 = vld [vmem:[%s5 + $0x58] sm:$0xff]
      %v568 = vld [vmem:[%s5 + $0x60] sm:$0xff]
      %v569 = vld [vmem:[%s5 + $0x68] sm:$0xff]
      %v570 = vld [vmem:[%s5 + $0x70] sm:$0xff]
      %v571 = vld [vmem:[%s5 + $0x78] sm:$0xff]
      %v572 = vld [vmem:[%s6] sm:$0xff]
      %v573 = vld [vmem:[%s6 + $0x8] sm:$0xff]
      %v574 = vld [vmem:[%s6 + $0x10] sm:$0xff]
      %v575 = vld [vmem:[%s6 + $0x18] sm:$0xff]
      %v576 = vld [vmem:[%s6 + $0x20] sm:$0xff]
      %v577 = vld [vmem:[%s6 + $0x28] sm:$0xff]
      %v578 = vld [vmem:[%s6 + $0x30] sm:$0xff]
      %v579 = vld [vmem:[%s6 + $0x38] sm:$0xff]
      %v580 = vld [vmem:[%s6 + $0x40] sm:$0xff]
      %v581 = vld [vmem:[%s6 + $0x48] sm:$0xff]
      %v582 = vld [vmem:[%s6 + $0x50] sm:$0xff]
      %v583 = vld [vmem:[%s6 + $0x58] sm:$0xff]
      %v584 = vld [vmem:[%s6 + $0x60] sm:$0xff]
      %v585 = vld [vmem:[%s6 + $0x68] sm:$0xff]
      %v586 = vld [vmem:[%s6 + $0x70] sm:$0xff]
      %v587 = vld [vmem:[%s6 + $0x78] sm:$0xff]
      %589 = vset.pattern.permute.xlu0 0
      %590 = vperm.xlu0 %589, %v572
      %v591 = vpop.permute.xlu0 %590
      %594 = vset.pattern.permute.xlu0 0
      %595 = vperm.xlu0 %594, %v573
      %v596 = vpop.permute.xlu0 %595
      %599 = vset.pattern.permute.xlu0 0
      %600 = vperm.xlu0 %599, %v574
      %v601 = vpop.permute.xlu0 %600
      %604 = vset.pattern.permute.xlu0 0
      %605 = vperm.xlu0 %604, %v575
      %v606 = vpop.permute.xlu0 %605
      %609 = vset.pattern.permute.xlu0 0
      %610 = vperm.xlu0 %609, %v576
      %v611 = vpop.permute.xlu0 %610
      %614 = vset.pattern.permute.xlu0 0
      %615 = vperm.xlu0 %614, %v577
      %v616 = vpop.permute.xlu0 %615
      %619 = vset.pattern.permute.xlu0 0
      %620 = vperm.xlu0 %619, %v578
      %v621 = vpop.permute.xlu0 %620
      %624 = vset.pattern.permute.xlu0 0
      %625 = vperm.xlu0 %624, %v579
      %v626 = vpop.permute.xlu0 %625
      %629 = vset.pattern.permute.xlu0 0
      %630 = vperm.xlu0 %629, %v580
      %v631 = vpop.permute.xlu0 %630
      %634 = vset.pattern.permute.xlu0 0
      %635 = vperm.xlu0 %634, %v581
      %v636 = vpop.permute.xlu0 %635
      %639 = vset.pattern.permute.xlu0 0
      %640 = vperm.xlu0 %639, %v582
      %v641 = vpop.permute.xlu0 %640
      %644 = vset.pattern.permute.xlu0 0
      %645 = vperm.xlu0 %644, %v583
      %v646 = vpop.permute.xlu0 %645
      %649 = vset.pattern.permute.xlu0 0
      %650 = vperm.xlu0 %649, %v584
      %v651 = vpop.permute.xlu0 %650
      %654 = vset.pattern.permute.xlu0 0
      %655 = vperm.xlu0 %654, %v585
      %v656 = vpop.permute.xlu0 %655
      %659 = vset.pattern.permute.xlu0 0
      %660 = vperm.xlu0 %659, %v586
      %v661 = vpop.permute.xlu0 %660
      %664 = vset.pattern.permute.xlu0 0
      %665 = vperm.xlu0 %664, %v587
      %v666 = vpop.permute.xlu0 %665
      %vm668 = vcmask 97280
      %v670 = vsel %vm668, %v556, 0
      %v673 = vsel %vm668, %v557, 0
      %v676 = vsel %vm668, %v558, 0
      %v679 = vsel %vm668, %v559, 0
      %v682 = vsel %vm668, %v560, 0
      %v685 = vsel %vm668, %v561, 0
      %v688 = vsel %vm668, %v562, 0
      %v691 = vsel %vm668, %v563, 0
      %v694 = vsel %vm668, %v564, 0
      %v697 = vsel %vm668, %v565, 0
      %v700 = vsel %vm668, %v566, 0
      %v703 = vsel %vm668, %v567, 0
      %v706 = vsel %vm668, %v568, 0
      %v709 = vsel %vm668, %v569, 0
      %v712 = vsel %vm668, %v570, 0
      %v715 = vsel %vm668, %v571, 0
      %vm717 = vcmask 1043456
      %v719 = vsel %vm717, %v552, 0
      %v722 = vsel %vm717, %v553, 0
      %724 = vmatpush.msra.mxu0 0.0
      %725 = vmatpush.msra.mxu0 0.0
      %726 = vmatpush.msra.mxu0 0.0
      %727 = vmatpush.msra.mxu0 0.0
      %728 = vmatpush.msra.mxu0 0.0
      %729 = vmatpush.msra.mxu0 0.0
      %730 = vmatpush.msra.mxu0 0.0
      %731 = vmatpush.msra.mxu0 0.0
      %732 = vmatpush.msra.mxu0 0.0
      %733 = vmatpush.msra.mxu0 0.0
      %734 = vmatpush.msra.mxu0 0.0
      %735 = vmatpush.msra.mxu0 0.0
      %736 = vmatpush.msra.mxu0 0.0
      %737 = vmatpush.msra.mxu0 0.0
      %v738 = vand.u32 %v719, 4294901760
      %739 = vmatpush.msra.mxu0 %v738
      %v740 = vand.u32 %v550, 4294901760
      %741 = vmatpush.msra.mxu0 %v740
      %v742 = vand.u32 %v670, 4294901760
      %v743 = vsub.f32 %v670, %v742
      %v744 = vand.u32 %v743, 4294901760
      %v745 = vsub.f32 %v743, %v744
      %v746 = vand.u32 %v745, 4294901760
      %747 = vmatmul.f32.gmra.mxu0 %v746
      %v748 = vpop.f32.mrf.mxu0
      %v749 = vadd.f32 %v591, %v748
      %v750 = vand.u32 %v673, 4294901760
      %v751 = vsub.f32 %v673, %v750
      %v752 = vand.u32 %v751, 4294901760
      %v753 = vsub.f32 %v751, %v752
      %v754 = vand.u32 %v753, 4294901760
      %755 = vmatmul.f32.gmra.mxu0 %v754
      %v756 = vpop.f32.mrf.mxu0
      %v757 = vadd.f32 %v596, %v756
      %v758 = vand.u32 %v676, 4294901760
      %v759 = vsub.f32 %v676, %v758
      %v760 = vand.u32 %v759, 4294901760
      %v761 = vsub.f32 %v759, %v760
      %v762 = vand.u32 %v761, 4294901760
      %763 = vmatmul.f32.gmra.mxu0 %v762
      %v764 = vpop.f32.mrf.mxu0
      %v765 = vadd.f32 %v601, %v764
      %v766 = vand.u32 %v679, 4294901760
      %v767 = vsub.f32 %v679, %v766
      %v768 = vand.u32 %v767, 4294901760
      %v769 = vsub.f32 %v767, %v768
      %v770 = vand.u32 %v769, 4294901760
      %771 = vmatmul.f32.gmra.mxu0 %v770
      %v772 = vpop.f32.mrf.mxu0
      %v773 = vadd.f32 %v606, %v772
      %v774 = vand.u32 %v682, 4294901760
      %v775 = vsub.f32 %v682, %v774
      %v776 = vand.u32 %v775, 4294901760
      %v777 = vsub.f32 %v775, %v776
      %v778 = vand.u32 %v777, 4294901760
      %779 = vmatmul.f32.gmra.mxu0 %v778
      %v780 = vpop.f32.mrf.mxu0
      %v781 = vadd.f32 %v611, %v780
      %v782 = vand.u32 %v685, 4294901760
      %v783 = vsub.f32 %v685, %v782
      %v784 = vand.u32 %v783, 4294901760
      %v785 = vsub.f32 %v783, %v784
      %v786 = vand.u32 %v785, 4294901760
      %787 = vmatmul.f32.gmra.mxu0 %v786
      %v788 = vpop.f32.mrf.mxu0
      %v789 = vadd.f32 %v616, %v788
      %v790 = vand.u32 %v688, 4294901760
      %v791 = vsub.f32 %v688, %v790
      %v792 = vand.u32 %v791, 4294901760
      %v793 = vsub.f32 %v791, %v792
      %v794 = vand.u32 %v793, 4294901760
      %795 = vmatmul.f32.gmra.mxu0 %v794
      %v796 = vpop.f32.mrf.mxu0
      %v797 = vadd.f32 %v621, %v796
      %v798 = vand.u32 %v691, 4294901760
      %v799 = vsub.f32 %v691, %v798
      %v800 = vand.u32 %v799, 4294901760
      %v801 = vsub.f32 %v799, %v800
      %v802 = vand.u32 %v801, 4294901760
      %803 = vmatmul.f32.gmra.mxu0 %v802
      %v804 = vpop.f32.mrf.mxu0
      %v805 = vadd.f32 %v626, %v804
      %v806 = vand.u32 %v694, 4294901760
      %v807 = vsub.f32 %v694, %v806
      %v808 = vand.u32 %v807, 4294901760
      %v809 = vsub.f32 %v807, %v808
      %v810 = vand.u32 %v809, 4294901760
      %811 = vmatmul.f32.gmra.mxu0 %v810
      %v812 = vpop.f32.mrf.mxu0
      %v813 = vadd.f32 %v631, %v812
      %v814 = vand.u32 %v697, 4294901760
      %v815 = vsub.f32 %v697, %v814
      %v816 = vand.u32 %v815, 4294901760
      %v817 = vsub.f32 %v815, %v816
      %v818 = vand.u32 %v817, 4294901760
      %819 = vmatmul.f32.gmra.mxu0 %v818
      %v820 = vpop.f32.mrf.mxu0
      %v821 = vadd.f32 %v636, %v820
      %v822 = vand.u32 %v700, 4294901760
      %v823 = vsub.f32 %v700, %v822
      %v824 = vand.u32 %v823, 4294901760
      %v825 = vsub.f32 %v823, %v824
      %v826 = vand.u32 %v825, 4294901760
      %827 = vmatmul.f32.gmra.mxu0 %v826
      %v828 = vpop.f32.mrf.mxu0
      %v829 = vadd.f32 %v641, %v828
      %v830 = vand.u32 %v703, 4294901760
      %v831 = vsub.f32 %v703, %v830
      %v832 = vand.u32 %v831, 4294901760
      %v833 = vsub.f32 %v831, %v832
      %v834 = vand.u32 %v833, 4294901760
      %835 = vmatmul.f32.gmra.mxu0 %v834
      %v836 = vpop.f32.mrf.mxu0
      %v837 = vadd.f32 %v646, %v836
      %v838 = vand.u32 %v706, 4294901760
      %v839 = vsub.f32 %v706, %v838
      %v840 = vand.u32 %v839, 4294901760
      %v841 = vsub.f32 %v839, %v840
      %v842 = vand.u32 %v841, 4294901760
      %843 = vmatmul.f32.gmra.mxu0 %v842
      %v844 = vpop.f32.mrf.mxu0
      %v845 = vadd.f32 %v651, %v844
      %v846 = vand.u32 %v709, 4294901760
      %v847 = vsub.f32 %v709, %v846
      %v848 = vand.u32 %v847, 4294901760
      %v849 = vsub.f32 %v847, %v848
      %v850 = vand.u32 %v849, 4294901760
      %851 = vmatmul.f32.gmra.mxu0 %v850
      %v852 = vpop.f32.mrf.mxu0
      %v853 = vadd.f32 %v656, %v852
      %v854 = vand.u32 %v712, 4294901760
      %v855 = vsub.f32 %v712, %v854
      %v856 = vand.u32 %v855, 4294901760
      %v857 = vsub.f32 %v855, %v856
      %v858 = vand.u32 %v857, 4294901760
      %859 = vmatmul.f32.gmra.mxu0 %v858
      %v860 = vpop.f32.mrf.mxu0
      %v861 = vadd.f32 %v661, %v860
      %v862 = vand.u32 %v715, 4294901760
      %v863 = vsub.f32 %v715, %v862
      %v864 = vand.u32 %v863, 4294901760
      %v865 = vsub.f32 %v863, %v864
      %v866 = vand.u32 %v865, 4294901760
      %867 = vmatmul.f32.gmra.mxu0 %v866
      %v868 = vpop.f32.mrf.mxu0
      %v869 = vadd.f32 %v666, %v868
      %870 = vdwg.mxu0
      %871 = vmatpush.msra.mxu0 0.0
      %872 = vmatpush.msra.mxu0 0.0
      %873 = vmatpush.msra.mxu0 0.0
      %874 = vmatpush.msra.mxu0 0.0
      %875 = vmatpush.msra.mxu0 0.0
      %876 = vmatpush.msra.mxu0 0.0
      %877 = vmatpush.msra.mxu0 0.0
      %878 = vmatpush.msra.mxu0 0.0
      %879 = vmatpush.msra.mxu0 0.0
      %880 = vmatpush.msra.mxu0 0.0
      %881 = vmatpush.msra.mxu0 0.0
      %882 = vmatpush.msra.mxu0 0.0
      %883 = vmatpush.msra.mxu0 0.0
      %884 = vmatpush.msra.mxu0 0.0
      %v885 = vand.u32 %v719, 4294901760
      %v886 = vsub.f32 %v719, %v885
      %v887 = vand.u32 %v886, 4294901760
      %v888 = vsub.f32 %v886, %v887
      %v889 = vand.u32 %v888, 4294901760
      %890 = vmatpush.msra.mxu0 %v889
      %v891 = vand.u32 %v550, 4294901760
      %v892 = vsub.f32 %v550, %v891
      %v893 = vand.u32 %v892, 4294901760
      %v894 = vsub.f32 %v892, %v893
      %v895 = vand.u32 %v894, 4294901760
      %896 = vmatpush.msra.mxu0 %v895
      %v897 = vand.u32 %v670, 4294901760
      %898 = vmatmul.f32.gmra.mxu0 %v897
      %v899 = vpop.f32.mrf.mxu0
      %v900 = vadd.f32 %v749, %v899
      %v901 = vand.u32 %v673, 4294901760
      %902 = vmatmul.f32.gmra.mxu0 %v901
      %v903 = vpop.f32.mrf.mxu0
      %v904 = vadd.f32 %v757, %v903
      %v905 = vand.u32 %v676, 4294901760
      %906 = vmatmul.f32.gmra.mxu0 %v905
      %v907 = vpop.f32.mrf.mxu0
      %v908 = vadd.f32 %v765, %v907
      %v909 = vand.u32 %v679, 4294901760
      %910 = vmatmul.f32.gmra.mxu0 %v909
      %v911 = vpop.f32.mrf.mxu0
      %v912 = vadd.f32 %v773, %v911
      %v913 = vand.u32 %v682, 4294901760
      %914 = vmatmul.f32.gmra.mxu0 %v913
      %v915 = vpop.f32.mrf.mxu0
      %v916 = vadd.f32 %v781, %v915
      %v917 = vand.u32 %v685, 4294901760
      %918 = vmatmul.f32.gmra.mxu0 %v917
      %v919 = vpop.f32.mrf.mxu0
      %v920 = vadd.f32 %v789, %v919
      %v921 = vand.u32 %v688, 4294901760
      %922 = vmatmul.f32.gmra.mxu0 %v921
      %v923 = vpop.f32.mrf.mxu0
      %v924 = vadd.f32 %v797, %v923
      %v925 = vand.u32 %v691, 4294901760
      %926 = vmatmul.f32.gmra.mxu0 %v925
      %v927 = vpop.f32.mrf.mxu0
      %v928 = vadd.f32 %v805, %v927
      %v929 = vand.u32 %v694, 4294901760
      %930 = vmatmul.f32.gmra.mxu0 %v929
      %v931 = vpop.f32.mrf.mxu0
      %v932 = vadd.f32 %v813, %v931
      %v933 = vand.u32 %v697, 4294901760
      %934 = vmatmul.f32.gmra.mxu0 %v933
      %v935 = vpop.f32.mrf.mxu0
      %v936 = vadd.f32 %v821, %v935
      %v937 = vand.u32 %v700, 4294901760
      %938 = vmatmul.f32.gmra.mxu0 %v937
      %v939 = vpop.f32.mrf.mxu0
      %v940 = vadd.f32 %v829, %v939
      %v941 = vand.u32 %v703, 4294901760
      %942 = vmatmul.f32.gmra.mxu0 %v941
      %v943 = vpop.f32.mrf.mxu0
      %v944 = vadd.f32 %v837, %v943
      %v945 = vand.u32 %v706, 4294901760
      %946 = vmatmul.f32.gmra.mxu0 %v945
      %v947 = vpop.f32.mrf.mxu0
      %v948 = vadd.f32 %v845, %v947
      %v949 = vand.u32 %v709, 4294901760
      %950 = vmatmul.f32.gmra.mxu0 %v949
      %v951 = vpop.f32.mrf.mxu0
      %v952 = vadd.f32 %v853, %v951
      %v953 = vand.u32 %v712, 4294901760
      %954 = vmatmul.f32.gmra.mxu0 %v953
      %v955 = vpop.f32.mrf.mxu0
      %v956 = vadd.f32 %v861, %v955
      %v957 = vand.u32 %v715, 4294901760
      %958 = vmatmul.f32.gmra.mxu0 %v957
      %v959 = vpop.f32.mrf.mxu0
      %v960 = vadd.f32 %v869, %v959
      %961 = vdwg.mxu0
      %962 = vmatpush.msra.mxu0 0.0
      %963 = vmatpush.msra.mxu0 0.0
      %964 = vmatpush.msra.mxu0 0.0
      %965 = vmatpush.msra.mxu0 0.0
      %966 = vmatpush.msra.mxu0 0.0
      %967 = vmatpush.msra.mxu0 0.0
      %968 = vmatpush.msra.mxu0 0.0
      %969 = vmatpush.msra.mxu0 0.0
      %970 = vmatpush.msra.mxu0 0.0
      %971 = vmatpush.msra.mxu0 0.0
      %972 = vmatpush.msra.mxu0 0.0
      %973 = vmatpush.msra.mxu0 0.0
      %974 = vmatpush.msra.mxu0 0.0
      %975 = vmatpush.msra.mxu0 0.0
      %v976 = vand.u32 %v719, 4294901760
      %v977 = vsub.f32 %v719, %v976
      %978 = vmatpush.msra.mxu0 %v977
      %v979 = vand.u32 %v550, 4294901760
      %v980 = vsub.f32 %v550, %v979
      %981 = vmatpush.msra.mxu0 %v980
      %v982 = vand.u32 %v670, 4294901760
      %v983 = vsub.f32 %v670, %v982
      %984 = vmatmul.f32.gmra.mxu0 %v983
      %v985 = vpop.f32.mrf.mxu0
      %v986 = vadd.f32 %v900, %v985
      %v987 = vand.u32 %v673, 4294901760
      %v988 = vsub.f32 %v673, %v987
      %989 = vmatmul.f32.gmra.mxu0 %v988
      %v990 = vpop.f32.mrf.mxu0
      %v991 = vadd.f32 %v904, %v990
      %v992 = vand.u32 %v676, 4294901760
      %v993 = vsub.f32 %v676, %v992
      %994 = vmatmul.f32.gmra.mxu0 %v993
      %v995 = vpop.f32.mrf.mxu0
      %v996 = vadd.f32 %v908, %v995
      %v997 = vand.u32 %v679, 4294901760
      %v998 = vsub.f32 %v679, %v997
      %999 = vmatmul.f32.gmra.mxu0 %v998
      %v1000 = vpop.f32.mrf.mxu0
      %v1001 = vadd.f32 %v912, %v1000
      %v1002 = vand.u32 %v682, 4294901760
      %v1003 = vsub.f32 %v682, %v1002
      %1004 = vmatmul.f32.gmra.mxu0 %v1003
      %v1005 = vpop.f32.mrf.mxu0
      %v1006 = vadd.f32 %v916, %v1005
      %v1007 = vand.u32 %v685, 4294901760
      %v1008 = vsub.f32 %v685, %v1007
      %1009 = vmatmul.f32.gmra.mxu0 %v1008
      %v1010 = vpop.f32.mrf.mxu0
      %v1011 = vadd.f32 %v920, %v1010
      %v1012 = vand.u32 %v688, 4294901760
      %v1013 = vsub.f32 %v688, %v1012
      %1014 = vmatmul.f32.gmra.mxu0 %v1013
      %v1015 = vpop.f32.mrf.mxu0
      %v1016 = vadd.f32 %v924, %v1015
      %v1017 = vand.u32 %v691, 4294901760
      %v1018 = vsub.f32 %v691, %v1017
      %1019 = vmatmul.f32.gmra.mxu0 %v1018
      %v1020 = vpop.f32.mrf.mxu0
      %v1021 = vadd.f32 %v928, %v1020
      %v1022 = vand.u32 %v694, 4294901760
      %v1023 = vsub.f32 %v694, %v1022
      %1024 = vmatmul.f32.gmra.mxu0 %v1023
      %v1025 = vpop.f32.mrf.mxu0
      %v1026 = vadd.f32 %v932, %v1025
      %v1027 = vand.u32 %v697, 4294901760
      %v1028 = vsub.f32 %v697, %v1027
      %1029 = vmatmul.f32.gmra.mxu0 %v1028
      %v1030 = vpop.f32.mrf.mxu0
      %v1031 = vadd.f32 %v936, %v1030
      %v1032 = vand.u32 %v700, 4294901760
      %v1033 = vsub.f32 %v700, %v1032
      %1034 = vmatmul.f32.gmra.mxu0 %v1033
      %v1035 = vpop.f32.mrf.mxu0
      %v1036 = vadd.f32 %v940, %v1035
      %v1037 = vand.u32 %v703, 4294901760
      %v1038 = vsub.f32 %v703, %v1037
      %1039 = vmatmul.f32.gmra.mxu0 %v1038
      %v1040 = vpop.f32.mrf.mxu0
      %v1041 = vadd.f32 %v944, %v1040
      %v1042 = vand.u32 %v706, 4294901760
      %v1043 = vsub.f32 %v706, %v1042
      %1044 = vmatmul.f32.gmra.mxu0 %v1043
      %v1045 = vpop.f32.mrf.mxu0
      %v1046 = vadd.f32 %v948, %v1045
      %v1047 = vand.u32 %v709, 4294901760
      %v1048 = vsub.f32 %v709, %v1047
      %1049 = vmatmul.f32.gmra.mxu0 %v1048
      %v1050 = vpop.f32.mrf.mxu0
      %v1051 = vadd.f32 %v952, %v1050
      %v1052 = vand.u32 %v712, 4294901760
      %v1053 = vsub.f32 %v712, %v1052
      %1054 = vmatmul.f32.gmra.mxu0 %v1053
      %v1055 = vpop.f32.mrf.mxu0
      %v1056 = vadd.f32 %v956, %v1055
      %v1057 = vand.u32 %v715, 4294901760
      %v1058 = vsub.f32 %v715, %v1057
      %1059 = vmatmul.f32.gmra.mxu0 %v1058
      %v1060 = vpop.f32.mrf.mxu0
      %v1061 = vadd.f32 %v960, %v1060
      %1062 = vdwg.mxu0
      %1063 = vmatpush.msra.mxu0 0.0
      %1064 = vmatpush.msra.mxu0 0.0
      %1065 = vmatpush.msra.mxu0 0.0
      %1066 = vmatpush.msra.mxu0 0.0
      %1067 = vmatpush.msra.mxu0 0.0
      %1068 = vmatpush.msra.mxu0 0.0
      %1069 = vmatpush.msra.mxu0 0.0
      %1070 = vmatpush.msra.mxu0 0.0
      %1071 = vmatpush.msra.mxu0 0.0
      %1072 = vmatpush.msra.mxu0 0.0
      %1073 = vmatpush.msra.mxu0 0.0
      %1074 = vmatpush.msra.mxu0 0.0
      %1075 = vmatpush.msra.mxu0 0.0
      %1076 = vmatpush.msra.mxu0 0.0
      %v1077 = vand.u32 %v719, 4294901760
      %1078 = vmatpush.msra.mxu0 %v1077
      %v1079 = vand.u32 %v550, 4294901760
      %1080 = vmatpush.msra.mxu0 %v1079
      %v1081 = vand.u32 %v670, 4294901760
      %v1082 = vsub.f32 %v670, %v1081
      %v1083 = vand.u32 %v1082, 4294901760
      %1084 = vmatmul.f32.gmra.mxu0 %v1083
      %v1085 = vpop.f32.mrf.mxu0
      %v1086 = vadd.f32 %v986, %v1085
      %v1087 = vand.u32 %v673, 4294901760
      %v1088 = vsub.f32 %v673, %v1087
      %v1089 = vand.u32 %v1088, 4294901760
      %1090 = vmatmul.f32.gmra.mxu0 %v1089
      %v1091 = vpop.f32.mrf.mxu0
      %v1092 = vadd.f32 %v991, %v1091
      %v1093 = vand.u32 %v676, 4294901760
      %v1094 = vsub.f32 %v676, %v1093
      %v1095 = vand.u32 %v1094, 4294901760
      %1096 = vmatmul.f32.gmra.mxu0 %v1095
      %v1097 = vpop.f32.mrf.mxu0
      %v1098 = vadd.f32 %v996, %v1097
      %v1099 = vand.u32 %v679, 4294901760
      %v1100 = vsub.f32 %v679, %v1099
      %v1101 = vand.u32 %v1100, 4294901760
      %1102 = vmatmul.f32.gmra.mxu0 %v1101
      %v1103 = vpop.f32.mrf.mxu0
      %v1104 = vadd.f32 %v1001, %v1103
      %v1105 = vand.u32 %v682, 4294901760
      %v1106 = vsub.f32 %v682, %v1105
      %v1107 = vand.u32 %v1106, 4294901760
      %1108 = vmatmul.f32.gmra.mxu0 %v1107
      %v1109 = vpop.f32.mrf.mxu0
      %v1110 = vadd.f32 %v1006, %v1109
      %v1111 = vand.u32 %v685, 4294901760
      %v1112 = vsub.f32 %v685, %v1111
      %v1113 = vand.u32 %v1112, 4294901760
      %1114 = vmatmul.f32.gmra.mxu0 %v1113
      %v1115 = vpop.f32.mrf.mxu0
      %v1116 = vadd.f32 %v1011, %v1115
      %v1117 = vand.u32 %v688, 4294901760
      %v1118 = vsub.f32 %v688, %v1117
      %v1119 = vand.u32 %v1118, 4294901760
      %1120 = vmatmul.f32.gmra.mxu0 %v1119
      %v1121 = vpop.f32.mrf.mxu0
      %v1122 = vadd.f32 %v1016, %v1121
      %v1123 = vand.u32 %v691, 4294901760
      %v1124 = vsub.f32 %v691, %v1123
      %v1125 = vand.u32 %v1124, 4294901760
      %1126 = vmatmul.f32.gmra.mxu0 %v1125
      %v1127 = vpop.f32.mrf.mxu0
      %v1128 = vadd.f32 %v1021, %v1127
      %v1129 = vand.u32 %v694, 4294901760
      %v1130 = vsub.f32 %v694, %v1129
      %v1131 = vand.u32 %v1130, 4294901760
      %1132 = vmatmul.f32.gmra.mxu0 %v1131
      %v1133 = vpop.f32.mrf.mxu0
      %v1134 = vadd.f32 %v1026, %v1133
      %v1135 = vand.u32 %v697, 4294901760
      %v1136 = vsub.f32 %v697, %v1135
      %v1137 = vand.u32 %v1136, 4294901760
      %1138 = vmatmul.f32.gmra.mxu0 %v1137
      %v1139 = vpop.f32.mrf.mxu0
      %v1140 = vadd.f32 %v1031, %v1139
      %v1141 = vand.u32 %v700, 4294901760
      %v1142 = vsub.f32 %v700, %v1141
      %v1143 = vand.u32 %v1142, 4294901760
      %1144 = vmatmul.f32.gmra.mxu0 %v1143
      %v1145 = vpop.f32.mrf.mxu0
      %v1146 = vadd.f32 %v1036, %v1145
      %v1147 = vand.u32 %v703, 4294901760
      %v1148 = vsub.f32 %v703, %v1147
      %v1149 = vand.u32 %v1148, 4294901760
      %1150 = vmatmul.f32.gmra.mxu0 %v1149
      %v1151 = vpop.f32.mrf.mxu0
      %v1152 = vadd.f32 %v1041, %v1151
      %v1153 = vand.u32 %v706, 4294901760
      %v1154 = vsub.f32 %v706, %v1153
      %v1155 = vand.u32 %v1154, 4294901760
      %1156 = vmatmul.f32.gmra.mxu0 %v1155
      %v1157 = vpop.f32.mrf.mxu0
      %v1158 = vadd.f32 %v1046, %v1157
      %v1159 = vand.u32 %v709, 4294901760
      %v1160 = vsub.f32 %v709, %v1159
      %v1161 = vand.u32 %v1160, 4294901760
      %1162 = vmatmul.f32.gmra.mxu0 %v1161
      %v1163 = vpop.f32.mrf.mxu0
      %v1164 = vadd.f32 %v1051, %v1163
      %v1165 = vand.u32 %v712, 4294901760
      %v1166 = vsub.f32 %v712, %v1165
      %v1167 = vand.u32 %v1166, 4294901760
      %1168 = vmatmul.f32.gmra.mxu0 %v1167
      %v1169 = vpop.f32.mrf.mxu0
      %v1170 = vadd.f32 %v1056, %v1169
      %v1171 = vand.u32 %v715, 4294901760
      %v1172 = vsub.f32 %v715, %v1171
      %v1173 = vand.u32 %v1172, 4294901760
      %1174 = vmatmul.f32.gmra.mxu0 %v1173
      %v1175 = vpop.f32.mrf.mxu0
      %v1176 = vadd.f32 %v1061, %v1175
      %1177 = vdwg.mxu0
      %1178 = vmatpush.msra.mxu0 0.0
      %1179 = vmatpush.msra.mxu0 0.0
      %1180 = vmatpush.msra.mxu0 0.0
      %1181 = vmatpush.msra.mxu0 0.0
      %1182 = vmatpush.msra.mxu0 0.0
      %1183 = vmatpush.msra.mxu0 0.0
      %1184 = vmatpush.msra.mxu0 0.0
      %1185 = vmatpush.msra.mxu0 0.0
      %1186 = vmatpush.msra.mxu0 0.0
      %1187 = vmatpush.msra.mxu0 0.0
      %1188 = vmatpush.msra.mxu0 0.0
      %1189 = vmatpush.msra.mxu0 0.0
      %1190 = vmatpush.msra.mxu0 0.0
      %1191 = vmatpush.msra.mxu0 0.0
      %v1192 = vand.u32 %v719, 4294901760
      %v1193 = vsub.f32 %v719, %v1192
      %v1194 = vand.u32 %v1193, 4294901760
      %1195 = vmatpush.msra.mxu0 %v1194
      %v1196 = vand.u32 %v550, 4294901760
      %v1197 = vsub.f32 %v550, %v1196
      %v1198 = vand.u32 %v1197, 4294901760
      %1199 = vmatpush.msra.mxu0 %v1198
      %v1200 = vand.u32 %v670, 4294901760
      %1201 = vmatmul.f32.gmra.mxu0 %v1200
      %v1202 = vpop.f32.mrf.mxu0
      %v1203 = vadd.f32 %v1086, %v1202
      %v1204 = vand.u32 %v673, 4294901760
      %1205 = vmatmul.f32.gmra.mxu0 %v1204
      %v1206 = vpop.f32.mrf.mxu0
      %v1207 = vadd.f32 %v1092, %v1206
      %v1208 = vand.u32 %v676, 4294901760
      %1209 = vmatmul.f32.gmra.mxu0 %v1208
      %v1210 = vpop.f32.mrf.mxu0
      %v1211 = vadd.f32 %v1098, %v1210
      %v1212 = vand.u32 %v679, 4294901760
      %1213 = vmatmul.f32.gmra.mxu0 %v1212
      %v1214 = vpop.f32.mrf.mxu0
      %v1215 = vadd.f32 %v1104, %v1214
      %v1216 = vand.u32 %v682, 4294901760
      %1217 = vmatmul.f32.gmra.mxu0 %v1216
      %v1218 = vpop.f32.mrf.mxu0
      %v1219 = vadd.f32 %v1110, %v1218
      %v1220 = vand.u32 %v685, 4294901760
      %1221 = vmatmul.f32.gmra.mxu0 %v1220
      %v1222 = vpop.f32.mrf.mxu0
      %v1223 = vadd.f32 %v1116, %v1222
      %v1224 = vand.u32 %v688, 4294901760
      %1225 = vmatmul.f32.gmra.mxu0 %v1224
      %v1226 = vpop.f32.mrf.mxu0
      %v1227 = vadd.f32 %v1122, %v1226
      %v1228 = vand.u32 %v691, 4294901760
      %1229 = vmatmul.f32.gmra.mxu0 %v1228
      %v1230 = vpop.f32.mrf.mxu0
      %v1231 = vadd.f32 %v1128, %v1230
      %v1232 = vand.u32 %v694, 4294901760
      %1233 = vmatmul.f32.gmra.mxu0 %v1232
      %v1234 = vpop.f32.mrf.mxu0
      %v1235 = vadd.f32 %v1134, %v1234
      %v1236 = vand.u32 %v697, 4294901760
      %1237 = vmatmul.f32.gmra.mxu0 %v1236
      %v1238 = vpop.f32.mrf.mxu0
      %v1239 = vadd.f32 %v1140, %v1238
      %v1240 = vand.u32 %v700, 4294901760
      %1241 = vmatmul.f32.gmra.mxu0 %v1240
      %v1242 = vpop.f32.mrf.mxu0
      %v1243 = vadd.f32 %v1146, %v1242
      %v1244 = vand.u32 %v703, 4294901760
      %1245 = vmatmul.f32.gmra.mxu0 %v1244
      %v1246 = vpop.f32.mrf.mxu0
      %v1247 = vadd.f32 %v1152, %v1246
      %v1248 = vand.u32 %v706, 4294901760
      %1249 = vmatmul.f32.gmra.mxu0 %v1248
      %v1250 = vpop.f32.mrf.mxu0
      %v1251 = vadd.f32 %v1158, %v1250
      %v1252 = vand.u32 %v709, 4294901760
      %1253 = vmatmul.f32.gmra.mxu0 %v1252
      %v1254 = vpop.f32.mrf.mxu0
      %v1255 = vadd.f32 %v1164, %v1254
      %v1256 = vand.u32 %v712, 4294901760
      %1257 = vmatmul.f32.gmra.mxu0 %v1256
      %v1258 = vpop.f32.mrf.mxu0
      %v1259 = vadd.f32 %v1170, %v1258
      %v1260 = vand.u32 %v715, 4294901760
      %1261 = vmatmul.f32.gmra.mxu0 %v1260
      %v1262 = vpop.f32.mrf.mxu0
      %v1263 = vadd.f32 %v1176, %v1262
      %1264 = vdwg.mxu0
      %1265 = vmatpush.msra.mxu0 0.0
      %1266 = vmatpush.msra.mxu0 0.0
      %1267 = vmatpush.msra.mxu0 0.0
      %1268 = vmatpush.msra.mxu0 0.0
      %1269 = vmatpush.msra.mxu0 0.0
      %1270 = vmatpush.msra.mxu0 0.0
      %1271 = vmatpush.msra.mxu0 0.0
      %1272 = vmatpush.msra.mxu0 0.0
      %1273 = vmatpush.msra.mxu0 0.0
      %1274 = vmatpush.msra.mxu0 0.0
      %1275 = vmatpush.msra.mxu0 0.0
      %1276 = vmatpush.msra.mxu0 0.0
      %1277 = vmatpush.msra.mxu0 0.0
      %1278 = vmatpush.msra.mxu0 0.0
      %v1279 = vand.u32 %v719, 4294901760
      %1280 = vmatpush.msra.mxu0 %v1279
      %v1281 = vand.u32 %v550, 4294901760
      %1282 = vmatpush.msra.mxu0 %v1281
      %v1283 = vand.u32 %v670, 4294901760
      %1284 = vmatmul.f32.gmra.mxu0 %v1283
      %v1285 = vpop.f32.mrf.mxu0
      %v1286 = vadd.f32 %v1203, %v1285
      %v1287 = vand.u32 %v673, 4294901760
      %1288 = vmatmul.f32.gmra.mxu0 %v1287
      %v1289 = vpop.f32.mrf.mxu0
      %v1290 = vadd.f32 %v1207, %v1289
      %v1291 = vand.u32 %v676, 4294901760
      %1292 = vmatmul.f32.gmra.mxu0 %v1291
      %v1293 = vpop.f32.mrf.mxu0
      %v1294 = vadd.f32 %v1211, %v1293
      %v1295 = vand.u32 %v679, 4294901760
      %1296 = vmatmul.f32.gmra.mxu0 %v1295
      %v1297 = vpop.f32.mrf.mxu0
      %v1298 = vadd.f32 %v1215, %v1297
      %v1299 = vand.u32 %v682, 4294901760
      %1300 = vmatmul.f32.gmra.mxu0 %v1299
      %v1301 = vpop.f32.mrf.mxu0
      %v1302 = vadd.f32 %v1219, %v1301
      %v1303 = vand.u32 %v685, 4294901760
      %1304 = vmatmul.f32.gmra.mxu0 %v1303
      %v1305 = vpop.f32.mrf.mxu0
      %v1306 = vadd.f32 %v1223, %v1305
      %v1307 = vand.u32 %v688, 4294901760
      %1308 = vmatmul.f32.gmra.mxu0 %v1307
      %v1309 = vpop.f32.mrf.mxu0
      %v1310 = vadd.f32 %v1227, %v1309
      %v1311 = vand.u32 %v691, 4294901760
      %1312 = vmatmul.f32.gmra.mxu0 %v1311
      %v1313 = vpop.f32.mrf.mxu0
      %v1314 = vadd.f32 %v1231, %v1313
      %v1315 = vand.u32 %v694, 4294901760
      %1316 = vmatmul.f32.gmra.mxu0 %v1315
      %v1317 = vpop.f32.mrf.mxu0
      %v1318 = vadd.f32 %v1235, %v1317
      %v1319 = vand.u32 %v697, 4294901760
      %1320 = vmatmul.f32.gmra.mxu0 %v1319
      %v1321 = vpop.f32.mrf.mxu0
      %v1322 = vadd.f32 %v1239, %v1321
      %v1323 = vand.u32 %v700, 4294901760
      %1324 = vmatmul.f32.gmra.mxu0 %v1323
      %v1325 = vpop.f32.mrf.mxu0
      %v1326 = vadd.f32 %v1243, %v1325
      %v1327 = vand.u32 %v703, 4294901760
      %1328 = vmatmul.f32.gmra.mxu0 %v1327
      %v1329 = vpop.f32.mrf.mxu0
      %v1330 = vadd.f32 %v1247, %v1329
      %v1331 = vand.u32 %v706, 4294901760
      %1332 = vmatmul.f32.gmra.mxu0 %v1331
      %v1333 = vpop.f32.mrf.mxu0
      %v1334 = vadd.f32 %v1251, %v1333
      %v1335 = vand.u32 %v709, 4294901760
      %1336 = vmatmul.f32.gmra.mxu0 %v1335
      %v1337 = vpop.f32.mrf.mxu0
      %v1338 = vadd.f32 %v1255, %v1337
      %v1339 = vand.u32 %v712, 4294901760
      %1340 = vmatmul.f32.gmra.mxu0 %v1339
      %v1341 = vpop.f32.mrf.mxu0
      %v1342 = vadd.f32 %v1259, %v1341
      %v1343 = vand.u32 %v715, 4294901760
      %1344 = vmatmul.f32.gmra.mxu0 %v1343
      %v1345 = vpop.f32.mrf.mxu0
      %v1346 = vadd.f32 %v1263, %v1345
      %1347 = vdwg.mxu0
      %1348 = vmatpush.msra.mxu0 0.0
      %1349 = vmatpush.msra.mxu0 0.0
      %1350 = vmatpush.msra.mxu0 0.0
      %1351 = vmatpush.msra.mxu0 0.0
      %1352 = vmatpush.msra.mxu0 0.0
      %1353 = vmatpush.msra.mxu0 0.0
      %1354 = vmatpush.msra.mxu0 0.0
      %1355 = vmatpush.msra.mxu0 0.0
      %1356 = vmatpush.msra.mxu0 0.0
      %1357 = vmatpush.msra.mxu0 0.0
      %1358 = vmatpush.msra.mxu0 0.0
      %1359 = vmatpush.msra.mxu0 0.0
      %1360 = vmatpush.msra.mxu0 0.0
      %1361 = vmatpush.msra.mxu0 0.0
      %v1362 = vand.u32 %v722, 4294901760
      %1363 = vmatpush.msra.mxu0 %v1362
      %v1364 = vand.u32 %v551, 4294901760
      %1365 = vmatpush.msra.mxu0 %v1364
      %v1366 = vand.u32 %v670, 4294901760
      %v1367 = vsub.f32 %v670, %v1366
      %v1368 = vand.u32 %v1367, 4294901760
      %v1369 = vsub.f32 %v1367, %v1368
      %v1370 = vand.u32 %v1369, 4294901760
      %1371 = vmatmul.f32.gmra.mxu0 %v1370
      %v1372 = vpop.f32.mrf.mxu0
      %v1373 = vadd.f32 %v591, %v1372
      %v1374 = vand.u32 %v673, 4294901760
      %v1375 = vsub.f32 %v673, %v1374
      %v1376 = vand.u32 %v1375, 4294901760
      %v1377 = vsub.f32 %v1375, %v1376
      %v1378 = vand.u32 %v1377, 4294901760
      %1379 = vmatmul.f32.gmra.mxu0 %v1378
      %v1380 = vpop.f32.mrf.mxu0
      %v1381 = vadd.f32 %v596, %v1380
      %v1382 = vand.u32 %v676, 4294901760
      %v1383 = vsub.f32 %v676, %v1382
      %v1384 = vand.u32 %v1383, 4294901760
      %v1385 = vsub.f32 %v1383, %v1384
      %v1386 = vand.u32 %v1385, 4294901760
      %1387 = vmatmul.f32.gmra.mxu0 %v1386
      %v1388 = vpop.f32.mrf.mxu0
      %v1389 = vadd.f32 %v601, %v1388
      %v1390 = vand.u32 %v679, 4294901760
      %v1391 = vsub.f32 %v679, %v1390
      %v1392 = vand.u32 %v1391, 4294901760
      %v1393 = vsub.f32 %v1391, %v1392
      %v1394 = vand.u32 %v1393, 4294901760
      %1395 = vmatmul.f32.gmra.mxu0 %v1394
      %v1396 = vpop.f32.mrf.mxu0
      %v1397 = vadd.f32 %v606, %v1396
      %v1398 = vand.u32 %v682, 4294901760
      %v1399 = vsub.f32 %v682, %v1398
      %v1400 = vand.u32 %v1399, 4294901760
      %v1401 = vsub.f32 %v1399, %v1400
      %v1402 = vand.u32 %v1401, 4294901760
      %1403 = vmatmul.f32.gmra.mxu0 %v1402
      %v1404 = vpop.f32.mrf.mxu0
      %v1405 = vadd.f32 %v611, %v1404
      %v1406 = vand.u32 %v685, 4294901760
      %v1407 = vsub.f32 %v685, %v1406
      %v1408 = vand.u32 %v1407, 4294901760
      %v1409 = vsub.f32 %v1407, %v1408
      %v1410 = vand.u32 %v1409, 4294901760
      %1411 = vmatmul.f32.gmra.mxu0 %v1410
      %v1412 = vpop.f32.mrf.mxu0
      %v1413 = vadd.f32 %v616, %v1412
      %v1414 = vand.u32 %v688, 4294901760
      %v1415 = vsub.f32 %v688, %v1414
      %v1416 = vand.u32 %v1415, 4294901760
      %v1417 = vsub.f32 %v1415, %v1416
      %v1418 = vand.u32 %v1417, 4294901760
      %1419 = vmatmul.f32.gmra.mxu0 %v1418
      %v1420 = vpop.f32.mrf.mxu0
      %v1421 = vadd.f32 %v621, %v1420
      %v1422 = vand.u32 %v691, 4294901760
      %v1423 = vsub.f32 %v691, %v1422
      %v1424 = vand.u32 %v1423, 4294901760
      %v1425 = vsub.f32 %v1423, %v1424
      %v1426 = vand.u32 %v1425, 4294901760
      %1427 = vmatmul.f32.gmra.mxu0 %v1426
      %v1428 = vpop.f32.mrf.mxu0
      %v1429 = vadd.f32 %v626, %v1428
      %v1430 = vand.u32 %v694, 4294901760
      %v1431 = vsub.f32 %v694, %v1430
      %v1432 = vand.u32 %v1431, 4294901760
      %v1433 = vsub.f32 %v1431, %v1432
      %v1434 = vand.u32 %v1433, 4294901760
      %1435 = vmatmul.f32.gmra.mxu0 %v1434
      %v1436 = vpop.f32.mrf.mxu0
      %v1437 = vadd.f32 %v631, %v1436
      %v1438 = vand.u32 %v697, 4294901760
      %v1439 = vsub.f32 %v697, %v1438
      %v1440 = vand.u32 %v1439, 4294901760
      %v1441 = vsub.f32 %v1439, %v1440
      %v1442 = vand.u32 %v1441, 4294901760
      %1443 = vmatmul.f32.gmra.mxu0 %v1442
      %v1444 = vpop.f32.mrf.mxu0
      %v1445 = vadd.f32 %v636, %v1444
      %v1446 = vand.u32 %v700, 4294901760
      %v1447 = vsub.f32 %v700, %v1446
      %v1448 = vand.u32 %v1447, 4294901760
      %v1449 = vsub.f32 %v1447, %v1448
      %v1450 = vand.u32 %v1449, 4294901760
      %1451 = vmatmul.f32.gmra.mxu0 %v1450
      %v1452 = vpop.f32.mrf.mxu0
      %v1453 = vadd.f32 %v641, %v1452
      %v1454 = vand.u32 %v703, 4294901760
      %v1455 = vsub.f32 %v703, %v1454
      %v1456 = vand.u32 %v1455, 4294901760
      %v1457 = vsub.f32 %v1455, %v1456
      %v1458 = vand.u32 %v1457, 4294901760
      %1459 = vmatmul.f32.gmra.mxu0 %v1458
      %v1460 = vpop.f32.mrf.mxu0
      %v1461 = vadd.f32 %v646, %v1460
      %v1462 = vand.u32 %v706, 4294901760
      %v1463 = vsub.f32 %v706, %v1462
      %v1464 = vand.u32 %v1463, 4294901760
      %v1465 = vsub.f32 %v1463, %v1464
      %v1466 = vand.u32 %v1465, 4294901760
      %1467 = vmatmul.f32.gmra.mxu0 %v1466
      %v1468 = vpop.f32.mrf.mxu0
      %v1469 = vadd.f32 %v651, %v1468
      %v1470 = vand.u32 %v709, 4294901760
      %v1471 = vsub.f32 %v709, %v1470
      %v1472 = vand.u32 %v1471, 4294901760
      %v1473 = vsub.f32 %v1471, %v1472
      %v1474 = vand.u32 %v1473, 4294901760
      %1475 = vmatmul.f32.gmra.mxu0 %v1474
      %v1476 = vpop.f32.mrf.mxu0
      %v1477 = vadd.f32 %v656, %v1476
      %v1478 = vand.u32 %v712, 4294901760
      %v1479 = vsub.f32 %v712, %v1478
      %v1480 = vand.u32 %v1479, 4294901760
      %v1481 = vsub.f32 %v1479, %v1480
      %v1482 = vand.u32 %v1481, 4294901760
      %1483 = vmatmul.f32.gmra.mxu0 %v1482
      %v1484 = vpop.f32.mrf.mxu0
      %v1485 = vadd.f32 %v661, %v1484
      %v1486 = vand.u32 %v715, 4294901760
      %v1487 = vsub.f32 %v715, %v1486
      %v1488 = vand.u32 %v1487, 4294901760
      %v1489 = vsub.f32 %v1487, %v1488
      %v1490 = vand.u32 %v1489, 4294901760
      %1491 = vmatmul.f32.gmra.mxu0 %v1490
      %v1492 = vpop.f32.mrf.mxu0
      %v1493 = vadd.f32 %v666, %v1492
      %1494 = vdwg.mxu0
      %1495 = vmatpush.msra.mxu0 0.0
      %1496 = vmatpush.msra.mxu0 0.0
      %1497 = vmatpush.msra.mxu0 0.0
      %1498 = vmatpush.msra.mxu0 0.0
      %1499 = vmatpush.msra.mxu0 0.0
      %1500 = vmatpush.msra.mxu0 0.0
      %1501 = vmatpush.msra.mxu0 0.0
      %1502 = vmatpush.msra.mxu0 0.0
      %1503 = vmatpush.msra.mxu0 0.0
      %1504 = vmatpush.msra.mxu0 0.0
      %1505 = vmatpush.msra.mxu0 0.0
      %1506 = vmatpush.msra.mxu0 0.0
      %1507 = vmatpush.msra.mxu0 0.0
      %1508 = vmatpush.msra.mxu0 0.0
      %v1509 = vand.u32 %v722, 4294901760
      %v1510 = vsub.f32 %v722, %v1509
      %v1511 = vand.u32 %v1510, 4294901760
      %v1512 = vsub.f32 %v1510, %v1511
      %v1513 = vand.u32 %v1512, 4294901760
      %1514 = vmatpush.msra.mxu0 %v1513
      %v1515 = vand.u32 %v551, 4294901760
      %v1516 = vsub.f32 %v551, %v1515
      %v1517 = vand.u32 %v1516, 4294901760
      %v1518 = vsub.f32 %v1516, %v1517
      %v1519 = vand.u32 %v1518, 4294901760
      %1520 = vmatpush.msra.mxu0 %v1519
      %v1521 = vand.u32 %v670, 4294901760
      %1522 = vmatmul.f32.gmra.mxu0 %v1521
      %v1523 = vpop.f32.mrf.mxu0
      %v1524 = vadd.f32 %v1373, %v1523
      %v1525 = vand.u32 %v673, 4294901760
      %1526 = vmatmul.f32.gmra.mxu0 %v1525
      %v1527 = vpop.f32.mrf.mxu0
      %v1528 = vadd.f32 %v1381, %v1527
      %v1529 = vand.u32 %v676, 4294901760
      %1530 = vmatmul.f32.gmra.mxu0 %v1529
      %v1531 = vpop.f32.mrf.mxu0
      %v1532 = vadd.f32 %v1389, %v1531
      %v1533 = vand.u32 %v679, 4294901760
      %1534 = vmatmul.f32.gmra.mxu0 %v1533
      %v1535 = vpop.f32.mrf.mxu0
      %v1536 = vadd.f32 %v1397, %v1535
      %v1537 = vand.u32 %v682, 4294901760
      %1538 = vmatmul.f32.gmra.mxu0 %v1537
      %v1539 = vpop.f32.mrf.mxu0
      %v1540 = vadd.f32 %v1405, %v1539
      %v1541 = vand.u32 %v685, 4294901760
      %1542 = vmatmul.f32.gmra.mxu0 %v1541
      %v1543 = vpop.f32.mrf.mxu0
      %v1544 = vadd.f32 %v1413, %v1543
      %v1545 = vand.u32 %v688, 4294901760
      %1546 = vmatmul.f32.gmra.mxu0 %v1545
      %v1547 = vpop.f32.mrf.mxu0
      %v1548 = vadd.f32 %v1421, %v1547
      %v1549 = vand.u32 %v691, 4294901760
      %1550 = vmatmul.f32.gmra.mxu0 %v1549
      %v1551 = vpop.f32.mrf.mxu0
      %v1552 = vadd.f32 %v1429, %v1551
      %v1553 = vand.u32 %v694, 4294901760
      %1554 = vmatmul.f32.gmra.mxu0 %v1553
      %v1555 = vpop.f32.mrf.mxu0
      %v1556 = vadd.f32 %v1437, %v1555
      %v1557 = vand.u32 %v697, 4294901760
      %1558 = vmatmul.f32.gmra.mxu0 %v1557
      %v1559 = vpop.f32.mrf.mxu0
      %v1560 = vadd.f32 %v1445, %v1559
      %v1561 = vand.u32 %v700, 4294901760
      %1562 = vmatmul.f32.gmra.mxu0 %v1561
      %v1563 = vpop.f32.mrf.mxu0
      %v1564 = vadd.f32 %v1453, %v1563
      %v1565 = vand.u32 %v703, 4294901760
      %1566 = vmatmul.f32.gmra.mxu0 %v1565
      %v1567 = vpop.f32.mrf.mxu0
      %v1568 = vadd.f32 %v1461, %v1567
      %v1569 = vand.u32 %v706, 4294901760
      %1570 = vmatmul.f32.gmra.mxu0 %v1569
      %v1571 = vpop.f32.mrf.mxu0
      %v1572 = vadd.f32 %v1469, %v1571
      %v1573 = vand.u32 %v709, 4294901760
      %1574 = vmatmul.f32.gmra.mxu0 %v1573
      %v1575 = vpop.f32.mrf.mxu0
      %v1576 = vadd.f32 %v1477, %v1575
      %v1577 = vand.u32 %v712, 4294901760
      %1578 = vmatmul.f32.gmra.mxu0 %v1577
      %v1579 = vpop.f32.mrf.mxu0
      %v1580 = vadd.f32 %v1485, %v1579
      %v1581 = vand.u32 %v715, 4294901760
      %1582 = vmatmul.f32.gmra.mxu0 %v1581
      %v1583 = vpop.f32.mrf.mxu0
      %v1584 = vadd.f32 %v1493, %v1583
      %1585 = vdwg.mxu0
      %1586 = vmatpush.msra.mxu0 0.0
      %1587 = vmatpush.msra.mxu0 0.0
      %1588 = vmatpush.msra.mxu0 0.0
      %1589 = vmatpush.msra.mxu0 0.0
      %1590 = vmatpush.msra.mxu0 0.0
      %1591 = vmatpush.msra.mxu0 0.0
      %1592 = vmatpush.msra.mxu0 0.0
      %1593 = vmatpush.msra.mxu0 0.0
      %1594 = vmatpush.msra.mxu0 0.0
      %1595 = vmatpush.msra.mxu0 0.0
      %1596 = vmatpush.msra.mxu0 0.0
      %1597 = vmatpush.msra.mxu0 0.0
      %1598 = vmatpush.msra.mxu0 0.0
      %1599 = vmatpush.msra.mxu0 0.0
      %v1600 = vand.u32 %v722, 4294901760
      %v1601 = vsub.f32 %v722, %v1600
      %1602 = vmatpush.msra.mxu0 %v1601
      %v1603 = vand.u32 %v551, 4294901760
      %v1604 = vsub.f32 %v551, %v1603
      %1605 = vmatpush.msra.mxu0 %v1604
      %v1606 = vand.u32 %v670, 4294901760
      %v1607 = vsub.f32 %v670, %v1606
      %1608 = vmatmul.f32.gmra.mxu0 %v1607
      %v1609 = vpop.f32.mrf.mxu0
      %v1610 = vadd.f32 %v1524, %v1609
      %v1611 = vand.u32 %v673, 4294901760
      %v1612 = vsub.f32 %v673, %v1611
      %1613 = vmatmul.f32.gmra.mxu0 %v1612
      %v1614 = vpop.f32.mrf.mxu0
      %v1615 = vadd.f32 %v1528, %v1614
      %v1616 = vand.u32 %v676, 4294901760
      %v1617 = vsub.f32 %v676, %v1616
      %1618 = vmatmul.f32.gmra.mxu0 %v1617
      %v1619 = vpop.f32.mrf.mxu0
      %v1620 = vadd.f32 %v1532, %v1619
      %v1621 = vand.u32 %v679, 4294901760
      %v1622 = vsub.f32 %v679, %v1621
      %1623 = vmatmul.f32.gmra.mxu0 %v1622
      %v1624 = vpop.f32.mrf.mxu0
      %v1625 = vadd.f32 %v1536, %v1624
      %v1626 = vand.u32 %v682, 4294901760
      %v1627 = vsub.f32 %v682, %v1626
      %1628 = vmatmul.f32.gmra.mxu0 %v1627
      %v1629 = vpop.f32.mrf.mxu0
      %v1630 = vadd.f32 %v1540, %v1629
      %v1631 = vand.u32 %v685, 4294901760
      %v1632 = vsub.f32 %v685, %v1631
      %1633 = vmatmul.f32.gmra.mxu0 %v1632
      %v1634 = vpop.f32.mrf.mxu0
      %v1635 = vadd.f32 %v1544, %v1634
      %v1636 = vand.u32 %v688, 4294901760
      %v1637 = vsub.f32 %v688, %v1636
      %1638 = vmatmul.f32.gmra.mxu0 %v1637
      %v1639 = vpop.f32.mrf.mxu0
      %v1640 = vadd.f32 %v1548, %v1639
      %v1641 = vand.u32 %v691, 4294901760
      %v1642 = vsub.f32 %v691, %v1641
      %1643 = vmatmul.f32.gmra.mxu0 %v1642
      %v1644 = vpop.f32.mrf.mxu0
      %v1645 = vadd.f32 %v1552, %v1644
      %v1646 = vand.u32 %v694, 4294901760
      %v1647 = vsub.f32 %v694, %v1646
      %1648 = vmatmul.f32.gmra.mxu0 %v1647
      %v1649 = vpop.f32.mrf.mxu0
      %v1650 = vadd.f32 %v1556, %v1649
      %v1651 = vand.u32 %v697, 4294901760
      %v1652 = vsub.f32 %v697, %v1651
      %1653 = vmatmul.f32.gmra.mxu0 %v1652
      %v1654 = vpop.f32.mrf.mxu0
      %v1655 = vadd.f32 %v1560, %v1654
      %v1656 = vand.u32 %v700, 4294901760
      %v1657 = vsub.f32 %v700, %v1656
      %1658 = vmatmul.f32.gmra.mxu0 %v1657
      %v1659 = vpop.f32.mrf.mxu0
      %v1660 = vadd.f32 %v1564, %v1659
      %v1661 = vand.u32 %v703, 4294901760
      %v1662 = vsub.f32 %v703, %v1661
      %1663 = vmatmul.f32.gmra.mxu0 %v1662
      %v1664 = vpop.f32.mrf.mxu0
      %v1665 = vadd.f32 %v1568, %v1664
      %v1666 = vand.u32 %v706, 4294901760
      %v1667 = vsub.f32 %v706, %v1666
      %1668 = vmatmul.f32.gmra.mxu0 %v1667
      %v1669 = vpop.f32.mrf.mxu0
      %v1670 = vadd.f32 %v1572, %v1669
      %v1671 = vand.u32 %v709, 4294901760
      %v1672 = vsub.f32 %v709, %v1671
      %1673 = vmatmul.f32.gmra.mxu0 %v1672
      %v1674 = vpop.f32.mrf.mxu0
      %v1675 = vadd.f32 %v1576, %v1674
      %v1676 = vand.u32 %v712, 4294901760
      %v1677 = vsub.f32 %v712, %v1676
      %1678 = vmatmul.f32.gmra.mxu0 %v1677
      %v1679 = vpop.f32.mrf.mxu0
      %v1680 = vadd.f32 %v1580, %v1679
      %v1681 = vand.u32 %v715, 4294901760
      %v1682 = vsub.f32 %v715, %v1681
      %1683 = vmatmul.f32.gmra.mxu0 %v1682
      %v1684 = vpop.f32.mrf.mxu0
      %v1685 = vadd.f32 %v1584, %v1684
      %1686 = vdwg.mxu0
      %1687 = vmatpush.msra.mxu0 0.0
      %1688 = vmatpush.msra.mxu0 0.0
      %1689 = vmatpush.msra.mxu0 0.0
      %1690 = vmatpush.msra.mxu0 0.0
      %1691 = vmatpush.msra.mxu0 0.0
      %1692 = vmatpush.msra.mxu0 0.0
      %1693 = vmatpush.msra.mxu0 0.0
      %1694 = vmatpush.msra.mxu0 0.0
      %1695 = vmatpush.msra.mxu0 0.0
      %1696 = vmatpush.msra.mxu0 0.0
      %1697 = vmatpush.msra.mxu0 0.0
      %1698 = vmatpush.msra.mxu0 0.0
      %1699 = vmatpush.msra.mxu0 0.0
      %1700 = vmatpush.msra.mxu0 0.0
      %v1701 = vand.u32 %v722, 4294901760
      %1702 = vmatpush.msra.mxu0 %v1701
      %v1703 = vand.u32 %v551, 4294901760
      %1704 = vmatpush.msra.mxu0 %v1703
      %v1705 = vand.u32 %v670, 4294901760
      %v1706 = vsub.f32 %v670, %v1705
      %v1707 = vand.u32 %v1706, 4294901760
      %1708 = vmatmul.f32.gmra.mxu0 %v1707
      %v1709 = vpop.f32.mrf.mxu0
      %v1710 = vadd.f32 %v1610, %v1709
      %v1711 = vand.u32 %v673, 4294901760
      %v1712 = vsub.f32 %v673, %v1711
      %v1713 = vand.u32 %v1712, 4294901760
      %1714 = vmatmul.f32.gmra.mxu0 %v1713
      %v1715 = vpop.f32.mrf.mxu0
      %v1716 = vadd.f32 %v1615, %v1715
      %v1717 = vand.u32 %v676, 4294901760
      %v1718 = vsub.f32 %v676, %v1717
      %v1719 = vand.u32 %v1718, 4294901760
      %1720 = vmatmul.f32.gmra.mxu0 %v1719
      %v1721 = vpop.f32.mrf.mxu0
      %v1722 = vadd.f32 %v1620, %v1721
      %v1723 = vand.u32 %v679, 4294901760
      %v1724 = vsub.f32 %v679, %v1723
      %v1725 = vand.u32 %v1724, 4294901760
      %1726 = vmatmul.f32.gmra.mxu0 %v1725
      %v1727 = vpop.f32.mrf.mxu0
      %v1728 = vadd.f32 %v1625, %v1727
      %v1729 = vand.u32 %v682, 4294901760
      %v1730 = vsub.f32 %v682, %v1729
      %v1731 = vand.u32 %v1730, 4294901760
      %1732 = vmatmul.f32.gmra.mxu0 %v1731
      %v1733 = vpop.f32.mrf.mxu0
      %v1734 = vadd.f32 %v1630, %v1733
      %v1735 = vand.u32 %v685, 4294901760
      %v1736 = vsub.f32 %v685, %v1735
      %v1737 = vand.u32 %v1736, 4294901760
      %1738 = vmatmul.f32.gmra.mxu0 %v1737
      %v1739 = vpop.f32.mrf.mxu0
      %v1740 = vadd.f32 %v1635, %v1739
      %v1741 = vand.u32 %v688, 4294901760
      %v1742 = vsub.f32 %v688, %v1741
      %v1743 = vand.u32 %v1742, 4294901760
      %1744 = vmatmul.f32.gmra.mxu0 %v1743
      %v1745 = vpop.f32.mrf.mxu0
      %v1746 = vadd.f32 %v1640, %v1745
      %v1747 = vand.u32 %v691, 4294901760
      %v1748 = vsub.f32 %v691, %v1747
      %v1749 = vand.u32 %v1748, 4294901760
      %1750 = vmatmul.f32.gmra.mxu0 %v1749
      %v1751 = vpop.f32.mrf.mxu0
      %v1752 = vadd.f32 %v1645, %v1751
      %v1753 = vand.u32 %v694, 4294901760
      %v1754 = vsub.f32 %v694, %v1753
      %v1755 = vand.u32 %v1754, 4294901760
      %1756 = vmatmul.f32.gmra.mxu0 %v1755
      %v1757 = vpop.f32.mrf.mxu0
      %v1758 = vadd.f32 %v1650, %v1757
      %v1759 = vand.u32 %v697, 4294901760
      %v1760 = vsub.f32 %v697, %v1759
      %v1761 = vand.u32 %v1760, 4294901760
      %1762 = vmatmul.f32.gmra.mxu0 %v1761
      %v1763 = vpop.f32.mrf.mxu0
      %v1764 = vadd.f32 %v1655, %v1763
      %v1765 = vand.u32 %v700, 4294901760
      %v1766 = vsub.f32 %v700, %v1765
      %v1767 = vand.u32 %v1766, 4294901760
      %1768 = vmatmul.f32.gmra.mxu0 %v1767
      %v1769 = vpop.f32.mrf.mxu0
      %v1770 = vadd.f32 %v1660, %v1769
      %v1771 = vand.u32 %v703, 4294901760
      %v1772 = vsub.f32 %v703, %v1771
      %v1773 = vand.u32 %v1772, 4294901760
      %1774 = vmatmul.f32.gmra.mxu0 %v1773
      %v1775 = vpop.f32.mrf.mxu0
      %v1776 = vadd.f32 %v1665, %v1775
      %v1777 = vand.u32 %v706, 4294901760
      %v1778 = vsub.f32 %v706, %v1777
      %v1779 = vand.u32 %v1778, 4294901760
      %1780 = vmatmul.f32.gmra.mxu0 %v1779
      %v1781 = vpop.f32.mrf.mxu0
      %v1782 = vadd.f32 %v1670, %v1781
      %v1783 = vand.u32 %v709, 4294901760
      %v1784 = vsub.f32 %v709, %v1783
      %v1785 = vand.u32 %v1784, 4294901760
      %1786 = vmatmul.f32.gmra.mxu0 %v1785
      %v1787 = vpop.f32.mrf.mxu0
      %v1788 = vadd.f32 %v1675, %v1787
      %v1789 = vand.u32 %v712, 4294901760
      %v1790 = vsub.f32 %v712, %v1789
      %v1791 = vand.u32 %v1790, 4294901760
      %1792 = vmatmul.f32.gmra.mxu0 %v1791
      %v1793 = vpop.f32.mrf.mxu0
      %v1794 = vadd.f32 %v1680, %v1793
      %v1795 = vand.u32 %v715, 4294901760
      %v1796 = vsub.f32 %v715, %v1795
      %v1797 = vand.u32 %v1796, 4294901760
      %1798 = vmatmul.f32.gmra.mxu0 %v1797
      %v1799 = vpop.f32.mrf.mxu0
      %v1800 = vadd.f32 %v1685, %v1799
      %1801 = vdwg.mxu0
      %1802 = vmatpush.msra.mxu0 0.0
      %1803 = vmatpush.msra.mxu0 0.0
      %1804 = vmatpush.msra.mxu0 0.0
      %1805 = vmatpush.msra.mxu0 0.0
      %1806 = vmatpush.msra.mxu0 0.0
      %1807 = vmatpush.msra.mxu0 0.0
      %1808 = vmatpush.msra.mxu0 0.0
      %1809 = vmatpush.msra.mxu0 0.0
      %1810 = vmatpush.msra.mxu0 0.0
      %1811 = vmatpush.msra.mxu0 0.0
      %1812 = vmatpush.msra.mxu0 0.0
      %1813 = vmatpush.msra.mxu0 0.0
      %1814 = vmatpush.msra.mxu0 0.0
      %1815 = vmatpush.msra.mxu0 0.0
      %v1816 = vand.u32 %v722, 4294901760
      %v1817 = vsub.f32 %v722, %v1816
      %v1818 = vand.u32 %v1817, 4294901760
      %1819 = vmatpush.msra.mxu0 %v1818
      %v1820 = vand.u32 %v551, 4294901760
      %v1821 = vsub.f32 %v551, %v1820
      %v1822 = vand.u32 %v1821, 4294901760
      %1823 = vmatpush.msra.mxu0 %v1822
      %v1824 = vand.u32 %v670, 4294901760
      %1825 = vmatmul.f32.gmra.mxu0 %v1824
      %v1826 = vpop.f32.mrf.mxu0
      %v1827 = vadd.f32 %v1710, %v1826
      %v1828 = vand.u32 %v673, 4294901760
      %1829 = vmatmul.f32.gmra.mxu0 %v1828
      %v1830 = vpop.f32.mrf.mxu0
      %v1831 = vadd.f32 %v1716, %v1830
      %v1832 = vand.u32 %v676, 4294901760
      %1833 = vmatmul.f32.gmra.mxu0 %v1832
      %v1834 = vpop.f32.mrf.mxu0
      %v1835 = vadd.f32 %v1722, %v1834
      %v1836 = vand.u32 %v679, 4294901760
      %1837 = vmatmul.f32.gmra.mxu0 %v1836
      %v1838 = vpop.f32.mrf.mxu0
      %v1839 = vadd.f32 %v1728, %v1838
      %v1840 = vand.u32 %v682, 4294901760
      %1841 = vmatmul.f32.gmra.mxu0 %v1840
      %v1842 = vpop.f32.mrf.mxu0
      %v1843 = vadd.f32 %v1734, %v1842
      %v1844 = vand.u32 %v685, 4294901760
      %1845 = vmatmul.f32.gmra.mxu0 %v1844
      %v1846 = vpop.f32.mrf.mxu0
      %v1847 = vadd.f32 %v1740, %v1846
      %v1848 = vand.u32 %v688, 4294901760
      %1849 = vmatmul.f32.gmra.mxu0 %v1848
      %v1850 = vpop.f32.mrf.mxu0
      %v1851 = vadd.f32 %v1746, %v1850
      %v1852 = vand.u32 %v691, 4294901760
      %1853 = vmatmul.f32.gmra.mxu0 %v1852
      %v1854 = vpop.f32.mrf.mxu0
      %v1855 = vadd.f32 %v1752, %v1854
      %v1856 = vand.u32 %v694, 4294901760
      %1857 = vmatmul.f32.gmra.mxu0 %v1856
      %v1858 = vpop.f32.mrf.mxu0
      %v1859 = vadd.f32 %v1758, %v1858
      %v1860 = vand.u32 %v697, 4294901760
      %1861 = vmatmul.f32.gmra.mxu0 %v1860
      %v1862 = vpop.f32.mrf.mxu0
      %v1863 = vadd.f32 %v1764, %v1862
      %v1864 = vand.u32 %v700, 4294901760
      %1865 = vmatmul.f32.gmra.mxu0 %v1864
      %v1866 = vpop.f32.mrf.mxu0
      %v1867 = vadd.f32 %v1770, %v1866
      %v1868 = vand.u32 %v703, 4294901760
      %1869 = vmatmul.f32.gmra.mxu0 %v1868
      %v1870 = vpop.f32.mrf.mxu0
      %v1871 = vadd.f32 %v1776, %v1870
      %v1872 = vand.u32 %v706, 4294901760
      %1873 = vmatmul.f32.gmra.mxu0 %v1872
      %v1874 = vpop.f32.mrf.mxu0
      %v1875 = vadd.f32 %v1782, %v1874
      %v1876 = vand.u32 %v709, 4294901760
      %1877 = vmatmul.f32.gmra.mxu0 %v1876
      %v1878 = vpop.f32.mrf.mxu0
      %v1879 = vadd.f32 %v1788, %v1878
      %v1880 = vand.u32 %v712, 4294901760
      %1881 = vmatmul.f32.gmra.mxu0 %v1880
      %v1882 = vpop.f32.mrf.mxu0
      %v1883 = vadd.f32 %v1794, %v1882
      %v1884 = vand.u32 %v715, 4294901760
      %1885 = vmatmul.f32.gmra.mxu0 %v1884
      %v1886 = vpop.f32.mrf.mxu0
      %v1887 = vadd.f32 %v1800, %v1886
      %1888 = vdwg.mxu0
      %1889 = vmatpush.msra.mxu0 0.0
      %1890 = vmatpush.msra.mxu0 0.0
      %1891 = vmatpush.msra.mxu0 0.0
      %1892 = vmatpush.msra.mxu0 0.0
      %1893 = vmatpush.msra.mxu0 0.0
      %1894 = vmatpush.msra.mxu0 0.0
      %1895 = vmatpush.msra.mxu0 0.0
      %1896 = vmatpush.msra.mxu0 0.0
      %1897 = vmatpush.msra.mxu0 0.0
      %1898 = vmatpush.msra.mxu0 0.0
      %1899 = vmatpush.msra.mxu0 0.0
      %1900 = vmatpush.msra.mxu0 0.0
      %1901 = vmatpush.msra.mxu0 0.0
      %1902 = vmatpush.msra.mxu0 0.0
      %v1903 = vand.u32 %v722, 4294901760
      %1904 = vmatpush.msra.mxu0 %v1903
      %v1905 = vand.u32 %v551, 4294901760
      %1906 = vmatpush.msra.mxu0 %v1905
      %v1907 = vand.u32 %v670, 4294901760
      %1908 = vmatmul.f32.gmra.mxu0 %v1907
      %v1909 = vpop.f32.mrf.mxu0
      %v1910 = vadd.f32 %v1827, %v1909
      %v1911 = vand.u32 %v673, 4294901760
      %1912 = vmatmul.f32.gmra.mxu0 %v1911
      %v1913 = vpop.f32.mrf.mxu0
      %v1914 = vadd.f32 %v1831, %v1913
      %v1915 = vand.u32 %v676, 4294901760
      %1916 = vmatmul.f32.gmra.mxu0 %v1915
      %v1917 = vpop.f32.mrf.mxu0
      %v1918 = vadd.f32 %v1835, %v1917
      %v1919 = vand.u32 %v679, 4294901760
      %1920 = vmatmul.f32.gmra.mxu0 %v1919
      %v1921 = vpop.f32.mrf.mxu0
      %v1922 = vadd.f32 %v1839, %v1921
      %v1923 = vand.u32 %v682, 4294901760
      %1924 = vmatmul.f32.gmra.mxu0 %v1923
      %v1925 = vpop.f32.mrf.mxu0
      %v1926 = vadd.f32 %v1843, %v1925
      %v1927 = vand.u32 %v685, 4294901760
      %1928 = vmatmul.f32.gmra.mxu0 %v1927
      %v1929 = vpop.f32.mrf.mxu0
      %v1930 = vadd.f32 %v1847, %v1929
      %v1931 = vand.u32 %v688, 4294901760
      %1932 = vmatmul.f32.gmra.mxu0 %v1931
      %v1933 = vpop.f32.mrf.mxu0
      %v1934 = vadd.f32 %v1851, %v1933
      %v1935 = vand.u32 %v691, 4294901760
      %1936 = vmatmul.f32.gmra.mxu0 %v1935
      %v1937 = vpop.f32.mrf.mxu0
      %v1938 = vadd.f32 %v1855, %v1937
      %v1939 = vand.u32 %v694, 4294901760
      %1940 = vmatmul.f32.gmra.mxu0 %v1939
      %v1941 = vpop.f32.mrf.mxu0
      %v1942 = vadd.f32 %v1859, %v1941
      %v1943 = vand.u32 %v697, 4294901760
      %1944 = vmatmul.f32.gmra.mxu0 %v1943
      %v1945 = vpop.f32.mrf.mxu0
      %v1946 = vadd.f32 %v1863, %v1945
      %v1947 = vand.u32 %v700, 4294901760
      %1948 = vmatmul.f32.gmra.mxu0 %v1947
      %v1949 = vpop.f32.mrf.mxu0
      %v1950 = vadd.f32 %v1867, %v1949
      %v1951 = vand.u32 %v703, 4294901760
      %1952 = vmatmul.f32.gmra.mxu0 %v1951
      %v1953 = vpop.f32.mrf.mxu0
      %v1954 = vadd.f32 %v1871, %v1953
      %v1955 = vand.u32 %v706, 4294901760
      %1956 = vmatmul.f32.gmra.mxu0 %v1955
      %v1957 = vpop.f32.mrf.mxu0
      %v1958 = vadd.f32 %v1875, %v1957
      %v1959 = vand.u32 %v709, 4294901760
      %1960 = vmatmul.f32.gmra.mxu0 %v1959
      %v1961 = vpop.f32.mrf.mxu0
      %v1962 = vadd.f32 %v1879, %v1961
      %v1963 = vand.u32 %v712, 4294901760
      %1964 = vmatmul.f32.gmra.mxu0 %v1963
      %v1965 = vpop.f32.mrf.mxu0
      %v1966 = vadd.f32 %v1883, %v1965
      %v1967 = vand.u32 %v715, 4294901760
      %1968 = vmatmul.f32.gmra.mxu0 %v1967
      %v1969 = vpop.f32.mrf.mxu0
      %v1970 = vadd.f32 %v1887, %v1969
      %1971 = vdwg.mxu0
      %vm1972 = vcmp.ge.f32.partialorder %v1286, 0.0
      %vm1973 = vcmp.ge.f32.partialorder %v1910, 0.0
      %vm1974 = vcmp.ge.f32.partialorder %v1290, 0.0
      %vm1975 = vcmp.ge.f32.partialorder %v1914, 0.0
      %vm1976 = vcmp.ge.f32.partialorder %v1294, 0.0
      %vm1977 = vcmp.ge.f32.partialorder %v1918, 0.0
      %vm1978 = vcmp.ge.f32.partialorder %v1298, 0.0
      %vm1979 = vcmp.ge.f32.partialorder %v1922, 0.0
      %vm1980 = vcmp.ge.f32.partialorder %v1302, 0.0
      %vm1981 = vcmp.ge.f32.partialorder %v1926, 0.0
      %vm1982 = vcmp.ge.f32.partialorder %v1306, 0.0
      %vm1983 = vcmp.ge.f32.partialorder %v1930, 0.0
      %vm1984 = vcmp.ge.f32.partialorder %v1310, 0.0
      %vm1985 = vcmp.ge.f32.partialorder %v1934, 0.0
      %vm1986 = vcmp.ge.f32.partialorder %v1314, 0.0
      %vm1987 = vcmp.ge.f32.partialorder %v1938, 0.0
      %vm1988 = vcmp.ge.f32.partialorder %v1318, 0.0
      %vm1989 = vcmp.ge.f32.partialorder %v1942, 0.0
      %vm1990 = vcmp.ge.f32.partialorder %v1322, 0.0
      %vm1991 = vcmp.ge.f32.partialorder %v1946, 0.0
      %vm1992 = vcmp.ge.f32.partialorder %v1326, 0.0
      %vm1993 = vcmp.ge.f32.partialorder %v1950, 0.0
      %vm1994 = vcmp.ge.f32.partialorder %v1330, 0.0
      %vm1995 = vcmp.ge.f32.partialorder %v1954, 0.0
      %vm1996 = vcmp.ge.f32.partialorder %v1334, 0.0
      %vm1997 = vcmp.ge.f32.partialorder %v1958, 0.0
      %vm1998 = vcmp.ge.f32.partialorder %v1338, 0.0
      %vm1999 = vcmp.ge.f32.partialorder %v1962, 0.0
      %vm2000 = vcmp.ge.f32.partialorder %v1342, 0.0
      %vm2001 = vcmp.ge.f32.partialorder %v1966, 0.0
      %vm2002 = vcmp.ge.f32.partialorder %v1346, 0.0
      %vm2003 = vcmp.ge.f32.partialorder %v1970, 0.0
      %v2004 = vmul.f32 %v1286, 0.05
      %v2005 = vmul.f32 %v1910, 0.05
      %v2006 = vmul.f32 %v1290, 0.05
      %v2007 = vmul.f32 %v1914, 0.05
      %v2008 = vmul.f32 %v1294, 0.05
      %v2009 = vmul.f32 %v1918, 0.05
      %v2010 = vmul.f32 %v1298, 0.05
      %v2011 = vmul.f32 %v1922, 0.05
      %v2012 = vmul.f32 %v1302, 0.05
      %v2013 = vmul.f32 %v1926, 0.05
      %v2014 = vmul.f32 %v1306, 0.05
      %v2015 = vmul.f32 %v1930, 0.05
      %v2016 = vmul.f32 %v1310, 0.05
      %v2017 = vmul.f32 %v1934, 0.05
      %v2018 = vmul.f32 %v1314, 0.05
      %v2019 = vmul.f32 %v1938, 0.05
      %v2020 = vmul.f32 %v1318, 0.05
      %v2021 = vmul.f32 %v1942, 0.05
      %v2022 = vmul.f32 %v1322, 0.05
      %v2023 = vmul.f32 %v1946, 0.05
      %v2024 = vmul.f32 %v1326, 0.05
      %v2025 = vmul.f32 %v1950, 0.05
      %v2026 = vmul.f32 %v1330, 0.05
      %v2027 = vmul.f32 %v1954, 0.05
      %v2028 = vmul.f32 %v1334, 0.05
      %v2029 = vmul.f32 %v1958, 0.05
      %v2030 = vmul.f32 %v1338, 0.05
      %v2031 = vmul.f32 %v1962, 0.05
      %v2032 = vmul.f32 %v1342, 0.05
      %v2033 = vmul.f32 %v1966, 0.05
      %v2034 = vmul.f32 %v1346, 0.05
      %v2035 = vmul.f32 %v1970, 0.05
      %v2036 = vsel %vm1972, %v1286, %v2004
      %v2037 = vsel %vm1973, %v1910, %v2005
      %v2038 = vsel %vm1974, %v1290, %v2006
      %v2039 = vsel %vm1975, %v1914, %v2007
      %v2040 = vsel %vm1976, %v1294, %v2008
      %v2041 = vsel %vm1977, %v1918, %v2009
      %v2042 = vsel %vm1978, %v1298, %v2010
      %v2043 = vsel %vm1979, %v1922, %v2011
      %v2044 = vsel %vm1980, %v1302, %v2012
      %v2045 = vsel %vm1981, %v1926, %v2013
      %v2046 = vsel %vm1982, %v1306, %v2014
      %v2047 = vsel %vm1983, %v1930, %v2015
      %v2048 = vsel %vm1984, %v1310, %v2016
      %v2049 = vsel %vm1985, %v1934, %v2017
      %v2050 = vsel %vm1986, %v1314, %v2018
      %v2051 = vsel %vm1987, %v1938, %v2019
      %v2052 = vsel %vm1988, %v1318, %v2020
      %v2053 = vsel %vm1989, %v1942, %v2021
      %v2054 = vsel %vm1990, %v1322, %v2022
      %v2055 = vsel %vm1991, %v1946, %v2023
      %v2056 = vsel %vm1992, %v1326, %v2024
      %v2057 = vsel %vm1993, %v1950, %v2025
      %v2058 = vsel %vm1994, %v1330, %v2026
      %v2059 = vsel %vm1995, %v1954, %v2027
      %v2060 = vsel %vm1996, %v1334, %v2028
      %v2061 = vsel %vm1997, %v1958, %v2029
      %v2062 = vsel %vm1998, %v1338, %v2030
      %v2063 = vsel %vm1999, %v1962, %v2031
      %v2064 = vsel %vm2000, %v1342, %v2032
      %v2065 = vsel %vm2001, %v1966, %v2033
      %v2066 = vsel %vm2002, %v1346, %v2034
      %v2067 = vsel %vm2003, %v1970, %v2035
      %v2069 = vsel %vm717, %v555, 0
      %2071 = vmatpush.msra.mxu0 0.0
      %2072 = vmatpush.msra.mxu0 0.0
      %2073 = vmatpush.msra.mxu0 0.0
      %2074 = vmatpush.msra.mxu0 0.0
      %2075 = vmatpush.msra.mxu0 0.0
      %2076 = vmatpush.msra.mxu0 0.0
      %2077 = vmatpush.msra.mxu0 0.0
      %2078 = vmatpush.msra.mxu0 0.0
      %2079 = vmatpush.msra.mxu0 0.0
      %2080 = vmatpush.msra.mxu0 0.0
      %2081 = vmatpush.msra.mxu0 0.0
      %2082 = vmatpush.msra.mxu0 0.0
      %2083 = vmatpush.msra.mxu0 0.0
      %2084 = vmatpush.msra.mxu0 0.0
      %v2085 = vand.u32 %v2069, 4294901760
      %2086 = vmatpush.msra.mxu0 %v2085
      %v2087 = vand.u32 %v554, 4294901760
      %2088 = vmatpush.msra.mxu0 %v2087
      %v2089 = vand.u32 %v670, 4294901760
      %v2090 = vsub.f32 %v670, %v2089
      %v2091 = vand.u32 %v2090, 4294901760
      %v2092 = vsub.f32 %v2090, %v2091
      %v2093 = vand.u32 %v2092, 4294901760
      %2094 = vmatmul.f32.gmra.mxu0 %v2093
      %v2095 = vpop.f32.mrf.mxu0
      %v2096 = vadd.f32 %v591, %v2095
      %v2097 = vand.u32 %v673, 4294901760
      %v2098 = vsub.f32 %v673, %v2097
      %v2099 = vand.u32 %v2098, 4294901760
      %v2100 = vsub.f32 %v2098, %v2099
      %v2101 = vand.u32 %v2100, 4294901760
      %2102 = vmatmul.f32.gmra.mxu0 %v2101
      %v2103 = vpop.f32.mrf.mxu0
      %v2104 = vadd.f32 %v596, %v2103
      %v2105 = vand.u32 %v676, 4294901760
      %v2106 = vsub.f32 %v676, %v2105
      %v2107 = vand.u32 %v2106, 4294901760
      %v2108 = vsub.f32 %v2106, %v2107
      %v2109 = vand.u32 %v2108, 4294901760
      %2110 = vmatmul.f32.gmra.mxu0 %v2109
      %v2111 = vpop.f32.mrf.mxu0
      %v2112 = vadd.f32 %v601, %v2111
      %2113 = vdwg.mxu0
      %2114 = vmatpush.msra.mxu0 0.0
      %2115 = vmatpush.msra.mxu0 0.0
      %2116 = vmatpush.msra.mxu0 0.0
      %2117 = vmatpush.msra.mxu0 0.0
      %2118 = vmatpush.msra.mxu0 0.0
      %2119 = vmatpush.msra.mxu0 0.0
      %2120 = vmatpush.msra.mxu0 0.0
      %2121 = vmatpush.msra.mxu0 0.0
      %2122 = vmatpush.msra.mxu0 0.0
      %2123 = vmatpush.msra.mxu0 0.0
      %2124 = vmatpush.msra.mxu0 0.0
      %2125 = vmatpush.msra.mxu0 0.0
      %2126 = vmatpush.msra.mxu0 0.0
      %2127 = vmatpush.msra.mxu0 0.0
      %v2128 = vand.u32 %v2069, 4294901760
      %v2129 = vsub.f32 %v2069, %v2128
      %v2130 = vand.u32 %v2129, 4294901760
      %v2131 = vsub.f32 %v2129, %v2130
      %v2132 = vand.u32 %v2131, 4294901760
      %2133 = vmatpush.msra.mxu0 %v2132
      %v2134 = vand.u32 %v554, 4294901760
      %v2135 = vsub.f32 %v554, %v2134
      %v2136 = vand.u32 %v2135, 4294901760
      %v2137 = vsub.f32 %v2135, %v2136
      %v2138 = vand.u32 %v2137, 4294901760
      %2139 = vmatpush.msra.mxu0 %v2138
      %v2140 = vand.u32 %v670, 4294901760
      %2141 = vmatmul.f32.gmra.mxu0 %v2140
      %v2142 = vpop.f32.mrf.mxu0
      %v2143 = vadd.f32 %v2096, %v2142
      %v2144 = vand.u32 %v673, 4294901760
      %2145 = vmatmul.f32.gmra.mxu0 %v2144
      %v2146 = vpop.f32.mrf.mxu0
      %v2147 = vadd.f32 %v2104, %v2146
      %v2148 = vand.u32 %v676, 4294901760
      %2149 = vmatmul.f32.gmra.mxu0 %v2148
      %v2150 = vpop.f32.mrf.mxu0
      %v2151 = vadd.f32 %v2112, %v2150
      %2152 = vdwg.mxu0
      %2153 = vmatpush.msra.mxu0 0.0
      %2154 = vmatpush.msra.mxu0 0.0
      %2155 = vmatpush.msra.mxu0 0.0
      %2156 = vmatpush.msra.mxu0 0.0
      %2157 = vmatpush.msra.mxu0 0.0
      %2158 = vmatpush.msra.mxu0 0.0
      %2159 = vmatpush.msra.mxu0 0.0
      %2160 = vmatpush.msra.mxu0 0.0
      %2161 = vmatpush.msra.mxu0 0.0
      %2162 = vmatpush.msra.mxu0 0.0
      %2163 = vmatpush.msra.mxu0 0.0
      %2164 = vmatpush.msra.mxu0 0.0
      %2165 = vmatpush.msra.mxu0 0.0
      %2166 = vmatpush.msra.mxu0 0.0
      %v2167 = vand.u32 %v2069, 4294901760
      %v2168 = vsub.f32 %v2069, %v2167
      %2169 = vmatpush.msra.mxu0 %v2168
      %v2170 = vand.u32 %v554, 4294901760
      %v2171 = vsub.f32 %v554, %v2170
      %2172 = vmatpush.msra.mxu0 %v2171
      %v2173 = vand.u32 %v670, 4294901760
      %v2174 = vsub.f32 %v670, %v2173
      %2175 = vmatmul.f32.gmra.mxu0 %v2174
      %v2176 = vpop.f32.mrf.mxu0
      %v2177 = vadd.f32 %v2143, %v2176
      %v2178 = vand.u32 %v673, 4294901760
      %v2179 = vsub.f32 %v673, %v2178
      %2180 = vmatmul.f32.gmra.mxu0 %v2179
      %v2181 = vpop.f32.mrf.mxu0
      %v2182 = vadd.f32 %v2147, %v2181
      %v2183 = vand.u32 %v676, 4294901760
      %v2184 = vsub.f32 %v676, %v2183
      %2185 = vmatmul.f32.gmra.mxu0 %v2184
      %v2186 = vpop.f32.mrf.mxu0
      %v2187 = vadd.f32 %v2151, %v2186
      %2188 = vdwg.mxu0
      %2189 = vmatpush.msra.mxu0 0.0
      %2190 = vmatpush.msra.mxu0 0.0
      %2191 = vmatpush.msra.mxu0 0.0
      %2192 = vmatpush.msra.mxu0 0.0
      %2193 = vmatpush.msra.mxu0 0.0
      %2194 = vmatpush.msra.mxu0 0.0
      %2195 = vmatpush.msra.mxu0 0.0
      %2196 = vmatpush.msra.mxu0 0.0
      %2197 = vmatpush.msra.mxu0 0.0
      %2198 = vmatpush.msra.mxu0 0.0
      %2199 = vmatpush.msra.mxu0 0.0
      %2200 = vmatpush.msra.mxu0 0.0
      %2201 = vmatpush.msra.mxu0 0.0
      %2202 = vmatpush.msra.mxu0 0.0
      %v2203 = vand.u32 %v2069, 4294901760
      %2204 = vmatpush.msra.mxu0 %v2203
      %v2205 = vand.u32 %v554, 4294901760
      %2206 = vmatpush.msra.mxu0 %v2205
      %v2207 = vand.u32 %v670, 4294901760
      %v2208 = vsub.f32 %v670, %v2207
      %v2209 = vand.u32 %v2208, 4294901760
      %2210 = vmatmul.f32.gmra.mxu0 %v2209
      %v2211 = vpop.f32.mrf.mxu0
      %v2212 = vadd.f32 %v2177, %v2211
      %v2213 = vand.u32 %v673, 4294901760
      %v2214 = vsub.f32 %v673, %v2213
      %v2215 = vand.u32 %v2214, 4294901760
      %2216 = vmatmul.f32.gmra.mxu0 %v2215
      %v2217 = vpop.f32.mrf.mxu0
      %v2218 = vadd.f32 %v2182, %v2217
      %v2219 = vand.u32 %v676, 4294901760
      %v2220 = vsub.f32 %v676, %v2219
      %v2221 = vand.u32 %v2220, 4294901760
      %2222 = vmatmul.f32.gmra.mxu0 %v2221
      %v2223 = vpop.f32.mrf.mxu0
      %v2224 = vadd.f32 %v2187, %v2223
      %2225 = vdwg.mxu0
      %2226 = vmatpush.msra.mxu0 0.0
      %2227 = vmatpush.msra.mxu0 0.0
      %2228 = vmatpush.msra.mxu0 0.0
      %2229 = vmatpush.msra.mxu0 0.0
      %2230 = vmatpush.msra.mxu0 0.0
      %2231 = vmatpush.msra.mxu0 0.0
      %2232 = vmatpush.msra.mxu0 0.0
      %2233 = vmatpush.msra.mxu0 0.0
      %2234 = vmatpush.msra.mxu0 0.0
      %2235 = vmatpush.msra.mxu0 0.0
      %2236 = vmatpush.msra.mxu0 0.0
      %2237 = vmatpush.msra.mxu0 0.0
      %2238 = vmatpush.msra.mxu0 0.0
      %2239 = vmatpush.msra.mxu0 0.0
      %v2240 = vand.u32 %v2069, 4294901760
      %v2241 = vsub.f32 %v2069, %v2240
      %v2242 = vand.u32 %v2241, 4294901760
      %2243 = vmatpush.msra.mxu0 %v2242
      %v2244 = vand.u32 %v554, 4294901760
      %v2245 = vsub.f32 %v554, %v2244
      %v2246 = vand.u32 %v2245, 4294901760
      %2247 = vmatpush.msra.mxu0 %v2246
      %v2248 = vand.u32 %v670, 4294901760
      %2249 = vmatmul.f32.gmra.mxu0 %v2248
      %v2250 = vpop.f32.mrf.mxu0
      %v2251 = vadd.f32 %v2212, %v2250
      %v2252 = vand.u32 %v673, 4294901760
      %2253 = vmatmul.f32.gmra.mxu0 %v2252
      %v2254 = vpop.f32.mrf.mxu0
      %v2255 = vadd.f32 %v2218, %v2254
      %v2256 = vand.u32 %v676, 4294901760
      %2257 = vmatmul.f32.gmra.mxu0 %v2256
      %v2258 = vpop.f32.mrf.mxu0
      %v2259 = vadd.f32 %v2224, %v2258
      %2260 = vdwg.mxu0
      %2261 = vmatpush.msra.mxu0 0.0
      %2262 = vmatpush.msra.mxu0 0.0
      %2263 = vmatpush.msra.mxu0 0.0
      %2264 = vmatpush.msra.mxu0 0.0
      %2265 = vmatpush.msra.mxu0 0.0
      %2266 = vmatpush.msra.mxu0 0.0
      %2267 = vmatpush.msra.mxu0 0.0
      %2268 = vmatpush.msra.mxu0 0.0
      %2269 = vmatpush.msra.mxu0 0.0
      %2270 = vmatpush.msra.mxu0 0.0
      %2271 = vmatpush.msra.mxu0 0.0
      %2272 = vmatpush.msra.mxu0 0.0
      %2273 = vmatpush.msra.mxu0 0.0
      %2274 = vmatpush.msra.mxu0 0.0
      %v2275 = vand.u32 %v2069, 4294901760
      %2276 = vmatpush.msra.mxu0 %v2275
      %v2277 = vand.u32 %v554, 4294901760
      %2278 = vmatpush.msra.mxu0 %v2277
      %v2279 = vand.u32 %v670, 4294901760
      %2280 = vmatmul.f32.gmra.mxu0 %v2279
      %v2281 = vpop.f32.mrf.mxu0
      %v2282 = vadd.f32 %v2251, %v2281
      %v2283 = vand.u32 %v673, 4294901760
      %2284 = vmatmul.f32.gmra.mxu0 %v2283
      %v2285 = vpop.f32.mrf.mxu0
      %v2286 = vadd.f32 %v2255, %v2285
      %v2287 = vand.u32 %v676, 4294901760
      %2288 = vmatmul.f32.gmra.mxu0 %v2287
      %v2289 = vpop.f32.mrf.mxu0
      %v2290 = vadd.f32 %v2259, %v2289
      %2291 = vdwg.mxu0
      %vm2292 = vcmp.ge.f32.partialorder %v2282, 0.0
      %vm2293 = vcmp.ge.f32.partialorder %v2286, 0.0
      %vm2294 = vcmp.ge.f32.partialorder %v2290, 0.0
      %v2295 = vmul.f32 %v2282, 0.05
      %v2296 = vmul.f32 %v2286, 0.05
      %v2297 = vmul.f32 %v2290, 0.05
      %v2298 = vsel %vm2292, %v2282, %v2295
      %v2299 = vsel %vm2293, %v2286, %v2296
      %v2300 = vsel %vm2294, %v2290, %v2297
      %v2301 = vlaneseq
      %v2302 = vand.u32 %v2301, 127
      %p2303 = scmp.gt.s32.totalorder %s29, 0
      %s2304 = scalar_select %p2303, 1, 0
      %s2305 = scvt.s32.f32 %s2304
      %p2306 = scmp.lt.s32.totalorder %s29, 0
      %s2307 = scalar_select %p2306, 1, 0
      %s2308 = scvt.s32.f32 %s2307
      %vm2309 = vcmp.lt.s32.totalorder %v2302, 16
      %v2310 = vstv %s2305
      %v2311 = vstv %s2308
      %v2312 = vsel %vm2309, %v2310, %v2311
      %v2313 = vmul.f32 %v2298, %v2312
      %v2314 = vmul.f32 %v2299, %v2312
      %v2315 = vmul.f32 %v2300, %v2312
      %v2316 = vld [vmem:[%s7] sm:$0xff]
      %v2317 = vld [vmem:[%s7 + $0x8] sm:$0x1]
      %v2318 = vld [vmem:[%s8] sm:$0xff]
      %v2319 = vld [vmem:[%s8 + $0x8] sm:$0x1]
      %2321 = vset.pattern.permute.xlu0 0
      %2322 = vperm.xlu0 %2321, %v2318
      %v2323 = vpop.permute.xlu0 %2322
      %2326 = vset.pattern.permute.xlu0 0
      %2327 = vperm.xlu0 %2326, %v2319
      %v2328 = vpop.permute.xlu0 %2327
      %vm2330 = vcmask 850944
      %v2332 = vsel %vm2330, %v2316, 0
      %v2335 = vsel %vm2330, %v2317, 0
      %2337 = vmatpush.msra.mxu0 0.0
      %2338 = vmatpush.msra.mxu0 0.0
      %2339 = vmatpush.msra.mxu0 0.0
      %v2340 = vand.u32 %v2066, 4294901760
      %2341 = vmatpush.msra.mxu0 %v2340
      %v2342 = vand.u32 %v2064, 4294901760
      %2343 = vmatpush.msra.mxu0 %v2342
      %v2344 = vand.u32 %v2062, 4294901760
      %2345 = vmatpush.msra.mxu0 %v2344
      %v2346 = vand.u32 %v2060, 4294901760
      %2347 = vmatpush.msra.mxu0 %v2346
      %v2348 = vand.u32 %v2058, 4294901760
      %2349 = vmatpush.msra.mxu0 %v2348
      %v2350 = vand.u32 %v2056, 4294901760
      %2351 = vmatpush.msra.mxu0 %v2350
      %v2352 = vand.u32 %v2054, 4294901760
      %2353 = vmatpush.msra.mxu0 %v2352
      %v2354 = vand.u32 %v2052, 4294901760
      %2355 = vmatpush.msra.mxu0 %v2354
      %v2356 = vand.u32 %v2050, 4294901760
      %2357 = vmatpush.msra.mxu0 %v2356
      %v2358 = vand.u32 %v2048, 4294901760
      %2359 = vmatpush.msra.mxu0 %v2358
      %v2360 = vand.u32 %v2046, 4294901760
      %2361 = vmatpush.msra.mxu0 %v2360
      %v2362 = vand.u32 %v2044, 4294901760
      %2363 = vmatpush.msra.mxu0 %v2362
      %v2364 = vand.u32 %v2042, 4294901760
      %2365 = vmatpush.msra.mxu0 %v2364
      %v2366 = vand.u32 %v2332, 4294901760
      %v2367 = vsub.f32 %v2332, %v2366
      %v2368 = vand.u32 %v2367, 4294901760
      %v2369 = vsub.f32 %v2367, %v2368
      %v2370 = vand.u32 %v2369, 4294901760
      %2371 = vmatmul.f32.gmra.mxu0 %v2370
      %v2372 = vpop.f32.mrf.mxu0
      %v2373 = vadd.f32 %v2323, %v2372
      %v2374 = vand.u32 %v2335, 4294901760
      %v2375 = vsub.f32 %v2335, %v2374
      %v2376 = vand.u32 %v2375, 4294901760
      %v2377 = vsub.f32 %v2375, %v2376
      %v2378 = vand.u32 %v2377, 4294901760
      %2379 = vmatmul.f32.gmra.mxu0 %v2378
      %v2380 = vpop.f32.mrf.mxu0
      %v2381 = vadd.f32 %v2328, %v2380
      %2382 = vdwg.mxu0
      %2383 = vmatpush.msra.mxu0 0.0
      %2384 = vmatpush.msra.mxu0 0.0
      %2385 = vmatpush.msra.mxu0 0.0
      %v2386 = vand.u32 %v2066, 4294901760
      %v2387 = vsub.f32 %v2066, %v2386
      %v2388 = vand.u32 %v2387, 4294901760
      %v2389 = vsub.f32 %v2387, %v2388
      %v2390 = vand.u32 %v2389, 4294901760
      %2391 = vmatpush.msra.mxu0 %v2390
      %v2392 = vand.u32 %v2064, 4294901760
      %v2393 = vsub.f32 %v2064, %v2392
      %v2394 = vand.u32 %v2393, 4294901760
      %v2395 = vsub.f32 %v2393, %v2394
      %v2396 = vand.u32 %v2395, 4294901760
      %2397 = vmatpush.msra.mxu0 %v2396
      %v2398 = vand.u32 %v2062, 4294901760
      %v2399 = vsub.f32 %v2062, %v2398
      %v2400 = vand.u32 %v2399, 4294901760
      %v2401 = vsub.f32 %v2399, %v2400
      %v2402 = vand.u32 %v2401, 4294901760
      %2403 = vmatpush.msra.mxu0 %v2402
      %v2404 = vand.u32 %v2060, 4294901760
      %v2405 = vsub.f32 %v2060, %v2404
      %v2406 = vand.u32 %v2405, 4294901760
      %v2407 = vsub.f32 %v2405, %v2406
      %v2408 = vand.u32 %v2407, 4294901760
      %2409 = vmatpush.msra.mxu0 %v2408
      %v2410 = vand.u32 %v2058, 4294901760
      %v2411 = vsub.f32 %v2058, %v2410
      %v2412 = vand.u32 %v2411, 4294901760
      %v2413 = vsub.f32 %v2411, %v2412
      %v2414 = vand.u32 %v2413, 4294901760
      %2415 = vmatpush.msra.mxu0 %v2414
      %v2416 = vand.u32 %v2056, 4294901760
      %v2417 = vsub.f32 %v2056, %v2416
      %v2418 = vand.u32 %v2417, 4294901760
      %v2419 = vsub.f32 %v2417, %v2418
      %v2420 = vand.u32 %v2419, 4294901760
      %2421 = vmatpush.msra.mxu0 %v2420
      %v2422 = vand.u32 %v2054, 4294901760
      %v2423 = vsub.f32 %v2054, %v2422
      %v2424 = vand.u32 %v2423, 4294901760
      %v2425 = vsub.f32 %v2423, %v2424
      %v2426 = vand.u32 %v2425, 4294901760
      %2427 = vmatpush.msra.mxu0 %v2426
      %v2428 = vand.u32 %v2052, 4294901760
      %v2429 = vsub.f32 %v2052, %v2428
      %v2430 = vand.u32 %v2429, 4294901760
      %v2431 = vsub.f32 %v2429, %v2430
      %v2432 = vand.u32 %v2431, 4294901760
      %2433 = vmatpush.msra.mxu0 %v2432
      %v2434 = vand.u32 %v2050, 4294901760
      %v2435 = vsub.f32 %v2050, %v2434
      %v2436 = vand.u32 %v2435, 4294901760
      %v2437 = vsub.f32 %v2435, %v2436
      %v2438 = vand.u32 %v2437, 4294901760
      %2439 = vmatpush.msra.mxu0 %v2438
      %v2440 = vand.u32 %v2048, 4294901760
      %v2441 = vsub.f32 %v2048, %v2440
      %v2442 = vand.u32 %v2441, 4294901760
      %v2443 = vsub.f32 %v2441, %v2442
      %v2444 = vand.u32 %v2443, 4294901760
      %2445 = vmatpush.msra.mxu0 %v2444
      %v2446 = vand.u32 %v2046, 4294901760
      %v2447 = vsub.f32 %v2046, %v2446
      %v2448 = vand.u32 %v2447, 4294901760
      %v2449 = vsub.f32 %v2447, %v2448
      %v2450 = vand.u32 %v2449, 4294901760
      %2451 = vmatpush.msra.mxu0 %v2450
      %v2452 = vand.u32 %v2044, 4294901760
      %v2453 = vsub.f32 %v2044, %v2452
      %v2454 = vand.u32 %v2453, 4294901760
      %v2455 = vsub.f32 %v2453, %v2454
      %v2456 = vand.u32 %v2455, 4294901760
      %2457 = vmatpush.msra.mxu0 %v2456
      %v2458 = vand.u32 %v2042, 4294901760
      %v2459 = vsub.f32 %v2042, %v2458
      %v2460 = vand.u32 %v2459, 4294901760
      %v2461 = vsub.f32 %v2459, %v2460
      %v2462 = vand.u32 %v2461, 4294901760
      %2463 = vmatpush.msra.mxu0 %v2462
      %v2464 = vand.u32 %v2332, 4294901760
      %2465 = vmatmul.f32.gmra.mxu0 %v2464
      %v2466 = vpop.f32.mrf.mxu0
      %v2467 = vadd.f32 %v2373, %v2466
      %v2468 = vand.u32 %v2335, 4294901760
      %2469 = vmatmul.f32.gmra.mxu0 %v2468
      %v2470 = vpop.f32.mrf.mxu0
      %v2471 = vadd.f32 %v2381, %v2470
      %2472 = vdwg.mxu0
      %2473 = vmatpush.msra.mxu0 0.0
      %2474 = vmatpush.msra.mxu0 0.0
      %2475 = vmatpush.msra.mxu0 0.0
      %v2476 = vand.u32 %v2066, 4294901760
      %v2477 = vsub.f32 %v2066, %v2476
      %2478 = vmatpush.msra.mxu0 %v2477
      %v2479 = vand.u32 %v2064, 4294901760
      %v2480 = vsub.f32 %v2064, %v2479
      %2481 = vmatpush.msra.mxu0 %v2480
      %v2482 = vand.u32 %v2062, 4294901760
      %v2483 = vsub.f32 %v2062, %v2482
      %2484 = vmatpush.msra.mxu0 %v2483
      %v2485 = vand.u32 %v2060, 4294901760
      %v2486 = vsub.f32 %v2060, %v2485
      %2487 = vmatpush.msra.mxu0 %v2486
      %v2488 = vand.u32 %v2058, 4294901760
      %v2489 = vsub.f32 %v2058, %v2488
      %2490 = vmatpush.msra.mxu0 %v2489
      %v2491 = vand.u32 %v2056, 4294901760
      %v2492 = vsub.f32 %v2056, %v2491
      %2493 = vmatpush.msra.mxu0 %v2492
      %v2494 = vand.u32 %v2054, 4294901760
      %v2495 = vsub.f32 %v2054, %v2494
      %2496 = vmatpush.msra.mxu0 %v2495
      %v2497 = vand.u32 %v2052, 4294901760
      %v2498 = vsub.f32 %v2052, %v2497
      %2499 = vmatpush.msra.mxu0 %v2498
      %v2500 = vand.u32 %v2050, 4294901760
      %v2501 = vsub.f32 %v2050, %v2500
      %2502 = vmatpush.msra.mxu0 %v2501
      %v2503 = vand.u32 %v2048, 4294901760
      %v2504 = vsub.f32 %v2048, %v2503
      %2505 = vmatpush.msra.mxu0 %v2504
      %v2506 = vand.u32 %v2046, 4294901760
      %v2507 = vsub.f32 %v2046, %v2506
      %2508 = vmatpush.msra.mxu0 %v2507
      %v2509 = vand.u32 %v2044, 4294901760
      %v2510 = vsub.f32 %v2044, %v2509
      %2511 = vmatpush.msra.mxu0 %v2510
      %v2512 = vand.u32 %v2042, 4294901760
      %v2513 = vsub.f32 %v2042, %v2512
      %2514 = vmatpush.msra.mxu0 %v2513
      %v2515 = vand.u32 %v2332, 4294901760
      %v2516 = vsub.f32 %v2332, %v2515
      %2517 = vmatmul.f32.gmra.mxu0 %v2516
      %v2518 = vpop.f32.mrf.mxu0
      %v2519 = vadd.f32 %v2467, %v2518
      %v2520 = vand.u32 %v2335, 4294901760
      %v2521 = vsub.f32 %v2335, %v2520
      %2522 = vmatmul.f32.gmra.mxu0 %v2521
      %v2523 = vpop.f32.mrf.mxu0
      %v2524 = vadd.f32 %v2471, %v2523
      %2525 = vdwg.mxu0
      %2526 = vmatpush.msra.mxu0 0.0
      %2527 = vmatpush.msra.mxu0 0.0
      %2528 = vmatpush.msra.mxu0 0.0
      %v2529 = vand.u32 %v2066, 4294901760
      %2530 = vmatpush.msra.mxu0 %v2529
      %v2531 = vand.u32 %v2064, 4294901760
      %2532 = vmatpush.msra.mxu0 %v2531
      %v2533 = vand.u32 %v2062, 4294901760
      %2534 = vmatpush.msra.mxu0 %v2533
      %v2535 = vand.u32 %v2060, 4294901760
      %2536 = vmatpush.msra.mxu0 %v2535
      %v2537 = vand.u32 %v2058, 4294901760
      %2538 = vmatpush.msra.mxu0 %v2537
      %v2539 = vand.u32 %v2056, 4294901760
      %2540 = vmatpush.msra.mxu0 %v2539
      %v2541 = vand.u32 %v2054, 4294901760
      %2542 = vmatpush.msra.mxu0 %v2541
      %v2543 = vand.u32 %v2052, 4294901760
      %2544 = vmatpush.msra.mxu0 %v2543
      %v2545 = vand.u32 %v2050, 4294901760
      %2546 = vmatpush.msra.mxu0 %v2545
      %v2547 = vand.u32 %v2048, 4294901760
      %2548 = vmatpush.msra.mxu0 %v2547
      %v2549 = vand.u32 %v2046, 4294901760
      %2550 = vmatpush.msra.mxu0 %v2549
      %v2551 = vand.u32 %v2044, 4294901760
      %2552 = vmatpush.msra.mxu0 %v2551
      %v2553 = vand.u32 %v2042, 4294901760
      %2554 = vmatpush.msra.mxu0 %v2553
      %v2555 = vand.u32 %v2332, 4294901760
      %v2556 = vsub.f32 %v2332, %v2555
      %v2557 = vand.u32 %v2556, 4294901760
      %2558 = vmatmul.f32.gmra.mxu0 %v2557
      %v2559 = vpop.f32.mrf.mxu0
      %v2560 = vadd.f32 %v2519, %v2559
      %v2561 = vand.u32 %v2335, 4294901760
      %v2562 = vsub.f32 %v2335, %v2561
      %v2563 = vand.u32 %v2562, 4294901760
      %2564 = vmatmul.f32.gmra.mxu0 %v2563
      %v2565 = vpop.f32.mrf.mxu0
      %v2566 = vadd.f32 %v2524, %v2565
      %2567 = vdwg.mxu0
      %2568 = vmatpush.msra.mxu0 0.0
      %2569 = vmatpush.msra.mxu0 0.0
      %2570 = vmatpush.msra.mxu0 0.0
      %v2571 = vand.u32 %v2066, 4294901760
      %v2572 = vsub.f32 %v2066, %v2571
      %v2573 = vand.u32 %v2572, 4294901760
      %2574 = vmatpush.msra.mxu0 %v2573
      %v2575 = vand.u32 %v2064, 4294901760
      %v2576 = vsub.f32 %v2064, %v2575
      %v2577 = vand.u32 %v2576, 4294901760
      %2578 = vmatpush.msra.mxu0 %v2577
      %v2579 = vand.u32 %v2062, 4294901760
      %v2580 = vsub.f32 %v2062, %v2579
      %v2581 = vand.u32 %v2580, 4294901760
      %2582 = vmatpush.msra.mxu0 %v2581
      %v2583 = vand.u32 %v2060, 4294901760
      %v2584 = vsub.f32 %v2060, %v2583
      %v2585 = vand.u32 %v2584, 4294901760
      %2586 = vmatpush.msra.mxu0 %v2585
      %v2587 = vand.u32 %v2058, 4294901760
      %v2588 = vsub.f32 %v2058, %v2587
      %v2589 = vand.u32 %v2588, 4294901760
      %2590 = vmatpush.msra.mxu0 %v2589
      %v2591 = vand.u32 %v2056, 4294901760
      %v2592 = vsub.f32 %v2056, %v2591
      %v2593 = vand.u32 %v2592, 4294901760
      %2594 = vmatpush.msra.mxu0 %v2593
      %v2595 = vand.u32 %v2054, 4294901760
      %v2596 = vsub.f32 %v2054, %v2595
      %v2597 = vand.u32 %v2596, 4294901760
      %2598 = vmatpush.msra.mxu0 %v2597
      %v2599 = vand.u32 %v2052, 4294901760
      %v2600 = vsub.f32 %v2052, %v2599
      %v2601 = vand.u32 %v2600, 4294901760
      %2602 = vmatpush.msra.mxu0 %v2601
      %v2603 = vand.u32 %v2050, 4294901760
      %v2604 = vsub.f32 %v2050, %v2603
      %v2605 = vand.u32 %v2604, 4294901760
      %2606 = vmatpush.msra.mxu0 %v2605
      %v2607 = vand.u32 %v2048, 4294901760
      %v2608 = vsub.f32 %v2048, %v2607
      %v2609 = vand.u32 %v2608, 4294901760
      %2610 = vmatpush.msra.mxu0 %v2609
      %v2611 = vand.u32 %v2046, 4294901760
      %v2612 = vsub.f32 %v2046, %v2611
      %v2613 = vand.u32 %v2612, 4294901760
      %2614 = vmatpush.msra.mxu0 %v2613
      %v2615 = vand.u32 %v2044, 4294901760
      %v2616 = vsub.f32 %v2044, %v2615
      %v2617 = vand.u32 %v2616, 4294901760
      %2618 = vmatpush.msra.mxu0 %v2617
      %v2619 = vand.u32 %v2042, 4294901760
      %v2620 = vsub.f32 %v2042, %v2619
      %v2621 = vand.u32 %v2620, 4294901760
      %2622 = vmatpush.msra.mxu0 %v2621
      %v2623 = vand.u32 %v2332, 4294901760
      %2624 = vmatmul.f32.gmra.mxu0 %v2623
      %v2625 = vpop.f32.mrf.mxu0
      %v2626 = vadd.f32 %v2560, %v2625
      %v2627 = vand.u32 %v2335, 4294901760
      %2628 = vmatmul.f32.gmra.mxu0 %v2627
      %v2629 = vpop.f32.mrf.mxu0
      %v2630 = vadd.f32 %v2566, %v2629
      %2631 = vdwg.mxu0
      %2632 = vmatpush.msra.mxu0 0.0
      %2633 = vmatpush.msra.mxu0 0.0
      %2634 = vmatpush.msra.mxu0 0.0
      %v2635 = vand.u32 %v2066, 4294901760
      %2636 = vmatpush.msra.mxu0 %v2635
      %v2637 = vand.u32 %v2064, 4294901760
      %2638 = vmatpush.msra.mxu0 %v2637
      %v2639 = vand.u32 %v2062, 4294901760
      %2640 = vmatpush.msra.mxu0 %v2639
      %v2641 = vand.u32 %v2060, 4294901760
      %2642 = vmatpush.msra.mxu0 %v2641
      %v2643 = vand.u32 %v2058, 4294901760
      %2644 = vmatpush.msra.mxu0 %v2643
      %v2645 = vand.u32 %v2056, 4294901760
      %2646 = vmatpush.msra.mxu0 %v2645
      %v2647 = vand.u32 %v2054, 4294901760
      %2648 = vmatpush.msra.mxu0 %v2647
      %v2649 = vand.u32 %v2052, 4294901760
      %2650 = vmatpush.msra.mxu0 %v2649
      %v2651 = vand.u32 %v2050, 4294901760
      %2652 = vmatpush.msra.mxu0 %v2651
      %v2653 = vand.u32 %v2048, 4294901760
      %2654 = vmatpush.msra.mxu0 %v2653
      %v2655 = vand.u32 %v2046, 4294901760
      %2656 = vmatpush.msra.mxu0 %v2655
      %v2657 = vand.u32 %v2044, 4294901760
      %2658 = vmatpush.msra.mxu0 %v2657
      %v2659 = vand.u32 %v2042, 4294901760
      %2660 = vmatpush.msra.mxu0 %v2659
      %v2661 = vand.u32 %v2332, 4294901760
      %2662 = vmatmul.f32.gmra.mxu0 %v2661
      %v2663 = vpop.f32.mrf.mxu0
      %v2664 = vadd.f32 %v2626, %v2663
      %v2665 = vand.u32 %v2335, 4294901760
      %2666 = vmatmul.f32.gmra.mxu0 %v2665
      %v2667 = vpop.f32.mrf.mxu0
      %v2668 = vadd.f32 %v2630, %v2667
      %2669 = vdwg.mxu0
      %2670 = vmatpush.msra.mxu0 0.0
      %2671 = vmatpush.msra.mxu0 0.0
      %2672 = vmatpush.msra.mxu0 0.0
      %v2673 = vand.u32 %v2067, 4294901760
      %2674 = vmatpush.msra.mxu0 %v2673
      %v2675 = vand.u32 %v2065, 4294901760
      %2676 = vmatpush.msra.mxu0 %v2675
      %v2677 = vand.u32 %v2063, 4294901760
      %2678 = vmatpush.msra.mxu0 %v2677
      %v2679 = vand.u32 %v2061, 4294901760
      %2680 = vmatpush.msra.mxu0 %v2679
      %v2681 = vand.u32 %v2059, 4294901760
      %2682 = vmatpush.msra.mxu0 %v2681
      %v2683 = vand.u32 %v2057, 4294901760
      %2684 = vmatpush.msra.mxu0 %v2683
      %v2685 = vand.u32 %v2055, 4294901760
      %2686 = vmatpush.msra.mxu0 %v2685
      %v2687 = vand.u32 %v2053, 4294901760
      %2688 = vmatpush.msra.mxu0 %v2687
      %v2689 = vand.u32 %v2051, 4294901760
      %2690 = vmatpush.msra.mxu0 %v2689
      %v2691 = vand.u32 %v2049, 4294901760
      %2692 = vmatpush.msra.mxu0 %v2691
      %v2693 = vand.u32 %v2047, 4294901760
      %2694 = vmatpush.msra.mxu0 %v2693
      %v2695 = vand.u32 %v2045, 4294901760
      %2696 = vmatpush.msra.mxu0 %v2695
      %v2697 = vand.u32 %v2043, 4294901760
      %2698 = vmatpush.msra.mxu0 %v2697
      %v2699 = vand.u32 %v2332, 4294901760
      %v2700 = vsub.f32 %v2332, %v2699
      %v2701 = vand.u32 %v2700, 4294901760
      %v2702 = vsub.f32 %v2700, %v2701
      %v2703 = vand.u32 %v2702, 4294901760
      %2704 = vmatmul.f32.gmra.mxu0 %v2703
      %v2705 = vpop.f32.mrf.mxu0
      %v2706 = vadd.f32 %v2323, %v2705
      %v2707 = vand.u32 %v2335, 4294901760
      %v2708 = vsub.f32 %v2335, %v2707
      %v2709 = vand.u32 %v2708, 4294901760
      %v2710 = vsub.f32 %v2708, %v2709
      %v2711 = vand.u32 %v2710, 4294901760
      %2712 = vmatmul.f32.gmra.mxu0 %v2711
      %v2713 = vpop.f32.mrf.mxu0
      %v2714 = vadd.f32 %v2328, %v2713
      %2715 = vdwg.mxu0
      %2716 = vmatpush.msra.mxu0 0.0
      %2717 = vmatpush.msra.mxu0 0.0
      %2718 = vmatpush.msra.mxu0 0.0
      %v2719 = vand.u32 %v2067, 4294901760
      %v2720 = vsub.f32 %v2067, %v2719
      %v2721 = vand.u32 %v2720, 4294901760
      %v2722 = vsub.f32 %v2720, %v2721
      %v2723 = vand.u32 %v2722, 4294901760
      %2724 = vmatpush.msra.mxu0 %v2723
      %v2725 = vand.u32 %v2065, 4294901760
      %v2726 = vsub.f32 %v2065, %v2725
      %v2727 = vand.u32 %v2726, 4294901760
      %v2728 = vsub.f32 %v2726, %v2727
      %v2729 = vand.u32 %v2728, 4294901760
      %2730 = vmatpush.msra.mxu0 %v2729
      %v2731 = vand.u32 %v2063, 4294901760
      %v2732 = vsub.f32 %v2063, %v2731
      %v2733 = vand.u32 %v2732, 4294901760
      %v2734 = vsub.f32 %v2732, %v2733
      %v2735 = vand.u32 %v2734, 4294901760
      %2736 = vmatpush.msra.mxu0 %v2735
      %v2737 = vand.u32 %v2061, 4294901760
      %v2738 = vsub.f32 %v2061, %v2737
      %v2739 = vand.u32 %v2738, 4294901760
      %v2740 = vsub.f32 %v2738, %v2739
      %v2741 = vand.u32 %v2740, 4294901760
      %2742 = vmatpush.msra.mxu0 %v2741
      %v2743 = vand.u32 %v2059, 4294901760
      %v2744 = vsub.f32 %v2059, %v2743
      %v2745 = vand.u32 %v2744, 4294901760
      %v2746 = vsub.f32 %v2744, %v2745
      %v2747 = vand.u32 %v2746, 4294901760
      %2748 = vmatpush.msra.mxu0 %v2747
      %v2749 = vand.u32 %v2057, 4294901760
      %v2750 = vsub.f32 %v2057, %v2749
      %v2751 = vand.u32 %v2750, 4294901760
      %v2752 = vsub.f32 %v2750, %v2751
      %v2753 = vand.u32 %v2752, 4294901760
      %2754 = vmatpush.msra.mxu0 %v2753
      %v2755 = vand.u32 %v2055, 4294901760
      %v2756 = vsub.f32 %v2055, %v2755
      %v2757 = vand.u32 %v2756, 4294901760
      %v2758 = vsub.f32 %v2756, %v2757
      %v2759 = vand.u32 %v2758, 4294901760
      %2760 = vmatpush.msra.mxu0 %v2759
      %v2761 = vand.u32 %v2053, 4294901760
      %v2762 = vsub.f32 %v2053, %v2761
      %v2763 = vand.u32 %v2762, 4294901760
      %v2764 = vsub.f32 %v2762, %v2763
      %v2765 = vand.u32 %v2764, 4294901760
      %2766 = vmatpush.msra.mxu0 %v2765
      %v2767 = vand.u32 %v2051, 4294901760
      %v2768 = vsub.f32 %v2051, %v2767
      %v2769 = vand.u32 %v2768, 4294901760
      %v2770 = vsub.f32 %v2768, %v2769
      %v2771 = vand.u32 %v2770, 4294901760
      %2772 = vmatpush.msra.mxu0 %v2771
      %v2773 = vand.u32 %v2049, 4294901760
      %v2774 = vsub.f32 %v2049, %v2773
      %v2775 = vand.u32 %v2774, 4294901760
      %v2776 = vsub.f32 %v2774, %v2775
      %v2777 = vand.u32 %v2776, 4294901760
      %2778 = vmatpush.msra.mxu0 %v2777
      %v2779 = vand.u32 %v2047, 4294901760
      %v2780 = vsub.f32 %v2047, %v2779
      %v2781 = vand.u32 %v2780, 4294901760
      %v2782 = vsub.f32 %v2780, %v2781
      %v2783 = vand.u32 %v2782, 4294901760
      %2784 = vmatpush.msra.mxu0 %v2783
      %v2785 = vand.u32 %v2045, 4294901760
      %v2786 = vsub.f32 %v2045, %v2785
      %v2787 = vand.u32 %v2786, 4294901760
      %v2788 = vsub.f32 %v2786, %v2787
      %v2789 = vand.u32 %v2788, 4294901760
      %2790 = vmatpush.msra.mxu0 %v2789
      %v2791 = vand.u32 %v2043, 4294901760
      %v2792 = vsub.f32 %v2043, %v2791
      %v2793 = vand.u32 %v2792, 4294901760
      %v2794 = vsub.f32 %v2792, %v2793
      %v2795 = vand.u32 %v2794, 4294901760
      %2796 = vmatpush.msra.mxu0 %v2795
      %v2797 = vand.u32 %v2332, 4294901760
      %2798 = vmatmul.f32.gmra.mxu0 %v2797
      %v2799 = vpop.f32.mrf.mxu0
      %v2800 = vadd.f32 %v2706, %v2799
      %v2801 = vand.u32 %v2335, 4294901760
      %2802 = vmatmul.f32.gmra.mxu0 %v2801
      %v2803 = vpop.f32.mrf.mxu0
      %v2804 = vadd.f32 %v2714, %v2803
      %2805 = vdwg.mxu0
      %2806 = vmatpush.msra.mxu0 0.0
      %2807 = vmatpush.msra.mxu0 0.0
      %2808 = vmatpush.msra.mxu0 0.0
      %v2809 = vand.u32 %v2067, 4294901760
      %v2810 = vsub.f32 %v2067, %v2809
      %2811 = vmatpush.msra.mxu0 %v2810
      %v2812 = vand.u32 %v2065, 4294901760
      %v2813 = vsub.f32 %v2065, %v2812
      %2814 = vmatpush.msra.mxu0 %v2813
      %v2815 = vand.u32 %v2063, 4294901760
      %v2816 = vsub.f32 %v2063, %v2815
      %2817 = vmatpush.msra.mxu0 %v2816
      %v2818 = vand.u32 %v2061, 4294901760
      %v2819 = vsub.f32 %v2061, %v2818
      %2820 = vmatpush.msra.mxu0 %v2819
      %v2821 = vand.u32 %v2059, 4294901760
      %v2822 = vsub.f32 %v2059, %v2821
      %2823 = vmatpush.msra.mxu0 %v2822
      %v2824 = vand.u32 %v2057, 4294901760
      %v2825 = vsub.f32 %v2057, %v2824
      %2826 = vmatpush.msra.mxu0 %v2825
      %v2827 = vand.u32 %v2055, 4294901760
      %v2828 = vsub.f32 %v2055, %v2827
      %2829 = vmatpush.msra.mxu0 %v2828
      %v2830 = vand.u32 %v2053, 4294901760
      %v2831 = vsub.f32 %v2053, %v2830
      %2832 = vmatpush.msra.mxu0 %v2831
      %v2833 = vand.u32 %v2051, 4294901760
      %v2834 = vsub.f32 %v2051, %v2833
      %2835 = vmatpush.msra.mxu0 %v2834
      %v2836 = vand.u32 %v2049, 4294901760
      %v2837 = vsub.f32 %v2049, %v2836
      %2838 = vmatpush.msra.mxu0 %v2837
      %v2839 = vand.u32 %v2047, 4294901760
      %v2840 = vsub.f32 %v2047, %v2839
      %2841 = vmatpush.msra.mxu0 %v2840
      %v2842 = vand.u32 %v2045, 4294901760
      %v2843 = vsub.f32 %v2045, %v2842
      %2844 = vmatpush.msra.mxu0 %v2843
      %v2845 = vand.u32 %v2043, 4294901760
      %v2846 = vsub.f32 %v2043, %v2845
      %2847 = vmatpush.msra.mxu0 %v2846
      %v2848 = vand.u32 %v2332, 4294901760
      %v2849 = vsub.f32 %v2332, %v2848
      %2850 = vmatmul.f32.gmra.mxu0 %v2849
      %v2851 = vpop.f32.mrf.mxu0
      %v2852 = vadd.f32 %v2800, %v2851
      %v2853 = vand.u32 %v2335, 4294901760
      %v2854 = vsub.f32 %v2335, %v2853
      %2855 = vmatmul.f32.gmra.mxu0 %v2854
      %v2856 = vpop.f32.mrf.mxu0
      %v2857 = vadd.f32 %v2804, %v2856
      %2858 = vdwg.mxu0
      %2859 = vmatpush.msra.mxu0 0.0
      %2860 = vmatpush.msra.mxu0 0.0
      %2861 = vmatpush.msra.mxu0 0.0
      %v2862 = vand.u32 %v2067, 4294901760
      %2863 = vmatpush.msra.mxu0 %v2862
      %v2864 = vand.u32 %v2065, 4294901760
      %2865 = vmatpush.msra.mxu0 %v2864
      %v2866 = vand.u32 %v2063, 4294901760
      %2867 = vmatpush.msra.mxu0 %v2866
      %v2868 = vand.u32 %v2061, 4294901760
      %2869 = vmatpush.msra.mxu0 %v2868
      %v2870 = vand.u32 %v2059, 4294901760
      %2871 = vmatpush.msra.mxu0 %v2870
      %v2872 = vand.u32 %v2057, 4294901760
      %2873 = vmatpush.msra.mxu0 %v2872
      %v2874 = vand.u32 %v2055, 4294901760
      %2875 = vmatpush.msra.mxu0 %v2874
      %v2876 = vand.u32 %v2053, 4294901760
      %2877 = vmatpush.msra.mxu0 %v2876
      %v2878 = vand.u32 %v2051, 4294901760
      %2879 = vmatpush.msra.mxu0 %v2878
      %v2880 = vand.u32 %v2049, 4294901760
      %2881 = vmatpush.msra.mxu0 %v2880
      %v2882 = vand.u32 %v2047, 4294901760
      %2883 = vmatpush.msra.mxu0 %v2882
      %v2884 = vand.u32 %v2045, 4294901760
      %2885 = vmatpush.msra.mxu0 %v2884
      %v2886 = vand.u32 %v2043, 4294901760
      %2887 = vmatpush.msra.mxu0 %v2886
      %v2888 = vand.u32 %v2332, 4294901760
      %v2889 = vsub.f32 %v2332, %v2888
      %v2890 = vand.u32 %v2889, 4294901760
      %2891 = vmatmul.f32.gmra.mxu0 %v2890
      %v2892 = vpop.f32.mrf.mxu0
      %v2893 = vadd.f32 %v2852, %v2892
      %v2894 = vand.u32 %v2335, 4294901760
      %v2895 = vsub.f32 %v2335, %v2894
      %v2896 = vand.u32 %v2895, 4294901760
      %2897 = vmatmul.f32.gmra.mxu0 %v2896
      %v2898 = vpop.f32.mrf.mxu0
      %v2899 = vadd.f32 %v2857, %v2898
      %2900 = vdwg.mxu0
      %2901 = vmatpush.msra.mxu0 0.0
      %2902 = vmatpush.msra.mxu0 0.0
      %2903 = vmatpush.msra.mxu0 0.0
      %v2904 = vand.u32 %v2067, 4294901760
      %v2905 = vsub.f32 %v2067, %v2904
      %v2906 = vand.u32 %v2905, 4294901760
      %2907 = vmatpush.msra.mxu0 %v2906
      %v2908 = vand.u32 %v2065, 4294901760
      %v2909 = vsub.f32 %v2065, %v2908
      %v2910 = vand.u32 %v2909, 4294901760
      %2911 = vmatpush.msra.mxu0 %v2910
      %v2912 = vand.u32 %v2063, 4294901760
      %v2913 = vsub.f32 %v2063, %v2912
      %v2914 = vand.u32 %v2913, 4294901760
      %2915 = vmatpush.msra.mxu0 %v2914
      %v2916 = vand.u32 %v2061, 4294901760
      %v2917 = vsub.f32 %v2061, %v2916
      %v2918 = vand.u32 %v2917, 4294901760
      %2919 = vmatpush.msra.mxu0 %v2918
      %v2920 = vand.u32 %v2059, 4294901760
      %v2921 = vsub.f32 %v2059, %v2920
      %v2922 = vand.u32 %v2921, 4294901760
      %2923 = vmatpush.msra.mxu0 %v2922
      %v2924 = vand.u32 %v2057, 4294901760
      %v2925 = vsub.f32 %v2057, %v2924
      %v2926 = vand.u32 %v2925, 4294901760
      %2927 = vmatpush.msra.mxu0 %v2926
      %v2928 = vand.u32 %v2055, 4294901760
      %v2929 = vsub.f32 %v2055, %v2928
      %v2930 = vand.u32 %v2929, 4294901760
      %2931 = vmatpush.msra.mxu0 %v2930
      %v2932 = vand.u32 %v2053, 4294901760
      %v2933 = vsub.f32 %v2053, %v2932
      %v2934 = vand.u32 %v2933, 4294901760
      %2935 = vmatpush.msra.mxu0 %v2934
      %v2936 = vand.u32 %v2051, 4294901760
      %v2937 = vsub.f32 %v2051, %v2936
      %v2938 = vand.u32 %v2937, 4294901760
      %2939 = vmatpush.msra.mxu0 %v2938
      %v2940 = vand.u32 %v2049, 4294901760
      %v2941 = vsub.f32 %v2049, %v2940
      %v2942 = vand.u32 %v2941, 4294901760
      %2943 = vmatpush.msra.mxu0 %v2942
      %v2944 = vand.u32 %v2047, 4294901760
      %v2945 = vsub.f32 %v2047, %v2944
      %v2946 = vand.u32 %v2945, 4294901760
      %2947 = vmatpush.msra.mxu0 %v2946
      %v2948 = vand.u32 %v2045, 4294901760
      %v2949 = vsub.f32 %v2045, %v2948
      %v2950 = vand.u32 %v2949, 4294901760
      %2951 = vmatpush.msra.mxu0 %v2950
      %v2952 = vand.u32 %v2043, 4294901760
      %v2953 = vsub.f32 %v2043, %v2952
      %v2954 = vand.u32 %v2953, 4294901760
      %2955 = vmatpush.msra.mxu0 %v2954
      %v2956 = vand.u32 %v2332, 4294901760
      %2957 = vmatmul.f32.gmra.mxu0 %v2956
      %v2958 = vpop.f32.mrf.mxu0
      %v2959 = vadd.f32 %v2893, %v2958
      %v2960 = vand.u32 %v2335, 4294901760
      %2961 = vmatmul.f32.gmra.mxu0 %v2960
      %v2962 = vpop.f32.mrf.mxu0
      %v2963 = vadd.f32 %v2899, %v2962
      %2964 = vdwg.mxu0
      %2965 = vmatpush.msra.mxu0 0.0
      %2966 = vmatpush.msra.mxu0 0.0
      %2967 = vmatpush.msra.mxu0 0.0
      %v2968 = vand.u32 %v2067, 4294901760
      %2969 = vmatpush.msra.mxu0 %v2968
      %v2970 = vand.u32 %v2065, 4294901760
      %2971 = vmatpush.msra.mxu0 %v2970
      %v2972 = vand.u32 %v2063, 4294901760
      %2973 = vmatpush.msra.mxu0 %v2972
      %v2974 = vand.u32 %v2061, 4294901760
      %2975 = vmatpush.msra.mxu0 %v2974
      %v2976 = vand.u32 %v2059, 4294901760
      %2977 = vmatpush.msra.mxu0 %v2976
      %v2978 = vand.u32 %v2057, 4294901760
      %2979 = vmatpush.msra.mxu0 %v2978
      %v2980 = vand.u32 %v2055, 4294901760
      %2981 = vmatpush.msra.mxu0 %v2980
      %v2982 = vand.u32 %v2053, 4294901760
      %2983 = vmatpush.msra.mxu0 %v2982
      %v2984 = vand.u32 %v2051, 4294901760
      %2985 = vmatpush.msra.mxu0 %v2984
      %v2986 = vand.u32 %v2049, 4294901760
      %2987 = vmatpush.msra.mxu0 %v2986
      %v2988 = vand.u32 %v2047, 4294901760
      %2989 = vmatpush.msra.mxu0 %v2988
      %v2990 = vand.u32 %v2045, 4294901760
      %2991 = vmatpush.msra.mxu0 %v2990
      %v2992 = vand.u32 %v2043, 4294901760
      %2993 = vmatpush.msra.mxu0 %v2992
      %v2994 = vand.u32 %v2332, 4294901760
      %2995 = vmatmul.f32.gmra.mxu0 %v2994
      %v2996 = vpop.f32.mrf.mxu0
      %v2997 = vadd.f32 %v2959, %v2996
      %v2998 = vand.u32 %v2335, 4294901760
      %2999 = vmatmul.f32.gmra.mxu0 %v2998
      %v3000 = vpop.f32.mrf.mxu0
      %v3001 = vadd.f32 %v2963, %v3000
      %3002 = vdwg.mxu0
      %3006 = vrot.lane.b32.xlu0 %v2313, 16
      %v3007 = vpop.permute.xlu0 %3006
      %3008 = vrot.lane.b32.xlu0 %v2314, 16
      %v3009 = vpop.permute.xlu0 %3008
      %3010 = vrot.lane.b32.xlu0 %v2315, 16
      %v3011 = vpop.permute.xlu0 %3010
      %3021 = vrot.lane.b32.xlu0 %v2036, 32
      %v3022 = vpop.permute.xlu0 %3021
      %3023 = vrot.lane.b32.xlu0 %v2037, 32
      %v3024 = vpop.permute.xlu0 %3023
      %3025 = vrot.lane.b32.xlu0 %v2038, 32
      %v3026 = vpop.permute.xlu0 %3025
      %3027 = vrot.lane.b32.xlu0 %v2039, 32
      %v3028 = vpop.permute.xlu0 %3027
      %3029 = vrot.lane.b32.xlu0 %v2040, 32
      %v3030 = vpop.permute.xlu0 %3029
      %3031 = vrot.lane.b32.xlu0 %v2041, 32
      %v3032 = vpop.permute.xlu0 %3031
      %vm3033 = vcmask 261120
      %v3034 = vsel %vm3033, %v3022, %v3024
      %v3035 = vsel %vm3033, %v3026, %v3028
      %v3036 = vsel %vm3033, %v3030, %v3032
      %vm3046 = vcmask 130048
      %v3047 = vsel %vm3046, 0.0, %v3007
      %v3048 = vsel %vm3046, 0.0, %v3009
      %v3049 = vsel %vm3046, 0.0, %v3011
      %v3050 = vsel %vm3033, %v3047, %v3022
      %v3051 = vsel %vm3033, %v3048, %v3026
      %v3052 = vsel %vm3033, %v3049, %v3030
      %v3053 = vsel %vm3033, %v3024, %v3007
      %v3054 = vsel %vm3033, %v3028, %v3009
      %v3055 = vsel %vm3033, %v3032, %v3011
      %vm3056 = vcmask 392192
      %v3057 = vsel %vm3056, %v3053, 0.0
      %v3058 = vsel %vm3056, %v3054, 0.0
      %v3059 = vsel %vm3056, %v3055, 0.0
      %v3060 = vld [vmem:[%s9] sm:$0xff]
      %v3061 = vld [vmem:[%s9 + $0x8] sm:$0xff]
      %v3062 = vld [vmem:[%s9 + $0x10] sm:$0xff]
      %v3063 = vld [vmem:[%s9 + $0x18] sm:$0xff]
      %v3064 = vld [vmem:[%s9 + $0x20] sm:$0xff]
      %v3065 = vld [vmem:[%s9 + $0x28] sm:$0xff]
      %v3066 = vld [vmem:[%s9 + $0x30] sm:$0xff]
      %v3067 = vld [vmem:[%s9 + $0x38] sm:$0xff]
      %v3068 = vld [vmem:[%s9 + $0x40] sm:$0xff]
      %v3069 = vld [vmem:[%s9 + $0x48] sm:$0xff]
      %v3070 = vld [vmem:[%s9 + $0x50] sm:$0xff]
      %v3071 = vld [vmem:[%s9 + $0x58] sm:$0xff]
      %v3072 = vld [vmem:[%s9 + $0x60] sm:$0xff]
      %v3073 = vld [vmem:[%s9 + $0x68] sm:$0xff]
      %v3074 = vld [vmem:[%s9 + $0x70] sm:$0xff]
      %v3075 = vld [vmem:[%s9 + $0x78] sm:$0xff]
      %v3076 = vld [vmem:[%s9 + $0x80] sm:$0xff]
      %v3077 = vld [vmem:[%s9 + $0x88] sm:$0xff]
      %vm3078 = vcmask 195584
      %v3080 = vsel %vm3078, %v3060, 0
      %v3083 = vsel %vm3078, %v3061, 0
      %v3086 = vsel %vm3078, %v3062, 0
      %v3089 = vsel %vm3078, %v3063, 0
      %v3092 = vsel %vm3078, %v3064, 0
      %v3095 = vsel %vm3078, %v3065, 0
      %v3098 = vsel %vm3078, %v3066, 0
      %v3101 = vsel %vm3078, %v3067, 0
      %v3104 = vsel %vm3078, %v3068, 0
      %v3107 = vsel %vm3078, %v3069, 0
      %v3110 = vsel %vm3078, %v3070, 0
      %v3113 = vsel %vm3078, %v3071, 0
      %v3116 = vsel %vm3078, %v3072, 0
      %v3119 = vsel %vm3078, %v3073, 0
      %v3122 = vsel %vm3078, %v3074, 0
      %v3125 = vsel %vm3078, %v3075, 0
      %v3128 = vsel %vm3078, %v3076, 0
      %v3131 = vsel %vm3078, %v3077, 0
      %3133 = vmatpush.msra.mxu0 0.0
      %3134 = vmatpush.msra.mxu0 0.0
      %3135 = vmatpush.msra.mxu0 0.0
      %3136 = vmatpush.msra.mxu0 0.0
      %3137 = vmatpush.msra.mxu0 0.0
      %3138 = vmatpush.msra.mxu0 0.0
      %3139 = vmatpush.msra.mxu0 0.0
      %3140 = vmatpush.msra.mxu0 0.0
      %3141 = vmatpush.msra.mxu0 0.0
      %3142 = vmatpush.msra.mxu0 0.0
      %3143 = vmatpush.msra.mxu0 0.0
      %3144 = vmatpush.msra.mxu0 0.0
      %3145 = vmatpush.msra.mxu0 0.0
      %v3146 = vand.u32 %v3052, 4294901760
      %3147 = vmatpush.msra.mxu0 %v3146
      %v3148 = vand.u32 %v3051, 4294901760
      %3149 = vmatpush.msra.mxu0 %v3148
      %v3150 = vand.u32 %v3050, 4294901760
      %3151 = vmatpush.msra.mxu0 %v3150
      %v3152 = vand.u32 %v3080, 4294901760
      %v3153 = vsub.f32 %v3080, %v3152
      %v3154 = vand.u32 %v3153, 4294901760
      %v3155 = vsub.f32 %v3153, %v3154
      %v3156 = vand.u32 %v3155, 4294901760
      %3157 = vmatmul.f32.gmra.mxu0 %v3156
      %v3158 = vpop.f32.mrf.mxu0
      %v3159 = vadd.f32 0.0, %v3158
      %v3160 = vand.u32 %v3083, 4294901760
      %v3161 = vsub.f32 %v3083, %v3160
      %v3162 = vand.u32 %v3161, 4294901760
      %v3163 = vsub.f32 %v3161, %v3162
      %v3164 = vand.u32 %v3163, 4294901760
      %3165 = vmatmul.f32.gmra.mxu0 %v3164
      %v3166 = vpop.f32.mrf.mxu0
      %v3167 = vadd.f32 0.0, %v3166
      %v3168 = vand.u32 %v3086, 4294901760
      %v3169 = vsub.f32 %v3086, %v3168
      %v3170 = vand.u32 %v3169, 4294901760
      %v3171 = vsub.f32 %v3169, %v3170
      %v3172 = vand.u32 %v3171, 4294901760
      %3173 = vmatmul.f32.gmra.mxu0 %v3172
      %v3174 = vpop.f32.mrf.mxu0
      %v3175 = vadd.f32 0.0, %v3174
      %v3176 = vand.u32 %v3089, 4294901760
      %v3177 = vsub.f32 %v3089, %v3176
      %v3178 = vand.u32 %v3177, 4294901760
      %v3179 = vsub.f32 %v3177, %v3178
      %v3180 = vand.u32 %v3179, 4294901760
      %3181 = vmatmul.f32.gmra.mxu0 %v3180
      %v3182 = vpop.f32.mrf.mxu0
      %v3183 = vadd.f32 0.0, %v3182
      %v3184 = vand.u32 %v3092, 4294901760
      %v3185 = vsub.f32 %v3092, %v3184
      %v3186 = vand.u32 %v3185, 4294901760
      %v3187 = vsub.f32 %v3185, %v3186
      %v3188 = vand.u32 %v3187, 4294901760
      %3189 = vmatmul.f32.gmra.mxu0 %v3188
      %v3190 = vpop.f32.mrf.mxu0
      %v3191 = vadd.f32 0.0, %v3190
      %v3192 = vand.u32 %v3095, 4294901760
      %v3193 = vsub.f32 %v3095, %v3192
      %v3194 = vand.u32 %v3193, 4294901760
      %v3195 = vsub.f32 %v3193, %v3194
      %v3196 = vand.u32 %v3195, 4294901760
      %3197 = vmatmul.f32.gmra.mxu0 %v3196
      %v3198 = vpop.f32.mrf.mxu0
      %v3199 = vadd.f32 0.0, %v3198
      %v3200 = vand.u32 %v3098, 4294901760
      %v3201 = vsub.f32 %v3098, %v3200
      %v3202 = vand.u32 %v3201, 4294901760
      %v3203 = vsub.f32 %v3201, %v3202
      %v3204 = vand.u32 %v3203, 4294901760
      %3205 = vmatmul.f32.gmra.mxu0 %v3204
      %v3206 = vpop.f32.mrf.mxu0
      %v3207 = vadd.f32 0.0, %v3206
      %v3208 = vand.u32 %v3101, 4294901760
      %v3209 = vsub.f32 %v3101, %v3208
      %v3210 = vand.u32 %v3209, 4294901760
      %v3211 = vsub.f32 %v3209, %v3210
      %v3212 = vand.u32 %v3211, 4294901760
      %3213 = vmatmul.f32.gmra.mxu0 %v3212
      %v3214 = vpop.f32.mrf.mxu0
      %v3215 = vadd.f32 0.0, %v3214
      %v3216 = vand.u32 %v3104, 4294901760
      %v3217 = vsub.f32 %v3104, %v3216
      %v3218 = vand.u32 %v3217, 4294901760
      %v3219 = vsub.f32 %v3217, %v3218
      %v3220 = vand.u32 %v3219, 4294901760
      %3221 = vmatmul.f32.gmra.mxu0 %v3220
      %v3222 = vpop.f32.mrf.mxu0
      %v3223 = vadd.f32 0.0, %v3222
      %v3224 = vand.u32 %v3107, 4294901760
      %v3225 = vsub.f32 %v3107, %v3224
      %v3226 = vand.u32 %v3225, 4294901760
      %v3227 = vsub.f32 %v3225, %v3226
      %v3228 = vand.u32 %v3227, 4294901760
      %3229 = vmatmul.f32.gmra.mxu0 %v3228
      %v3230 = vpop.f32.mrf.mxu0
      %v3231 = vadd.f32 0.0, %v3230
      %v3232 = vand.u32 %v3110, 4294901760
      %v3233 = vsub.f32 %v3110, %v3232
      %v3234 = vand.u32 %v3233, 4294901760
      %v3235 = vsub.f32 %v3233, %v3234
      %v3236 = vand.u32 %v3235, 4294901760
      %3237 = vmatmul.f32.gmra.mxu0 %v3236
      %v3238 = vpop.f32.mrf.mxu0
      %v3239 = vadd.f32 0.0, %v3238
      %v3240 = vand.u32 %v3113, 4294901760
      %v3241 = vsub.f32 %v3113, %v3240
      %v3242 = vand.u32 %v3241, 4294901760
      %v3243 = vsub.f32 %v3241, %v3242
      %v3244 = vand.u32 %v3243, 4294901760
      %3245 = vmatmul.f32.gmra.mxu0 %v3244
      %v3246 = vpop.f32.mrf.mxu0
      %v3247 = vadd.f32 0.0, %v3246
      %v3248 = vand.u32 %v3116, 4294901760
      %v3249 = vsub.f32 %v3116, %v3248
      %v3250 = vand.u32 %v3249, 4294901760
      %v3251 = vsub.f32 %v3249, %v3250
      %v3252 = vand.u32 %v3251, 4294901760
      %3253 = vmatmul.f32.gmra.mxu0 %v3252
      %v3254 = vpop.f32.mrf.mxu0
      %v3255 = vadd.f32 0.0, %v3254
      %v3256 = vand.u32 %v3119, 4294901760
      %v3257 = vsub.f32 %v3119, %v3256
      %v3258 = vand.u32 %v3257, 4294901760
      %v3259 = vsub.f32 %v3257, %v3258
      %v3260 = vand.u32 %v3259, 4294901760
      %3261 = vmatmul.f32.gmra.mxu0 %v3260
      %v3262 = vpop.f32.mrf.mxu0
      %v3263 = vadd.f32 0.0, %v3262
      %v3264 = vand.u32 %v3122, 4294901760
      %v3265 = vsub.f32 %v3122, %v3264
      %v3266 = vand.u32 %v3265, 4294901760
      %v3267 = vsub.f32 %v3265, %v3266
      %v3268 = vand.u32 %v3267, 4294901760
      %3269 = vmatmul.f32.gmra.mxu0 %v3268
      %v3270 = vpop.f32.mrf.mxu0
      %v3271 = vadd.f32 0.0, %v3270
      %v3272 = vand.u32 %v3125, 4294901760
      %v3273 = vsub.f32 %v3125, %v3272
      %v3274 = vand.u32 %v3273, 4294901760
      %v3275 = vsub.f32 %v3273, %v3274
      %v3276 = vand.u32 %v3275, 4294901760
      %3277 = vmatmul.f32.gmra.mxu0 %v3276
      %v3278 = vpop.f32.mrf.mxu0
      %v3279 = vadd.f32 0.0, %v3278
      %v3280 = vand.u32 %v3128, 4294901760
      %v3281 = vsub.f32 %v3128, %v3280
      %v3282 = vand.u32 %v3281, 4294901760
      %v3283 = vsub.f32 %v3281, %v3282
      %v3284 = vand.u32 %v3283, 4294901760
      %3285 = vmatmul.f32.gmra.mxu0 %v3284
      %v3286 = vpop.f32.mrf.mxu0
      %v3287 = vadd.f32 0.0, %v3286
      %v3288 = vand.u32 %v3131, 4294901760
      %v3289 = vsub.f32 %v3131, %v3288
      %v3290 = vand.u32 %v3289, 4294901760
      %v3291 = vsub.f32 %v3289, %v3290
      %v3292 = vand.u32 %v3291, 4294901760
      %3293 = vmatmul.f32.gmra.mxu0 %v3292
      %v3294 = vpop.f32.mrf.mxu0
      %v3295 = vadd.f32 0.0, %v3294
      %3296 = vdwg.mxu0
      %3297 = vmatpush.msra.mxu0 0.0
      %3298 = vmatpush.msra.mxu0 0.0
      %3299 = vmatpush.msra.mxu0 0.0
      %3300 = vmatpush.msra.mxu0 0.0
      %3301 = vmatpush.msra.mxu0 0.0
      %3302 = vmatpush.msra.mxu0 0.0
      %3303 = vmatpush.msra.mxu0 0.0
      %3304 = vmatpush.msra.mxu0 0.0
      %3305 = vmatpush.msra.mxu0 0.0
      %3306 = vmatpush.msra.mxu0 0.0
      %3307 = vmatpush.msra.mxu0 0.0
      %3308 = vmatpush.msra.mxu0 0.0
      %3309 = vmatpush.msra.mxu0 0.0
      %v3310 = vand.u32 %v3052, 4294901760
      %v3311 = vsub.f32 %v3052, %v3310
      %v3312 = vand.u32 %v3311, 4294901760
      %v3313 = vsub.f32 %v3311, %v3312
      %v3314 = vand.u32 %v3313, 4294901760
      %3315 = vmatpush.msra.mxu0 %v3314
      %v3316 = vand.u32 %v3051, 4294901760
      %v3317 = vsub.f32 %v3051, %v3316
      %v3318 = vand.u32 %v3317, 4294901760
      %v3319 = vsub.f32 %v3317, %v3318
      %v3320 = vand.u32 %v3319, 4294901760
      %3321 = vmatpush.msra.mxu0 %v3320
      %v3322 = vand.u32 %v3050, 4294901760
      %v3323 = vsub.f32 %v3050, %v3322
      %v3324 = vand.u32 %v3323, 4294901760
      %v3325 = vsub.f32 %v3323, %v3324
      %v3326 = vand.u32 %v3325, 4294901760
      %3327 = vmatpush.msra.mxu0 %v3326
      %v3328 = vand.u32 %v3080, 4294901760
      %3329 = vmatmul.f32.gmra.mxu0 %v3328
      %v3330 = vpop.f32.mrf.mxu0
      %v3331 = vadd.f32 %v3159, %v3330
      %v3332 = vand.u32 %v3083, 4294901760
      %3333 = vmatmul.f32.gmra.mxu0 %v3332
      %v3334 = vpop.f32.mrf.mxu0
      %v3335 = vadd.f32 %v3167, %v3334
      %v3336 = vand.u32 %v3086, 4294901760
      %3337 = vmatmul.f32.gmra.mxu0 %v3336
      %v3338 = vpop.f32.mrf.mxu0
      %v3339 = vadd.f32 %v3175, %v3338
      %v3340 = vand.u32 %v3089, 4294901760
      %3341 = vmatmul.f32.gmra.mxu0 %v3340
      %v3342 = vpop.f32.mrf.mxu0
      %v3343 = vadd.f32 %v3183, %v3342
      %v3344 = vand.u32 %v3092, 4294901760
      %3345 = vmatmul.f32.gmra.mxu0 %v3344
      %v3346 = vpop.f32.mrf.mxu0
      %v3347 = vadd.f32 %v3191, %v3346
      %v3348 = vand.u32 %v3095, 4294901760
      %3349 = vmatmul.f32.gmra.mxu0 %v3348
      %v3350 = vpop.f32.mrf.mxu0
      %v3351 = vadd.f32 %v3199, %v3350
      %v3352 = vand.u32 %v3098, 4294901760
      %3353 = vmatmul.f32.gmra.mxu0 %v3352
      %v3354 = vpop.f32.mrf.mxu0
      %v3355 = vadd.f32 %v3207, %v3354
      %v3356 = vand.u32 %v3101, 4294901760
      %3357 = vmatmul.f32.gmra.mxu0 %v3356
      %v3358 = vpop.f32.mrf.mxu0
      %v3359 = vadd.f32 %v3215, %v3358
      %v3360 = vand.u32 %v3104, 4294901760
      %3361 = vmatmul.f32.gmra.mxu0 %v3360
      %v3362 = vpop.f32.mrf.mxu0
      %v3363 = vadd.f32 %v3223, %v3362
      %v3364 = vand.u32 %v3107, 4294901760
      %3365 = vmatmul.f32.gmra.mxu0 %v3364
      %v3366 = vpop.f32.mrf.mxu0
      %v3367 = vadd.f32 %v3231, %v3366
      %v3368 = vand.u32 %v3110, 4294901760
      %3369 = vmatmul.f32.gmra.mxu0 %v3368
      %v3370 = vpop.f32.mrf.mxu0
      %v3371 = vadd.f32 %v3239, %v3370
      %v3372 = vand.u32 %v3113, 4294901760
      %3373 = vmatmul.f32.gmra.mxu0 %v3372
      %v3374 = vpop.f32.mrf.mxu0
      %v3375 = vadd.f32 %v3247, %v3374
      %v3376 = vand.u32 %v3116, 4294901760
      %3377 = vmatmul.f32.gmra.mxu0 %v3376
      %v3378 = vpop.f32.mrf.mxu0
      %v3379 = vadd.f32 %v3255, %v3378
      %v3380 = vand.u32 %v3119, 4294901760
      %3381 = vmatmul.f32.gmra.mxu0 %v3380
      %v3382 = vpop.f32.mrf.mxu0
      %v3383 = vadd.f32 %v3263, %v3382
      %v3384 = vand.u32 %v3122, 4294901760
      %3385 = vmatmul.f32.gmra.mxu0 %v3384
      %v3386 = vpop.f32.mrf.mxu0
      %v3387 = vadd.f32 %v3271, %v3386
      %v3388 = vand.u32 %v3125, 4294901760
      %3389 = vmatmul.f32.gmra.mxu0 %v3388
      %v3390 = vpop.f32.mrf.mxu0
      %v3391 = vadd.f32 %v3279, %v3390
      %v3392 = vand.u32 %v3128, 4294901760
      %3393 = vmatmul.f32.gmra.mxu0 %v3392
      %v3394 = vpop.f32.mrf.mxu0
      %v3395 = vadd.f32 %v3287, %v3394
      %v3396 = vand.u32 %v3131, 4294901760
      %3397 = vmatmul.f32.gmra.mxu0 %v3396
      %v3398 = vpop.f32.mrf.mxu0
      %v3399 = vadd.f32 %v3295, %v3398
      %3400 = vdwg.mxu0
      %3401 = vmatpush.msra.mxu0 0.0
      %3402 = vmatpush.msra.mxu0 0.0
      %3403 = vmatpush.msra.mxu0 0.0
      %3404 = vmatpush.msra.mxu0 0.0
      %3405 = vmatpush.msra.mxu0 0.0
      %3406 = vmatpush.msra.mxu0 0.0
      %3407 = vmatpush.msra.mxu0 0.0
      %3408 = vmatpush.msra.mxu0 0.0
      %3409 = vmatpush.msra.mxu0 0.0
      %3410 = vmatpush.msra.mxu0 0.0
      %3411 = vmatpush.msra.mxu0 0.0
      %3412 = vmatpush.msra.mxu0 0.0
      %3413 = vmatpush.msra.mxu0 0.0
      %v3414 = vand.u32 %v3052, 4294901760
      %v3415 = vsub.f32 %v3052, %v3414
      %3416 = vmatpush.msra.mxu0 %v3415
      %v3417 = vand.u32 %v3051, 4294901760
      %v3418 = vsub.f32 %v3051, %v3417
      %3419 = vmatpush.msra.mxu0 %v3418
      %v3420 = vand.u32 %v3050, 4294901760
      %v3421 = vsub.f32 %v3050, %v3420
      %3422 = vmatpush.msra.mxu0 %v3421
      %v3423 = vand.u32 %v3080, 4294901760
      %v3424 = vsub.f32 %v3080, %v3423
      %3425 = vmatmul.f32.gmra.mxu0 %v3424
      %v3426 = vpop.f32.mrf.mxu0
      %v3427 = vadd.f32 %v3331, %v3426
      %v3428 = vand.u32 %v3083, 4294901760
      %v3429 = vsub.f32 %v3083, %v3428
      %3430 = vmatmul.f32.gmra.mxu0 %v3429
      %v3431 = vpop.f32.mrf.mxu0
      %v3432 = vadd.f32 %v3335, %v3431
      %v3433 = vand.u32 %v3086, 4294901760
      %v3434 = vsub.f32 %v3086, %v3433
      %3435 = vmatmul.f32.gmra.mxu0 %v3434
      %v3436 = vpop.f32.mrf.mxu0
      %v3437 = vadd.f32 %v3339, %v3436
      %v3438 = vand.u32 %v3089, 4294901760
      %v3439 = vsub.f32 %v3089, %v3438
      %3440 = vmatmul.f32.gmra.mxu0 %v3439
      %v3441 = vpop.f32.mrf.mxu0
      %v3442 = vadd.f32 %v3343, %v3441
      %v3443 = vand.u32 %v3092, 4294901760
      %v3444 = vsub.f32 %v3092, %v3443
      %3445 = vmatmul.f32.gmra.mxu0 %v3444
      %v3446 = vpop.f32.mrf.mxu0
      %v3447 = vadd.f32 %v3347, %v3446
      %v3448 = vand.u32 %v3095, 4294901760
      %v3449 = vsub.f32 %v3095, %v3448
      %3450 = vmatmul.f32.gmra.mxu0 %v3449
      %v3451 = vpop.f32.mrf.mxu0
      %v3452 = vadd.f32 %v3351, %v3451
      %v3453 = vand.u32 %v3098, 4294901760
      %v3454 = vsub.f32 %v3098, %v3453
      %3455 = vmatmul.f32.gmra.mxu0 %v3454
      %v3456 = vpop.f32.mrf.mxu0
      %v3457 = vadd.f32 %v3355, %v3456
      %v3458 = vand.u32 %v3101, 4294901760
      %v3459 = vsub.f32 %v3101, %v3458
      %3460 = vmatmul.f32.gmra.mxu0 %v3459
      %v3461 = vpop.f32.mrf.mxu0
      %v3462 = vadd.f32 %v3359, %v3461
      %v3463 = vand.u32 %v3104, 4294901760
      %v3464 = vsub.f32 %v3104, %v3463
      %3465 = vmatmul.f32.gmra.mxu0 %v3464
      %v3466 = vpop.f32.mrf.mxu0
      %v3467 = vadd.f32 %v3363, %v3466
      %v3468 = vand.u32 %v3107, 4294901760
      %v3469 = vsub.f32 %v3107, %v3468
      %3470 = vmatmul.f32.gmra.mxu0 %v3469
      %v3471 = vpop.f32.mrf.mxu0
      %v3472 = vadd.f32 %v3367, %v3471
      %v3473 = vand.u32 %v3110, 4294901760
      %v3474 = vsub.f32 %v3110, %v3473
      %3475 = vmatmul.f32.gmra.mxu0 %v3474
      %v3476 = vpop.f32.mrf.mxu0
      %v3477 = vadd.f32 %v3371, %v3476
      %v3478 = vand.u32 %v3113, 4294901760
      %v3479 = vsub.f32 %v3113, %v3478
      %3480 = vmatmul.f32.gmra.mxu0 %v3479
      %v3481 = vpop.f32.mrf.mxu0
      %v3482 = vadd.f32 %v3375, %v3481
      %v3483 = vand.u32 %v3116, 4294901760
      %v3484 = vsub.f32 %v3116, %v3483
      %3485 = vmatmul.f32.gmra.mxu0 %v3484
      %v3486 = vpop.f32.mrf.mxu0
      %v3487 = vadd.f32 %v3379, %v3486
      %v3488 = vand.u32 %v3119, 4294901760
      %v3489 = vsub.f32 %v3119, %v3488
      %3490 = vmatmul.f32.gmra.mxu0 %v3489
      %v3491 = vpop.f32.mrf.mxu0
      %v3492 = vadd.f32 %v3383, %v3491
      %v3493 = vand.u32 %v3122, 4294901760
      %v3494 = vsub.f32 %v3122, %v3493
      %3495 = vmatmul.f32.gmra.mxu0 %v3494
      %v3496 = vpop.f32.mrf.mxu0
      %v3497 = vadd.f32 %v3387, %v3496
      %v3498 = vand.u32 %v3125, 4294901760
      %v3499 = vsub.f32 %v3125, %v3498
      %3500 = vmatmul.f32.gmra.mxu0 %v3499
      %v3501 = vpop.f32.mrf.mxu0
      %v3502 = vadd.f32 %v3391, %v3501
      %v3503 = vand.u32 %v3128, 4294901760
      %v3504 = vsub.f32 %v3128, %v3503
      %3505 = vmatmul.f32.gmra.mxu0 %v3504
      %v3506 = vpop.f32.mrf.mxu0
      %v3507 = vadd.f32 %v3395, %v3506
      %v3508 = vand.u32 %v3131, 4294901760
      %v3509 = vsub.f32 %v3131, %v3508
      %3510 = vmatmul.f32.gmra.mxu0 %v3509
      %v3511 = vpop.f32.mrf.mxu0
      %v3512 = vadd.f32 %v3399, %v3511
      %3513 = vdwg.mxu0
      %3514 = vmatpush.msra.mxu0 0.0
      %3515 = vmatpush.msra.mxu0 0.0
      %3516 = vmatpush.msra.mxu0 0.0
      %3517 = vmatpush.msra.mxu0 0.0
      %3518 = vmatpush.msra.mxu0 0.0
      %3519 = vmatpush.msra.mxu0 0.0
      %3520 = vmatpush.msra.mxu0 0.0
      %3521 = vmatpush.msra.mxu0 0.0
      %3522 = vmatpush.msra.mxu0 0.0
      %3523 = vmatpush.msra.mxu0 0.0
      %3524 = vmatpush.msra.mxu0 0.0
      %3525 = vmatpush.msra.mxu0 0.0
      %3526 = vmatpush.msra.mxu0 0.0
      %v3527 = vand.u32 %v3052, 4294901760
      %3528 = vmatpush.msra.mxu0 %v3527
      %v3529 = vand.u32 %v3051, 4294901760
      %3530 = vmatpush.msra.mxu0 %v3529
      %v3531 = vand.u32 %v3050, 4294901760
      %3532 = vmatpush.msra.mxu0 %v3531
      %v3533 = vand.u32 %v3080, 4294901760
      %v3534 = vsub.f32 %v3080, %v3533
      %v3535 = vand.u32 %v3534, 4294901760
      %3536 = vmatmul.f32.gmra.mxu0 %v3535
      %v3537 = vpop.f32.mrf.mxu0
      %v3538 = vadd.f32 %v3427, %v3537
      %v3539 = vand.u32 %v3083, 4294901760
      %v3540 = vsub.f32 %v3083, %v3539
      %v3541 = vand.u32 %v3540, 4294901760
      %3542 = vmatmul.f32.gmra.mxu0 %v3541
      %v3543 = vpop.f32.mrf.mxu0
      %v3544 = vadd.f32 %v3432, %v3543
      %v3545 = vand.u32 %v3086, 4294901760
      %v3546 = vsub.f32 %v3086, %v3545
      %v3547 = vand.u32 %v3546, 4294901760
      %3548 = vmatmul.f32.gmra.mxu0 %v3547
      %v3549 = vpop.f32.mrf.mxu0
      %v3550 = vadd.f32 %v3437, %v3549
      %v3551 = vand.u32 %v3089, 4294901760
      %v3552 = vsub.f32 %v3089, %v3551
      %v3553 = vand.u32 %v3552, 4294901760
      %3554 = vmatmul.f32.gmra.mxu0 %v3553
      %v3555 = vpop.f32.mrf.mxu0
      %v3556 = vadd.f32 %v3442, %v3555
      %v3557 = vand.u32 %v3092, 4294901760
      %v3558 = vsub.f32 %v3092, %v3557
      %v3559 = vand.u32 %v3558, 4294901760
      %3560 = vmatmul.f32.gmra.mxu0 %v3559
      %v3561 = vpop.f32.mrf.mxu0
      %v3562 = vadd.f32 %v3447, %v3561
      %v3563 = vand.u32 %v3095, 4294901760
      %v3564 = vsub.f32 %v3095, %v3563
      %v3565 = vand.u32 %v3564, 4294901760
      %3566 = vmatmul.f32.gmra.mxu0 %v3565
      %v3567 = vpop.f32.mrf.mxu0
      %v3568 = vadd.f32 %v3452, %v3567
      %v3569 = vand.u32 %v3098, 4294901760
      %v3570 = vsub.f32 %v3098, %v3569
      %v3571 = vand.u32 %v3570, 4294901760
      %3572 = vmatmul.f32.gmra.mxu0 %v3571
      %v3573 = vpop.f32.mrf.mxu0
      %v3574 = vadd.f32 %v3457, %v3573
      %v3575 = vand.u32 %v3101, 4294901760
      %v3576 = vsub.f32 %v3101, %v3575
      %v3577 = vand.u32 %v3576, 4294901760
      %3578 = vmatmul.f32.gmra.mxu0 %v3577
      %v3579 = vpop.f32.mrf.mxu0
      %v3580 = vadd.f32 %v3462, %v3579
      %v3581 = vand.u32 %v3104, 4294901760
      %v3582 = vsub.f32 %v3104, %v3581
      %v3583 = vand.u32 %v3582, 4294901760
      %3584 = vmatmul.f32.gmra.mxu0 %v3583
      %v3585 = vpop.f32.mrf.mxu0
      %v3586 = vadd.f32 %v3467, %v3585
      %v3587 = vand.u32 %v3107, 4294901760
      %v3588 = vsub.f32 %v3107, %v3587
      %v3589 = vand.u32 %v3588, 4294901760
      %3590 = vmatmul.f32.gmra.mxu0 %v3589
      %v3591 = vpop.f32.mrf.mxu0
      %v3592 = vadd.f32 %v3472, %v3591
      %v3593 = vand.u32 %v3110, 4294901760
      %v3594 = vsub.f32 %v3110, %v3593
      %v3595 = vand.u32 %v3594, 4294901760
      %3596 = vmatmul.f32.gmra.mxu0 %v3595
      %v3597 = vpop.f32.mrf.mxu0
      %v3598 = vadd.f32 %v3477, %v3597
      %v3599 = vand.u32 %v3113, 4294901760
      %v3600 = vsub.f32 %v3113, %v3599
      %v3601 = vand.u32 %v3600, 4294901760
      %3602 = vmatmul.f32.gmra.mxu0 %v3601
      %v3603 = vpop.f32.mrf.mxu0
      %v3604 = vadd.f32 %v3482, %v3603
      %v3605 = vand.u32 %v3116, 4294901760
      %v3606 = vsub.f32 %v3116, %v3605
      %v3607 = vand.u32 %v3606, 4294901760
      %3608 = vmatmul.f32.gmra.mxu0 %v3607
      %v3609 = vpop.f32.mrf.mxu0
      %v3610 = vadd.f32 %v3487, %v3609
      %v3611 = vand.u32 %v3119, 4294901760
      %v3612 = vsub.f32 %v3119, %v3611
      %v3613 = vand.u32 %v3612, 4294901760
      %3614 = vmatmul.f32.gmra.mxu0 %v3613
      %v3615 = vpop.f32.mrf.mxu0
      %v3616 = vadd.f32 %v3492, %v3615
      %v3617 = vand.u32 %v3122, 4294901760
      %v3618 = vsub.f32 %v3122, %v3617
      %v3619 = vand.u32 %v3618, 4294901760
      %3620 = vmatmul.f32.gmra.mxu0 %v3619
      %v3621 = vpop.f32.mrf.mxu0
      %v3622 = vadd.f32 %v3497, %v3621
      %v3623 = vand.u32 %v3125, 4294901760
      %v3624 = vsub.f32 %v3125, %v3623
      %v3625 = vand.u32 %v3624, 4294901760
      %3626 = vmatmul.f32.gmra.mxu0 %v3625
      %v3627 = vpop.f32.mrf.mxu0
      %v3628 = vadd.f32 %v3502, %v3627
      %v3629 = vand.u32 %v3128, 4294901760
      %v3630 = vsub.f32 %v3128, %v3629
      %v3631 = vand.u32 %v3630, 4294901760
      %3632 = vmatmul.f32.gmra.mxu0 %v3631
      %v3633 = vpop.f32.mrf.mxu0
      %v3634 = vadd.f32 %v3507, %v3633
      %v3635 = vand.u32 %v3131, 4294901760
      %v3636 = vsub.f32 %v3131, %v3635
      %v3637 = vand.u32 %v3636, 4294901760
      %3638 = vmatmul.f32.gmra.mxu0 %v3637
      %v3639 = vpop.f32.mrf.mxu0
      %v3640 = vadd.f32 %v3512, %v3639
      %3641 = vdwg.mxu0
      %3642 = vmatpush.msra.mxu0 0.0
      %3643 = vmatpush.msra.mxu0 0.0
      %3644 = vmatpush.msra.mxu0 0.0
      %3645 = vmatpush.msra.mxu0 0.0
      %3646 = vmatpush.msra.mxu0 0.0
      %3647 = vmatpush.msra.mxu0 0.0
      %3648 = vmatpush.msra.mxu0 0.0
      %3649 = vmatpush.msra.mxu0 0.0
      %3650 = vmatpush.msra.mxu0 0.0
      %3651 = vmatpush.msra.mxu0 0.0
      %3652 = vmatpush.msra.mxu0 0.0
      %3653 = vmatpush.msra.mxu0 0.0
      %3654 = vmatpush.msra.mxu0 0.0
      %v3655 = vand.u32 %v3052, 4294901760
      %v3656 = vsub.f32 %v3052, %v3655
      %v3657 = vand.u32 %v3656, 4294901760
      %3658 = vmatpush.msra.mxu0 %v3657
      %v3659 = vand.u32 %v3051, 4294901760
      %v3660 = vsub.f32 %v3051, %v3659
      %v3661 = vand.u32 %v3660, 4294901760
      %3662 = vmatpush.msra.mxu0 %v3661
      %v3663 = vand.u32 %v3050, 4294901760
      %v3664 = vsub.f32 %v3050, %v3663
      %v3665 = vand.u32 %v3664, 4294901760
      %3666 = vmatpush.msra.mxu0 %v3665
      %v3667 = vand.u32 %v3080, 4294901760
      %3668 = vmatmul.f32.gmra.mxu0 %v3667
      %v3669 = vpop.f32.mrf.mxu0
      %v3670 = vadd.f32 %v3538, %v3669
      %v3671 = vand.u32 %v3083, 4294901760
      %3672 = vmatmul.f32.gmra.mxu0 %v3671
      %v3673 = vpop.f32.mrf.mxu0
      %v3674 = vadd.f32 %v3544, %v3673
      %v3675 = vand.u32 %v3086, 4294901760
      %3676 = vmatmul.f32.gmra.mxu0 %v3675
      %v3677 = vpop.f32.mrf.mxu0
      %v3678 = vadd.f32 %v3550, %v3677
      %v3679 = vand.u32 %v3089, 4294901760
      %3680 = vmatmul.f32.gmra.mxu0 %v3679
      %v3681 = vpop.f32.mrf.mxu0
      %v3682 = vadd.f32 %v3556, %v3681
      %v3683 = vand.u32 %v3092, 4294901760
      %3684 = vmatmul.f32.gmra.mxu0 %v3683
      %v3685 = vpop.f32.mrf.mxu0
      %v3686 = vadd.f32 %v3562, %v3685
      %v3687 = vand.u32 %v3095, 4294901760
      %3688 = vmatmul.f32.gmra.mxu0 %v3687
      %v3689 = vpop.f32.mrf.mxu0
      %v3690 = vadd.f32 %v3568, %v3689
      %v3691 = vand.u32 %v3098, 4294901760
      %3692 = vmatmul.f32.gmra.mxu0 %v3691
      %v3693 = vpop.f32.mrf.mxu0
      %v3694 = vadd.f32 %v3574, %v3693
      %v3695 = vand.u32 %v3101, 4294901760
      %3696 = vmatmul.f32.gmra.mxu0 %v3695
      %v3697 = vpop.f32.mrf.mxu0
      %v3698 = vadd.f32 %v3580, %v3697
      %v3699 = vand.u32 %v3104, 4294901760
      %3700 = vmatmul.f32.gmra.mxu0 %v3699
      %v3701 = vpop.f32.mrf.mxu0
      %v3702 = vadd.f32 %v3586, %v3701
      %v3703 = vand.u32 %v3107, 4294901760
      %3704 = vmatmul.f32.gmra.mxu0 %v3703
      %v3705 = vpop.f32.mrf.mxu0
      %v3706 = vadd.f32 %v3592, %v3705
      %v3707 = vand.u32 %v3110, 4294901760
      %3708 = vmatmul.f32.gmra.mxu0 %v3707
      %v3709 = vpop.f32.mrf.mxu0
      %v3710 = vadd.f32 %v3598, %v3709
      %v3711 = vand.u32 %v3113, 4294901760
      %3712 = vmatmul.f32.gmra.mxu0 %v3711
      %v3713 = vpop.f32.mrf.mxu0
      %v3714 = vadd.f32 %v3604, %v3713
      %v3715 = vand.u32 %v3116, 4294901760
      %3716 = vmatmul.f32.gmra.mxu0 %v3715
      %v3717 = vpop.f32.mrf.mxu0
      %v3718 = vadd.f32 %v3610, %v3717
      %v3719 = vand.u32 %v3119, 4294901760
      %3720 = vmatmul.f32.gmra.mxu0 %v3719
      %v3721 = vpop.f32.mrf.mxu0
      %v3722 = vadd.f32 %v3616, %v3721
      %v3723 = vand.u32 %v3122, 4294901760
      %3724 = vmatmul.f32.gmra.mxu0 %v3723
      %v3725 = vpop.f32.mrf.mxu0
      %v3726 = vadd.f32 %v3622, %v3725
      %v3727 = vand.u32 %v3125, 4294901760
      %3728 = vmatmul.f32.gmra.mxu0 %v3727
      %v3729 = vpop.f32.mrf.mxu0
      %v3730 = vadd.f32 %v3628, %v3729
      %v3731 = vand.u32 %v3128, 4294901760
      %3732 = vmatmul.f32.gmra.mxu0 %v3731
      %v3733 = vpop.f32.mrf.mxu0
      %v3734 = vadd.f32 %v3634, %v3733
      %v3735 = vand.u32 %v3131, 4294901760
      %3736 = vmatmul.f32.gmra.mxu0 %v3735
      %v3737 = vpop.f32.mrf.mxu0
      %v3738 = vadd.f32 %v3640, %v3737
      %3739 = vdwg.mxu0
      %3740 = vmatpush.msra.mxu0 0.0
      %3741 = vmatpush.msra.mxu0 0.0
      %3742 = vmatpush.msra.mxu0 0.0
      %3743 = vmatpush.msra.mxu0 0.0
      %3744 = vmatpush.msra.mxu0 0.0
      %3745 = vmatpush.msra.mxu0 0.0
      %3746 = vmatpush.msra.mxu0 0.0
      %3747 = vmatpush.msra.mxu0 0.0
      %3748 = vmatpush.msra.mxu0 0.0
      %3749 = vmatpush.msra.mxu0 0.0
      %3750 = vmatpush.msra.mxu0 0.0
      %3751 = vmatpush.msra.mxu0 0.0
      %3752 = vmatpush.msra.mxu0 0.0
      %v3753 = vand.u32 %v3052, 4294901760
      %3754 = vmatpush.msra.mxu0 %v3753
      %v3755 = vand.u32 %v3051, 4294901760
      %3756 = vmatpush.msra.mxu0 %v3755
      %v3757 = vand.u32 %v3050, 4294901760
      %3758 = vmatpush.msra.mxu0 %v3757
      %v3759 = vand.u32 %v3080, 4294901760
      %3760 = vmatmul.f32.gmra.mxu0 %v3759
      %v3761 = vpop.f32.mrf.mxu0
      %v3762 = vadd.f32 %v3670, %v3761
      %v3763 = vand.u32 %v3083, 4294901760
      %3764 = vmatmul.f32.gmra.mxu0 %v3763
      %v3765 = vpop.f32.mrf.mxu0
      %v3766 = vadd.f32 %v3674, %v3765
      %v3767 = vand.u32 %v3086, 4294901760
      %3768 = vmatmul.f32.gmra.mxu0 %v3767
      %v3769 = vpop.f32.mrf.mxu0
      %v3770 = vadd.f32 %v3678, %v3769
      %v3771 = vand.u32 %v3089, 4294901760
      %3772 = vmatmul.f32.gmra.mxu0 %v3771
      %v3773 = vpop.f32.mrf.mxu0
      %v3774 = vadd.f32 %v3682, %v3773
      %v3775 = vand.u32 %v3092, 4294901760
      %3776 = vmatmul.f32.gmra.mxu0 %v3775
      %v3777 = vpop.f32.mrf.mxu0
      %v3778 = vadd.f32 %v3686, %v3777
      %v3779 = vand.u32 %v3095, 4294901760
      %3780 = vmatmul.f32.gmra.mxu0 %v3779
      %v3781 = vpop.f32.mrf.mxu0
      %v3782 = vadd.f32 %v3690, %v3781
      %v3783 = vand.u32 %v3098, 4294901760
      %3784 = vmatmul.f32.gmra.mxu0 %v3783
      %v3785 = vpop.f32.mrf.mxu0
      %v3786 = vadd.f32 %v3694, %v3785
      %v3787 = vand.u32 %v3101, 4294901760
      %3788 = vmatmul.f32.gmra.mxu0 %v3787
      %v3789 = vpop.f32.mrf.mxu0
      %v3790 = vadd.f32 %v3698, %v3789
      %v3791 = vand.u32 %v3104, 4294901760
      %3792 = vmatmul.f32.gmra.mxu0 %v3791
      %v3793 = vpop.f32.mrf.mxu0
      %v3794 = vadd.f32 %v3702, %v3793
      %v3795 = vand.u32 %v3107, 4294901760
      %3796 = vmatmul.f32.gmra.mxu0 %v3795
      %v3797 = vpop.f32.mrf.mxu0
      %v3798 = vadd.f32 %v3706, %v3797
      %v3799 = vand.u32 %v3110, 4294901760
      %3800 = vmatmul.f32.gmra.mxu0 %v3799
      %v3801 = vpop.f32.mrf.mxu0
      %v3802 = vadd.f32 %v3710, %v3801
      %v3803 = vand.u32 %v3113, 4294901760
      %3804 = vmatmul.f32.gmra.mxu0 %v3803
      %v3805 = vpop.f32.mrf.mxu0
      %v3806 = vadd.f32 %v3714, %v3805
      %v3807 = vand.u32 %v3116, 4294901760
      %3808 = vmatmul.f32.gmra.mxu0 %v3807
      %v3809 = vpop.f32.mrf.mxu0
      %v3810 = vadd.f32 %v3718, %v3809
      %v3811 = vand.u32 %v3119, 4294901760
      %3812 = vmatmul.f32.gmra.mxu0 %v3811
      %v3813 = vpop.f32.mrf.mxu0
      %v3814 = vadd.f32 %v3722, %v3813
      %v3815 = vand.u32 %v3122, 4294901760
      %3816 = vmatmul.f32.gmra.mxu0 %v3815
      %v3817 = vpop.f32.mrf.mxu0
      %v3818 = vadd.f32 %v3726, %v3817
      %v3819 = vand.u32 %v3125, 4294901760
      %3820 = vmatmul.f32.gmra.mxu0 %v3819
      %v3821 = vpop.f32.mrf.mxu0
      %v3822 = vadd.f32 %v3730, %v3821
      %v3823 = vand.u32 %v3128, 4294901760
      %3824 = vmatmul.f32.gmra.mxu0 %v3823
      %v3825 = vpop.f32.mrf.mxu0
      %v3826 = vadd.f32 %v3734, %v3825
      %v3827 = vand.u32 %v3131, 4294901760
      %3828 = vmatmul.f32.gmra.mxu0 %v3827
      %v3829 = vpop.f32.mrf.mxu0
      %v3830 = vadd.f32 %v3738, %v3829
      %3831 = vdwg.mxu0
      %3832 = vmatpush.msra.mxu0 0.0
      %3833 = vmatpush.msra.mxu0 0.0
      %3834 = vmatpush.msra.mxu0 0.0
      %3835 = vmatpush.msra.mxu0 0.0
      %3836 = vmatpush.msra.mxu0 0.0
      %3837 = vmatpush.msra.mxu0 0.0
      %3838 = vmatpush.msra.mxu0 0.0
      %3839 = vmatpush.msra.mxu0 0.0
      %3840 = vmatpush.msra.mxu0 0.0
      %3841 = vmatpush.msra.mxu0 0.0
      %3842 = vmatpush.msra.mxu0 0.0
      %3843 = vmatpush.msra.mxu0 0.0
      %3844 = vmatpush.msra.mxu0 0.0
      %v3845 = vand.u32 %v3036, 4294901760
      %3846 = vmatpush.msra.mxu0 %v3845
      %v3847 = vand.u32 %v3035, 4294901760
      %3848 = vmatpush.msra.mxu0 %v3847
      %v3849 = vand.u32 %v3034, 4294901760
      %3850 = vmatpush.msra.mxu0 %v3849
      %v3851 = vand.u32 %v3080, 4294901760
      %v3852 = vsub.f32 %v3080, %v3851
      %v3853 = vand.u32 %v3852, 4294901760
      %v3854 = vsub.f32 %v3852, %v3853
      %v3855 = vand.u32 %v3854, 4294901760
      %3856 = vmatmul.f32.gmra.mxu0 %v3855
      %v3857 = vpop.f32.mrf.mxu0
      %v3858 = vadd.f32 0.0, %v3857
      %v3859 = vand.u32 %v3083, 4294901760
      %v3860 = vsub.f32 %v3083, %v3859
      %v3861 = vand.u32 %v3860, 4294901760
      %v3862 = vsub.f32 %v3860, %v3861
      %v3863 = vand.u32 %v3862, 4294901760
      %3864 = vmatmul.f32.gmra.mxu0 %v3863
      %v3865 = vpop.f32.mrf.mxu0
      %v3866 = vadd.f32 0.0, %v3865
      %v3867 = vand.u32 %v3086, 4294901760
      %v3868 = vsub.f32 %v3086, %v3867
      %v3869 = vand.u32 %v3868, 4294901760
      %v3870 = vsub.f32 %v3868, %v3869
      %v3871 = vand.u32 %v3870, 4294901760
      %3872 = vmatmul.f32.gmra.mxu0 %v3871
      %v3873 = vpop.f32.mrf.mxu0
      %v3874 = vadd.f32 0.0, %v3873
      %v3875 = vand.u32 %v3089, 4294901760
      %v3876 = vsub.f32 %v3089, %v3875
      %v3877 = vand.u32 %v3876, 4294901760
      %v3878 = vsub.f32 %v3876, %v3877
      %v3879 = vand.u32 %v3878, 4294901760
      %3880 = vmatmul.f32.gmra.mxu0 %v3879
      %v3881 = vpop.f32.mrf.mxu0
      %v3882 = vadd.f32 0.0, %v3881
      %v3883 = vand.u32 %v3092, 4294901760
      %v3884 = vsub.f32 %v3092, %v3883
      %v3885 = vand.u32 %v3884, 4294901760
      %v3886 = vsub.f32 %v3884, %v3885
      %v3887 = vand.u32 %v3886, 4294901760
      %3888 = vmatmul.f32.gmra.mxu0 %v3887
      %v3889 = vpop.f32.mrf.mxu0
      %v3890 = vadd.f32 0.0, %v3889
      %v3891 = vand.u32 %v3095, 4294901760
      %v3892 = vsub.f32 %v3095, %v3891
      %v3893 = vand.u32 %v3892, 4294901760
      %v3894 = vsub.f32 %v3892, %v3893
      %v3895 = vand.u32 %v3894, 4294901760
      %3896 = vmatmul.f32.gmra.mxu0 %v3895
      %v3897 = vpop.f32.mrf.mxu0
      %v3898 = vadd.f32 0.0, %v3897
      %v3899 = vand.u32 %v3098, 4294901760
      %v3900 = vsub.f32 %v3098, %v3899
      %v3901 = vand.u32 %v3900, 4294901760
      %v3902 = vsub.f32 %v3900, %v3901
      %v3903 = vand.u32 %v3902, 4294901760
      %3904 = vmatmul.f32.gmra.mxu0 %v3903
      %v3905 = vpop.f32.mrf.mxu0
      %v3906 = vadd.f32 0.0, %v3905
      %v3907 = vand.u32 %v3101, 4294901760
      %v3908 = vsub.f32 %v3101, %v3907
      %v3909 = vand.u32 %v3908, 4294901760
      %v3910 = vsub.f32 %v3908, %v3909
      %v3911 = vand.u32 %v3910, 4294901760
      %3912 = vmatmul.f32.gmra.mxu0 %v3911
      %v3913 = vpop.f32.mrf.mxu0
      %v3914 = vadd.f32 0.0, %v3913
      %v3915 = vand.u32 %v3104, 4294901760
      %v3916 = vsub.f32 %v3104, %v3915
      %v3917 = vand.u32 %v3916, 4294901760
      %v3918 = vsub.f32 %v3916, %v3917
      %v3919 = vand.u32 %v3918, 4294901760
      %3920 = vmatmul.f32.gmra.mxu0 %v3919
      %v3921 = vpop.f32.mrf.mxu0
      %v3922 = vadd.f32 0.0, %v3921
      %v3923 = vand.u32 %v3107, 4294901760
      %v3924 = vsub.f32 %v3107, %v3923
      %v3925 = vand.u32 %v3924, 4294901760
      %v3926 = vsub.f32 %v3924, %v3925
      %v3927 = vand.u32 %v3926, 4294901760
      %3928 = vmatmul.f32.gmra.mxu0 %v3927
      %v3929 = vpop.f32.mrf.mxu0
      %v3930 = vadd.f32 0.0, %v3929
      %v3931 = vand.u32 %v3110, 4294901760
      %v3932 = vsub.f32 %v3110, %v3931
      %v3933 = vand.u32 %v3932, 4294901760
      %v3934 = vsub.f32 %v3932, %v3933
      %v3935 = vand.u32 %v3934, 4294901760
      %3936 = vmatmul.f32.gmra.mxu0 %v3935
      %v3937 = vpop.f32.mrf.mxu0
      %v3938 = vadd.f32 0.0, %v3937
      %v3939 = vand.u32 %v3113, 4294901760
      %v3940 = vsub.f32 %v3113, %v3939
      %v3941 = vand.u32 %v3940, 4294901760
      %v3942 = vsub.f32 %v3940, %v3941
      %v3943 = vand.u32 %v3942, 4294901760
      %3944 = vmatmul.f32.gmra.mxu0 %v3943
      %v3945 = vpop.f32.mrf.mxu0
      %v3946 = vadd.f32 0.0, %v3945
      %v3947 = vand.u32 %v3116, 4294901760
      %v3948 = vsub.f32 %v3116, %v3947
      %v3949 = vand.u32 %v3948, 4294901760
      %v3950 = vsub.f32 %v3948, %v3949
      %v3951 = vand.u32 %v3950, 4294901760
      %3952 = vmatmul.f32.gmra.mxu0 %v3951
      %v3953 = vpop.f32.mrf.mxu0
      %v3954 = vadd.f32 0.0, %v3953
      %v3955 = vand.u32 %v3119, 4294901760
      %v3956 = vsub.f32 %v3119, %v3955
      %v3957 = vand.u32 %v3956, 4294901760
      %v3958 = vsub.f32 %v3956, %v3957
      %v3959 = vand.u32 %v3958, 4294901760
      %3960 = vmatmul.f32.gmra.mxu0 %v3959
      %v3961 = vpop.f32.mrf.mxu0
      %v3962 = vadd.f32 0.0, %v3961
      %v3963 = vand.u32 %v3122, 4294901760
      %v3964 = vsub.f32 %v3122, %v3963
      %v3965 = vand.u32 %v3964, 4294901760
      %v3966 = vsub.f32 %v3964, %v3965
      %v3967 = vand.u32 %v3966, 4294901760
      %3968 = vmatmul.f32.gmra.mxu0 %v3967
      %v3969 = vpop.f32.mrf.mxu0
      %v3970 = vadd.f32 0.0, %v3969
      %v3971 = vand.u32 %v3125, 4294901760
      %v3972 = vsub.f32 %v3125, %v3971
      %v3973 = vand.u32 %v3972, 4294901760
      %v3974 = vsub.f32 %v3972, %v3973
      %v3975 = vand.u32 %v3974, 4294901760
      %3976 = vmatmul.f32.gmra.mxu0 %v3975
      %v3977 = vpop.f32.mrf.mxu0
      %v3978 = vadd.f32 0.0, %v3977
      %v3979 = vand.u32 %v3128, 4294901760
      %v3980 = vsub.f32 %v3128, %v3979
      %v3981 = vand.u32 %v3980, 4294901760
      %v3982 = vsub.f32 %v3980, %v3981
      %v3983 = vand.u32 %v3982, 4294901760
      %3984 = vmatmul.f32.gmra.mxu0 %v3983
      %v3985 = vpop.f32.mrf.mxu0
      %v3986 = vadd.f32 0.0, %v3985
      %v3987 = vand.u32 %v3131, 4294901760
      %v3988 = vsub.f32 %v3131, %v3987
      %v3989 = vand.u32 %v3988, 4294901760
      %v3990 = vsub.f32 %v3988, %v3989
      %v3991 = vand.u32 %v3990, 4294901760
      %3992 = vmatmul.f32.gmra.mxu0 %v3991
      %v3993 = vpop.f32.mrf.mxu0
      %v3994 = vadd.f32 0.0, %v3993
      %3995 = vdwg.mxu0
      %3996 = vmatpush.msra.mxu0 0.0
      %3997 = vmatpush.msra.mxu0 0.0
      %3998 = vmatpush.msra.mxu0 0.0
      %3999 = vmatpush.msra.mxu0 0.0
      %4000 = vmatpush.msra.mxu0 0.0
      %4001 = vmatpush.msra.mxu0 0.0
      %4002 = vmatpush.msra.mxu0 0.0
      %4003 = vmatpush.msra.mxu0 0.0
      %4004 = vmatpush.msra.mxu0 0.0
      %4005 = vmatpush.msra.mxu0 0.0
      %4006 = vmatpush.msra.mxu0 0.0
      %4007 = vmatpush.msra.mxu0 0.0
      %4008 = vmatpush.msra.mxu0 0.0
      %v4009 = vand.u32 %v3036, 4294901760
      %v4010 = vsub.f32 %v3036, %v4009
      %v4011 = vand.u32 %v4010, 4294901760
      %v4012 = vsub.f32 %v4010, %v4011
      %v4013 = vand.u32 %v4012, 4294901760
      %4014 = vmatpush.msra.mxu0 %v4013
      %v4015 = vand.u32 %v3035, 4294901760
      %v4016 = vsub.f32 %v3035, %v4015
      %v4017 = vand.u32 %v4016, 4294901760
      %v4018 = vsub.f32 %v4016, %v4017
      %v4019 = vand.u32 %v4018, 4294901760
      %4020 = vmatpush.msra.mxu0 %v4019
      %v4021 = vand.u32 %v3034, 4294901760
      %v4022 = vsub.f32 %v3034, %v4021
      %v4023 = vand.u32 %v4022, 4294901760
      %v4024 = vsub.f32 %v4022, %v4023
      %v4025 = vand.u32 %v4024, 4294901760
      %4026 = vmatpush.msra.mxu0 %v4025
      %v4027 = vand.u32 %v3080, 4294901760
      %4028 = vmatmul.f32.gmra.mxu0 %v4027
      %v4029 = vpop.f32.mrf.mxu0
      %v4030 = vadd.f32 %v3858, %v4029
      %v4031 = vand.u32 %v3083, 4294901760
      %4032 = vmatmul.f32.gmra.mxu0 %v4031
      %v4033 = vpop.f32.mrf.mxu0
      %v4034 = vadd.f32 %v3866, %v4033
      %v4035 = vand.u32 %v3086, 4294901760
      %4036 = vmatmul.f32.gmra.mxu0 %v4035
      %v4037 = vpop.f32.mrf.mxu0
      %v4038 = vadd.f32 %v3874, %v4037
      %v4039 = vand.u32 %v3089, 4294901760
      %4040 = vmatmul.f32.gmra.mxu0 %v4039
      %v4041 = vpop.f32.mrf.mxu0
      %v4042 = vadd.f32 %v3882, %v4041
      %v4043 = vand.u32 %v3092, 4294901760
      %4044 = vmatmul.f32.gmra.mxu0 %v4043
      %v4045 = vpop.f32.mrf.mxu0
      %v4046 = vadd.f32 %v3890, %v4045
      %v4047 = vand.u32 %v3095, 4294901760
      %4048 = vmatmul.f32.gmra.mxu0 %v4047
      %v4049 = vpop.f32.mrf.mxu0
      %v4050 = vadd.f32 %v3898, %v4049
      %v4051 = vand.u32 %v3098, 4294901760
      %4052 = vmatmul.f32.gmra.mxu0 %v4051
      %v4053 = vpop.f32.mrf.mxu0
      %v4054 = vadd.f32 %v3906, %v4053
      %v4055 = vand.u32 %v3101, 4294901760
      %4056 = vmatmul.f32.gmra.mxu0 %v4055
      %v4057 = vpop.f32.mrf.mxu0
      %v4058 = vadd.f32 %v3914, %v4057
      %v4059 = vand.u32 %v3104, 4294901760
      %4060 = vmatmul.f32.gmra.mxu0 %v4059
      %v4061 = vpop.f32.mrf.mxu0
      %v4062 = vadd.f32 %v3922, %v4061
      %v4063 = vand.u32 %v3107, 4294901760
      %4064 = vmatmul.f32.gmra.mxu0 %v4063
      %v4065 = vpop.f32.mrf.mxu0
      %v4066 = vadd.f32 %v3930, %v4065
      %v4067 = vand.u32 %v3110, 4294901760
      %4068 = vmatmul.f32.gmra.mxu0 %v4067
      %v4069 = vpop.f32.mrf.mxu0
      %v4070 = vadd.f32 %v3938, %v4069
      %v4071 = vand.u32 %v3113, 4294901760
      %4072 = vmatmul.f32.gmra.mxu0 %v4071
      %v4073 = vpop.f32.mrf.mxu0
      %v4074 = vadd.f32 %v3946, %v4073
      %v4075 = vand.u32 %v3116, 4294901760
      %4076 = vmatmul.f32.gmra.mxu0 %v4075
      %v4077 = vpop.f32.mrf.mxu0
      %v4078 = vadd.f32 %v3954, %v4077
      %v4079 = vand.u32 %v3119, 4294901760
      %4080 = vmatmul.f32.gmra.mxu0 %v4079
      %v4081 = vpop.f32.mrf.mxu0
      %v4082 = vadd.f32 %v3962, %v4081
      %v4083 = vand.u32 %v3122, 4294901760
      %4084 = vmatmul.f32.gmra.mxu0 %v4083
      %v4085 = vpop.f32.mrf.mxu0
      %v4086 = vadd.f32 %v3970, %v4085
      %v4087 = vand.u32 %v3125, 4294901760
      %4088 = vmatmul.f32.gmra.mxu0 %v4087
      %v4089 = vpop.f32.mrf.mxu0
      %v4090 = vadd.f32 %v3978, %v4089
      %v4091 = vand.u32 %v3128, 4294901760
      %4092 = vmatmul.f32.gmra.mxu0 %v4091
      %v4093 = vpop.f32.mrf.mxu0
      %v4094 = vadd.f32 %v3986, %v4093
      %v4095 = vand.u32 %v3131, 4294901760
      %4096 = vmatmul.f32.gmra.mxu0 %v4095
      %v4097 = vpop.f32.mrf.mxu0
      %v4098 = vadd.f32 %v3994, %v4097
      %4099 = vdwg.mxu0
      %4100 = vmatpush.msra.mxu0 0.0
      %4101 = vmatpush.msra.mxu0 0.0
      %4102 = vmatpush.msra.mxu0 0.0
      %4103 = vmatpush.msra.mxu0 0.0
      %4104 = vmatpush.msra.mxu0 0.0
      %4105 = vmatpush.msra.mxu0 0.0
      %4106 = vmatpush.msra.mxu0 0.0
      %4107 = vmatpush.msra.mxu0 0.0
      %4108 = vmatpush.msra.mxu0 0.0
      %4109 = vmatpush.msra.mxu0 0.0
      %4110 = vmatpush.msra.mxu0 0.0
      %4111 = vmatpush.msra.mxu0 0.0
      %4112 = vmatpush.msra.mxu0 0.0
      %v4113 = vand.u32 %v3036, 4294901760
      %v4114 = vsub.f32 %v3036, %v4113
      %4115 = vmatpush.msra.mxu0 %v4114
      %v4116 = vand.u32 %v3035, 4294901760
      %v4117 = vsub.f32 %v3035, %v4116
      %4118 = vmatpush.msra.mxu0 %v4117
      %v4119 = vand.u32 %v3034, 4294901760
      %v4120 = vsub.f32 %v3034, %v4119
      %4121 = vmatpush.msra.mxu0 %v4120
      %v4122 = vand.u32 %v3080, 4294901760
      %v4123 = vsub.f32 %v3080, %v4122
      %4124 = vmatmul.f32.gmra.mxu0 %v4123
      %v4125 = vpop.f32.mrf.mxu0
      %v4126 = vadd.f32 %v4030, %v4125
      %v4127 = vand.u32 %v3083, 4294901760
      %v4128 = vsub.f32 %v3083, %v4127
      %4129 = vmatmul.f32.gmra.mxu0 %v4128
      %v4130 = vpop.f32.mrf.mxu0
      %v4131 = vadd.f32 %v4034, %v4130
      %v4132 = vand.u32 %v3086, 4294901760
      %v4133 = vsub.f32 %v3086, %v4132
      %4134 = vmatmul.f32.gmra.mxu0 %v4133
      %v4135 = vpop.f32.mrf.mxu0
      %v4136 = vadd.f32 %v4038, %v4135
      %v4137 = vand.u32 %v3089, 4294901760
      %v4138 = vsub.f32 %v3089, %v4137
      %4139 = vmatmul.f32.gmra.mxu0 %v4138
      %v4140 = vpop.f32.mrf.mxu0
      %v4141 = vadd.f32 %v4042, %v4140
      %v4142 = vand.u32 %v3092, 4294901760
      %v4143 = vsub.f32 %v3092, %v4142
      %4144 = vmatmul.f32.gmra.mxu0 %v4143
      %v4145 = vpop.f32.mrf.mxu0
      %v4146 = vadd.f32 %v4046, %v4145
      %v4147 = vand.u32 %v3095, 4294901760
      %v4148 = vsub.f32 %v3095, %v4147
      %4149 = vmatmul.f32.gmra.mxu0 %v4148
      %v4150 = vpop.f32.mrf.mxu0
      %v4151 = vadd.f32 %v4050, %v4150
      %v4152 = vand.u32 %v3098, 4294901760
      %v4153 = vsub.f32 %v3098, %v4152
      %4154 = vmatmul.f32.gmra.mxu0 %v4153
      %v4155 = vpop.f32.mrf.mxu0
      %v4156 = vadd.f32 %v4054, %v4155
      %v4157 = vand.u32 %v3101, 4294901760
      %v4158 = vsub.f32 %v3101, %v4157
      %4159 = vmatmul.f32.gmra.mxu0 %v4158
      %v4160 = vpop.f32.mrf.mxu0
      %v4161 = vadd.f32 %v4058, %v4160
      %v4162 = vand.u32 %v3104, 4294901760
      %v4163 = vsub.f32 %v3104, %v4162
      %4164 = vmatmul.f32.gmra.mxu0 %v4163
      %v4165 = vpop.f32.mrf.mxu0
      %v4166 = vadd.f32 %v4062, %v4165
      %v4167 = vand.u32 %v3107, 4294901760
      %v4168 = vsub.f32 %v3107, %v4167
      %4169 = vmatmul.f32.gmra.mxu0 %v4168
      %v4170 = vpop.f32.mrf.mxu0
      %v4171 = vadd.f32 %v4066, %v4170
      %v4172 = vand.u32 %v3110, 4294901760
      %v4173 = vsub.f32 %v3110, %v4172
      %4174 = vmatmul.f32.gmra.mxu0 %v4173
      %v4175 = vpop.f32.mrf.mxu0
      %v4176 = vadd.f32 %v4070, %v4175
      %v4177 = vand.u32 %v3113, 4294901760
      %v4178 = vsub.f32 %v3113, %v4177
      %4179 = vmatmul.f32.gmra.mxu0 %v4178
      %v4180 = vpop.f32.mrf.mxu0
      %v4181 = vadd.f32 %v4074, %v4180
      %v4182 = vand.u32 %v3116, 4294901760
      %v4183 = vsub.f32 %v3116, %v4182
      %4184 = vmatmul.f32.gmra.mxu0 %v4183
      %v4185 = vpop.f32.mrf.mxu0
      %v4186 = vadd.f32 %v4078, %v4185
      %v4187 = vand.u32 %v3119, 4294901760
      %v4188 = vsub.f32 %v3119, %v4187
      %4189 = vmatmul.f32.gmra.mxu0 %v4188
      %v4190 = vpop.f32.mrf.mxu0
      %v4191 = vadd.f32 %v4082, %v4190
      %v4192 = vand.u32 %v3122, 4294901760
      %v4193 = vsub.f32 %v3122, %v4192
      %4194 = vmatmul.f32.gmra.mxu0 %v4193
      %v4195 = vpop.f32.mrf.mxu0
      %v4196 = vadd.f32 %v4086, %v4195
      %v4197 = vand.u32 %v3125, 4294901760
      %v4198 = vsub.f32 %v3125, %v4197
      %4199 = vmatmul.f32.gmra.mxu0 %v4198
      %v4200 = vpop.f32.mrf.mxu0
      %v4201 = vadd.f32 %v4090, %v4200
      %v4202 = vand.u32 %v3128, 4294901760
      %v4203 = vsub.f32 %v3128, %v4202
      %4204 = vmatmul.f32.gmra.mxu0 %v4203
      %v4205 = vpop.f32.mrf.mxu0
      %v4206 = vadd.f32 %v4094, %v4205
      %v4207 = vand.u32 %v3131, 4294901760
      %v4208 = vsub.f32 %v3131, %v4207
      %4209 = vmatmul.f32.gmra.mxu0 %v4208
      %v4210 = vpop.f32.mrf.mxu0
      %v4211 = vadd.f32 %v4098, %v4210
      %4212 = vdwg.mxu0
      %4213 = vmatpush.msra.mxu0 0.0
      %4214 = vmatpush.msra.mxu0 0.0
      %4215 = vmatpush.msra.mxu0 0.0
      %4216 = vmatpush.msra.mxu0 0.0
      %4217 = vmatpush.msra.mxu0 0.0
      %4218 = vmatpush.msra.mxu0 0.0
      %4219 = vmatpush.msra.mxu0 0.0
      %4220 = vmatpush.msra.mxu0 0.0
      %4221 = vmatpush.msra.mxu0 0.0
      %4222 = vmatpush.msra.mxu0 0.0
      %4223 = vmatpush.msra.mxu0 0.0
      %4224 = vmatpush.msra.mxu0 0.0
      %4225 = vmatpush.msra.mxu0 0.0
      %v4226 = vand.u32 %v3036, 4294901760
      %4227 = vmatpush.msra.mxu0 %v4226
      %v4228 = vand.u32 %v3035, 4294901760
      %4229 = vmatpush.msra.mxu0 %v4228
      %v4230 = vand.u32 %v3034, 4294901760
      %4231 = vmatpush.msra.mxu0 %v4230
      %v4232 = vand.u32 %v3080, 4294901760
      %v4233 = vsub.f32 %v3080, %v4232
      %v4234 = vand.u32 %v4233, 4294901760
      %4235 = vmatmul.f32.gmra.mxu0 %v4234
      %v4236 = vpop.f32.mrf.mxu0
      %v4237 = vadd.f32 %v4126, %v4236
      %v4238 = vand.u32 %v3083, 4294901760
      %v4239 = vsub.f32 %v3083, %v4238
      %v4240 = vand.u32 %v4239, 4294901760
      %4241 = vmatmul.f32.gmra.mxu0 %v4240
      %v4242 = vpop.f32.mrf.mxu0
      %v4243 = vadd.f32 %v4131, %v4242
      %v4244 = vand.u32 %v3086, 4294901760
      %v4245 = vsub.f32 %v3086, %v4244
      %v4246 = vand.u32 %v4245, 4294901760
      %4247 = vmatmul.f32.gmra.mxu0 %v4246
      %v4248 = vpop.f32.mrf.mxu0
      %v4249 = vadd.f32 %v4136, %v4248
      %v4250 = vand.u32 %v3089, 4294901760
      %v4251 = vsub.f32 %v3089, %v4250
      %v4252 = vand.u32 %v4251, 4294901760
      %4253 = vmatmul.f32.gmra.mxu0 %v4252
      %v4254 = vpop.f32.mrf.mxu0
      %v4255 = vadd.f32 %v4141, %v4254
      %v4256 = vand.u32 %v3092, 4294901760
      %v4257 = vsub.f32 %v3092, %v4256
      %v4258 = vand.u32 %v4257, 4294901760
      %4259 = vmatmul.f32.gmra.mxu0 %v4258
      %v4260 = vpop.f32.mrf.mxu0
      %v4261 = vadd.f32 %v4146, %v4260
      %v4262 = vand.u32 %v3095, 4294901760
      %v4263 = vsub.f32 %v3095, %v4262
      %v4264 = vand.u32 %v4263, 4294901760
      %4265 = vmatmul.f32.gmra.mxu0 %v4264
      %v4266 = vpop.f32.mrf.mxu0
      %v4267 = vadd.f32 %v4151, %v4266
      %v4268 = vand.u32 %v3098, 4294901760
      %v4269 = vsub.f32 %v3098, %v4268
      %v4270 = vand.u32 %v4269, 4294901760
      %4271 = vmatmul.f32.gmra.mxu0 %v4270
      %v4272 = vpop.f32.mrf.mxu0
      %v4273 = vadd.f32 %v4156, %v4272
      %v4274 = vand.u32 %v3101, 4294901760
      %v4275 = vsub.f32 %v3101, %v4274
      %v4276 = vand.u32 %v4275, 4294901760
      %4277 = vmatmul.f32.gmra.mxu0 %v4276
      %v4278 = vpop.f32.mrf.mxu0
      %v4279 = vadd.f32 %v4161, %v4278
      %v4280 = vand.u32 %v3104, 4294901760
      %v4281 = vsub.f32 %v3104, %v4280
      %v4282 = vand.u32 %v4281, 4294901760
      %4283 = vmatmul.f32.gmra.mxu0 %v4282
      %v4284 = vpop.f32.mrf.mxu0
      %v4285 = vadd.f32 %v4166, %v4284
      %v4286 = vand.u32 %v3107, 4294901760
      %v4287 = vsub.f32 %v3107, %v4286
      %v4288 = vand.u32 %v4287, 4294901760
      %4289 = vmatmul.f32.gmra.mxu0 %v4288
      %v4290 = vpop.f32.mrf.mxu0
      %v4291 = vadd.f32 %v4171, %v4290
      %v4292 = vand.u32 %v3110, 4294901760
      %v4293 = vsub.f32 %v3110, %v4292
      %v4294 = vand.u32 %v4293, 4294901760
      %4295 = vmatmul.f32.gmra.mxu0 %v4294
      %v4296 = vpop.f32.mrf.mxu0
      %v4297 = vadd.f32 %v4176, %v4296
      %v4298 = vand.u32 %v3113, 4294901760
      %v4299 = vsub.f32 %v3113, %v4298
      %v4300 = vand.u32 %v4299, 4294901760
      %4301 = vmatmul.f32.gmra.mxu0 %v4300
      %v4302 = vpop.f32.mrf.mxu0
      %v4303 = vadd.f32 %v4181, %v4302
      %v4304 = vand.u32 %v3116, 4294901760
      %v4305 = vsub.f32 %v3116, %v4304
      %v4306 = vand.u32 %v4305, 4294901760
      %4307 = vmatmul.f32.gmra.mxu0 %v4306
      %v4308 = vpop.f32.mrf.mxu0
      %v4309 = vadd.f32 %v4186, %v4308
      %v4310 = vand.u32 %v3119, 4294901760
      %v4311 = vsub.f32 %v3119, %v4310
      %v4312 = vand.u32 %v4311, 4294901760
      %4313 = vmatmul.f32.gmra.mxu0 %v4312
      %v4314 = vpop.f32.mrf.mxu0
      %v4315 = vadd.f32 %v4191, %v4314
      %v4316 = vand.u32 %v3122, 4294901760
      %v4317 = vsub.f32 %v3122, %v4316
      %v4318 = vand.u32 %v4317, 4294901760
      %4319 = vmatmul.f32.gmra.mxu0 %v4318
      %v4320 = vpop.f32.mrf.mxu0
      %v4321 = vadd.f32 %v4196, %v4320
      %v4322 = vand.u32 %v3125, 4294901760
      %v4323 = vsub.f32 %v3125, %v4322
      %v4324 = vand.u32 %v4323, 4294901760
      %4325 = vmatmul.f32.gmra.mxu0 %v4324
      %v4326 = vpop.f32.mrf.mxu0
      %v4327 = vadd.f32 %v4201, %v4326
      %v4328 = vand.u32 %v3128, 4294901760
      %v4329 = vsub.f32 %v3128, %v4328
      %v4330 = vand.u32 %v4329, 4294901760
      %4331 = vmatmul.f32.gmra.mxu0 %v4330
      %v4332 = vpop.f32.mrf.mxu0
      %v4333 = vadd.f32 %v4206, %v4332
      %v4334 = vand.u32 %v3131, 4294901760
      %v4335 = vsub.f32 %v3131, %v4334
      %v4336 = vand.u32 %v4335, 4294901760
      %4337 = vmatmul.f32.gmra.mxu0 %v4336
      %v4338 = vpop.f32.mrf.mxu0
      %v4339 = vadd.f32 %v4211, %v4338
      %4340 = vdwg.mxu0
      %4341 = vmatpush.msra.mxu0 0.0
      %4342 = vmatpush.msra.mxu0 0.0
      %4343 = vmatpush.msra.mxu0 0.0
      %4344 = vmatpush.msra.mxu0 0.0
      %4345 = vmatpush.msra.mxu0 0.0
      %4346 = vmatpush.msra.mxu0 0.0
      %4347 = vmatpush.msra.mxu0 0.0
      %4348 = vmatpush.msra.mxu0 0.0
      %4349 = vmatpush.msra.mxu0 0.0
      %4350 = vmatpush.msra.mxu0 0.0
      %4351 = vmatpush.msra.mxu0 0.0
      %4352 = vmatpush.msra.mxu0 0.0
      %4353 = vmatpush.msra.mxu0 0.0
      %v4354 = vand.u32 %v3036, 4294901760
      %v4355 = vsub.f32 %v3036, %v4354
      %v4356 = vand.u32 %v4355, 4294901760
      %4357 = vmatpush.msra.mxu0 %v4356
      %v4358 = vand.u32 %v3035, 4294901760
      %v4359 = vsub.f32 %v3035, %v4358
      %v4360 = vand.u32 %v4359, 4294901760
      %4361 = vmatpush.msra.mxu0 %v4360
      %v4362 = vand.u32 %v3034, 4294901760
      %v4363 = vsub.f32 %v3034, %v4362
      %v4364 = vand.u32 %v4363, 4294901760
      %4365 = vmatpush.msra.mxu0 %v4364
      %v4366 = vand.u32 %v3080, 4294901760
      %4367 = vmatmul.f32.gmra.mxu0 %v4366
      %v4368 = vpop.f32.mrf.mxu0
      %v4369 = vadd.f32 %v4237, %v4368
      %v4370 = vand.u32 %v3083, 4294901760
      %4371 = vmatmul.f32.gmra.mxu0 %v4370
      %v4372 = vpop.f32.mrf.mxu0
      %v4373 = vadd.f32 %v4243, %v4372
      %v4374 = vand.u32 %v3086, 4294901760
      %4375 = vmatmul.f32.gmra.mxu0 %v4374
      %v4376 = vpop.f32.mrf.mxu0
      %v4377 = vadd.f32 %v4249, %v4376
      %v4378 = vand.u32 %v3089, 4294901760
      %4379 = vmatmul.f32.gmra.mxu0 %v4378
      %v4380 = vpop.f32.mrf.mxu0
      %v4381 = vadd.f32 %v4255, %v4380
      %v4382 = vand.u32 %v3092, 4294901760
      %4383 = vmatmul.f32.gmra.mxu0 %v4382
      %v4384 = vpop.f32.mrf.mxu0
      %v4385 = vadd.f32 %v4261, %v4384
      %v4386 = vand.u32 %v3095, 4294901760
      %4387 = vmatmul.f32.gmra.mxu0 %v4386
      %v4388 = vpop.f32.mrf.mxu0
      %v4389 = vadd.f32 %v4267, %v4388
      %v4390 = vand.u32 %v3098, 4294901760
      %4391 = vmatmul.f32.gmra.mxu0 %v4390
      %v4392 = vpop.f32.mrf.mxu0
      %v4393 = vadd.f32 %v4273, %v4392
      %v4394 = vand.u32 %v3101, 4294901760
      %4395 = vmatmul.f32.gmra.mxu0 %v4394
      %v4396 = vpop.f32.mrf.mxu0
      %v4397 = vadd.f32 %v4279, %v4396
      %v4398 = vand.u32 %v3104, 4294901760
      %4399 = vmatmul.f32.gmra.mxu0 %v4398
      %v4400 = vpop.f32.mrf.mxu0
      %v4401 = vadd.f32 %v4285, %v4400
      %v4402 = vand.u32 %v3107, 4294901760
      %4403 = vmatmul.f32.gmra.mxu0 %v4402
      %v4404 = vpop.f32.mrf.mxu0
      %v4405 = vadd.f32 %v4291, %v4404
      %v4406 = vand.u32 %v3110, 4294901760
      %4407 = vmatmul.f32.gmra.mxu0 %v4406
      %v4408 = vpop.f32.mrf.mxu0
      %v4409 = vadd.f32 %v4297, %v4408
      %v4410 = vand.u32 %v3113, 4294901760
      %4411 = vmatmul.f32.gmra.mxu0 %v4410
      %v4412 = vpop.f32.mrf.mxu0
      %v4413 = vadd.f32 %v4303, %v4412
      %v4414 = vand.u32 %v3116, 4294901760
      %4415 = vmatmul.f32.gmra.mxu0 %v4414
      %v4416 = vpop.f32.mrf.mxu0
      %v4417 = vadd.f32 %v4309, %v4416
      %v4418 = vand.u32 %v3119, 4294901760
      %4419 = vmatmul.f32.gmra.mxu0 %v4418
      %v4420 = vpop.f32.mrf.mxu0
      %v4421 = vadd.f32 %v4315, %v4420
      %v4422 = vand.u32 %v3122, 4294901760
      %4423 = vmatmul.f32.gmra.mxu0 %v4422
      %v4424 = vpop.f32.mrf.mxu0
      %v4425 = vadd.f32 %v4321, %v4424
      %v4426 = vand.u32 %v3125, 4294901760
      %4427 = vmatmul.f32.gmra.mxu0 %v4426
      %v4428 = vpop.f32.mrf.mxu0
      %v4429 = vadd.f32 %v4327, %v4428
      %v4430 = vand.u32 %v3128, 4294901760
      %4431 = vmatmul.f32.gmra.mxu0 %v4430
      %v4432 = vpop.f32.mrf.mxu0
      %v4433 = vadd.f32 %v4333, %v4432
      %v4434 = vand.u32 %v3131, 4294901760
      %4435 = vmatmul.f32.gmra.mxu0 %v4434
      %v4436 = vpop.f32.mrf.mxu0
      %v4437 = vadd.f32 %v4339, %v4436
      %4438 = vdwg.mxu0
      %4439 = vmatpush.msra.mxu0 0.0
      %4440 = vmatpush.msra.mxu0 0.0
      %4441 = vmatpush.msra.mxu0 0.0
      %4442 = vmatpush.msra.mxu0 0.0
      %4443 = vmatpush.msra.mxu0 0.0
      %4444 = vmatpush.msra.mxu0 0.0
      %4445 = vmatpush.msra.mxu0 0.0
      %4446 = vmatpush.msra.mxu0 0.0
      %4447 = vmatpush.msra.mxu0 0.0
      %4448 = vmatpush.msra.mxu0 0.0
      %4449 = vmatpush.msra.mxu0 0.0
      %4450 = vmatpush.msra.mxu0 0.0
      %4451 = vmatpush.msra.mxu0 0.0
      %v4452 = vand.u32 %v3036, 4294901760
      %4453 = vmatpush.msra.mxu0 %v4452
      %v4454 = vand.u32 %v3035, 4294901760
      %4455 = vmatpush.msra.mxu0 %v4454
      %v4456 = vand.u32 %v3034, 4294901760
      %4457 = vmatpush.msra.mxu0 %v4456
      %v4458 = vand.u32 %v3080, 4294901760
      %4459 = vmatmul.f32.gmra.mxu0 %v4458
      %v4460 = vpop.f32.mrf.mxu0
      %v4461 = vadd.f32 %v4369, %v4460
      %v4462 = vand.u32 %v3083, 4294901760
      %4463 = vmatmul.f32.gmra.mxu0 %v4462
      %v4464 = vpop.f32.mrf.mxu0
      %v4465 = vadd.f32 %v4373, %v4464
      %v4466 = vand.u32 %v3086, 4294901760
      %4467 = vmatmul.f32.gmra.mxu0 %v4466
      %v4468 = vpop.f32.mrf.mxu0
      %v4469 = vadd.f32 %v4377, %v4468
      %v4470 = vand.u32 %v3089, 4294901760
      %4471 = vmatmul.f32.gmra.mxu0 %v4470
      %v4472 = vpop.f32.mrf.mxu0
      %v4473 = vadd.f32 %v4381, %v4472
      %v4474 = vand.u32 %v3092, 4294901760
      %4475 = vmatmul.f32.gmra.mxu0 %v4474
      %v4476 = vpop.f32.mrf.mxu0
      %v4477 = vadd.f32 %v4385, %v4476
      %v4478 = vand.u32 %v3095, 4294901760
      %4479 = vmatmul.f32.gmra.mxu0 %v4478
      %v4480 = vpop.f32.mrf.mxu0
      %v4481 = vadd.f32 %v4389, %v4480
      %v4482 = vand.u32 %v3098, 4294901760
      %4483 = vmatmul.f32.gmra.mxu0 %v4482
      %v4484 = vpop.f32.mrf.mxu0
      %v4485 = vadd.f32 %v4393, %v4484
      %v4486 = vand.u32 %v3101, 4294901760
      %4487 = vmatmul.f32.gmra.mxu0 %v4486
      %v4488 = vpop.f32.mrf.mxu0
      %v4489 = vadd.f32 %v4397, %v4488
      %v4490 = vand.u32 %v3104, 4294901760
      %4491 = vmatmul.f32.gmra.mxu0 %v4490
      %v4492 = vpop.f32.mrf.mxu0
      %v4493 = vadd.f32 %v4401, %v4492
      %v4494 = vand.u32 %v3107, 4294901760
      %4495 = vmatmul.f32.gmra.mxu0 %v4494
      %v4496 = vpop.f32.mrf.mxu0
      %v4497 = vadd.f32 %v4405, %v4496
      %v4498 = vand.u32 %v3110, 4294901760
      %4499 = vmatmul.f32.gmra.mxu0 %v4498
      %v4500 = vpop.f32.mrf.mxu0
      %v4501 = vadd.f32 %v4409, %v4500
      %v4502 = vand.u32 %v3113, 4294901760
      %4503 = vmatmul.f32.gmra.mxu0 %v4502
      %v4504 = vpop.f32.mrf.mxu0
      %v4505 = vadd.f32 %v4413, %v4504
      %v4506 = vand.u32 %v3116, 4294901760
      %4507 = vmatmul.f32.gmra.mxu0 %v4506
      %v4508 = vpop.f32.mrf.mxu0
      %v4509 = vadd.f32 %v4417, %v4508
      %v4510 = vand.u32 %v3119, 4294901760
      %4511 = vmatmul.f32.gmra.mxu0 %v4510
      %v4512 = vpop.f32.mrf.mxu0
      %v4513 = vadd.f32 %v4421, %v4512
      %v4514 = vand.u32 %v3122, 4294901760
      %4515 = vmatmul.f32.gmra.mxu0 %v4514
      %v4516 = vpop.f32.mrf.mxu0
      %v4517 = vadd.f32 %v4425, %v4516
      %v4518 = vand.u32 %v3125, 4294901760
      %4519 = vmatmul.f32.gmra.mxu0 %v4518
      %v4520 = vpop.f32.mrf.mxu0
      %v4521 = vadd.f32 %v4429, %v4520
      %v4522 = vand.u32 %v3128, 4294901760
      %4523 = vmatmul.f32.gmra.mxu0 %v4522
      %v4524 = vpop.f32.mrf.mxu0
      %v4525 = vadd.f32 %v4433, %v4524
      %v4526 = vand.u32 %v3131, 4294901760
      %4527 = vmatmul.f32.gmra.mxu0 %v4526
      %v4528 = vpop.f32.mrf.mxu0
      %v4529 = vadd.f32 %v4437, %v4528
      %4530 = vdwg.mxu0
      %4531 = vmatpush.msra.mxu0 0.0
      %4532 = vmatpush.msra.mxu0 0.0
      %4533 = vmatpush.msra.mxu0 0.0
      %4534 = vmatpush.msra.mxu0 0.0
      %4535 = vmatpush.msra.mxu0 0.0
      %4536 = vmatpush.msra.mxu0 0.0
      %4537 = vmatpush.msra.mxu0 0.0
      %4538 = vmatpush.msra.mxu0 0.0
      %4539 = vmatpush.msra.mxu0 0.0
      %4540 = vmatpush.msra.mxu0 0.0
      %4541 = vmatpush.msra.mxu0 0.0
      %4542 = vmatpush.msra.mxu0 0.0
      %4543 = vmatpush.msra.mxu0 0.0
      %v4544 = vand.u32 %v3059, 4294901760
      %4545 = vmatpush.msra.mxu0 %v4544
      %v4546 = vand.u32 %v3058, 4294901760
      %4547 = vmatpush.msra.mxu0 %v4546
      %v4548 = vand.u32 %v3057, 4294901760
      %4549 = vmatpush.msra.mxu0 %v4548
      %v4550 = vand.u32 %v3080, 4294901760
      %v4551 = vsub.f32 %v3080, %v4550
      %v4552 = vand.u32 %v4551, 4294901760
      %v4553 = vsub.f32 %v4551, %v4552
      %v4554 = vand.u32 %v4553, 4294901760
      %4555 = vmatmul.f32.gmra.mxu0 %v4554
      %v4556 = vpop.f32.mrf.mxu0
      %v4557 = vadd.f32 0.0, %v4556
      %v4558 = vand.u32 %v3083, 4294901760
      %v4559 = vsub.f32 %v3083, %v4558
      %v4560 = vand.u32 %v4559, 4294901760
      %v4561 = vsub.f32 %v4559, %v4560
      %v4562 = vand.u32 %v4561, 4294901760
      %4563 = vmatmul.f32.gmra.mxu0 %v4562
      %v4564 = vpop.f32.mrf.mxu0
      %v4565 = vadd.f32 0.0, %v4564
      %v4566 = vand.u32 %v3086, 4294901760
      %v4567 = vsub.f32 %v3086, %v4566
      %v4568 = vand.u32 %v4567, 4294901760
      %v4569 = vsub.f32 %v4567, %v4568
      %v4570 = vand.u32 %v4569, 4294901760
      %4571 = vmatmul.f32.gmra.mxu0 %v4570
      %v4572 = vpop.f32.mrf.mxu0
      %v4573 = vadd.f32 0.0, %v4572
      %v4574 = vand.u32 %v3089, 4294901760
      %v4575 = vsub.f32 %v3089, %v4574
      %v4576 = vand.u32 %v4575, 4294901760
      %v4577 = vsub.f32 %v4575, %v4576
      %v4578 = vand.u32 %v4577, 4294901760
      %4579 = vmatmul.f32.gmra.mxu0 %v4578
      %v4580 = vpop.f32.mrf.mxu0
      %v4581 = vadd.f32 0.0, %v4580
      %v4582 = vand.u32 %v3092, 4294901760
      %v4583 = vsub.f32 %v3092, %v4582
      %v4584 = vand.u32 %v4583, 4294901760
      %v4585 = vsub.f32 %v4583, %v4584
      %v4586 = vand.u32 %v4585, 4294901760
      %4587 = vmatmul.f32.gmra.mxu0 %v4586
      %v4588 = vpop.f32.mrf.mxu0
      %v4589 = vadd.f32 0.0, %v4588
      %v4590 = vand.u32 %v3095, 4294901760
      %v4591 = vsub.f32 %v3095, %v4590
      %v4592 = vand.u32 %v4591, 4294901760
      %v4593 = vsub.f32 %v4591, %v4592
      %v4594 = vand.u32 %v4593, 4294901760
      %4595 = vmatmul.f32.gmra.mxu0 %v4594
      %v4596 = vpop.f32.mrf.mxu0
      %v4597 = vadd.f32 0.0, %v4596
      %v4598 = vand.u32 %v3098, 4294901760
      %v4599 = vsub.f32 %v3098, %v4598
      %v4600 = vand.u32 %v4599, 4294901760
      %v4601 = vsub.f32 %v4599, %v4600
      %v4602 = vand.u32 %v4601, 4294901760
      %4603 = vmatmul.f32.gmra.mxu0 %v4602
      %v4604 = vpop.f32.mrf.mxu0
      %v4605 = vadd.f32 0.0, %v4604
      %v4606 = vand.u32 %v3101, 4294901760
      %v4607 = vsub.f32 %v3101, %v4606
      %v4608 = vand.u32 %v4607, 4294901760
      %v4609 = vsub.f32 %v4607, %v4608
      %v4610 = vand.u32 %v4609, 4294901760
      %4611 = vmatmul.f32.gmra.mxu0 %v4610
      %v4612 = vpop.f32.mrf.mxu0
      %v4613 = vadd.f32 0.0, %v4612
      %v4614 = vand.u32 %v3104, 4294901760
      %v4615 = vsub.f32 %v3104, %v4614
      %v4616 = vand.u32 %v4615, 4294901760
      %v4617 = vsub.f32 %v4615, %v4616
      %v4618 = vand.u32 %v4617, 4294901760
      %4619 = vmatmul.f32.gmra.mxu0 %v4618
      %v4620 = vpop.f32.mrf.mxu0
      %v4621 = vadd.f32 0.0, %v4620
      %v4622 = vand.u32 %v3107, 4294901760
      %v4623 = vsub.f32 %v3107, %v4622
      %v4624 = vand.u32 %v4623, 4294901760
      %v4625 = vsub.f32 %v4623, %v4624
      %v4626 = vand.u32 %v4625, 4294901760
      %4627 = vmatmul.f32.gmra.mxu0 %v4626
      %v4628 = vpop.f32.mrf.mxu0
      %v4629 = vadd.f32 0.0, %v4628
      %v4630 = vand.u32 %v3110, 4294901760
      %v4631 = vsub.f32 %v3110, %v4630
      %v4632 = vand.u32 %v4631, 4294901760
      %v4633 = vsub.f32 %v4631, %v4632
      %v4634 = vand.u32 %v4633, 4294901760
      %4635 = vmatmul.f32.gmra.mxu0 %v4634
      %v4636 = vpop.f32.mrf.mxu0
      %v4637 = vadd.f32 0.0, %v4636
      %v4638 = vand.u32 %v3113, 4294901760
      %v4639 = vsub.f32 %v3113, %v4638
      %v4640 = vand.u32 %v4639, 4294901760
      %v4641 = vsub.f32 %v4639, %v4640
      %v4642 = vand.u32 %v4641, 4294901760
      %4643 = vmatmul.f32.gmra.mxu0 %v4642
      %v4644 = vpop.f32.mrf.mxu0
      %v4645 = vadd.f32 0.0, %v4644
      %v4646 = vand.u32 %v3116, 4294901760
      %v4647 = vsub.f32 %v3116, %v4646
      %v4648 = vand.u32 %v4647, 4294901760
      %v4649 = vsub.f32 %v4647, %v4648
      %v4650 = vand.u32 %v4649, 4294901760
      %4651 = vmatmul.f32.gmra.mxu0 %v4650
      %v4652 = vpop.f32.mrf.mxu0
      %v4653 = vadd.f32 0.0, %v4652
      %v4654 = vand.u32 %v3119, 4294901760
      %v4655 = vsub.f32 %v3119, %v4654
      %v4656 = vand.u32 %v4655, 4294901760
      %v4657 = vsub.f32 %v4655, %v4656
      %v4658 = vand.u32 %v4657, 4294901760
      %4659 = vmatmul.f32.gmra.mxu0 %v4658
      %v4660 = vpop.f32.mrf.mxu0
      %v4661 = vadd.f32 0.0, %v4660
      %v4662 = vand.u32 %v3122, 4294901760
      %v4663 = vsub.f32 %v3122, %v4662
      %v4664 = vand.u32 %v4663, 4294901760
      %v4665 = vsub.f32 %v4663, %v4664
      %v4666 = vand.u32 %v4665, 4294901760
      %4667 = vmatmul.f32.gmra.mxu0 %v4666
      %v4668 = vpop.f32.mrf.mxu0
      %v4669 = vadd.f32 0.0, %v4668
      %v4670 = vand.u32 %v3125, 4294901760
      %v4671 = vsub.f32 %v3125, %v4670
      %v4672 = vand.u32 %v4671, 4294901760
      %v4673 = vsub.f32 %v4671, %v4672
      %v4674 = vand.u32 %v4673, 4294901760
      %4675 = vmatmul.f32.gmra.mxu0 %v4674
      %v4676 = vpop.f32.mrf.mxu0
      %v4677 = vadd.f32 0.0, %v4676
      %v4678 = vand.u32 %v3128, 4294901760
      %v4679 = vsub.f32 %v3128, %v4678
      %v4680 = vand.u32 %v4679, 4294901760
      %v4681 = vsub.f32 %v4679, %v4680
      %v4682 = vand.u32 %v4681, 4294901760
      %4683 = vmatmul.f32.gmra.mxu0 %v4682
      %v4684 = vpop.f32.mrf.mxu0
      %v4685 = vadd.f32 0.0, %v4684
      %v4686 = vand.u32 %v3131, 4294901760
      %v4687 = vsub.f32 %v3131, %v4686
      %v4688 = vand.u32 %v4687, 4294901760
      %v4689 = vsub.f32 %v4687, %v4688
      %v4690 = vand.u32 %v4689, 4294901760
      %4691 = vmatmul.f32.gmra.mxu0 %v4690
      %v4692 = vpop.f32.mrf.mxu0
      %v4693 = vadd.f32 0.0, %v4692
      %4694 = vdwg.mxu0
      %4695 = vmatpush.msra.mxu0 0.0
      %4696 = vmatpush.msra.mxu0 0.0
      %4697 = vmatpush.msra.mxu0 0.0
      %4698 = vmatpush.msra.mxu0 0.0
      %4699 = vmatpush.msra.mxu0 0.0
      %4700 = vmatpush.msra.mxu0 0.0
      %4701 = vmatpush.msra.mxu0 0.0
      %4702 = vmatpush.msra.mxu0 0.0
      %4703 = vmatpush.msra.mxu0 0.0
      %4704 = vmatpush.msra.mxu0 0.0
      %4705 = vmatpush.msra.mxu0 0.0
      %4706 = vmatpush.msra.mxu0 0.0
      %4707 = vmatpush.msra.mxu0 0.0
      %v4708 = vand.u32 %v3059, 4294901760
      %v4709 = vsub.f32 %v3059, %v4708
      %v4710 = vand.u32 %v4709, 4294901760
      %v4711 = vsub.f32 %v4709, %v4710
      %v4712 = vand.u32 %v4711, 4294901760
      %4713 = vmatpush.msra.mxu0 %v4712
      %v4714 = vand.u32 %v3058, 4294901760
      %v4715 = vsub.f32 %v3058, %v4714
      %v4716 = vand.u32 %v4715, 4294901760
      %v4717 = vsub.f32 %v4715, %v4716
      %v4718 = vand.u32 %v4717, 4294901760
      %4719 = vmatpush.msra.mxu0 %v4718
      %v4720 = vand.u32 %v3057, 4294901760
      %v4721 = vsub.f32 %v3057, %v4720
      %v4722 = vand.u32 %v4721, 4294901760
      %v4723 = vsub.f32 %v4721, %v4722
      %v4724 = vand.u32 %v4723, 4294901760
      %4725 = vmatpush.msra.mxu0 %v4724
      %v4726 = vand.u32 %v3080, 4294901760
      %4727 = vmatmul.f32.gmra.mxu0 %v4726
      %v4728 = vpop.f32.mrf.mxu0
      %v4729 = vadd.f32 %v4557, %v4728
      %v4730 = vand.u32 %v3083, 4294901760
      %4731 = vmatmul.f32.gmra.mxu0 %v4730
      %v4732 = vpop.f32.mrf.mxu0
      %v4733 = vadd.f32 %v4565, %v4732
      %v4734 = vand.u32 %v3086, 4294901760
      %4735 = vmatmul.f32.gmra.mxu0 %v4734
      %v4736 = vpop.f32.mrf.mxu0
      %v4737 = vadd.f32 %v4573, %v4736
      %v4738 = vand.u32 %v3089, 4294901760
      %4739 = vmatmul.f32.gmra.mxu0 %v4738
      %v4740 = vpop.f32.mrf.mxu0
      %v4741 = vadd.f32 %v4581, %v4740
      %v4742 = vand.u32 %v3092, 4294901760
      %4743 = vmatmul.f32.gmra.mxu0 %v4742
      %v4744 = vpop.f32.mrf.mxu0
      %v4745 = vadd.f32 %v4589, %v4744
      %v4746 = vand.u32 %v3095, 4294901760
      %4747 = vmatmul.f32.gmra.mxu0 %v4746
      %v4748 = vpop.f32.mrf.mxu0
      %v4749 = vadd.f32 %v4597, %v4748
      %v4750 = vand.u32 %v3098, 4294901760
      %4751 = vmatmul.f32.gmra.mxu0 %v4750
      %v4752 = vpop.f32.mrf.mxu0
      %v4753 = vadd.f32 %v4605, %v4752
      %v4754 = vand.u32 %v3101, 4294901760
      %4755 = vmatmul.f32.gmra.mxu0 %v4754
      %v4756 = vpop.f32.mrf.mxu0
      %v4757 = vadd.f32 %v4613, %v4756
      %v4758 = vand.u32 %v3104, 4294901760
      %4759 = vmatmul.f32.gmra.mxu0 %v4758
      %v4760 = vpop.f32.mrf.mxu0
      %v4761 = vadd.f32 %v4621, %v4760
      %v4762 = vand.u32 %v3107, 4294901760
      %4763 = vmatmul.f32.gmra.mxu0 %v4762
      %v4764 = vpop.f32.mrf.mxu0
      %v4765 = vadd.f32 %v4629, %v4764
      %v4766 = vand.u32 %v3110, 4294901760
      %4767 = vmatmul.f32.gmra.mxu0 %v4766
      %v4768 = vpop.f32.mrf.mxu0
      %v4769 = vadd.f32 %v4637, %v4768
      %v4770 = vand.u32 %v3113, 4294901760
      %4771 = vmatmul.f32.gmra.mxu0 %v4770
      %v4772 = vpop.f32.mrf.mxu0
      %v4773 = vadd.f32 %v4645, %v4772
      %v4774 = vand.u32 %v3116, 4294901760
      %4775 = vmatmul.f32.gmra.mxu0 %v4774
      %v4776 = vpop.f32.mrf.mxu0
      %v4777 = vadd.f32 %v4653, %v4776
      %v4778 = vand.u32 %v3119, 4294901760
      %4779 = vmatmul.f32.gmra.mxu0 %v4778
      %v4780 = vpop.f32.mrf.mxu0
      %v4781 = vadd.f32 %v4661, %v4780
      %v4782 = vand.u32 %v3122, 4294901760
      %4783 = vmatmul.f32.gmra.mxu0 %v4782
      %v4784 = vpop.f32.mrf.mxu0
      %v4785 = vadd.f32 %v4669, %v4784
      %v4786 = vand.u32 %v3125, 4294901760
      %4787 = vmatmul.f32.gmra.mxu0 %v4786
      %v4788 = vpop.f32.mrf.mxu0
      %v4789 = vadd.f32 %v4677, %v4788
      %v4790 = vand.u32 %v3128, 4294901760
      %4791 = vmatmul.f32.gmra.mxu0 %v4790
      %v4792 = vpop.f32.mrf.mxu0
      %v4793 = vadd.f32 %v4685, %v4792
      %v4794 = vand.u32 %v3131, 4294901760
      %4795 = vmatmul.f32.gmra.mxu0 %v4794
      %v4796 = vpop.f32.mrf.mxu0
      %v4797 = vadd.f32 %v4693, %v4796
      %4798 = vdwg.mxu0
      %4799 = vmatpush.msra.mxu0 0.0
      %4800 = vmatpush.msra.mxu0 0.0
      %4801 = vmatpush.msra.mxu0 0.0
      %4802 = vmatpush.msra.mxu0 0.0
      %4803 = vmatpush.msra.mxu0 0.0
      %4804 = vmatpush.msra.mxu0 0.0
      %4805 = vmatpush.msra.mxu0 0.0
      %4806 = vmatpush.msra.mxu0 0.0
      %4807 = vmatpush.msra.mxu0 0.0
      %4808 = vmatpush.msra.mxu0 0.0
      %4809 = vmatpush.msra.mxu0 0.0
      %4810 = vmatpush.msra.mxu0 0.0
      %4811 = vmatpush.msra.mxu0 0.0
      %v4812 = vand.u32 %v3059, 4294901760
      %v4813 = vsub.f32 %v3059, %v4812
      %4814 = vmatpush.msra.mxu0 %v4813
      %v4815 = vand.u32 %v3058, 4294901760
      %v4816 = vsub.f32 %v3058, %v4815
      %4817 = vmatpush.msra.mxu0 %v4816
      %v4818 = vand.u32 %v3057, 4294901760
      %v4819 = vsub.f32 %v3057, %v4818
      %4820 = vmatpush.msra.mxu0 %v4819
      %v4821 = vand.u32 %v3080, 4294901760
      %v4822 = vsub.f32 %v3080, %v4821
      %4823 = vmatmul.f32.gmra.mxu0 %v4822
      %v4824 = vpop.f32.mrf.mxu0
      %v4825 = vadd.f32 %v4729, %v4824
      %v4826 = vand.u32 %v3083, 4294901760
      %v4827 = vsub.f32 %v3083, %v4826
      %4828 = vmatmul.f32.gmra.mxu0 %v4827
      %v4829 = vpop.f32.mrf.mxu0
      %v4830 = vadd.f32 %v4733, %v4829
      %v4831 = vand.u32 %v3086, 4294901760
      %v4832 = vsub.f32 %v3086, %v4831
      %4833 = vmatmul.f32.gmra.mxu0 %v4832
      %v4834 = vpop.f32.mrf.mxu0
      %v4835 = vadd.f32 %v4737, %v4834
      %v4836 = vand.u32 %v3089, 4294901760
      %v4837 = vsub.f32 %v3089, %v4836
      %4838 = vmatmul.f32.gmra.mxu0 %v4837
      %v4839 = vpop.f32.mrf.mxu0
      %v4840 = vadd.f32 %v4741, %v4839
      %v4841 = vand.u32 %v3092, 4294901760
      %v4842 = vsub.f32 %v3092, %v4841
      %4843 = vmatmul.f32.gmra.mxu0 %v4842
      %v4844 = vpop.f32.mrf.mxu0
      %v4845 = vadd.f32 %v4745, %v4844
      %v4846 = vand.u32 %v3095, 4294901760
      %v4847 = vsub.f32 %v3095, %v4846
      %4848 = vmatmul.f32.gmra.mxu0 %v4847
      %v4849 = vpop.f32.mrf.mxu0
      %v4850 = vadd.f32 %v4749, %v4849
      %v4851 = vand.u32 %v3098, 4294901760
      %v4852 = vsub.f32 %v3098, %v4851
      %4853 = vmatmul.f32.gmra.mxu0 %v4852
      %v4854 = vpop.f32.mrf.mxu0
      %v4855 = vadd.f32 %v4753, %v4854
      %v4856 = vand.u32 %v3101, 4294901760
      %v4857 = vsub.f32 %v3101, %v4856
      %4858 = vmatmul.f32.gmra.mxu0 %v4857
      %v4859 = vpop.f32.mrf.mxu0
      %v4860 = vadd.f32 %v4757, %v4859
      %v4861 = vand.u32 %v3104, 4294901760
      %v4862 = vsub.f32 %v3104, %v4861
      %4863 = vmatmul.f32.gmra.mxu0 %v4862
      %v4864 = vpop.f32.mrf.mxu0
      %v4865 = vadd.f32 %v4761, %v4864
      %v4866 = vand.u32 %v3107, 4294901760
      %v4867 = vsub.f32 %v3107, %v4866
      %4868 = vmatmul.f32.gmra.mxu0 %v4867
      %v4869 = vpop.f32.mrf.mxu0
      %v4870 = vadd.f32 %v4765, %v4869
      %v4871 = vand.u32 %v3110, 4294901760
      %v4872 = vsub.f32 %v3110, %v4871
      %4873 = vmatmul.f32.gmra.mxu0 %v4872
      %v4874 = vpop.f32.mrf.mxu0
      %v4875 = vadd.f32 %v4769, %v4874
      %v4876 = vand.u32 %v3113, 4294901760
      %v4877 = vsub.f32 %v3113, %v4876
      %4878 = vmatmul.f32.gmra.mxu0 %v4877
      %v4879 = vpop.f32.mrf.mxu0
      %v4880 = vadd.f32 %v4773, %v4879
      %v4881 = vand.u32 %v3116, 4294901760
      %v4882 = vsub.f32 %v3116, %v4881
      %4883 = vmatmul.f32.gmra.mxu0 %v4882
      %v4884 = vpop.f32.mrf.mxu0
      %v4885 = vadd.f32 %v4777, %v4884
      %v4886 = vand.u32 %v3119, 4294901760
      %v4887 = vsub.f32 %v3119, %v4886
      %4888 = vmatmul.f32.gmra.mxu0 %v4887
      %v4889 = vpop.f32.mrf.mxu0
      %v4890 = vadd.f32 %v4781, %v4889
      %v4891 = vand.u32 %v3122, 4294901760
      %v4892 = vsub.f32 %v3122, %v4891
      %4893 = vmatmul.f32.gmra.mxu0 %v4892
      %v4894 = vpop.f32.mrf.mxu0
      %v4895 = vadd.f32 %v4785, %v4894
      %v4896 = vand.u32 %v3125, 4294901760
      %v4897 = vsub.f32 %v3125, %v4896
      %4898 = vmatmul.f32.gmra.mxu0 %v4897
      %v4899 = vpop.f32.mrf.mxu0
      %v4900 = vadd.f32 %v4789, %v4899
      %v4901 = vand.u32 %v3128, 4294901760
      %v4902 = vsub.f32 %v3128, %v4901
      %4903 = vmatmul.f32.gmra.mxu0 %v4902
      %v4904 = vpop.f32.mrf.mxu0
      %v4905 = vadd.f32 %v4793, %v4904
      %v4906 = vand.u32 %v3131, 4294901760
      %v4907 = vsub.f32 %v3131, %v4906
      %4908 = vmatmul.f32.gmra.mxu0 %v4907
      %v4909 = vpop.f32.mrf.mxu0
      %v4910 = vadd.f32 %v4797, %v4909
      %4911 = vdwg.mxu0
      %4912 = vmatpush.msra.mxu0 0.0
      %4913 = vmatpush.msra.mxu0 0.0
      %4914 = vmatpush.msra.mxu0 0.0
      %4915 = vmatpush.msra.mxu0 0.0
      %4916 = vmatpush.msra.mxu0 0.0
      %4917 = vmatpush.msra.mxu0 0.0
      %4918 = vmatpush.msra.mxu0 0.0
      %4919 = vmatpush.msra.mxu0 0.0
      %4920 = vmatpush.msra.mxu0 0.0
      %4921 = vmatpush.msra.mxu0 0.0
      %4922 = vmatpush.msra.mxu0 0.0
      %4923 = vmatpush.msra.mxu0 0.0
      %4924 = vmatpush.msra.mxu0 0.0
      %v4925 = vand.u32 %v3059, 4294901760
      %4926 = vmatpush.msra.mxu0 %v4925
      %v4927 = vand.u32 %v3058, 4294901760
      %4928 = vmatpush.msra.mxu0 %v4927
      %v4929 = vand.u32 %v3057, 4294901760
      %4930 = vmatpush.msra.mxu0 %v4929
      %v4931 = vand.u32 %v3080, 4294901760
      %v4932 = vsub.f32 %v3080, %v4931
      %v4933 = vand.u32 %v4932, 4294901760
      %4934 = vmatmul.f32.gmra.mxu0 %v4933
      %v4935 = vpop.f32.mrf.mxu0
      %v4936 = vadd.f32 %v4825, %v4935
      %v4937 = vand.u32 %v3083, 4294901760
      %v4938 = vsub.f32 %v3083, %v4937
      %v4939 = vand.u32 %v4938, 4294901760
      %4940 = vmatmul.f32.gmra.mxu0 %v4939
      %v4941 = vpop.f32.mrf.mxu0
      %v4942 = vadd.f32 %v4830, %v4941
      %v4943 = vand.u32 %v3086, 4294901760
      %v4944 = vsub.f32 %v3086, %v4943
      %v4945 = vand.u32 %v4944, 4294901760
      %4946 = vmatmul.f32.gmra.mxu0 %v4945
      %v4947 = vpop.f32.mrf.mxu0
      %v4948 = vadd.f32 %v4835, %v4947
      %v4949 = vand.u32 %v3089, 4294901760
      %v4950 = vsub.f32 %v3089, %v4949
      %v4951 = vand.u32 %v4950, 4294901760
      %4952 = vmatmul.f32.gmra.mxu0 %v4951
      %v4953 = vpop.f32.mrf.mxu0
      %v4954 = vadd.f32 %v4840, %v4953
      %v4955 = vand.u32 %v3092, 4294901760
      %v4956 = vsub.f32 %v3092, %v4955
      %v4957 = vand.u32 %v4956, 4294901760
      %4958 = vmatmul.f32.gmra.mxu0 %v4957
      %v4959 = vpop.f32.mrf.mxu0
      %v4960 = vadd.f32 %v4845, %v4959
      %v4961 = vand.u32 %v3095, 4294901760
      %v4962 = vsub.f32 %v3095, %v4961
      %v4963 = vand.u32 %v4962, 4294901760
      %4964 = vmatmul.f32.gmra.mxu0 %v4963
      %v4965 = vpop.f32.mrf.mxu0
      %v4966 = vadd.f32 %v4850, %v4965
      %v4967 = vand.u32 %v3098, 4294901760
      %v4968 = vsub.f32 %v3098, %v4967
      %v4969 = vand.u32 %v4968, 4294901760
      %4970 = vmatmul.f32.gmra.mxu0 %v4969
      %v4971 = vpop.f32.mrf.mxu0
      %v4972 = vadd.f32 %v4855, %v4971
      %v4973 = vand.u32 %v3101, 4294901760
      %v4974 = vsub.f32 %v3101, %v4973
      %v4975 = vand.u32 %v4974, 4294901760
      %4976 = vmatmul.f32.gmra.mxu0 %v4975
      %v4977 = vpop.f32.mrf.mxu0
      %v4978 = vadd.f32 %v4860, %v4977
      %v4979 = vand.u32 %v3104, 4294901760
      %v4980 = vsub.f32 %v3104, %v4979
      %v4981 = vand.u32 %v4980, 4294901760
      %4982 = vmatmul.f32.gmra.mxu0 %v4981
      %v4983 = vpop.f32.mrf.mxu0
      %v4984 = vadd.f32 %v4865, %v4983
      %v4985 = vand.u32 %v3107, 4294901760
      %v4986 = vsub.f32 %v3107, %v4985
      %v4987 = vand.u32 %v4986, 4294901760
      %4988 = vmatmul.f32.gmra.mxu0 %v4987
      %v4989 = vpop.f32.mrf.mxu0
      %v4990 = vadd.f32 %v4870, %v4989
      %v4991 = vand.u32 %v3110, 4294901760
      %v4992 = vsub.f32 %v3110, %v4991
      %v4993 = vand.u32 %v4992, 4294901760
      %4994 = vmatmul.f32.gmra.mxu0 %v4993
      %v4995 = vpop.f32.mrf.mxu0
      %v4996 = vadd.f32 %v4875, %v4995
      %v4997 = vand.u32 %v3113, 4294901760
      %v4998 = vsub.f32 %v3113, %v4997
      %v4999 = vand.u32 %v4998, 4294901760
      %5000 = vmatmul.f32.gmra.mxu0 %v4999
      %v5001 = vpop.f32.mrf.mxu0
      %v5002 = vadd.f32 %v4880, %v5001
      %v5003 = vand.u32 %v3116, 4294901760
      %v5004 = vsub.f32 %v3116, %v5003
      %v5005 = vand.u32 %v5004, 4294901760
      %5006 = vmatmul.f32.gmra.mxu0 %v5005
      %v5007 = vpop.f32.mrf.mxu0
      %v5008 = vadd.f32 %v4885, %v5007
      %v5009 = vand.u32 %v3119, 4294901760
      %v5010 = vsub.f32 %v3119, %v5009
      %v5011 = vand.u32 %v5010, 4294901760
      %5012 = vmatmul.f32.gmra.mxu0 %v5011
      %v5013 = vpop.f32.mrf.mxu0
      %v5014 = vadd.f32 %v4890, %v5013
      %v5015 = vand.u32 %v3122, 4294901760
      %v5016 = vsub.f32 %v3122, %v5015
      %v5017 = vand.u32 %v5016, 4294901760
      %5018 = vmatmul.f32.gmra.mxu0 %v5017
      %v5019 = vpop.f32.mrf.mxu0
      %v5020 = vadd.f32 %v4895, %v5019
      %v5021 = vand.u32 %v3125, 4294901760
      %v5022 = vsub.f32 %v3125, %v5021
      %v5023 = vand.u32 %v5022, 4294901760
      %5024 = vmatmul.f32.gmra.mxu0 %v5023
      %v5025 = vpop.f32.mrf.mxu0
      %v5026 = vadd.f32 %v4900, %v5025
      %v5027 = vand.u32 %v3128, 4294901760
      %v5028 = vsub.f32 %v3128, %v5027
      %v5029 = vand.u32 %v5028, 4294901760
      %5030 = vmatmul.f32.gmra.mxu0 %v5029
      %v5031 = vpop.f32.mrf.mxu0
      %v5032 = vadd.f32 %v4905, %v5031
      %v5033 = vand.u32 %v3131, 4294901760
      %v5034 = vsub.f32 %v3131, %v5033
      %v5035 = vand.u32 %v5034, 4294901760
      %5036 = vmatmul.f32.gmra.mxu0 %v5035
      %v5037 = vpop.f32.mrf.mxu0
      %v5038 = vadd.f32 %v4910, %v5037
      %5039 = vdwg.mxu0
      %5040 = vmatpush.msra.mxu0 0.0
      %5041 = vmatpush.msra.mxu0 0.0
      %5042 = vmatpush.msra.mxu0 0.0
      %5043 = vmatpush.msra.mxu0 0.0
      %5044 = vmatpush.msra.mxu0 0.0
      %5045 = vmatpush.msra.mxu0 0.0
      %5046 = vmatpush.msra.mxu0 0.0
      %5047 = vmatpush.msra.mxu0 0.0
      %5048 = vmatpush.msra.mxu0 0.0
      %5049 = vmatpush.msra.mxu0 0.0
      %5050 = vmatpush.msra.mxu0 0.0
      %5051 = vmatpush.msra.mxu0 0.0
      %5052 = vmatpush.msra.mxu0 0.0
      %v5053 = vand.u32 %v3059, 4294901760
      %v5054 = vsub.f32 %v3059, %v5053
      %v5055 = vand.u32 %v5054, 4294901760
      %5056 = vmatpush.msra.mxu0 %v5055
      %v5057 = vand.u32 %v3058, 4294901760
      %v5058 = vsub.f32 %v3058, %v5057
      %v5059 = vand.u32 %v5058, 4294901760
      %5060 = vmatpush.msra.mxu0 %v5059
      %v5061 = vand.u32 %v3057, 4294901760
      %v5062 = vsub.f32 %v3057, %v5061
      %v5063 = vand.u32 %v5062, 4294901760
      %5064 = vmatpush.msra.mxu0 %v5063
      %v5065 = vand.u32 %v3080, 4294901760
      %5066 = vmatmul.f32.gmra.mxu0 %v5065
      %v5067 = vpop.f32.mrf.mxu0
      %v5068 = vadd.f32 %v4936, %v5067
      %v5069 = vand.u32 %v3083, 4294901760
      %5070 = vmatmul.f32.gmra.mxu0 %v5069
      %v5071 = vpop.f32.mrf.mxu0
      %v5072 = vadd.f32 %v4942, %v5071
      %v5073 = vand.u32 %v3086, 4294901760
      %5074 = vmatmul.f32.gmra.mxu0 %v5073
      %v5075 = vpop.f32.mrf.mxu0
      %v5076 = vadd.f32 %v4948, %v5075
      %v5077 = vand.u32 %v3089, 4294901760
      %5078 = vmatmul.f32.gmra.mxu0 %v5077
      %v5079 = vpop.f32.mrf.mxu0
      %v5080 = vadd.f32 %v4954, %v5079
      %v5081 = vand.u32 %v3092, 4294901760
      %5082 = vmatmul.f32.gmra.mxu0 %v5081
      %v5083 = vpop.f32.mrf.mxu0
      %v5084 = vadd.f32 %v4960, %v5083
      %v5085 = vand.u32 %v3095, 4294901760
      %5086 = vmatmul.f32.gmra.mxu0 %v5085
      %v5087 = vpop.f32.mrf.mxu0
      %v5088 = vadd.f32 %v4966, %v5087
      %v5089 = vand.u32 %v3098, 4294901760
      %5090 = vmatmul.f32.gmra.mxu0 %v5089
      %v5091 = vpop.f32.mrf.mxu0
      %v5092 = vadd.f32 %v4972, %v5091
      %v5093 = vand.u32 %v3101, 4294901760
      %5094 = vmatmul.f32.gmra.mxu0 %v5093
      %v5095 = vpop.f32.mrf.mxu0
      %v5096 = vadd.f32 %v4978, %v5095
      %v5097 = vand.u32 %v3104, 4294901760
      %5098 = vmatmul.f32.gmra.mxu0 %v5097
      %v5099 = vpop.f32.mrf.mxu0
      %v5100 = vadd.f32 %v4984, %v5099
      %v5101 = vand.u32 %v3107, 4294901760
      %5102 = vmatmul.f32.gmra.mxu0 %v5101
      %v5103 = vpop.f32.mrf.mxu0
      %v5104 = vadd.f32 %v4990, %v5103
      %v5105 = vand.u32 %v3110, 4294901760
      %5106 = vmatmul.f32.gmra.mxu0 %v5105
      %v5107 = vpop.f32.mrf.mxu0
      %v5108 = vadd.f32 %v4996, %v5107
      %v5109 = vand.u32 %v3113, 4294901760
      %5110 = vmatmul.f32.gmra.mxu0 %v5109
      %v5111 = vpop.f32.mrf.mxu0
      %v5112 = vadd.f32 %v5002, %v5111
      %v5113 = vand.u32 %v3116, 4294901760
      %5114 = vmatmul.f32.gmra.mxu0 %v5113
      %v5115 = vpop.f32.mrf.mxu0
      %v5116 = vadd.f32 %v5008, %v5115
      %v5117 = vand.u32 %v3119, 4294901760
      %5118 = vmatmul.f32.gmra.mxu0 %v5117
      %v5119 = vpop.f32.mrf.mxu0
      %v5120 = vadd.f32 %v5014, %v5119
      %v5121 = vand.u32 %v3122, 4294901760
      %5122 = vmatmul.f32.gmra.mxu0 %v5121
      %v5123 = vpop.f32.mrf.mxu0
      %v5124 = vadd.f32 %v5020, %v5123
      %v5125 = vand.u32 %v3125, 4294901760
      %5126 = vmatmul.f32.gmra.mxu0 %v5125
      %v5127 = vpop.f32.mrf.mxu0
      %v5128 = vadd.f32 %v5026, %v5127
      %v5129 = vand.u32 %v3128, 4294901760
      %5130 = vmatmul.f32.gmra.mxu0 %v5129
      %v5131 = vpop.f32.mrf.mxu0
      %v5132 = vadd.f32 %v5032, %v5131
      %v5133 = vand.u32 %v3131, 4294901760
      %5134 = vmatmul.f32.gmra.mxu0 %v5133
      %v5135 = vpop.f32.mrf.mxu0
      %v5136 = vadd.f32 %v5038, %v5135
      %5137 = vdwg.mxu0
      %5138 = vmatpush.msra.mxu0 0.0
      %5139 = vmatpush.msra.mxu0 0.0
      %5140 = vmatpush.msra.mxu0 0.0
      %5141 = vmatpush.msra.mxu0 0.0
      %5142 = vmatpush.msra.mxu0 0.0
      %5143 = vmatpush.msra.mxu0 0.0
      %5144 = vmatpush.msra.mxu0 0.0
      %5145 = vmatpush.msra.mxu0 0.0
      %5146 = vmatpush.msra.mxu0 0.0
      %5147 = vmatpush.msra.mxu0 0.0
      %5148 = vmatpush.msra.mxu0 0.0
      %5149 = vmatpush.msra.mxu0 0.0
      %5150 = vmatpush.msra.mxu0 0.0
      %v5151 = vand.u32 %v3059, 4294901760
      %5152 = vmatpush.msra.mxu0 %v5151
      %v5153 = vand.u32 %v3058, 4294901760
      %5154 = vmatpush.msra.mxu0 %v5153
      %v5155 = vand.u32 %v3057, 4294901760
      %5156 = vmatpush.msra.mxu0 %v5155
      %v5157 = vand.u32 %v3080, 4294901760
      %5158 = vmatmul.f32.gmra.mxu0 %v5157
      %v5159 = vpop.f32.mrf.mxu0
      %v5160 = vadd.f32 %v5068, %v5159
      %v5161 = vand.u32 %v3083, 4294901760
      %5162 = vmatmul.f32.gmra.mxu0 %v5161
      %v5163 = vpop.f32.mrf.mxu0
      %v5164 = vadd.f32 %v5072, %v5163
      %v5165 = vand.u32 %v3086, 4294901760
      %5166 = vmatmul.f32.gmra.mxu0 %v5165
      %v5167 = vpop.f32.mrf.mxu0
      %v5168 = vadd.f32 %v5076, %v5167
      %v5169 = vand.u32 %v3089, 4294901760
      %5170 = vmatmul.f32.gmra.mxu0 %v5169
      %v5171 = vpop.f32.mrf.mxu0
      %v5172 = vadd.f32 %v5080, %v5171
      %v5173 = vand.u32 %v3092, 4294901760
      %5174 = vmatmul.f32.gmra.mxu0 %v5173
      %v5175 = vpop.f32.mrf.mxu0
      %v5176 = vadd.f32 %v5084, %v5175
      %v5177 = vand.u32 %v3095, 4294901760
      %5178 = vmatmul.f32.gmra.mxu0 %v5177
      %v5179 = vpop.f32.mrf.mxu0
      %v5180 = vadd.f32 %v5088, %v5179
      %v5181 = vand.u32 %v3098, 4294901760
      %5182 = vmatmul.f32.gmra.mxu0 %v5181
      %v5183 = vpop.f32.mrf.mxu0
      %v5184 = vadd.f32 %v5092, %v5183
      %v5185 = vand.u32 %v3101, 4294901760
      %5186 = vmatmul.f32.gmra.mxu0 %v5185
      %v5187 = vpop.f32.mrf.mxu0
      %v5188 = vadd.f32 %v5096, %v5187
      %v5189 = vand.u32 %v3104, 4294901760
      %5190 = vmatmul.f32.gmra.mxu0 %v5189
      %v5191 = vpop.f32.mrf.mxu0
      %v5192 = vadd.f32 %v5100, %v5191
      %v5193 = vand.u32 %v3107, 4294901760
      %5194 = vmatmul.f32.gmra.mxu0 %v5193
      %v5195 = vpop.f32.mrf.mxu0
      %v5196 = vadd.f32 %v5104, %v5195
      %v5197 = vand.u32 %v3110, 4294901760
      %5198 = vmatmul.f32.gmra.mxu0 %v5197
      %v5199 = vpop.f32.mrf.mxu0
      %v5200 = vadd.f32 %v5108, %v5199
      %v5201 = vand.u32 %v3113, 4294901760
      %5202 = vmatmul.f32.gmra.mxu0 %v5201
      %v5203 = vpop.f32.mrf.mxu0
      %v5204 = vadd.f32 %v5112, %v5203
      %v5205 = vand.u32 %v3116, 4294901760
      %5206 = vmatmul.f32.gmra.mxu0 %v5205
      %v5207 = vpop.f32.mrf.mxu0
      %v5208 = vadd.f32 %v5116, %v5207
      %v5209 = vand.u32 %v3119, 4294901760
      %5210 = vmatmul.f32.gmra.mxu0 %v5209
      %v5211 = vpop.f32.mrf.mxu0
      %v5212 = vadd.f32 %v5120, %v5211
      %v5213 = vand.u32 %v3122, 4294901760
      %5214 = vmatmul.f32.gmra.mxu0 %v5213
      %v5215 = vpop.f32.mrf.mxu0
      %v5216 = vadd.f32 %v5124, %v5215
      %v5217 = vand.u32 %v3125, 4294901760
      %5218 = vmatmul.f32.gmra.mxu0 %v5217
      %v5219 = vpop.f32.mrf.mxu0
      %v5220 = vadd.f32 %v5128, %v5219
      %v5221 = vand.u32 %v3128, 4294901760
      %5222 = vmatmul.f32.gmra.mxu0 %v5221
      %v5223 = vpop.f32.mrf.mxu0
      %v5224 = vadd.f32 %v5132, %v5223
      %v5225 = vand.u32 %v3131, 4294901760
      %5226 = vmatmul.f32.gmra.mxu0 %v5225
      %v5227 = vpop.f32.mrf.mxu0
      %v5228 = vadd.f32 %v5136, %v5227
      %5229 = vdwg.mxu0
      %5236 = vrot.lane.b32.xlu0 %v3786, 112
      %v5237 = vpop.permute.xlu0 %5236
      %5238 = vrot.lane.b32.xlu0 %v4485, 112
      %v5239 = vpop.permute.xlu0 %5238
      %5240 = vrot.lane.b32.xlu0 %v5184, 112
      %v5241 = vpop.permute.xlu0 %5240
      %5242 = vrot.lane.b32.xlu0 %v3790, 112
      %v5243 = vpop.permute.xlu0 %5242
      %5244 = vrot.lane.b32.xlu0 %v4489, 112
      %v5245 = vpop.permute.xlu0 %5244
      %5246 = vrot.lane.b32.xlu0 %v5188, 112
      %v5247 = vpop.permute.xlu0 %5246
      %vm5248 = vcmask 916480
      %v5249 = vsel %vm5248, %v5237, %v5239
      %v5250 = vsel %vm5248, %v5239, %v5241
      %v5251 = vsel %vm5248, %v5243, %v5245
      %v5252 = vsel %vm5248, %v5245, %v5247
      %v5259 = vadd.f32 %v3762, %v5249
      %v5260 = vadd.f32 %v4461, %v5250
      %v5261 = vadd.f32 %v5160, %v5241
      %v5262 = vadd.f32 %v3766, %v5251
      %v5263 = vadd.f32 %v4465, %v5252
      %v5264 = vadd.f32 %v5164, %v5247
      %5271 = vrot.lane.b32.xlu0 %v3810, 96
      %v5272 = vpop.permute.xlu0 %5271
      %5273 = vrot.lane.b32.xlu0 %v4509, 96
      %v5274 = vpop.permute.xlu0 %5273
      %5275 = vrot.lane.b32.xlu0 %v5208, 96
      %v5276 = vpop.permute.xlu0 %5275
      %5277 = vrot.lane.b32.xlu0 %v3814, 96
      %v5278 = vpop.permute.xlu0 %5277
      %5279 = vrot.lane.b32.xlu0 %v4513, 96
      %v5280 = vpop.permute.xlu0 %5279
      %5281 = vrot.lane.b32.xlu0 %v5212, 96
      %v5282 = vpop.permute.xlu0 %5281
      %vm5283 = vcmask 785408
      %v5284 = vsel %vm5283, %v5272, %v5274
      %v5285 = vsel %vm5283, %v5274, %v5276
      %v5286 = vsel %vm5283, %v5278, %v5280
      %v5287 = vsel %vm5283, %v5280, %v5282
      %v5294 = vadd.f32 %v5259, %v5284
      %v5295 = vadd.f32 %v5260, %v5285
      %v5296 = vadd.f32 %v5261, %v5276
      %v5297 = vadd.f32 %v5262, %v5286
      %v5298 = vadd.f32 %v5263, %v5287
      %v5299 = vadd.f32 %v5264, %v5282
      %5306 = vrot.lane.b32.xlu0 %v3794, 112
      %v5307 = vpop.permute.xlu0 %5306
      %5308 = vrot.lane.b32.xlu0 %v4493, 112
      %v5309 = vpop.permute.xlu0 %5308
      %5310 = vrot.lane.b32.xlu0 %v5192, 112
      %v5311 = vpop.permute.xlu0 %5310
      %5312 = vrot.lane.b32.xlu0 %v3798, 112
      %v5313 = vpop.permute.xlu0 %5312
      %5314 = vrot.lane.b32.xlu0 %v4497, 112
      %v5315 = vpop.permute.xlu0 %5314
      %5316 = vrot.lane.b32.xlu0 %v5196, 112
      %v5317 = vpop.permute.xlu0 %5316
      %v5318 = vsel %vm5248, %v5307, %v5309
      %v5319 = vsel %vm5248, %v5309, %v5311
      %v5320 = vsel %vm5248, %v5313, %v5315
      %v5321 = vsel %vm5248, %v5315, %v5317
      %v5328 = vadd.f32 %v3770, %v5318
      %v5329 = vadd.f32 %v4469, %v5319
      %v5330 = vadd.f32 %v5168, %v5311
      %v5331 = vadd.f32 %v3774, %v5320
      %v5332 = vadd.f32 %v4473, %v5321
      %v5333 = vadd.f32 %v5172, %v5317
      %5340 = vrot.lane.b32.xlu0 %v3818, 96
      %v5341 = vpop.permute.xlu0 %5340
      %5342 = vrot.lane.b32.xlu0 %v4517, 96
      %v5343 = vpop.permute.xlu0 %5342
      %5344 = vrot.lane.b32.xlu0 %v5216, 96
      %v5345 = vpop.permute.xlu0 %5344
      %5346 = vrot.lane.b32.xlu0 %v3822, 96
      %v5347 = vpop.permute.xlu0 %5346
      %5348 = vrot.lane.b32.xlu0 %v4521, 96
      %v5349 = vpop.permute.xlu0 %5348
      %5350 = vrot.lane.b32.xlu0 %v5220, 96
      %v5351 = vpop.permute.xlu0 %5350
      %v5352 = vsel %vm5283, %v5341, %v5343
      %v5353 = vsel %vm5283, %v5343, %v5345
      %v5354 = vsel %vm5283, %v5347, %v5349
      %v5355 = vsel %vm5283, %v5349, %v5351
      %v5362 = vadd.f32 %v5328, %v5352
      %v5363 = vadd.f32 %v5329, %v5353
      %v5364 = vadd.f32 %v5330, %v5345
      %v5365 = vadd.f32 %v5331, %v5354
      %v5366 = vadd.f32 %v5332, %v5355
      %v5367 = vadd.f32 %v5333, %v5351
      %5374 = vrot.lane.b32.xlu0 %v3802, 112
      %v5375 = vpop.permute.xlu0 %5374
      %5376 = vrot.lane.b32.xlu0 %v4501, 112
      %v5377 = vpop.permute.xlu0 %5376
      %5378 = vrot.lane.b32.xlu0 %v5200, 112
      %v5379 = vpop.permute.xlu0 %5378
      %5380 = vrot.lane.b32.xlu0 %v3806, 112
      %v5381 = vpop.permute.xlu0 %5380
      %5382 = vrot.lane.b32.xlu0 %v4505, 112
      %v5383 = vpop.permute.xlu0 %5382
      %5384 = vrot.lane.b32.xlu0 %v5204, 112
      %v5385 = vpop.permute.xlu0 %5384
      %v5386 = vsel %vm5248, %v5375, %v5377
      %v5387 = vsel %vm5248, %v5377, %v5379
      %v5388 = vsel %vm5248, %v5381, %v5383
      %v5389 = vsel %vm5248, %v5383, %v5385
      %v5396 = vadd.f32 %v3778, %v5386
      %v5397 = vadd.f32 %v4477, %v5387
      %v5398 = vadd.f32 %v5176, %v5379
      %v5399 = vadd.f32 %v3782, %v5388
      %v5400 = vadd.f32 %v4481, %v5389
      %v5401 = vadd.f32 %v5180, %v5385
      %5408 = vrot.lane.b32.xlu0 %v3826, 96
      %v5409 = vpop.permute.xlu0 %5408
      %5410 = vrot.lane.b32.xlu0 %v4525, 96
      %v5411 = vpop.permute.xlu0 %5410
      %5412 = vrot.lane.b32.xlu0 %v5224, 96
      %v5413 = vpop.permute.xlu0 %5412
      %5414 = vrot.lane.b32.xlu0 %v3830, 96
      %v5415 = vpop.permute.xlu0 %5414
      %5416 = vrot.lane.b32.xlu0 %v4529, 96
      %v5417 = vpop.permute.xlu0 %5416
      %5418 = vrot.lane.b32.xlu0 %v5228, 96
      %v5419 = vpop.permute.xlu0 %5418
      %v5420 = vsel %vm5283, %v5409, %v5411
      %v5421 = vsel %vm5283, %v5411, %v5413
      %v5422 = vsel %vm5283, %v5415, %v5417
      %v5423 = vsel %vm5283, %v5417, %v5419
      %v5430 = vadd.f32 %v5396, %v5420
      %v5431 = vadd.f32 %v5397, %v5421
      %v5432 = vadd.f32 %v5398, %v5413
      %v5433 = vadd.f32 %v5399, %v5422
      %v5434 = vadd.f32 %v5400, %v5423
      %v5435 = vadd.f32 %v5401, %v5419
      %v5436 = vld [vmem:[%s3] sm:$0x3]
      %v5438 = vperm.slane %v5436, 0
      %v5439 = vperm.slane %v5436, 1
      %5440 = vrot.lane.b32.xlu0 %v5438, 15
      %v5441 = vpop.permute.xlu0 %5440
      %5442 = vrot.lane.b32.xlu0 %v5439, 15
      %v5443 = vpop.permute.xlu0 %5442
      %vm5444 = vcmask 121856
      %v5445 = vsel %vm5444, %v5441, %v5443
      %v5449 = vmul.f32 %v5294, %v5441
      %v5450 = vmul.f32 %v5295, %v5445
      %v5451 = vmul.f32 %v5296, %v5443
      %v5452 = vmul.f32 %v5297, %v5441
      %v5453 = vmul.f32 %v5298, %v5445
      %v5454 = vmul.f32 %v5299, %v5443
      %5461 = vrot.lane.b32.xlu0 %v5449, 1
      %v5462 = vpop.permute.xlu0 %5461
      %5463 = vrot.lane.b32.xlu0 %v5450, 1
      %v5464 = vpop.permute.xlu0 %5463
      %5465 = vrot.lane.b32.xlu0 %v5451, 1
      %v5466 = vpop.permute.xlu0 %5465
      %5467 = vrot.lane.b32.xlu0 %v5452, 1
      %v5468 = vpop.permute.xlu0 %5467
      %5469 = vrot.lane.b32.xlu0 %v5453, 1
      %v5470 = vpop.permute.xlu0 %5469
      %5471 = vrot.lane.b32.xlu0 %v5454, 1
      %v5472 = vpop.permute.xlu0 %5471
      %vm5473 = vcmask 7168
      %v5474 = vsel %vm5473, %v5462, %v5464
      %v5475 = vsel %vm5473, %v5464, %v5466
      %v5476 = vsel %vm5473, %v5468, %v5470
      %v5477 = vsel %vm5473, %v5470, %v5472
      %v5484 = vadd.f32 %v5362, %v5462
      %v5485 = vadd.f32 %v5363, %v5474
      %v5486 = vadd.f32 %v5364, %v5475
      %v5487 = vadd.f32 %v5365, %v5468
      %v5488 = vadd.f32 %v5366, %v5476
      %v5489 = vadd.f32 %v5367, %v5477
      %v5490 = vld [vmem:[%s4] sm:$0x3]
      %v5492 = vperm.slane %v5490, 0
      %v5493 = vperm.slane %v5490, 1
      %5494 = vrot.lane.b32.xlu0 %v5492, 17
      %v5495 = vpop.permute.xlu0 %5494
      %5496 = vrot.lane.b32.xlu0 %v5493, 17
      %v5497 = vpop.permute.xlu0 %5496
      %vm5498 = vcmask 138240
      %v5499 = vsel %vm5498, %v5495, %v5497
      %v5503 = vmul.f32 %v5430, %v5495
      %v5504 = vmul.f32 %v5431, %v5499
      %v5505 = vmul.f32 %v5432, %v5497
      %v5506 = vmul.f32 %v5433, %v5495
      %v5507 = vmul.f32 %v5434, %v5499
      %v5508 = vmul.f32 %v5435, %v5497
      %5515 = vrot.lane.b32.xlu0 %v5503, 127
      %v5516 = vpop.permute.xlu0 %5515
      %5517 = vrot.lane.b32.xlu0 %v5504, 127
      %v5518 = vpop.permute.xlu0 %5517
      %5519 = vrot.lane.b32.xlu0 %v5505, 127
      %v5520 = vpop.permute.xlu0 %5519
      %5521 = vrot.lane.b32.xlu0 %v5506, 127
      %v5522 = vpop.permute.xlu0 %5521
      %5523 = vrot.lane.b32.xlu0 %v5507, 127
      %v5524 = vpop.permute.xlu0 %5523
      %5525 = vrot.lane.b32.xlu0 %v5508, 127
      %v5526 = vpop.permute.xlu0 %5525
      %vm5527 = vcmask 1039360
      %v5528 = vsel %vm5527, %v5516, %v5518
      %v5529 = vsel %vm5527, %v5518, %v5520
      %v5530 = vsel %vm5527, %v5522, %v5524
      %v5531 = vsel %vm5527, %v5524, %v5526
      %v5538 = vadd.f32 %v5484, %v5528
      %v5539 = vadd.f32 %v5485, %v5529
      %v5540 = vadd.f32 %v5486, %v5520
      %v5541 = vadd.f32 %v5487, %v5530
      %v5542 = vadd.f32 %v5488, %v5531
      %v5543 = vadd.f32 %v5489, %v5526
      %v5544 = vld [vmem:[%s10] sm:$0xff]
      %v5545 = vld [vmem:[%s10 + $0x8] sm:$0xf]
      %5547 = vset.pattern.permute.xlu0 0
      %5548 = vperm.xlu0 %5547, %v5544
      %v5549 = vpop.permute.xlu0 %5548
      %5552 = vset.pattern.permute.xlu0 0
      %5553 = vperm.xlu0 %5552, %v5545
      %v5554 = vpop.permute.xlu0 %5553
      %v5556 = vadd.f32 %v5538, %v5549
      %v5557 = vadd.f32 %v5539, %v5549
      %v5558 = vadd.f32 %v5540, %v5549
      %v5559 = vadd.f32 %v5541, %v5554
      %v5560 = vadd.f32 %v5542, %v5554
      %v5561 = vadd.f32 %v5543, %v5554
      %v5562 = vld [vmem:[%s538] sm:$0x77]
      %v5563 = vld [vmem:[%s11] sm:$0xff]
      %v5564 = vld [vmem:[%s11 + $0x8] sm:$0xf]
      %5567 = vrot.lane.b32.xlu0 %v5563, 116
      %v5568 = vpop.permute.xlu0 %5567
      %5569 = vrot.lane.b32.xlu0 %v5564, 116
      %v5570 = vpop.permute.xlu0 %5569
      %vm5571 = vcmask 72704
      %v5572 = vsel %vm5571, %v5568, 0
      %v5574 = vsel %vm5571, %v5570, 0
      %vm5576 = vcmask 1040384
      %v5578 = vsel %vm5576, %v2668, 0
      %v5581 = vsel %vm5576, %v3001, 0
      %5583 = vmatpush.msra.mxu0 0.0
      %5584 = vmatpush.msra.mxu0 0.0
      %5585 = vmatpush.msra.mxu0 0.0
      %5586 = vmatpush.msra.mxu0 0.0
      %5587 = vmatpush.msra.mxu0 0.0
      %5588 = vmatpush.msra.mxu0 0.0
      %5589 = vmatpush.msra.mxu0 0.0
      %5590 = vmatpush.msra.mxu0 0.0
      %5591 = vmatpush.msra.mxu0 0.0
      %5592 = vmatpush.msra.mxu0 0.0
      %5593 = vmatpush.msra.mxu0 0.0
      %5594 = vmatpush.msra.mxu0 0.0
      %5595 = vmatpush.msra.mxu0 0.0
      %5596 = vmatpush.msra.mxu0 0.0
      %v5597 = vand.u32 %v5578, 4294901760
      %5598 = vmatpush.msra.mxu0 %v5597
      %v5599 = vand.u32 %v2664, 4294901760
      %5600 = vmatpush.msra.mxu0 %v5599
      %v5601 = vand.u32 %v5572, 4294901760
      %v5602 = vsub.f32 %v5572, %v5601
      %v5603 = vand.u32 %v5602, 4294901760
      %v5604 = vsub.f32 %v5602, %v5603
      %v5605 = vand.u32 %v5604, 4294901760
      %5606 = vmatmul.f32.gmra.mxu0 %v5605
      %v5607 = vpop.f32.mrf.mxu0
      %v5608 = vadd.f32 0.0, %v5607
      %v5609 = vand.u32 %v5574, 4294901760
      %v5610 = vsub.f32 %v5574, %v5609
      %v5611 = vand.u32 %v5610, 4294901760
      %v5612 = vsub.f32 %v5610, %v5611
      %v5613 = vand.u32 %v5612, 4294901760
      %5614 = vmatmul.f32.gmra.mxu0 %v5613
      %v5615 = vpop.f32.mrf.mxu0
      %v5616 = vadd.f32 0.0, %v5615
      %5617 = vdwg.mxu0
      %5618 = vmatpush.msra.mxu0 0.0
      %5619 = vmatpush.msra.mxu0 0.0
      %5620 = vmatpush.msra.mxu0 0.0
      %5621 = vmatpush.msra.mxu0 0.0
      %5622 = vmatpush.msra.mxu0 0.0
      %5623 = vmatpush.msra.mxu0 0.0
      %5624 = vmatpush.msra.mxu0 0.0
      %5625 = vmatpush.msra.mxu0 0.0
      %5626 = vmatpush.msra.mxu0 0.0
      %5627 = vmatpush.msra.mxu0 0.0
      %5628 = vmatpush.msra.mxu0 0.0
      %5629 = vmatpush.msra.mxu0 0.0
      %5630 = vmatpush.msra.mxu0 0.0
      %5631 = vmatpush.msra.mxu0 0.0
      %v5632 = vand.u32 %v5578, 4294901760
      %v5633 = vsub.f32 %v5578, %v5632
      %v5634 = vand.u32 %v5633, 4294901760
      %v5635 = vsub.f32 %v5633, %v5634
      %v5636 = vand.u32 %v5635, 4294901760
      %5637 = vmatpush.msra.mxu0 %v5636
      %v5638 = vand.u32 %v2664, 4294901760
      %v5639 = vsub.f32 %v2664, %v5638
      %v5640 = vand.u32 %v5639, 4294901760
      %v5641 = vsub.f32 %v5639, %v5640
      %v5642 = vand.u32 %v5641, 4294901760
      %5643 = vmatpush.msra.mxu0 %v5642
      %v5644 = vand.u32 %v5572, 4294901760
      %5645 = vmatmul.f32.gmra.mxu0 %v5644
      %v5646 = vpop.f32.mrf.mxu0
      %v5647 = vadd.f32 %v5608, %v5646
      %v5648 = vand.u32 %v5574, 4294901760
      %5649 = vmatmul.f32.gmra.mxu0 %v5648
      %v5650 = vpop.f32.mrf.mxu0
      %v5651 = vadd.f32 %v5616, %v5650
      %5652 = vdwg.mxu0
      %5653 = vmatpush.msra.mxu0 0.0
      %5654 = vmatpush.msra.mxu0 0.0
      %5655 = vmatpush.msra.mxu0 0.0
      %5656 = vmatpush.msra.mxu0 0.0
      %5657 = vmatpush.msra.mxu0 0.0
      %5658 = vmatpush.msra.mxu0 0.0
      %5659 = vmatpush.msra.mxu0 0.0
      %5660 = vmatpush.msra.mxu0 0.0
      %5661 = vmatpush.msra.mxu0 0.0
      %5662 = vmatpush.msra.mxu0 0.0
      %5663 = vmatpush.msra.mxu0 0.0
      %5664 = vmatpush.msra.mxu0 0.0
      %5665 = vmatpush.msra.mxu0 0.0
      %5666 = vmatpush.msra.mxu0 0.0
      %v5667 = vand.u32 %v5578, 4294901760
      %v5668 = vsub.f32 %v5578, %v5667
      %5669 = vmatpush.msra.mxu0 %v5668
      %v5670 = vand.u32 %v2664, 4294901760
      %v5671 = vsub.f32 %v2664, %v5670
      %5672 = vmatpush.msra.mxu0 %v5671
      %v5673 = vand.u32 %v5572, 4294901760
      %v5674 = vsub.f32 %v5572, %v5673
      %5675 = vmatmul.f32.gmra.mxu0 %v5674
      %v5676 = vpop.f32.mrf.mxu0
      %v5677 = vadd.f32 %v5647, %v5676
      %v5678 = vand.u32 %v5574, 4294901760
      %v5679 = vsub.f32 %v5574, %v5678
      %5680 = vmatmul.f32.gmra.mxu0 %v5679
      %v5681 = vpop.f32.mrf.mxu0
      %v5682 = vadd.f32 %v5651, %v5681
      %5683 = vdwg.mxu0
      %5684 = vmatpush.msra.mxu0 0.0
      %5685 = vmatpush.msra.mxu0 0.0
      %5686 = vmatpush.msra.mxu0 0.0
      %5687 = vmatpush.msra.mxu0 0.0
      %5688 = vmatpush.msra.mxu0 0.0
      %5689 = vmatpush.msra.mxu0 0.0
      %5690 = vmatpush.msra.mxu0 0.0
      %5691 = vmatpush.msra.mxu0 0.0
      %5692 = vmatpush.msra.mxu0 0.0
      %5693 = vmatpush.msra.mxu0 0.0
      %5694 = vmatpush.msra.mxu0 0.0
      %5695 = vmatpush.msra.mxu0 0.0
      %5696 = vmatpush.msra.mxu0 0.0
      %5697 = vmatpush.msra.mxu0 0.0
      %v5698 = vand.u32 %v5578, 4294901760
      %5699 = vmatpush.msra.mxu0 %v5698
      %v5700 = vand.u32 %v2664, 4294901760
      %5701 = vmatpush.msra.mxu0 %v5700
      %v5702 = vand.u32 %v5572, 4294901760
      %v5703 = vsub.f32 %v5572, %v5702
      %v5704 = vand.u32 %v5703, 4294901760
      %5705 = vmatmul.f32.gmra.mxu0 %v5704
      %v5706 = vpop.f32.mrf.mxu0
      %v5707 = vadd.f32 %v5677, %v5706
      %v5708 = vand.u32 %v5574, 4294901760
      %v5709 = vsub.f32 %v5574, %v5708
      %v5710 = vand.u32 %v5709, 4294901760
      %5711 = vmatmul.f32.gmra.mxu0 %v5710
      %v5712 = vpop.f32.mrf.mxu0
      %v5713 = vadd.f32 %v5682, %v5712
      %5714 = vdwg.mxu0
      %5715 = vmatpush.msra.mxu0 0.0
      %5716 = vmatpush.msra.mxu0 0.0
      %5717 = vmatpush.msra.mxu0 0.0
      %5718 = vmatpush.msra.mxu0 0.0
      %5719 = vmatpush.msra.mxu0 0.0
      %5720 = vmatpush.msra.mxu0 0.0
      %5721 = vmatpush.msra.mxu0 0.0
      %5722 = vmatpush.msra.mxu0 0.0
      %5723 = vmatpush.msra.mxu0 0.0
      %5724 = vmatpush.msra.mxu0 0.0
      %5725 = vmatpush.msra.mxu0 0.0
      %5726 = vmatpush.msra.mxu0 0.0
      %5727 = vmatpush.msra.mxu0 0.0
      %5728 = vmatpush.msra.mxu0 0.0
      %v5729 = vand.u32 %v5578, 4294901760
      %v5730 = vsub.f32 %v5578, %v5729
      %v5731 = vand.u32 %v5730, 4294901760
      %5732 = vmatpush.msra.mxu0 %v5731
      %v5733 = vand.u32 %v2664, 4294901760
      %v5734 = vsub.f32 %v2664, %v5733
      %v5735 = vand.u32 %v5734, 4294901760
      %5736 = vmatpush.msra.mxu0 %v5735
      %v5737 = vand.u32 %v5572, 4294901760
      %5738 = vmatmul.f32.gmra.mxu0 %v5737
      %v5739 = vpop.f32.mrf.mxu0
      %v5740 = vadd.f32 %v5707, %v5739
      %v5741 = vand.u32 %v5574, 4294901760
      %5742 = vmatmul.f32.gmra.mxu0 %v5741
      %v5743 = vpop.f32.mrf.mxu0
      %v5744 = vadd.f32 %v5713, %v5743
      %5745 = vdwg.mxu0
      %5746 = vmatpush.msra.mxu0 0.0
      %5747 = vmatpush.msra.mxu0 0.0
      %5748 = vmatpush.msra.mxu0 0.0
      %5749 = vmatpush.msra.mxu0 0.0
      %5750 = vmatpush.msra.mxu0 0.0
      %5751 = vmatpush.msra.mxu0 0.0
      %5752 = vmatpush.msra.mxu0 0.0
      %5753 = vmatpush.msra.mxu0 0.0
      %5754 = vmatpush.msra.mxu0 0.0
      %5755 = vmatpush.msra.mxu0 0.0
      %5756 = vmatpush.msra.mxu0 0.0
      %5757 = vmatpush.msra.mxu0 0.0
      %5758 = vmatpush.msra.mxu0 0.0
      %5759 = vmatpush.msra.mxu0 0.0
      %v5760 = vand.u32 %v5578, 4294901760
      %5761 = vmatpush.msra.mxu0 %v5760
      %v5762 = vand.u32 %v2664, 4294901760
      %5763 = vmatpush.msra.mxu0 %v5762
      %v5764 = vand.u32 %v5572, 4294901760
      %5765 = vmatmul.f32.gmra.mxu0 %v5764
      %v5766 = vpop.f32.mrf.mxu0
      %v5767 = vadd.f32 %v5740, %v5766
      %v5768 = vand.u32 %v5574, 4294901760
      %5769 = vmatmul.f32.gmra.mxu0 %v5768
      %v5770 = vpop.f32.mrf.mxu0
      %v5771 = vadd.f32 %v5744, %v5770
      %5772 = vdwg.mxu0
      %5773 = vmatpush.msra.mxu0 0.0
      %5774 = vmatpush.msra.mxu0 0.0
      %5775 = vmatpush.msra.mxu0 0.0
      %5776 = vmatpush.msra.mxu0 0.0
      %5777 = vmatpush.msra.mxu0 0.0
      %5778 = vmatpush.msra.mxu0 0.0
      %5779 = vmatpush.msra.mxu0 0.0
      %5780 = vmatpush.msra.mxu0 0.0
      %5781 = vmatpush.msra.mxu0 0.0
      %5782 = vmatpush.msra.mxu0 0.0
      %5783 = vmatpush.msra.mxu0 0.0
      %5784 = vmatpush.msra.mxu0 0.0
      %5785 = vmatpush.msra.mxu0 0.0
      %5786 = vmatpush.msra.mxu0 0.0
      %v5787 = vand.u32 %v5581, 4294901760
      %5788 = vmatpush.msra.mxu0 %v5787
      %v5789 = vand.u32 %v2997, 4294901760
      %5790 = vmatpush.msra.mxu0 %v5789
      %v5791 = vand.u32 %v5572, 4294901760
      %v5792 = vsub.f32 %v5572, %v5791
      %v5793 = vand.u32 %v5792, 4294901760
      %v5794 = vsub.f32 %v5792, %v5793
      %v5795 = vand.u32 %v5794, 4294901760
      %5796 = vmatmul.f32.gmra.mxu0 %v5795
      %v5797 = vpop.f32.mrf.mxu0
      %v5798 = vadd.f32 0.0, %v5797
      %v5799 = vand.u32 %v5574, 4294901760
      %v5800 = vsub.f32 %v5574, %v5799
      %v5801 = vand.u32 %v5800, 4294901760
      %v5802 = vsub.f32 %v5800, %v5801
      %v5803 = vand.u32 %v5802, 4294901760
      %5804 = vmatmul.f32.gmra.mxu0 %v5803
      %v5805 = vpop.f32.mrf.mxu0
      %v5806 = vadd.f32 0.0, %v5805
      %5807 = vdwg.mxu0
      %5808 = vmatpush.msra.mxu0 0.0
      %5809 = vmatpush.msra.mxu0 0.0
      %5810 = vmatpush.msra.mxu0 0.0
      %5811 = vmatpush.msra.mxu0 0.0
      %5812 = vmatpush.msra.mxu0 0.0
      %5813 = vmatpush.msra.mxu0 0.0
      %5814 = vmatpush.msra.mxu0 0.0
      %5815 = vmatpush.msra.mxu0 0.0
      %5816 = vmatpush.msra.mxu0 0.0
      %5817 = vmatpush.msra.mxu0 0.0
      %5818 = vmatpush.msra.mxu0 0.0
      %5819 = vmatpush.msra.mxu0 0.0
      %5820 = vmatpush.msra.mxu0 0.0
      %5821 = vmatpush.msra.mxu0 0.0
      %v5822 = vand.u32 %v5581, 4294901760
      %v5823 = vsub.f32 %v5581, %v5822
      %v5824 = vand.u32 %v5823, 4294901760
      %v5825 = vsub.f32 %v5823, %v5824
      %v5826 = vand.u32 %v5825, 4294901760
      %5827 = vmatpush.msra.mxu0 %v5826
      %v5828 = vand.u32 %v2997, 4294901760
      %v5829 = vsub.f32 %v2997, %v5828
      %v5830 = vand.u32 %v5829, 4294901760
      %v5831 = vsub.f32 %v5829, %v5830
      %v5832 = vand.u32 %v5831, 4294901760
      %5833 = vmatpush.msra.mxu0 %v5832
      %v5834 = vand.u32 %v5572, 4294901760
      %5835 = vmatmul.f32.gmra.mxu0 %v5834
      %v5836 = vpop.f32.mrf.mxu0
      %v5837 = vadd.f32 %v5798, %v5836
      %v5838 = vand.u32 %v5574, 4294901760
      %5839 = vmatmul.f32.gmra.mxu0 %v5838
      %v5840 = vpop.f32.mrf.mxu0
      %v5841 = vadd.f32 %v5806, %v5840
      %5842 = vdwg.mxu0
      %5843 = vmatpush.msra.mxu0 0.0
      %5844 = vmatpush.msra.mxu0 0.0
      %5845 = vmatpush.msra.mxu0 0.0
      %5846 = vmatpush.msra.mxu0 0.0
      %5847 = vmatpush.msra.mxu0 0.0
      %5848 = vmatpush.msra.mxu0 0.0
      %5849 = vmatpush.msra.mxu0 0.0
      %5850 = vmatpush.msra.mxu0 0.0
      %5851 = vmatpush.msra.mxu0 0.0
      %5852 = vmatpush.msra.mxu0 0.0
      %5853 = vmatpush.msra.mxu0 0.0
      %5854 = vmatpush.msra.mxu0 0.0
      %5855 = vmatpush.msra.mxu0 0.0
      %5856 = vmatpush.msra.mxu0 0.0
      %v5857 = vand.u32 %v5581, 4294901760
      %v5858 = vsub.f32 %v5581, %v5857
      %5859 = vmatpush.msra.mxu0 %v5858
      %v5860 = vand.u32 %v2997, 4294901760
      %v5861 = vsub.f32 %v2997, %v5860
      %5862 = vmatpush.msra.mxu0 %v5861
      %v5863 = vand.u32 %v5572, 4294901760
      %v5864 = vsub.f32 %v5572, %v5863
      %5865 = vmatmul.f32.gmra.mxu0 %v5864
      %v5866 = vpop.f32.mrf.mxu0
      %v5867 = vadd.f32 %v5837, %v5866
      %v5868 = vand.u32 %v5574, 4294901760
      %v5869 = vsub.f32 %v5574, %v5868
      %5870 = vmatmul.f32.gmra.mxu0 %v5869
      %v5871 = vpop.f32.mrf.mxu0
      %v5872 = vadd.f32 %v5841, %v5871
      %5873 = vdwg.mxu0
      %5874 = vmatpush.msra.mxu0 0.0
      %5875 = vmatpush.msra.mxu0 0.0
      %5876 = vmatpush.msra.mxu0 0.0
      %5877 = vmatpush.msra.mxu0 0.0
      %5878 = vmatpush.msra.mxu0 0.0
      %5879 = vmatpush.msra.mxu0 0.0
      %5880 = vmatpush.msra.mxu0 0.0
      %5881 = vmatpush.msra.mxu0 0.0
      %5882 = vmatpush.msra.mxu0 0.0
      %5883 = vmatpush.msra.mxu0 0.0
      %5884 = vmatpush.msra.mxu0 0.0
      %5885 = vmatpush.msra.mxu0 0.0
      %5886 = vmatpush.msra.mxu0 0.0
      %5887 = vmatpush.msra.mxu0 0.0
      %v5888 = vand.u32 %v5581, 4294901760
      %5889 = vmatpush.msra.mxu0 %v5888
      %v5890 = vand.u32 %v2997, 4294901760
      %5891 = vmatpush.msra.mxu0 %v5890
      %v5892 = vand.u32 %v5572, 4294901760
      %v5893 = vsub.f32 %v5572, %v5892
      %v5894 = vand.u32 %v5893, 4294901760
      %5895 = vmatmul.f32.gmra.mxu0 %v5894
      %v5896 = vpop.f32.mrf.mxu0
      %v5897 = vadd.f32 %v5867, %v5896
      %v5898 = vand.u32 %v5574, 4294901760
      %v5899 = vsub.f32 %v5574, %v5898
      %v5900 = vand.u32 %v5899, 4294901760
      %5901 = vmatmul.f32.gmra.mxu0 %v5900
      %v5902 = vpop.f32.mrf.mxu0
      %v5903 = vadd.f32 %v5872, %v5902
      %5904 = vdwg.mxu0
      %5905 = vmatpush.msra.mxu0 0.0
      %5906 = vmatpush.msra.mxu0 0.0
      %5907 = vmatpush.msra.mxu0 0.0
      %5908 = vmatpush.msra.mxu0 0.0
      %5909 = vmatpush.msra.mxu0 0.0
      %5910 = vmatpush.msra.mxu0 0.0
      %5911 = vmatpush.msra.mxu0 0.0
      %5912 = vmatpush.msra.mxu0 0.0
      %5913 = vmatpush.msra.mxu0 0.0
      %5914 = vmatpush.msra.mxu0 0.0
      %5915 = vmatpush.msra.mxu0 0.0
      %5916 = vmatpush.msra.mxu0 0.0
      %5917 = vmatpush.msra.mxu0 0.0
      %5918 = vmatpush.msra.mxu0 0.0
      %v5919 = vand.u32 %v5581, 4294901760
      %v5920 = vsub.f32 %v5581, %v5919
      %v5921 = vand.u32 %v5920, 4294901760
      %5922 = vmatpush.msra.mxu0 %v5921
      %v5923 = vand.u32 %v2997, 4294901760
      %v5924 = vsub.f32 %v2997, %v5923
      %v5925 = vand.u32 %v5924, 4294901760
      %5926 = vmatpush.msra.mxu0 %v5925
      %v5927 = vand.u32 %v5572, 4294901760
      %5928 = vmatmul.f32.gmra.mxu0 %v5927
      %v5929 = vpop.f32.mrf.mxu0
      %v5930 = vadd.f32 %v5897, %v5929
      %v5931 = vand.u32 %v5574, 4294901760
      %5932 = vmatmul.f32.gmra.mxu0 %v5931
      %v5933 = vpop.f32.mrf.mxu0
      %v5934 = vadd.f32 %v5903, %v5933
      %5935 = vdwg.mxu0
      %5936 = vmatpush.msra.mxu0 0.0
      %5937 = vmatpush.msra.mxu0 0.0
      %5938 = vmatpush.msra.mxu0 0.0
      %5939 = vmatpush.msra.mxu0 0.0
      %5940 = vmatpush.msra.mxu0 0.0
      %5941 = vmatpush.msra.mxu0 0.0
      %5942 = vmatpush.msra.mxu0 0.0
      %5943 = vmatpush.msra.mxu0 0.0
      %5944 = vmatpush.msra.mxu0 0.0
      %5945 = vmatpush.msra.mxu0 0.0
      %5946 = vmatpush.msra.mxu0 0.0
      %5947 = vmatpush.msra.mxu0 0.0
      %5948 = vmatpush.msra.mxu0 0.0
      %5949 = vmatpush.msra.mxu0 0.0
      %v5950 = vand.u32 %v5581, 4294901760
      %5951 = vmatpush.msra.mxu0 %v5950
      %v5952 = vand.u32 %v2997, 4294901760
      %5953 = vmatpush.msra.mxu0 %v5952
      %v5954 = vand.u32 %v5572, 4294901760
      %5955 = vmatmul.f32.gmra.mxu0 %v5954
      %v5956 = vpop.f32.mrf.mxu0
      %v5957 = vadd.f32 %v5930, %v5956
      %v5958 = vand.u32 %v5574, 4294901760
      %5959 = vmatmul.f32.gmra.mxu0 %v5958
      %v5960 = vpop.f32.mrf.mxu0
      %v5961 = vadd.f32 %v5934, %v5960
      %5962 = vdwg.mxu0
      %v5963 = vsel %vm668, %v5563, 0
      %v5965 = vsel %vm668, %v5564, 0
      %5967 = vmatpush.msra.mxu0 0.0
      %5968 = vmatpush.msra.mxu0 0.0
      %5969 = vmatpush.msra.mxu0 0.0
      %5970 = vmatpush.msra.mxu0 0.0
      %5971 = vmatpush.msra.mxu0 0.0
      %5972 = vmatpush.msra.mxu0 0.0
      %5973 = vmatpush.msra.mxu0 0.0
      %5974 = vmatpush.msra.mxu0 0.0
      %5975 = vmatpush.msra.mxu0 0.0
      %5976 = vmatpush.msra.mxu0 0.0
      %5977 = vmatpush.msra.mxu0 0.0
      %5978 = vmatpush.msra.mxu0 0.0
      %5979 = vmatpush.msra.mxu0 0.0
      %5980 = vmatpush.msra.mxu0 0.0
      %v5981 = vand.u32 %v719, 4294901760
      %5982 = vmatpush.msra.mxu0 %v5981
      %v5983 = vand.u32 %v550, 4294901760
      %5984 = vmatpush.msra.mxu0 %v5983
      %v5985 = vand.u32 %v5963, 4294901760
      %v5986 = vsub.f32 %v5963, %v5985
      %v5987 = vand.u32 %v5986, 4294901760
      %v5988 = vsub.f32 %v5986, %v5987
      %v5989 = vand.u32 %v5988, 4294901760
      %5990 = vmatmul.f32.gmra.mxu0 %v5989
      %v5991 = vpop.f32.mrf.mxu0
      %v5992 = vadd.f32 %v5767, %v5991
      %v5993 = vand.u32 %v5965, 4294901760
      %v5994 = vsub.f32 %v5965, %v5993
      %v5995 = vand.u32 %v5994, 4294901760
      %v5996 = vsub.f32 %v5994, %v5995
      %v5997 = vand.u32 %v5996, 4294901760
      %5998 = vmatmul.f32.gmra.mxu0 %v5997
      %v5999 = vpop.f32.mrf.mxu0
      %v6000 = vadd.f32 %v5771, %v5999
      %6001 = vdwg.mxu0
      %6002 = vmatpush.msra.mxu0 0.0
      %6003 = vmatpush.msra.mxu0 0.0
      %6004 = vmatpush.msra.mxu0 0.0
      %6005 = vmatpush.msra.mxu0 0.0
      %6006 = vmatpush.msra.mxu0 0.0
      %6007 = vmatpush.msra.mxu0 0.0
      %6008 = vmatpush.msra.mxu0 0.0
      %6009 = vmatpush.msra.mxu0 0.0
      %6010 = vmatpush.msra.mxu0 0.0
      %6011 = vmatpush.msra.mxu0 0.0
      %6012 = vmatpush.msra.mxu0 0.0
      %6013 = vmatpush.msra.mxu0 0.0
      %6014 = vmatpush.msra.mxu0 0.0
      %6015 = vmatpush.msra.mxu0 0.0
      %v6016 = vand.u32 %v719, 4294901760
      %v6017 = vsub.f32 %v719, %v6016
      %v6018 = vand.u32 %v6017, 4294901760
      %v6019 = vsub.f32 %v6017, %v6018
      %v6020 = vand.u32 %v6019, 4294901760
      %6021 = vmatpush.msra.mxu0 %v6020
      %v6022 = vand.u32 %v550, 4294901760
      %v6023 = vsub.f32 %v550, %v6022
      %v6024 = vand.u32 %v6023, 4294901760
      %v6025 = vsub.f32 %v6023, %v6024
      %v6026 = vand.u32 %v6025, 4294901760
      %6027 = vmatpush.msra.mxu0 %v6026
      %v6028 = vand.u32 %v5963, 4294901760
      %6029 = vmatmul.f32.gmra.mxu0 %v6028
      %v6030 = vpop.f32.mrf.mxu0
      %v6031 = vadd.f32 %v5992, %v6030
      %v6032 = vand.u32 %v5965, 4294901760
      %6033 = vmatmul.f32.gmra.mxu0 %v6032
      %v6034 = vpop.f32.mrf.mxu0
      %v6035 = vadd.f32 %v6000, %v6034
      %6036 = vdwg.mxu0
      %6037 = vmatpush.msra.mxu0 0.0
      %6038 = vmatpush.msra.mxu0 0.0
      %6039 = vmatpush.msra.mxu0 0.0
      %6040 = vmatpush.msra.mxu0 0.0
      %6041 = vmatpush.msra.mxu0 0.0
      %6042 = vmatpush.msra.mxu0 0.0
      %6043 = vmatpush.msra.mxu0 0.0
      %6044 = vmatpush.msra.mxu0 0.0
      %6045 = vmatpush.msra.mxu0 0.0
      %6046 = vmatpush.msra.mxu0 0.0
      %6047 = vmatpush.msra.mxu0 0.0
      %6048 = vmatpush.msra.mxu0 0.0
      %6049 = vmatpush.msra.mxu0 0.0
      %6050 = vmatpush.msra.mxu0 0.0
      %v6051 = vand.u32 %v719, 4294901760
      %v6052 = vsub.f32 %v719, %v6051
      %6053 = vmatpush.msra.mxu0 %v6052
      %v6054 = vand.u32 %v550, 4294901760
      %v6055 = vsub.f32 %v550, %v6054
      %6056 = vmatpush.msra.mxu0 %v6055
      %v6057 = vand.u32 %v5963, 4294901760
      %v6058 = vsub.f32 %v5963, %v6057
      %6059 = vmatmul.f32.gmra.mxu0 %v6058
      %v6060 = vpop.f32.mrf.mxu0
      %v6061 = vadd.f32 %v6031, %v6060
      %v6062 = vand.u32 %v5965, 4294901760
      %v6063 = vsub.f32 %v5965, %v6062
      %6064 = vmatmul.f32.gmra.mxu0 %v6063
      %v6065 = vpop.f32.mrf.mxu0
      %v6066 = vadd.f32 %v6035, %v6065
      %6067 = vdwg.mxu0
      %6068 = vmatpush.msra.mxu0 0.0
      %6069 = vmatpush.msra.mxu0 0.0
      %6070 = vmatpush.msra.mxu0 0.0
      %6071 = vmatpush.msra.mxu0 0.0
      %6072 = vmatpush.msra.mxu0 0.0
      %6073 = vmatpush.msra.mxu0 0.0
      %6074 = vmatpush.msra.mxu0 0.0
      %6075 = vmatpush.msra.mxu0 0.0
      %6076 = vmatpush.msra.mxu0 0.0
      %6077 = vmatpush.msra.mxu0 0.0
      %6078 = vmatpush.msra.mxu0 0.0
      %6079 = vmatpush.msra.mxu0 0.0
      %6080 = vmatpush.msra.mxu0 0.0
      %6081 = vmatpush.msra.mxu0 0.0
      %v6082 = vand.u32 %v719, 4294901760
      %6083 = vmatpush.msra.mxu0 %v6082
      %v6084 = vand.u32 %v550, 4294901760
      %6085 = vmatpush.msra.mxu0 %v6084
      %v6086 = vand.u32 %v5963, 4294901760
      %v6087 = vsub.f32 %v5963, %v6086
      %v6088 = vand.u32 %v6087, 4294901760
      %6089 = vmatmul.f32.gmra.mxu0 %v6088
      %v6090 = vpop.f32.mrf.mxu0
      %v6091 = vadd.f32 %v6061, %v6090
      %v6092 = vand.u32 %v5965, 4294901760
      %v6093 = vsub.f32 %v5965, %v6092
      %v6094 = vand.u32 %v6093, 4294901760
      %6095 = vmatmul.f32.gmra.mxu0 %v6094
      %v6096 = vpop.f32.mrf.mxu0
      %v6097 = vadd.f32 %v6066, %v6096
      %6098 = vdwg.mxu0
      %6099 = vmatpush.msra.mxu0 0.0
      %6100 = vmatpush.msra.mxu0 0.0
      %6101 = vmatpush.msra.mxu0 0.0
      %6102 = vmatpush.msra.mxu0 0.0
      %6103 = vmatpush.msra.mxu0 0.0
      %6104 = vmatpush.msra.mxu0 0.0
      %6105 = vmatpush.msra.mxu0 0.0
      %6106 = vmatpush.msra.mxu0 0.0
      %6107 = vmatpush.msra.mxu0 0.0
      %6108 = vmatpush.msra.mxu0 0.0
      %6109 = vmatpush.msra.mxu0 0.0
      %6110 = vmatpush.msra.mxu0 0.0
      %6111 = vmatpush.msra.mxu0 0.0
      %6112 = vmatpush.msra.mxu0 0.0
      %v6113 = vand.u32 %v719, 4294901760
      %v6114 = vsub.f32 %v719, %v6113
      %v6115 = vand.u32 %v6114, 4294901760
      %6116 = vmatpush.msra.mxu0 %v6115
      %v6117 = vand.u32 %v550, 4294901760
      %v6118 = vsub.f32 %v550, %v6117
      %v6119 = vand.u32 %v6118, 4294901760
      %6120 = vmatpush.msra.mxu0 %v6119
      %v6121 = vand.u32 %v5963, 4294901760
      %6122 = vmatmul.f32.gmra.mxu0 %v6121
      %v6123 = vpop.f32.mrf.mxu0
      %v6124 = vadd.f32 %v6091, %v6123
      %v6125 = vand.u32 %v5965, 4294901760
      %6126 = vmatmul.f32.gmra.mxu0 %v6125
      %v6127 = vpop.f32.mrf.mxu0
      %v6128 = vadd.f32 %v6097, %v6127
      %6129 = vdwg.mxu0
      %6130 = vmatpush.msra.mxu0 0.0
      %6131 = vmatpush.msra.mxu0 0.0
      %6132 = vmatpush.msra.mxu0 0.0
      %6133 = vmatpush.msra.mxu0 0.0
      %6134 = vmatpush.msra.mxu0 0.0
      %6135 = vmatpush.msra.mxu0 0.0
      %6136 = vmatpush.msra.mxu0 0.0
      %6137 = vmatpush.msra.mxu0 0.0
      %6138 = vmatpush.msra.mxu0 0.0
      %6139 = vmatpush.msra.mxu0 0.0
      %6140 = vmatpush.msra.mxu0 0.0
      %6141 = vmatpush.msra.mxu0 0.0
      %6142 = vmatpush.msra.mxu0 0.0
      %6143 = vmatpush.msra.mxu0 0.0
      %v6144 = vand.u32 %v719, 4294901760
      %6145 = vmatpush.msra.mxu0 %v6144
      %v6146 = vand.u32 %v550, 4294901760
      %6147 = vmatpush.msra.mxu0 %v6146
      %v6148 = vand.u32 %v5963, 4294901760
      %6149 = vmatmul.f32.gmra.mxu0 %v6148
      %v6150 = vpop.f32.mrf.mxu0
      %v6151 = vadd.f32 %v6124, %v6150
      %v6152 = vand.u32 %v5965, 4294901760
      %6153 = vmatmul.f32.gmra.mxu0 %v6152
      %v6154 = vpop.f32.mrf.mxu0
      %v6155 = vadd.f32 %v6128, %v6154
      %6156 = vdwg.mxu0
      %6157 = vmatpush.msra.mxu0 0.0
      %6158 = vmatpush.msra.mxu0 0.0
      %6159 = vmatpush.msra.mxu0 0.0
      %6160 = vmatpush.msra.mxu0 0.0
      %6161 = vmatpush.msra.mxu0 0.0
      %6162 = vmatpush.msra.mxu0 0.0
      %6163 = vmatpush.msra.mxu0 0.0
      %6164 = vmatpush.msra.mxu0 0.0
      %6165 = vmatpush.msra.mxu0 0.0
      %6166 = vmatpush.msra.mxu0 0.0
      %6167 = vmatpush.msra.mxu0 0.0
      %6168 = vmatpush.msra.mxu0 0.0
      %6169 = vmatpush.msra.mxu0 0.0
      %6170 = vmatpush.msra.mxu0 0.0
      %v6171 = vand.u32 %v722, 4294901760
      %6172 = vmatpush.msra.mxu0 %v6171
      %v6173 = vand.u32 %v551, 4294901760
      %6174 = vmatpush.msra.mxu0 %v6173
      %v6175 = vand.u32 %v5963, 4294901760
      %v6176 = vsub.f32 %v5963, %v6175
      %v6177 = vand.u32 %v6176, 4294901760
      %v6178 = vsub.f32 %v6176, %v6177
      %v6179 = vand.u32 %v6178, 4294901760
      %6180 = vmatmul.f32.gmra.mxu0 %v6179
      %v6181 = vpop.f32.mrf.mxu0
      %v6182 = vadd.f32 %v5957, %v6181
      %v6183 = vand.u32 %v5965, 4294901760
      %v6184 = vsub.f32 %v5965, %v6183
      %v6185 = vand.u32 %v6184, 4294901760
      %v6186 = vsub.f32 %v6184, %v6185
      %v6187 = vand.u32 %v6186, 4294901760
      %6188 = vmatmul.f32.gmra.mxu0 %v6187
      %v6189 = vpop.f32.mrf.mxu0
      %v6190 = vadd.f32 %v5961, %v6189
      %6191 = vdwg.mxu0
      %6192 = vmatpush.msra.mxu0 0.0
      %6193 = vmatpush.msra.mxu0 0.0
      %6194 = vmatpush.msra.mxu0 0.0
      %6195 = vmatpush.msra.mxu0 0.0
      %6196 = vmatpush.msra.mxu0 0.0
      %6197 = vmatpush.msra.mxu0 0.0
      %6198 = vmatpush.msra.mxu0 0.0
      %6199 = vmatpush.msra.mxu0 0.0
      %6200 = vmatpush.msra.mxu0 0.0
      %6201 = vmatpush.msra.mxu0 0.0
      %6202 = vmatpush.msra.mxu0 0.0
      %6203 = vmatpush.msra.mxu0 0.0
      %6204 = vmatpush.msra.mxu0 0.0
      %6205 = vmatpush.msra.mxu0 0.0
      %v6206 = vand.u32 %v722, 4294901760
      %v6207 = vsub.f32 %v722, %v6206
      %v6208 = vand.u32 %v6207, 4294901760
      %v6209 = vsub.f32 %v6207, %v6208
      %v6210 = vand.u32 %v6209, 4294901760
      %6211 = vmatpush.msra.mxu0 %v6210
      %v6212 = vand.u32 %v551, 4294901760
      %v6213 = vsub.f32 %v551, %v6212
      %v6214 = vand.u32 %v6213, 4294901760
      %v6215 = vsub.f32 %v6213, %v6214
      %v6216 = vand.u32 %v6215, 4294901760
      %6217 = vmatpush.msra.mxu0 %v6216
      %v6218 = vand.u32 %v5963, 4294901760
      %6219 = vmatmul.f32.gmra.mxu0 %v6218
      %v6220 = vpop.f32.mrf.mxu0
      %v6221 = vadd.f32 %v6182, %v6220
      %v6222 = vand.u32 %v5965, 4294901760
      %6223 = vmatmul.f32.gmra.mxu0 %v6222
      %v6224 = vpop.f32.mrf.mxu0
      %v6225 = vadd.f32 %v6190, %v6224
      %6226 = vdwg.mxu0
      %6227 = vmatpush.msra.mxu0 0.0
      %6228 = vmatpush.msra.mxu0 0.0
      %6229 = vmatpush.msra.mxu0 0.0
      %6230 = vmatpush.msra.mxu0 0.0
      %6231 = vmatpush.msra.mxu0 0.0
      %6232 = vmatpush.msra.mxu0 0.0
      %6233 = vmatpush.msra.mxu0 0.0
      %6234 = vmatpush.msra.mxu0 0.0
      %6235 = vmatpush.msra.mxu0 0.0
      %6236 = vmatpush.msra.mxu0 0.0
      %6237 = vmatpush.msra.mxu0 0.0
      %6238 = vmatpush.msra.mxu0 0.0
      %6239 = vmatpush.msra.mxu0 0.0
      %6240 = vmatpush.msra.mxu0 0.0
      %v6241 = vand.u32 %v722, 4294901760
      %v6242 = vsub.f32 %v722, %v6241
      %6243 = vmatpush.msra.mxu0 %v6242
      %v6244 = vand.u32 %v551, 4294901760
      %v6245 = vsub.f32 %v551, %v6244
      %6246 = vmatpush.msra.mxu0 %v6245
      %v6247 = vand.u32 %v5963, 4294901760
      %v6248 = vsub.f32 %v5963, %v6247
      %6249 = vmatmul.f32.gmra.mxu0 %v6248
      %v6250 = vpop.f32.mrf.mxu0
      %v6251 = vadd.f32 %v6221, %v6250
      %v6252 = vand.u32 %v5965, 4294901760
      %v6253 = vsub.f32 %v5965, %v6252
      %6254 = vmatmul.f32.gmra.mxu0 %v6253
      %v6255 = vpop.f32.mrf.mxu0
      %v6256 = vadd.f32 %v6225, %v6255
      %6257 = vdwg.mxu0
      %6258 = vmatpush.msra.mxu0 0.0
      %6259 = vmatpush.msra.mxu0 0.0
      %6260 = vmatpush.msra.mxu0 0.0
      %6261 = vmatpush.msra.mxu0 0.0
      %6262 = vmatpush.msra.mxu0 0.0
      %6263 = vmatpush.msra.mxu0 0.0
      %6264 = vmatpush.msra.mxu0 0.0
      %6265 = vmatpush.msra.mxu0 0.0
      %6266 = vmatpush.msra.mxu0 0.0
      %6267 = vmatpush.msra.mxu0 0.0
      %6268 = vmatpush.msra.mxu0 0.0
      %6269 = vmatpush.msra.mxu0 0.0
      %6270 = vmatpush.msra.mxu0 0.0
      %6271 = vmatpush.msra.mxu0 0.0
      %v6272 = vand.u32 %v722, 4294901760
      %6273 = vmatpush.msra.mxu0 %v6272
      %v6274 = vand.u32 %v551, 4294901760
      %6275 = vmatpush.msra.mxu0 %v6274
      %v6276 = vand.u32 %v5963, 4294901760
      %v6277 = vsub.f32 %v5963, %v6276
      %v6278 = vand.u32 %v6277, 4294901760
      %6279 = vmatmul.f32.gmra.mxu0 %v6278
      %v6280 = vpop.f32.mrf.mxu0
      %v6281 = vadd.f32 %v6251, %v6280
      %v6282 = vand.u32 %v5965, 4294901760
      %v6283 = vsub.f32 %v5965, %v6282
      %v6284 = vand.u32 %v6283, 4294901760
      %6285 = vmatmul.f32.gmra.mxu0 %v6284
      %v6286 = vpop.f32.mrf.mxu0
      %v6287 = vadd.f32 %v6256, %v6286
      %6288 = vdwg.mxu0
      %6289 = vmatpush.msra.mxu0 0.0
      %6290 = vmatpush.msra.mxu0 0.0
      %6291 = vmatpush.msra.mxu0 0.0
      %6292 = vmatpush.msra.mxu0 0.0
      %6293 = vmatpush.msra.mxu0 0.0
      %6294 = vmatpush.msra.mxu0 0.0
      %6295 = vmatpush.msra.mxu0 0.0
      %6296 = vmatpush.msra.mxu0 0.0
      %6297 = vmatpush.msra.mxu0 0.0
      %6298 = vmatpush.msra.mxu0 0.0
      %6299 = vmatpush.msra.mxu0 0.0
      %6300 = vmatpush.msra.mxu0 0.0
      %6301 = vmatpush.msra.mxu0 0.0
      %6302 = vmatpush.msra.mxu0 0.0
      %v6303 = vand.u32 %v722, 4294901760
      %v6304 = vsub.f32 %v722, %v6303
      %v6305 = vand.u32 %v6304, 4294901760
      %6306 = vmatpush.msra.mxu0 %v6305
      %v6307 = vand.u32 %v551, 4294901760
      %v6308 = vsub.f32 %v551, %v6307
      %v6309 = vand.u32 %v6308, 4294901760
      %6310 = vmatpush.msra.mxu0 %v6309
      %v6311 = vand.u32 %v5963, 4294901760
      %6312 = vmatmul.f32.gmra.mxu0 %v6311
      %v6313 = vpop.f32.mrf.mxu0
      %v6314 = vadd.f32 %v6281, %v6313
      %v6315 = vand.u32 %v5965, 4294901760
      %6316 = vmatmul.f32.gmra.mxu0 %v6315
      %v6317 = vpop.f32.mrf.mxu0
      %v6318 = vadd.f32 %v6287, %v6317
      %6319 = vdwg.mxu0
      %6320 = vmatpush.msra.mxu0 0.0
      %6321 = vmatpush.msra.mxu0 0.0
      %6322 = vmatpush.msra.mxu0 0.0
      %6323 = vmatpush.msra.mxu0 0.0
      %6324 = vmatpush.msra.mxu0 0.0
      %6325 = vmatpush.msra.mxu0 0.0
      %6326 = vmatpush.msra.mxu0 0.0
      %6327 = vmatpush.msra.mxu0 0.0
      %6328 = vmatpush.msra.mxu0 0.0
      %6329 = vmatpush.msra.mxu0 0.0
      %6330 = vmatpush.msra.mxu0 0.0
      %6331 = vmatpush.msra.mxu0 0.0
      %6332 = vmatpush.msra.mxu0 0.0
      %6333 = vmatpush.msra.mxu0 0.0
      %v6334 = vand.u32 %v722, 4294901760
      %6335 = vmatpush.msra.mxu0 %v6334
      %v6336 = vand.u32 %v551, 4294901760
      %6337 = vmatpush.msra.mxu0 %v6336
      %v6338 = vand.u32 %v5963, 4294901760
      %6339 = vmatmul.f32.gmra.mxu0 %v6338
      %v6340 = vpop.f32.mrf.mxu0
      %v6341 = vadd.f32 %v6314, %v6340
      %v6342 = vand.u32 %v5965, 4294901760
      %6343 = vmatmul.f32.gmra.mxu0 %v6342
      %v6344 = vpop.f32.mrf.mxu0
      %v6345 = vadd.f32 %v6318, %v6344
      %6346 = vdwg.mxu0
      %6347 = vrot.lane.b32.xlu0 %v5563, 107
      %v6348 = vpop.permute.xlu0 %6347
      %6349 = vrot.lane.b32.xlu0 %v5564, 107
      %v6350 = vpop.permute.xlu0 %6349
      %6357 = vrot.lane.b32.xlu0 %v5556, 112
      %v6358 = vpop.permute.xlu0 %6357
      %6359 = vrot.lane.b32.xlu0 %v5557, 112
      %v6360 = vpop.permute.xlu0 %6359
      %6361 = vrot.lane.b32.xlu0 %v5558, 112
      %v6362 = vpop.permute.xlu0 %6361
      %6363 = vrot.lane.b32.xlu0 %v5559, 112
      %v6364 = vpop.permute.xlu0 %6363
      %6365 = vrot.lane.b32.xlu0 %v5560, 112
      %v6366 = vpop.permute.xlu0 %6365
      %6367 = vrot.lane.b32.xlu0 %v5561, 112
      %v6368 = vpop.permute.xlu0 %6367
      %v6369 = vsel %vm5248, %v6358, %v6360
      %v6370 = vsel %vm5248, %v6360, %v6362
      %v6371 = vsel %vm5248, %v6364, %v6366
      %v6372 = vsel %vm5248, %v6366, %v6368
      %v6375 = vsel %vm668, %v6348, 0
      %v6377 = vsel %vm668, %v6350, 0
      %v6379 = vsel %vm717, %v6371, 0
      %v6381 = vsel %vm717, %v6372, 0
      %6383 = vmatpush.msra.mxu0 0.0
      %6384 = vmatpush.msra.mxu0 0.0
      %6385 = vmatpush.msra.mxu0 0.0
      %6386 = vmatpush.msra.mxu0 0.0
      %6387 = vmatpush.msra.mxu0 0.0
      %6388 = vmatpush.msra.mxu0 0.0
      %6389 = vmatpush.msra.mxu0 0.0
      %6390 = vmatpush.msra.mxu0 0.0
      %6391 = vmatpush.msra.mxu0 0.0
      %6392 = vmatpush.msra.mxu0 0.0
      %6393 = vmatpush.msra.mxu0 0.0
      %6394 = vmatpush.msra.mxu0 0.0
      %6395 = vmatpush.msra.mxu0 0.0
      %6396 = vmatpush.msra.mxu0 0.0
      %v6397 = vand.u32 %v6379, 4294901760
      %6398 = vmatpush.msra.mxu0 %v6397
      %v6399 = vand.u32 %v6369, 4294901760
      %6400 = vmatpush.msra.mxu0 %v6399
      %v6401 = vand.u32 %v6375, 4294901760
      %v6402 = vsub.f32 %v6375, %v6401
      %v6403 = vand.u32 %v6402, 4294901760
      %v6404 = vsub.f32 %v6402, %v6403
      %v6405 = vand.u32 %v6404, 4294901760
      %6406 = vmatmul.f32.gmra.mxu0 %v6405
      %v6407 = vpop.f32.mrf.mxu0
      %v6408 = vadd.f32 0.0, %v6407
      %v6409 = vand.u32 %v6377, 4294901760
      %v6410 = vsub.f32 %v6377, %v6409
      %v6411 = vand.u32 %v6410, 4294901760
      %v6412 = vsub.f32 %v6410, %v6411
      %v6413 = vand.u32 %v6412, 4294901760
      %6414 = vmatmul.f32.gmra.mxu0 %v6413
      %v6415 = vpop.f32.mrf.mxu0
      %v6416 = vadd.f32 0.0, %v6415
      %6417 = vdwg.mxu0
      %6418 = vmatpush.msra.mxu0 0.0
      %6419 = vmatpush.msra.mxu0 0.0
      %6420 = vmatpush.msra.mxu0 0.0
      %6421 = vmatpush.msra.mxu0 0.0
      %6422 = vmatpush.msra.mxu0 0.0
      %6423 = vmatpush.msra.mxu0 0.0
      %6424 = vmatpush.msra.mxu0 0.0
      %6425 = vmatpush.msra.mxu0 0.0
      %6426 = vmatpush.msra.mxu0 0.0
      %6427 = vmatpush.msra.mxu0 0.0
      %6428 = vmatpush.msra.mxu0 0.0
      %6429 = vmatpush.msra.mxu0 0.0
      %6430 = vmatpush.msra.mxu0 0.0
      %6431 = vmatpush.msra.mxu0 0.0
      %v6432 = vand.u32 %v6379, 4294901760
      %v6433 = vsub.f32 %v6379, %v6432
      %v6434 = vand.u32 %v6433, 4294901760
      %v6435 = vsub.f32 %v6433, %v6434
      %v6436 = vand.u32 %v6435, 4294901760
      %6437 = vmatpush.msra.mxu0 %v6436
      %v6438 = vand.u32 %v6369, 4294901760
      %v6439 = vsub.f32 %v6369, %v6438
      %v6440 = vand.u32 %v6439, 4294901760
      %v6441 = vsub.f32 %v6439, %v6440
      %v6442 = vand.u32 %v6441, 4294901760
      %6443 = vmatpush.msra.mxu0 %v6442
      %v6444 = vand.u32 %v6375, 4294901760
      %6445 = vmatmul.f32.gmra.mxu0 %v6444
      %v6446 = vpop.f32.mrf.mxu0
      %v6447 = vadd.f32 %v6408, %v6446
      %v6448 = vand.u32 %v6377, 4294901760
      %6449 = vmatmul.f32.gmra.mxu0 %v6448
      %v6450 = vpop.f32.mrf.mxu0
      %v6451 = vadd.f32 %v6416, %v6450
      %6452 = vdwg.mxu0
      %6453 = vmatpush.msra.mxu0 0.0
      %6454 = vmatpush.msra.mxu0 0.0
      %6455 = vmatpush.msra.mxu0 0.0
      %6456 = vmatpush.msra.mxu0 0.0
      %6457 = vmatpush.msra.mxu0 0.0
      %6458 = vmatpush.msra.mxu0 0.0
      %6459 = vmatpush.msra.mxu0 0.0
      %6460 = vmatpush.msra.mxu0 0.0
      %6461 = vmatpush.msra.mxu0 0.0
      %6462 = vmatpush.msra.mxu0 0.0
      %6463 = vmatpush.msra.mxu0 0.0
      %6464 = vmatpush.msra.mxu0 0.0
      %6465 = vmatpush.msra.mxu0 0.0
      %6466 = vmatpush.msra.mxu0 0.0
      %v6467 = vand.u32 %v6379, 4294901760
      %v6468 = vsub.f32 %v6379, %v6467
      %6469 = vmatpush.msra.mxu0 %v6468
      %v6470 = vand.u32 %v6369, 4294901760
      %v6471 = vsub.f32 %v6369, %v6470
      %6472 = vmatpush.msra.mxu0 %v6471
      %v6473 = vand.u32 %v6375, 4294901760
      %v6474 = vsub.f32 %v6375, %v6473
      %6475 = vmatmul.f32.gmra.mxu0 %v6474
      %v6476 = vpop.f32.mrf.mxu0
      %v6477 = vadd.f32 %v6447, %v6476
      %v6478 = vand.u32 %v6377, 4294901760
      %v6479 = vsub.f32 %v6377, %v6478
      %6480 = vmatmul.f32.gmra.mxu0 %v6479
      %v6481 = vpop.f32.mrf.mxu0
      %v6482 = vadd.f32 %v6451, %v6481
      %6483 = vdwg.mxu0
      %6484 = vmatpush.msra.mxu0 0.0
      %6485 = vmatpush.msra.mxu0 0.0
      %6486 = vmatpush.msra.mxu0 0.0
      %6487 = vmatpush.msra.mxu0 0.0
      %6488 = vmatpush.msra.mxu0 0.0
      %6489 = vmatpush.msra.mxu0 0.0
      %6490 = vmatpush.msra.mxu0 0.0
      %6491 = vmatpush.msra.mxu0 0.0
      %6492 = vmatpush.msra.mxu0 0.0
      %6493 = vmatpush.msra.mxu0 0.0
      %6494 = vmatpush.msra.mxu0 0.0
      %6495 = vmatpush.msra.mxu0 0.0
      %6496 = vmatpush.msra.mxu0 0.0
      %6497 = vmatpush.msra.mxu0 0.0
      %v6498 = vand.u32 %v6379, 4294901760
      %6499 = vmatpush.msra.mxu0 %v6498
      %v6500 = vand.u32 %v6369, 4294901760
      %6501 = vmatpush.msra.mxu0 %v6500
      %v6502 = vand.u32 %v6375, 4294901760
      %v6503 = vsub.f32 %v6375, %v6502
      %v6504 = vand.u32 %v6503, 4294901760
      %6505 = vmatmul.f32.gmra.mxu0 %v6504
      %v6506 = vpop.f32.mrf.mxu0
      %v6507 = vadd.f32 %v6477, %v6506
      %v6508 = vand.u32 %v6377, 4294901760
      %v6509 = vsub.f32 %v6377, %v6508
      %v6510 = vand.u32 %v6509, 4294901760
      %6511 = vmatmul.f32.gmra.mxu0 %v6510
      %v6512 = vpop.f32.mrf.mxu0
      %v6513 = vadd.f32 %v6482, %v6512
      %6514 = vdwg.mxu0
      %6515 = vmatpush.msra.mxu0 0.0
      %6516 = vmatpush.msra.mxu0 0.0
      %6517 = vmatpush.msra.mxu0 0.0
      %6518 = vmatpush.msra.mxu0 0.0
      %6519 = vmatpush.msra.mxu0 0.0
      %6520 = vmatpush.msra.mxu0 0.0
      %6521 = vmatpush.msra.mxu0 0.0
      %6522 = vmatpush.msra.mxu0 0.0
      %6523 = vmatpush.msra.mxu0 0.0
      %6524 = vmatpush.msra.mxu0 0.0
      %6525 = vmatpush.msra.mxu0 0.0
      %6526 = vmatpush.msra.mxu0 0.0
      %6527 = vmatpush.msra.mxu0 0.0
      %6528 = vmatpush.msra.mxu0 0.0
      %v6529 = vand.u32 %v6379, 4294901760
      %v6530 = vsub.f32 %v6379, %v6529
      %v6531 = vand.u32 %v6530, 4294901760
      %6532 = vmatpush.msra.mxu0 %v6531
      %v6533 = vand.u32 %v6369, 4294901760
      %v6534 = vsub.f32 %v6369, %v6533
      %v6535 = vand.u32 %v6534, 4294901760
      %6536 = vmatpush.msra.mxu0 %v6535
      %v6537 = vand.u32 %v6375, 4294901760
      %6538 = vmatmul.f32.gmra.mxu0 %v6537
      %v6539 = vpop.f32.mrf.mxu0
      %v6540 = vadd.f32 %v6507, %v6539
      %v6541 = vand.u32 %v6377, 4294901760
      %6542 = vmatmul.f32.gmra.mxu0 %v6541
      %v6543 = vpop.f32.mrf.mxu0
      %v6544 = vadd.f32 %v6513, %v6543
      %6545 = vdwg.mxu0
      %6546 = vmatpush.msra.mxu0 0.0
      %6547 = vmatpush.msra.mxu0 0.0
      %6548 = vmatpush.msra.mxu0 0.0
      %6549 = vmatpush.msra.mxu0 0.0
      %6550 = vmatpush.msra.mxu0 0.0
      %6551 = vmatpush.msra.mxu0 0.0
      %6552 = vmatpush.msra.mxu0 0.0
      %6553 = vmatpush.msra.mxu0 0.0
      %6554 = vmatpush.msra.mxu0 0.0
      %6555 = vmatpush.msra.mxu0 0.0
      %6556 = vmatpush.msra.mxu0 0.0
      %6557 = vmatpush.msra.mxu0 0.0
      %6558 = vmatpush.msra.mxu0 0.0
      %6559 = vmatpush.msra.mxu0 0.0
      %v6560 = vand.u32 %v6379, 4294901760
      %6561 = vmatpush.msra.mxu0 %v6560
      %v6562 = vand.u32 %v6369, 4294901760
      %6563 = vmatpush.msra.mxu0 %v6562
      %v6564 = vand.u32 %v6375, 4294901760
      %6565 = vmatmul.f32.gmra.mxu0 %v6564
      %v6566 = vpop.f32.mrf.mxu0
      %v6567 = vadd.f32 %v6540, %v6566
      %v6568 = vand.u32 %v6377, 4294901760
      %6569 = vmatmul.f32.gmra.mxu0 %v6568
      %v6570 = vpop.f32.mrf.mxu0
      %v6571 = vadd.f32 %v6544, %v6570
      %6572 = vdwg.mxu0
      %6573 = vmatpush.msra.mxu0 0.0
      %6574 = vmatpush.msra.mxu0 0.0
      %6575 = vmatpush.msra.mxu0 0.0
      %6576 = vmatpush.msra.mxu0 0.0
      %6577 = vmatpush.msra.mxu0 0.0
      %6578 = vmatpush.msra.mxu0 0.0
      %6579 = vmatpush.msra.mxu0 0.0
      %6580 = vmatpush.msra.mxu0 0.0
      %6581 = vmatpush.msra.mxu0 0.0
      %6582 = vmatpush.msra.mxu0 0.0
      %6583 = vmatpush.msra.mxu0 0.0
      %6584 = vmatpush.msra.mxu0 0.0
      %6585 = vmatpush.msra.mxu0 0.0
      %6586 = vmatpush.msra.mxu0 0.0
      %v6587 = vand.u32 %v6381, 4294901760
      %6588 = vmatpush.msra.mxu0 %v6587
      %v6589 = vand.u32 %v6370, 4294901760
      %6590 = vmatpush.msra.mxu0 %v6589
      %v6591 = vand.u32 %v6375, 4294901760
      %v6592 = vsub.f32 %v6375, %v6591
      %v6593 = vand.u32 %v6592, 4294901760
      %v6594 = vsub.f32 %v6592, %v6593
      %v6595 = vand.u32 %v6594, 4294901760
      %6596 = vmatmul.f32.gmra.mxu0 %v6595
      %v6597 = vpop.f32.mrf.mxu0
      %v6598 = vadd.f32 0.0, %v6597
      %v6599 = vand.u32 %v6377, 4294901760
      %v6600 = vsub.f32 %v6377, %v6599
      %v6601 = vand.u32 %v6600, 4294901760
      %v6602 = vsub.f32 %v6600, %v6601
      %v6603 = vand.u32 %v6602, 4294901760
      %6604 = vmatmul.f32.gmra.mxu0 %v6603
      %v6605 = vpop.f32.mrf.mxu0
      %v6606 = vadd.f32 0.0, %v6605
      %6607 = vdwg.mxu0
      %6608 = vmatpush.msra.mxu0 0.0
      %6609 = vmatpush.msra.mxu0 0.0
      %6610 = vmatpush.msra.mxu0 0.0
      %6611 = vmatpush.msra.mxu0 0.0
      %6612 = vmatpush.msra.mxu0 0.0
      %6613 = vmatpush.msra.mxu0 0.0
      %6614 = vmatpush.msra.mxu0 0.0
      %6615 = vmatpush.msra.mxu0 0.0
      %6616 = vmatpush.msra.mxu0 0.0
      %6617 = vmatpush.msra.mxu0 0.0
      %6618 = vmatpush.msra.mxu0 0.0
      %6619 = vmatpush.msra.mxu0 0.0
      %6620 = vmatpush.msra.mxu0 0.0
      %6621 = vmatpush.msra.mxu0 0.0
      %v6622 = vand.u32 %v6381, 4294901760
      %v6623 = vsub.f32 %v6381, %v6622
      %v6624 = vand.u32 %v6623, 4294901760
      %v6625 = vsub.f32 %v6623, %v6624
      %v6626 = vand.u32 %v6625, 4294901760
      %6627 = vmatpush.msra.mxu0 %v6626
      %v6628 = vand.u32 %v6370, 4294901760
      %v6629 = vsub.f32 %v6370, %v6628
      %v6630 = vand.u32 %v6629, 4294901760
      %v6631 = vsub.f32 %v6629, %v6630
      %v6632 = vand.u32 %v6631, 4294901760
      %6633 = vmatpush.msra.mxu0 %v6632
      %v6634 = vand.u32 %v6375, 4294901760
      %6635 = vmatmul.f32.gmra.mxu0 %v6634
      %v6636 = vpop.f32.mrf.mxu0
      %v6637 = vadd.f32 %v6598, %v6636
      %v6638 = vand.u32 %v6377, 4294901760
      %6639 = vmatmul.f32.gmra.mxu0 %v6638
      %v6640 = vpop.f32.mrf.mxu0
      %v6641 = vadd.f32 %v6606, %v6640
      %6642 = vdwg.mxu0
      %6643 = vmatpush.msra.mxu0 0.0
      %6644 = vmatpush.msra.mxu0 0.0
      %6645 = vmatpush.msra.mxu0 0.0
      %6646 = vmatpush.msra.mxu0 0.0
      %6647 = vmatpush.msra.mxu0 0.0
      %6648 = vmatpush.msra.mxu0 0.0
      %6649 = vmatpush.msra.mxu0 0.0
      %6650 = vmatpush.msra.mxu0 0.0
      %6651 = vmatpush.msra.mxu0 0.0
      %6652 = vmatpush.msra.mxu0 0.0
      %6653 = vmatpush.msra.mxu0 0.0
      %6654 = vmatpush.msra.mxu0 0.0
      %6655 = vmatpush.msra.mxu0 0.0
      %6656 = vmatpush.msra.mxu0 0.0
      %v6657 = vand.u32 %v6381, 4294901760
      %v6658 = vsub.f32 %v6381, %v6657
      %6659 = vmatpush.msra.mxu0 %v6658
      %v6660 = vand.u32 %v6370, 4294901760
      %v6661 = vsub.f32 %v6370, %v6660
      %6662 = vmatpush.msra.mxu0 %v6661
      %v6663 = vand.u32 %v6375, 4294901760
      %v6664 = vsub.f32 %v6375, %v6663
      %6665 = vmatmul.f32.gmra.mxu0 %v6664
      %v6666 = vpop.f32.mrf.mxu0
      %v6667 = vadd.f32 %v6637, %v6666
      %v6668 = vand.u32 %v6377, 4294901760
      %v6669 = vsub.f32 %v6377, %v6668
      %6670 = vmatmul.f32.gmra.mxu0 %v6669
      %v6671 = vpop.f32.mrf.mxu0
      %v6672 = vadd.f32 %v6641, %v6671
      %6673 = vdwg.mxu0
      %6674 = vmatpush.msra.mxu0 0.0
      %6675 = vmatpush.msra.mxu0 0.0
      %6676 = vmatpush.msra.mxu0 0.0
      %6677 = vmatpush.msra.mxu0 0.0
      %6678 = vmatpush.msra.mxu0 0.0
      %6679 = vmatpush.msra.mxu0 0.0
      %6680 = vmatpush.msra.mxu0 0.0
      %6681 = vmatpush.msra.mxu0 0.0
      %6682 = vmatpush.msra.mxu0 0.0
      %6683 = vmatpush.msra.mxu0 0.0
      %6684 = vmatpush.msra.mxu0 0.0
      %6685 = vmatpush.msra.mxu0 0.0
      %6686 = vmatpush.msra.mxu0 0.0
      %6687 = vmatpush.msra.mxu0 0.0
      %v6688 = vand.u32 %v6381, 4294901760
      %6689 = vmatpush.msra.mxu0 %v6688
      %v6690 = vand.u32 %v6370, 4294901760
      %6691 = vmatpush.msra.mxu0 %v6690
      %v6692 = vand.u32 %v6375, 4294901760
      %v6693 = vsub.f32 %v6375, %v6692
      %v6694 = vand.u32 %v6693, 4294901760
      %6695 = vmatmul.f32.gmra.mxu0 %v6694
      %v6696 = vpop.f32.mrf.mxu0
      %v6697 = vadd.f32 %v6667, %v6696
      %v6698 = vand.u32 %v6377, 4294901760
      %v6699 = vsub.f32 %v6377, %v6698
      %v6700 = vand.u32 %v6699, 4294901760
      %6701 = vmatmul.f32.gmra.mxu0 %v6700
      %v6702 = vpop.f32.mrf.mxu0
      %v6703 = vadd.f32 %v6672, %v6702
      %6704 = vdwg.mxu0
      %6705 = vmatpush.msra.mxu0 0.0
      %6706 = vmatpush.msra.mxu0 0.0
      %6707 = vmatpush.msra.mxu0 0.0
      %6708 = vmatpush.msra.mxu0 0.0
      %6709 = vmatpush.msra.mxu0 0.0
      %6710 = vmatpush.msra.mxu0 0.0
      %6711 = vmatpush.msra.mxu0 0.0
      %6712 = vmatpush.msra.mxu0 0.0
      %6713 = vmatpush.msra.mxu0 0.0
      %6714 = vmatpush.msra.mxu0 0.0
      %6715 = vmatpush.msra.mxu0 0.0
      %6716 = vmatpush.msra.mxu0 0.0
      %6717 = vmatpush.msra.mxu0 0.0
      %6718 = vmatpush.msra.mxu0 0.0
      %v6719 = vand.u32 %v6381, 4294901760
      %v6720 = vsub.f32 %v6381, %v6719
      %v6721 = vand.u32 %v6720, 4294901760
      %6722 = vmatpush.msra.mxu0 %v6721
      %v6723 = vand.u32 %v6370, 4294901760
      %v6724 = vsub.f32 %v6370, %v6723
      %v6725 = vand.u32 %v6724, 4294901760
      %6726 = vmatpush.msra.mxu0 %v6725
      %v6727 = vand.u32 %v6375, 4294901760
      %6728 = vmatmul.f32.gmra.mxu0 %v6727
      %v6729 = vpop.f32.mrf.mxu0
      %v6730 = vadd.f32 %v6697, %v6729
      %v6731 = vand.u32 %v6377, 4294901760
      %6732 = vmatmul.f32.gmra.mxu0 %v6731
      %v6733 = vpop.f32.mrf.mxu0
      %v6734 = vadd.f32 %v6703, %v6733
      %6735 = vdwg.mxu0
      %6736 = vmatpush.msra.mxu0 0.0
      %6737 = vmatpush.msra.mxu0 0.0
      %6738 = vmatpush.msra.mxu0 0.0
      %6739 = vmatpush.msra.mxu0 0.0
      %6740 = vmatpush.msra.mxu0 0.0
      %6741 = vmatpush.msra.mxu0 0.0
      %6742 = vmatpush.msra.mxu0 0.0
      %6743 = vmatpush.msra.mxu0 0.0
      %6744 = vmatpush.msra.mxu0 0.0
      %6745 = vmatpush.msra.mxu0 0.0
      %6746 = vmatpush.msra.mxu0 0.0
      %6747 = vmatpush.msra.mxu0 0.0
      %6748 = vmatpush.msra.mxu0 0.0
      %6749 = vmatpush.msra.mxu0 0.0
      %v6750 = vand.u32 %v6381, 4294901760
      %6751 = vmatpush.msra.mxu0 %v6750
      %v6752 = vand.u32 %v6370, 4294901760
      %6753 = vmatpush.msra.mxu0 %v6752
      %v6754 = vand.u32 %v6375, 4294901760
      %6755 = vmatmul.f32.gmra.mxu0 %v6754
      %v6756 = vpop.f32.mrf.mxu0
      %v6757 = vadd.f32 %v6730, %v6756
      %v6758 = vand.u32 %v6377, 4294901760
      %6759 = vmatmul.f32.gmra.mxu0 %v6758
      %v6760 = vpop.f32.mrf.mxu0
      %v6761 = vadd.f32 %v6734, %v6760
      %6762 = vdwg.mxu0
      %v6763 = vadd.f32 %v6151, %v6567
      %v6764 = vadd.f32 %v6341, %v6757
      %v6765 = vadd.f32 %v6155, %v6571
      %v6766 = vadd.f32 %v6345, %v6761
      %6767 = vrot.lane.b32.xlu0 %v5563, 95
      %v6768 = vpop.permute.xlu0 %6767
      %6769 = vrot.lane.b32.xlu0 %v5564, 95
      %v6770 = vpop.permute.xlu0 %6769
      %6772 = vst [vmem:[#allocation1] ss:$2 sm:$0xff] %v5562
      %v6773 = vld.sshfl [vmem:[#allocation1] sm:$0xff pattern:$0x75316420]
      %v6774 = vld.sshfl [vmem:[#allocation1 + $0x8] sm:$0xff pattern:$0x75316420]
      %vm6775 = vcmask 23552
      %v6776 = vsel %vm6775, %v6768, 0
      %v6778 = vsel %vm6775, %v6770, 0
      %vm6780 = vcmask 1042432
      %v6781 = vsel %vm6780, %v6773, 0
      %v6783 = vsel %vm6780, %v6774, 0
      %6785 = vmatpush.msra.mxu0 0.0
      %6786 = vmatpush.msra.mxu0 0.0
      %6787 = vmatpush.msra.mxu0 0.0
      %6788 = vmatpush.msra.mxu0 0.0
      %6789 = vmatpush.msra.mxu0 0.0
      %6790 = vmatpush.msra.mxu0 0.0
      %6791 = vmatpush.msra.mxu0 0.0
      %6792 = vmatpush.msra.mxu0 0.0
      %6793 = vmatpush.msra.mxu0 0.0
      %6794 = vmatpush.msra.mxu0 0.0
      %6795 = vmatpush.msra.mxu0 0.0
      %6796 = vmatpush.msra.mxu0 0.0
      %6797 = vmatpush.msra.mxu0 0.0
      %6798 = vmatpush.msra.mxu0 0.0
      %6799 = vmatpush.msra.mxu0 0.0
      %v6800 = vand.u32 %v6781, 4294901760
      %6801 = vmatpush.msra.mxu0 %v6800
      %v6802 = vand.u32 %v6776, 4294901760
      %v6803 = vsub.f32 %v6776, %v6802
      %v6804 = vand.u32 %v6803, 4294901760
      %v6805 = vsub.f32 %v6803, %v6804
      %v6806 = vand.u32 %v6805, 4294901760
      %6807 = vmatmul.f32.gmra.mxu0 %v6806
      %v6808 = vpop.f32.mrf.mxu0
      %v6809 = vadd.f32 0.0, %v6808
      %v6810 = vand.u32 %v6778, 4294901760
      %v6811 = vsub.f32 %v6778, %v6810
      %v6812 = vand.u32 %v6811, 4294901760
      %v6813 = vsub.f32 %v6811, %v6812
      %v6814 = vand.u32 %v6813, 4294901760
      %6815 = vmatmul.f32.gmra.mxu0 %v6814
      %v6816 = vpop.f32.mrf.mxu0
      %v6817 = vadd.f32 0.0, %v6816
      %6818 = vdwg.mxu0
      %6819 = vmatpush.msra.mxu0 0.0
      %6820 = vmatpush.msra.mxu0 0.0
      %6821 = vmatpush.msra.mxu0 0.0
      %6822 = vmatpush.msra.mxu0 0.0
      %6823 = vmatpush.msra.mxu0 0.0
      %6824 = vmatpush.msra.mxu0 0.0
      %6825 = vmatpush.msra.mxu0 0.0
      %6826 = vmatpush.msra.mxu0 0.0
      %6827 = vmatpush.msra.mxu0 0.0
      %6828 = vmatpush.msra.mxu0 0.0
      %6829 = vmatpush.msra.mxu0 0.0
      %6830 = vmatpush.msra.mxu0 0.0
      %6831 = vmatpush.msra.mxu0 0.0
      %6832 = vmatpush.msra.mxu0 0.0
      %6833 = vmatpush.msra.mxu0 0.0
      %v6834 = vand.u32 %v6781, 4294901760
      %v6835 = vsub.f32 %v6781, %v6834
      %v6836 = vand.u32 %v6835, 4294901760
      %v6837 = vsub.f32 %v6835, %v6836
      %v6838 = vand.u32 %v6837, 4294901760
      %6839 = vmatpush.msra.mxu0 %v6838
      %v6840 = vand.u32 %v6776, 4294901760
      %6841 = vmatmul.f32.gmra.mxu0 %v6840
      %v6842 = vpop.f32.mrf.mxu0
      %v6843 = vadd.f32 %v6809, %v6842
      %v6844 = vand.u32 %v6778, 4294901760
      %6845 = vmatmul.f32.gmra.mxu0 %v6844
      %v6846 = vpop.f32.mrf.mxu0
      %v6847 = vadd.f32 %v6817, %v6846
      %6848 = vdwg.mxu0
      %6849 = vmatpush.msra.mxu0 0.0
      %6850 = vmatpush.msra.mxu0 0.0
      %6851 = vmatpush.msra.mxu0 0.0
      %6852 = vmatpush.msra.mxu0 0.0
      %6853 = vmatpush.msra.mxu0 0.0
      %6854 = vmatpush.msra.mxu0 0.0
      %6855 = vmatpush.msra.mxu0 0.0
      %6856 = vmatpush.msra.mxu0 0.0
      %6857 = vmatpush.msra.mxu0 0.0
      %6858 = vmatpush.msra.mxu0 0.0
      %6859 = vmatpush.msra.mxu0 0.0
      %6860 = vmatpush.msra.mxu0 0.0
      %6861 = vmatpush.msra.mxu0 0.0
      %6862 = vmatpush.msra.mxu0 0.0
      %6863 = vmatpush.msra.mxu0 0.0
      %v6864 = vand.u32 %v6781, 4294901760
      %v6865 = vsub.f32 %v6781, %v6864
      %6866 = vmatpush.msra.mxu0 %v6865
      %v6867 = vand.u32 %v6776, 4294901760
      %v6868 = vsub.f32 %v6776, %v6867
      %6869 = vmatmul.f32.gmra.mxu0 %v6868
      %v6870 = vpop.f32.mrf.mxu0
      %v6871 = vadd.f32 %v6843, %v6870
      %v6872 = vand.u32 %v6778, 4294901760
      %v6873 = vsub.f32 %v6778, %v6872
      %6874 = vmatmul.f32.gmra.mxu0 %v6873
      %v6875 = vpop.f32.mrf.mxu0
      %v6876 = vadd.f32 %v6847, %v6875
      %6877 = vdwg.mxu0
      %6878 = vmatpush.msra.mxu0 0.0
      %6879 = vmatpush.msra.mxu0 0.0
      %6880 = vmatpush.msra.mxu0 0.0
      %6881 = vmatpush.msra.mxu0 0.0
      %6882 = vmatpush.msra.mxu0 0.0
      %6883 = vmatpush.msra.mxu0 0.0
      %6884 = vmatpush.msra.mxu0 0.0
      %6885 = vmatpush.msra.mxu0 0.0
      %6886 = vmatpush.msra.mxu0 0.0
      %6887 = vmatpush.msra.mxu0 0.0
      %6888 = vmatpush.msra.mxu0 0.0
      %6889 = vmatpush.msra.mxu0 0.0
      %6890 = vmatpush.msra.mxu0 0.0
      %6891 = vmatpush.msra.mxu0 0.0
      %6892 = vmatpush.msra.mxu0 0.0
      %v6893 = vand.u32 %v6781, 4294901760
      %6894 = vmatpush.msra.mxu0 %v6893
      %v6895 = vand.u32 %v6776, 4294901760
      %v6896 = vsub.f32 %v6776, %v6895
      %v6897 = vand.u32 %v6896, 4294901760
      %6898 = vmatmul.f32.gmra.mxu0 %v6897
      %v6899 = vpop.f32.mrf.mxu0
      %v6900 = vadd.f32 %v6871, %v6899
      %v6901 = vand.u32 %v6778, 4294901760
      %v6902 = vsub.f32 %v6778, %v6901
      %v6903 = vand.u32 %v6902, 4294901760
      %6904 = vmatmul.f32.gmra.mxu0 %v6903
      %v6905 = vpop.f32.mrf.mxu0
      %v6906 = vadd.f32 %v6876, %v6905
      %6907 = vdwg.mxu0
      %6908 = vmatpush.msra.mxu0 0.0
      %6909 = vmatpush.msra.mxu0 0.0
      %6910 = vmatpush.msra.mxu0 0.0
      %6911 = vmatpush.msra.mxu0 0.0
      %6912 = vmatpush.msra.mxu0 0.0
      %6913 = vmatpush.msra.mxu0 0.0
      %6914 = vmatpush.msra.mxu0 0.0
      %6915 = vmatpush.msra.mxu0 0.0
      %6916 = vmatpush.msra.mxu0 0.0
      %6917 = vmatpush.msra.mxu0 0.0
      %6918 = vmatpush.msra.mxu0 0.0
      %6919 = vmatpush.msra.mxu0 0.0
      %6920 = vmatpush.msra.mxu0 0.0
      %6921 = vmatpush.msra.mxu0 0.0
      %6922 = vmatpush.msra.mxu0 0.0
      %v6923 = vand.u32 %v6781, 4294901760
      %v6924 = vsub.f32 %v6781, %v6923
      %v6925 = vand.u32 %v6924, 4294901760
      %6926 = vmatpush.msra.mxu0 %v6925
      %v6927 = vand.u32 %v6776, 4294901760
      %6928 = vmatmul.f32.gmra.mxu0 %v6927
      %v6929 = vpop.f32.mrf.mxu0
      %v6930 = vadd.f32 %v6900, %v6929
      %v6931 = vand.u32 %v6778, 4294901760
      %6932 = vmatmul.f32.gmra.mxu0 %v6931
      %v6933 = vpop.f32.mrf.mxu0
      %v6934 = vadd.f32 %v6906, %v6933
      %6935 = vdwg.mxu0
      %6936 = vmatpush.msra.mxu0 0.0
      %6937 = vmatpush.msra.mxu0 0.0
      %6938 = vmatpush.msra.mxu0 0.0
      %6939 = vmatpush.msra.mxu0 0.0
      %6940 = vmatpush.msra.mxu0 0.0
      %6941 = vmatpush.msra.mxu0 0.0
      %6942 = vmatpush.msra.mxu0 0.0
      %6943 = vmatpush.msra.mxu0 0.0
      %6944 = vmatpush.msra.mxu0 0.0
      %6945 = vmatpush.msra.mxu0 0.0
      %6946 = vmatpush.msra.mxu0 0.0
      %6947 = vmatpush.msra.mxu0 0.0
      %6948 = vmatpush.msra.mxu0 0.0
      %6949 = vmatpush.msra.mxu0 0.0
      %6950 = vmatpush.msra.mxu0 0.0
      %v6951 = vand.u32 %v6781, 4294901760
      %6952 = vmatpush.msra.mxu0 %v6951
      %v6953 = vand.u32 %v6776, 4294901760
      %6954 = vmatmul.f32.gmra.mxu0 %v6953
      %v6955 = vpop.f32.mrf.mxu0
      %v6956 = vadd.f32 %v6930, %v6955
      %v6957 = vand.u32 %v6778, 4294901760
      %6958 = vmatmul.f32.gmra.mxu0 %v6957
      %v6959 = vpop.f32.mrf.mxu0
      %v6960 = vadd.f32 %v6934, %v6959
      %6961 = vdwg.mxu0
      %6962 = vmatpush.msra.mxu0 0.0
      %6963 = vmatpush.msra.mxu0 0.0
      %6964 = vmatpush.msra.mxu0 0.0
      %6965 = vmatpush.msra.mxu0 0.0
      %6966 = vmatpush.msra.mxu0 0.0
      %6967 = vmatpush.msra.mxu0 0.0
      %6968 = vmatpush.msra.mxu0 0.0
      %6969 = vmatpush.msra.mxu0 0.0
      %6970 = vmatpush.msra.mxu0 0.0
      %6971 = vmatpush.msra.mxu0 0.0
      %6972 = vmatpush.msra.mxu0 0.0
      %6973 = vmatpush.msra.mxu0 0.0
      %6974 = vmatpush.msra.mxu0 0.0
      %6975 = vmatpush.msra.mxu0 0.0
      %6976 = vmatpush.msra.mxu0 0.0
      %v6977 = vand.u32 %v6783, 4294901760
      %6978 = vmatpush.msra.mxu0 %v6977
      %v6979 = vand.u32 %v6776, 4294901760
      %v6980 = vsub.f32 %v6776, %v6979
      %v6981 = vand.u32 %v6980, 4294901760
      %v6982 = vsub.f32 %v6980, %v6981
      %v6983 = vand.u32 %v6982, 4294901760
      %6984 = vmatmul.f32.gmra.mxu0 %v6983
      %v6985 = vpop.f32.mrf.mxu0
      %v6986 = vadd.f32 0.0, %v6985
      %v6987 = vand.u32 %v6778, 4294901760
      %v6988 = vsub.f32 %v6778, %v6987
      %v6989 = vand.u32 %v6988, 4294901760
      %v6990 = vsub.f32 %v6988, %v6989
      %v6991 = vand.u32 %v6990, 4294901760
      %6992 = vmatmul.f32.gmra.mxu0 %v6991
      %v6993 = vpop.f32.mrf.mxu0
      %v6994 = vadd.f32 0.0, %v6993
      %6995 = vdwg.mxu0
      %6996 = vmatpush.msra.mxu0 0.0
      %6997 = vmatpush.msra.mxu0 0.0
      %6998 = vmatpush.msra.mxu0 0.0
      %6999 = vmatpush.msra.mxu0 0.0
      %7000 = vmatpush.msra.mxu0 0.0
      %7001 = vmatpush.msra.mxu0 0.0
      %7002 = vmatpush.msra.mxu0 0.0
      %7003 = vmatpush.msra.mxu0 0.0
      %7004 = vmatpush.msra.mxu0 0.0
      %7005 = vmatpush.msra.mxu0 0.0
      %7006 = vmatpush.msra.mxu0 0.0
      %7007 = vmatpush.msra.mxu0 0.0
      %7008 = vmatpush.msra.mxu0 0.0
      %7009 = vmatpush.msra.mxu0 0.0
      %7010 = vmatpush.msra.mxu0 0.0
      %v7011 = vand.u32 %v6783, 4294901760
      %v7012 = vsub.f32 %v6783, %v7011
      %v7013 = vand.u32 %v7012, 4294901760
      %v7014 = vsub.f32 %v7012, %v7013
      %v7015 = vand.u32 %v7014, 4294901760
      %7016 = vmatpush.msra.mxu0 %v7015
      %v7017 = vand.u32 %v6776, 4294901760
      %7018 = vmatmul.f32.gmra.mxu0 %v7017
      %v7019 = vpop.f32.mrf.mxu0
      %v7020 = vadd.f32 %v6986, %v7019
      %v7021 = vand.u32 %v6778, 4294901760
      %7022 = vmatmul.f32.gmra.mxu0 %v7021
      %v7023 = vpop.f32.mrf.mxu0
      %v7024 = vadd.f32 %v6994, %v7023
      %7025 = vdwg.mxu0
      %7026 = vmatpush.msra.mxu0 0.0
      %7027 = vmatpush.msra.mxu0 0.0
      %7028 = vmatpush.msra.mxu0 0.0
      %7029 = vmatpush.msra.mxu0 0.0
      %7030 = vmatpush.msra.mxu0 0.0
      %7031 = vmatpush.msra.mxu0 0.0
      %7032 = vmatpush.msra.mxu0 0.0
      %7033 = vmatpush.msra.mxu0 0.0
      %7034 = vmatpush.msra.mxu0 0.0
      %7035 = vmatpush.msra.mxu0 0.0
      %7036 = vmatpush.msra.mxu0 0.0
      %7037 = vmatpush.msra.mxu0 0.0
      %7038 = vmatpush.msra.mxu0 0.0
      %7039 = vmatpush.msra.mxu0 0.0
      %7040 = vmatpush.msra.mxu0 0.0
      %v7041 = vand.u32 %v6783, 4294901760
      %v7042 = vsub.f32 %v6783, %v7041
      %7043 = vmatpush.msra.mxu0 %v7042
      %v7044 = vand.u32 %v6776, 4294901760
      %v7045 = vsub.f32 %v6776, %v7044
      %7046 = vmatmul.f32.gmra.mxu0 %v7045
      %v7047 = vpop.f32.mrf.mxu0
      %v7048 = vadd.f32 %v7020, %v7047
      %v7049 = vand.u32 %v6778, 4294901760
      %v7050 = vsub.f32 %v6778, %v7049
      %7051 = vmatmul.f32.gmra.mxu0 %v7050
      %v7052 = vpop.f32.mrf.mxu0
      %v7053 = vadd.f32 %v7024, %v7052
      %7054 = vdwg.mxu0
      %7055 = vmatpush.msra.mxu0 0.0
      %7056 = vmatpush.msra.mxu0 0.0
      %7057 = vmatpush.msra.mxu0 0.0
      %7058 = vmatpush.msra.mxu0 0.0
      %7059 = vmatpush.msra.mxu0 0.0
      %7060 = vmatpush.msra.mxu0 0.0
      %7061 = vmatpush.msra.mxu0 0.0
      %7062 = vmatpush.msra.mxu0 0.0
      %7063 = vmatpush.msra.mxu0 0.0
      %7064 = vmatpush.msra.mxu0 0.0
      %7065 = vmatpush.msra.mxu0 0.0
      %7066 = vmatpush.msra.mxu0 0.0
      %7067 = vmatpush.msra.mxu0 0.0
      %7068 = vmatpush.msra.mxu0 0.0
      %7069 = vmatpush.msra.mxu0 0.0
      %v7070 = vand.u32 %v6783, 4294901760
      %7071 = vmatpush.msra.mxu0 %v7070
      %v7072 = vand.u32 %v6776, 4294901760
      %v7073 = vsub.f32 %v6776, %v7072
      %v7074 = vand.u32 %v7073, 4294901760
      %7075 = vmatmul.f32.gmra.mxu0 %v7074
      %v7076 = vpop.f32.mrf.mxu0
      %v7077 = vadd.f32 %v7048, %v7076
      %v7078 = vand.u32 %v6778, 4294901760
      %v7079 = vsub.f32 %v6778, %v7078
      %v7080 = vand.u32 %v7079, 4294901760
      %7081 = vmatmul.f32.gmra.mxu0 %v7080
      %v7082 = vpop.f32.mrf.mxu0
      %v7083 = vadd.f32 %v7053, %v7082
      %7084 = vdwg.mxu0
      %7085 = vmatpush.msra.mxu0 0.0
      %7086 = vmatpush.msra.mxu0 0.0
      %7087 = vmatpush.msra.mxu0 0.0
      %7088 = vmatpush.msra.mxu0 0.0
      %7089 = vmatpush.msra.mxu0 0.0
      %7090 = vmatpush.msra.mxu0 0.0
      %7091 = vmatpush.msra.mxu0 0.0
      %7092 = vmatpush.msra.mxu0 0.0
      %7093 = vmatpush.msra.mxu0 0.0
      %7094 = vmatpush.msra.mxu0 0.0
      %7095 = vmatpush.msra.mxu0 0.0
      %7096 = vmatpush.msra.mxu0 0.0
      %7097 = vmatpush.msra.mxu0 0.0
      %7098 = vmatpush.msra.mxu0 0.0
      %7099 = vmatpush.msra.mxu0 0.0
      %v7100 = vand.u32 %v6783, 4294901760
      %v7101 = vsub.f32 %v6783, %v7100
      %v7102 = vand.u32 %v7101, 4294901760
      %7103 = vmatpush.msra.mxu0 %v7102
      %v7104 = vand.u32 %v6776, 4294901760
      %7105 = vmatmul.f32.gmra.mxu0 %v7104
      %v7106 = vpop.f32.mrf.mxu0
      %v7107 = vadd.f32 %v7077, %v7106
      %v7108 = vand.u32 %v6778, 4294901760
      %7109 = vmatmul.f32.gmra.mxu0 %v7108
      %v7110 = vpop.f32.mrf.mxu0
      %v7111 = vadd.f32 %v7083, %v7110
      %7112 = vdwg.mxu0
      %7113 = vmatpush.msra.mxu0 0.0
      %7114 = vmatpush.msra.mxu0 0.0
      %7115 = vmatpush.msra.mxu0 0.0
      %7116 = vmatpush.msra.mxu0 0.0
      %7117 = vmatpush.msra.mxu0 0.0
      %7118 = vmatpush.msra.mxu0 0.0
      %7119 = vmatpush.msra.mxu0 0.0
      %7120 = vmatpush.msra.mxu0 0.0
      %7121 = vmatpush.msra.mxu0 0.0
      %7122 = vmatpush.msra.mxu0 0.0
      %7123 = vmatpush.msra.mxu0 0.0
      %7124 = vmatpush.msra.mxu0 0.0
      %7125 = vmatpush.msra.mxu0 0.0
      %7126 = vmatpush.msra.mxu0 0.0
      %7127 = vmatpush.msra.mxu0 0.0
      %v7128 = vand.u32 %v6783, 4294901760
      %7129 = vmatpush.msra.mxu0 %v7128
      %v7130 = vand.u32 %v6776, 4294901760
      %7131 = vmatmul.f32.gmra.mxu0 %v7130
      %v7132 = vpop.f32.mrf.mxu0
      %v7133 = vadd.f32 %v7107, %v7132
      %v7134 = vand.u32 %v6778, 4294901760
      %7135 = vmatmul.f32.gmra.mxu0 %v7134
      %v7136 = vpop.f32.mrf.mxu0
      %v7137 = vadd.f32 %v7111, %v7136
      %7138 = vdwg.mxu0
      %v7139 = vadd.f32 %v6763, %v6956
      %v7140 = vadd.f32 %v6764, %v7133
      %v7141 = vadd.f32 %v6765, %v6960
      %v7142 = vadd.f32 %v6766, %v7137
      %v7143 = vld [vmem:[%s12] sm:$0xff]
      %v7144 = vld [vmem:[%s12 + $0x8] sm:$0xf]
      %7146 = vset.pattern.permute.xlu0 0
      %7147 = vperm.xlu0 %7146, %v7143
      %v7148 = vpop.permute.xlu0 %7147
      %7151 = vset.pattern.permute.xlu0 0
      %7152 = vperm.xlu0 %7151, %v7144
      %v7153 = vpop.permute.xlu0 %7152
      %v7155 = vadd.f32 %v7139, %v7148
      %v7156 = vadd.f32 %v7140, %v7148
      %v7157 = vadd.f32 %v7141, %v7153
      %v7158 = vadd.f32 %v7142, %v7153
      %vm7159 = vcmp.ge.f32.partialorder %v7155, 0.0
      %vm7160 = vcmp.ge.f32.partialorder %v7156, 0.0
      %vm7161 = vcmp.ge.f32.partialorder %v7157, 0.0
      %vm7162 = vcmp.ge.f32.partialorder %v7158, 0.0
      %v7163 = vmul.f32 %v7155, 0.05
      %v7164 = vmul.f32 %v7156, 0.05
      %v7165 = vmul.f32 %v7157, 0.05
      %v7166 = vmul.f32 %v7158, 0.05
      %v7167 = vsel %vm7159, %v7155, %v7163
      %v7168 = vsel %vm7160, %v7156, %v7164
      %v7169 = vsel %vm7161, %v7157, %v7165
      %v7170 = vsel %vm7162, %v7158, %v7166
      %7171 = vst [vmem:[%s548] sm:$0xff] %v7167
      %7172 = vst [vmem:[%s548 + $0x8] sm:$0xff] %v7168
      %7173 = vst [vmem:[%s548 + $0x10] sm:$0xf] %v7169
      %7174 = vst [vmem:[%s548 + $0x18] sm:$0xf] %v7170
      %s7175 = smul.u32 2, %s29
      %p7176 = scmp.lt.s32.totalorder %s28, 1
      %s7177 = scalar_select %p7176, %s28, 1
      %p7178 = scmp.lt.s32.totalorder %s7175, 1
      %s7179 = scalar_select %p7178, %s7175, 1
      %s7180 = smul.addr %s7177, 4
      %s7181 = sadd.s32 %s7179, %s7180
      %s7182 = smul.addr %s7181, 8
      %s7183 = scalar_lea.vmem %s13, %s7182
      // Predicated region
      $region73: #{sesf_forward.1} parent=71 // pred_check
        %p7184 = pneg %p350
      $region74: #{sesf_forward.1} parent=71 // pred_check_branch
        %7186 = sbr.rel (%p7184) target = $region76
      $region75: #{sesf_forward.1} parent=71 // pred_region
        %s7187 = smul.u32 2, %s29
      $region76: #{sesf_forward.1} parent=71 // pred_fallthru
        _
    $region72: #{sesf_forward.1} parent=5 // pred_fallthru
      _
    %p7188 = scmp.le.s32.totalorder 2, %s19
    // Predicated region
    $region77: #{sesf_forward.1} parent=5 // pred_check
      %p7189 = pneg %p7188
    $region78: #{sesf_forward.1} parent=5 // pred_check_branch
      %7191 = sbr.rel (%p7189) target = $region80
    $region79: #{sesf_forward.1} parent=5 // pred_region
      %s7192 = ssub.s32 %s19, 2
      // Predicated region
      $region81: #{sesf_forward.1} parent=79 // pred_check
        %p7193 = pneg %p356
      $region82: #{sesf_forward.1} parent=79 // pred_check_branch
        %7195 = sbr.rel (%p7193) target = $region84
      $region83: #{sesf_forward.1} parent=79 // pred_region
        %s7196 = smul.u32 2, %s31
        %p7197 = scmp.lt.s32.totalorder %s30, 1
        %s7198 = scalar_select %p7197, %s30, 1
        %p7199 = scmp.lt.s32.totalorder %s7196, 1
        %s7200 = scalar_select %p7199, %s7196, 1
        %s7201 = smul.addr %s7198, 4
        %s7202 = sadd.s32 %s7200, %s7201
        %s7203 = smul.addr %s7202, 8
        %s7204 = scalar_lea.vmem %s13, %s7203
      $region84: #{sesf_forward.1} parent=79 // pred_fallthru
        _
    $region80: #{sesf_forward.1} parent=5 // pred_fallthru
      _
  $region6: #{sesf_forward.1} parent=0 // loop_footer
    %s23 = sadd.s32 1, %s19
  $region7: #{sesf_forward.1} parent=0 // loop_footer_branch
    %18 = sbr.rel target = $region3
  $region8: #{sesf_forward.1} parent=0 // loop_exit
    _

</llo_original>
